<compile_context>
chip_gen: v5e
topology: v5e:2x2
jax: 0.10.0
libtpu: 0.0.40
codegen_flags: <defaults>
</compile_context>

<pallas_src>
import functools
import math

import jax
import jax.numpy as jnp
import numpy as np
from jax.experimental import pallas as pl
from jax.experimental.pallas import tpu as pltpu

EPS = 1e-7
FEAT_ROWS = 14


def _cdiv(a, b):
    return -(-a // b)


def _round_up(x, m):
    return ((x + m - 1) // m) * m


def _default_target_tiles():
    """2 lane-tiles on dual-TensorCore v7x, 1 big tile on single-TC v5e/v6e."""
    try:
        kind = jax.devices()[0].device_kind.lower()
    except Exception:
        return 2
    return 2 if "v7" in kind else 1


def _choose_tiling(bm, target_tiles, max_tl):
    """tl = round_up(cdiv(bm, n_tiles), 128); pad bm only to n_tiles*tl."""
    n = max(1, int(target_tiles))
    while True:
        tl = _round_up(max(_cdiv(bm, n), 128), 128)
        if tl <= max_tl or tl == 128:
            break
        n += 1
    n_tiles = _cdiv(bm, tl)
    return tl, n_tiles, n_tiles * tl


def _regression_loss_kernel(feat_ref, *rest, reg_max, use_dfl):
    f32 = jnp.float32
    if use_dfl:
        regs_ref, out_ref = rest
    else:
        (out_ref,) = rest

    feat = feat_ref[...]                               # (14, TL) f32
    tl = feat.shape[1]

    def row(i):
        return feat[i:i + 1, :]                        # (1, TL)

    px1, py1, px2, py2 = row(0), row(1), row(2), row(3)
    gx1, gy1, gx2, gy2 = row(4), row(5), row(6), row(7)
    ax, ay = row(8), row(9)
    w_ = row(10)                                       # bbox_weight
    fg = row(11)                                       # fg mask (0./1.)
    stride = row(12)
    v = row(13)                                        # (4/pi^2)*(atan(w2/h2)-atan(w1/h1))^2

    # ---------------- CIoU (bbox_iou, xywh=False, CIoU=True) ----------------
    w1 = px2 - px1
    h1 = py2 - py1 + EPS
    w2 = gx2 - gx1
    h2 = gy2 - gy1 + EPS
    iw = jnp.maximum(jnp.minimum(px2, gx2) - jnp.maximum(px1, gx1), 0.0)
    ih = jnp.maximum(jnp.minimum(py2, gy2) - jnp.maximum(py1, gy1), 0.0)
    inter = iw * ih
    union = w1 * h1 + w2 * h2 - inter + EPS
    iou = inter / union                                # exact divide (parity)
    cw = jnp.maximum(px2, gx2) - jnp.minimum(px1, gx1)
    ch = jnp.maximum(py2, gy2) - jnp.minimum(py1, gy1)
    c2 = cw * cw + ch * ch + EPS
    rho2 = ((gx1 + gx2 - px1 - px2) ** 2 + (gy1 + gy2 - py1 - py2) ** 2) * 0.25
    alpha = v / (v - iou + (1.0 + EPS))
    ciou = iou - (rho2 / c2 + v * alpha)

    pos = fg > 0.0
    loss_iou = jnp.where(pos, (1.0 - ciou) * w_, 0.0)  # (1, TL)

    # ------------------------------- DFL loss --------------------------------
    if use_dfl:
        r1 = reg_max + 1
        hi = reg_max - 0.01

        # bbox2dist targets in stride units (exact divides, same order as module)
        ax_s, ay_s = ax / stride, ay / stride
        gx1_s, gy1_s = gx1 / stride, gy1 / stride
        gx2_s, gy2_s = gx2 / stride, gy2 / stride
        tgt = [
            jnp.minimum(jnp.maximum(ax_s - gx1_s, 0.0), hi),   # left
            jnp.minimum(jnp.maximum(ay_s - gy1_s, 0.0), hi),   # top
            jnp.minimum(jnp.maximum(gx2_s - ax_s, 0.0), hi),   # right
            jnp.minimum(jnp.maximum(gy2_s - ay_s, 0.0), hi),   # bottom
        ]

        # Hoisted bin-index iota, reused by all four sides.
        binf = jax.lax.broadcasted_iota(jnp.int32, (r1, tl), 0).astype(f32)

        dfl = jnp.zeros_like(loss_iou)                 # (1, TL)
        for k in range(4):                             # static unroll
            xk = regs_ref[k].astype(f32)               # aligned (r1, TL) plane, bf16 -> f32
            mk = jnp.max(xk, axis=0, keepdims=True)
            sk = jnp.sum(jnp.exp(xk - mk), axis=0, keepdims=True)
            lse = mk + jnp.log(sk)                     # (1, TL)
            # Triangular ("hat") weights == {wl at gt_left, wr at gt_right, 0 else}.
            wk = jnp.maximum(1.0 - jnp.abs(tgt[k] - binf), 0.0)
            wx = jnp.sum(wk * xk, axis=0, keepdims=True)
            dfl = dfl + (lse - wx)                     # CE_l*wl + CE_r*wr, summed over sides
        loss_dfl = jnp.where(pos, dfl * 0.25 * w_, 0.0)
    else:
        loss_dfl = jnp.zeros_like(loss_iou)

    out_ref[...] = jnp.concatenate([loss_iou, loss_dfl], axis=0)   # (2, TL) lane-dense


def regression_loss(pred_regs, pred_boxs, anchors, gt_boxs, bbox_weight,
                    fg_masks, strides, *, reg_max, use_dfl,
                    target_tiles=None, max_lane_tile=8192, regs_in_bf16=True):
    f32 = jnp.float32
    bm = pred_boxs.shape[0]
    r1 = reg_max + 1

    if target_tiles is None:
        target_tiles = _default_target_tiles()
    tl, n_tiles, bmp = _choose_tiling(bm, target_tiles, max_lane_tile)

    fg = fg_masks.reshape(bm, 1).astype(f32)
    bw = bbox_weight.reshape(bm, 1).astype(f32)
    pb = pred_boxs.astype(f32)
    gb = gt_boxs.astype(f32)
    st = strides.reshape(bm, 1).astype(f32)

    # TODO(synk): jnp.arctan has no reliable Mosaic lowering; the tiny CIoU
    # aspect-ratio term is computed here (fused into the packing pass) and
    # shipped as one extra 4 B/anchor feat row instead of being faked in-kernel.
    pw = pb[:, 2:3] - pb[:, 0:1]
    ph = pb[:, 3:4] - pb[:, 1:2] + EPS
    gw = gb[:, 2:3] - gb[:, 0:1]
    gh = gb[:, 3:4] - gb[:, 1:2] + EPS
    v = (4.0 / math.pi ** 2) * (jnp.arctan(gw / gh) - jnp.arctan(pw / ph)) ** 2

    # One packed lane-major feature slab: (14, bmp), anchors on lanes.
    feat = jnp.concatenate(
        [pb, gb, anchors.astype(f32), bw, fg, st, v], axis=1).T      # (14, bm)
    feat = jnp.pad(feat, ((0, 0), (0, bmp - bm)))

    operands = [feat]
    in_specs = [pl.BlockSpec((FEAT_ROWS, tl), lambda i: (0, i))]

    if use_dfl:
        rdt = jnp.bfloat16 if regs_in_bf16 else f32
        # Cast BEFORE the transpose so the repack pass moves half the bytes.
        regs = pred_regs.astype(rdt).reshape(bm, 4, r1).transpose(1, 2, 0)  # (4, r1, bm)
        regs = jnp.pad(regs, ((0, 0), (0, 0), (0, bmp - bm)))
        operands.append(regs)
        in_specs.append(pl.BlockSpec((4, r1, tl), lambda i: (0, 0, i)))

    kernel = functools.partial(_regression_loss_kernel,
                               reg_max=reg_max, use_dfl=use_dfl)

    out = pl.pallas_call(
        kernel,
        out_shape=jax.ShapeDtypeStruct((2, bmp), f32),
        grid_spec=pltpu.PrefetchScalarGridSpec(
            num_scalar_prefetch=0,
            grid=(n_tiles,),
            in_specs=in_specs,
            out_specs=pl.BlockSpec((2, tl), lambda i: (0, i)),
        ),
        compiler_params=pltpu.CompilerParams(
            dimension_semantics=("parallel",),
            allow_input_fusion=[True] * len(operands),
        ),
    )(*operands)

    loss_iou = out[0, :bm].reshape(bm, 1)
    loss_dfl = out[1, :bm].reshape(bm, 1)
    return loss_iou, loss_dfl


def regression_loss_ref(pred_regs, pred_boxs, anchors, gt_boxs, bbox_weight,
                        fg, strides, reg_max, use_dfl):
    """Pure-JAX reference (same masked-per-anchor semantics as the module)."""
    b1_x1, b1_y1, b1_x2, b1_y2 = jnp.split(pred_boxs, 4, -1)
    b2_x1, b2_y1, b2_x2, b2_y2 = jnp.split(gt_boxs, 4, -1)
    w1, h1 = b1_x2 - b1_x1, b1_y2 - b1_y1 + EPS
    w2, h2 = b2_x2 - b2_x1, b2_y2 - b2_y1 + EPS
    inter = (jnp.clip(jnp.minimum(b1_x2, b2_x2) - jnp.maximum(b1_x1, b2_x1), 0) *
             jnp.clip(jnp.minimum(b1_y2, b2_y2) - jnp.maximum(b1_y1, b2_y1), 0))
    union = w1 * h1 + w2 * h2 - inter + EPS
    iou = inter / union
    cw = jnp.maximum(b1_x2, b2_x2) - jnp.minimum(b1_x1, b2_x1)
    ch = jnp.maximum(b1_y2, b2_y2) - jnp.minimum(b1_y1, b2_y1)
    c2 = cw ** 2 + ch ** 2 + EPS
    rho2 = ((b2_x1 + b2_x2 - b1_x1 - b1_x2) ** 2 +
            (b2_y1 + b2_y2 - b1_y1 - b1_y2) ** 2) / 4.0
    v = (4.0 / math.pi ** 2) * (jnp.arctan(w2 / h2) - jnp.arctan(w1 / h1)) ** 2
    alpha = v / (v - iou + 1.0 + EPS)
    ciou = iou - (rho2 / c2 + v * alpha)
    loss_iou = jnp.where(fg > 0, (1.0 - ciou) * bbox_weight, 0.0)

    if not use_dfl:
        return loss_iou, jnp.zeros_like(loss_iou)

    r1 = reg_max + 1
    gt_s = gt_boxs / strides
    anc_s = anchors / strides
    ltrb = jnp.clip(jnp.concatenate([anc_s - gt_s[:, :2], gt_s[:, 2:] - anc_s], -1),
                    0.0, reg_max - 0.01)
    logp = jax.nn.log_softmax(pred_regs.reshape(-1, 4, r1), -1)
    gl = ltrb.astype(jnp.int32)
    gr = gl + 1
    wl = gr.astype(jnp.float32) - ltrb
    wr = 1.0 - wl
    ll = -jnp.take_along_axis(logp, gl[..., None], -1)[..., 0]
    lr = -jnp.take_along_axis(logp, gr[..., None], -1)[..., 0]
    loss_dfl = jnp.mean(ll * wl + lr * wr, -1, keepdims=True) * bbox_weight
    loss_dfl = jnp.where(fg > 0, loss_dfl, 0.0)
    return loss_iou, loss_dfl


if __name__ == "__main__":
    reg_max = 16
    use_dfl = True
    BM = 2048                        # anchors (small demo shape)

    key = jax.random.PRNGKey(0)
    k1, k2, k3, k4, k5, k6, k7, k8 = jax.random.split(key, 8)

    xy1 = jax.random.uniform(k1, (BM, 2), minval=0.0, maxval=10.0)
    wh = jax.random.uniform(k2, (BM, 2), minval=2.0, maxval=8.0)
    gt_boxs = jnp.concatenate([xy1, xy1 + wh], axis=-1)

    pxy1 = xy1 + jax.random.uniform(k3, (BM, 2), minval=-1.0, maxval=1.0)
    pwh = wh + jax.random.uniform(k4, (BM, 2), minval=-0.5, maxval=0.5)
    pred_boxs = jnp.concatenate([pxy1, pxy1 + pwh], axis=-1)

    anchors = xy1 + 0.5 * wh + jax.random.uniform(k5, (BM, 2), minval=-1.0, maxval=1.0)
    pred_regs = jax.random.normal(k6, (BM, 4 * (reg_max + 1)), dtype=jnp.float32)
    bbox_weight = jax.random.uniform(k7, (BM, 1), minval=0.5, maxval=2.0)
    fg_masks = jax.random.bernoulli(k8, 0.5, (BM,))
    strides = jnp.full((BM, 1), 8.0, dtype=jnp.float32)

    loss_iou, loss_dfl = regression_loss(
        pred_regs, pred_boxs, anchors, gt_boxs, bbox_weight, fg_masks, strides,
        reg_max=reg_max, use_dfl=use_dfl)
    jax.block_until_ready((loss_iou, loss_dfl))

    # Sanity check against the pure-JAX reference.  pred_regs are carried in
    # bf16 in HBM (bandwidth), so the reference sees the same bf16-quantized
    # logits; all other math is f32 / exact divides -> tight tolerance.
    fg_f = fg_masks.astype(jnp.float32).reshape(BM, 1)
    regs_q = pred_regs.astype(jnp.bfloat16).astype(jnp.float32)
    ref_iou, ref_dfl = regression_loss_ref(
        regs_q, pred_boxs, anchors, gt_boxs, bbox_weight, fg_f, strides,
        reg_max, use_dfl)
    np.testing.assert_allclose(np.asarray(loss_iou), np.asarray(ref_iou),
                               rtol=1e-3, atol=1e-3)
    np.testing.assert_allclose(np.asarray(loss_dfl), np.asarray(ref_dfl),
                               rtol=1e-3, atol=1e-3)

    # Exercise the use_dfl=False path too (single operand, DFL skipped).
    iou2, dfl2 = regression_loss(
        pred_regs, pred_boxs, anchors, gt_boxs, bbox_weight, fg_masks, strides,
        reg_max=reg_max, use_dfl=False)
    jax.block_until_ready((iou2, dfl2))
    np.testing.assert_allclose(np.asarray(iou2), np.asarray(ref_iou),
                               rtol=1e-3, atol=1e-3)
    assert float(jnp.max(jnp.abs(dfl2))) == 0.0

    print("KERNEL_OK")
</pallas_src>

<mosaic_0001>
module attributes {stable_mosaic.version = 11 : i64} {
  func.func @_regression_loss_kernel(%arg0: i32, %arg1: memref<14x2048xf32, #tpu.memory_space<vmem>>, %arg2: memref<4x17x2048xbf16, #tpu.memory_space<vmem>>, %arg3: memref<2x2048xf32, #tpu.memory_space<vmem>>) attributes {dimension_semantics = [#tpu.dimension_semantics<parallel>], iteration_bounds = array<i64: 1>, scalar_prefetch = 0 : i64, scratch_operands = 0 : i64, tpu.core_type = #tpu.core_type<tc>, window_params = [{transform_indices = @transform_0, window_bounds = array<i64: 14, 2048>}, {transform_indices = @transform_1, window_bounds = array<i64: 4, 17, 2048>}, {transform_indices = @transform_2, window_bounds = array<i64: 2, 2048>}]} {
    %c0 = arith.constant 0 : index
    %c0_0 = arith.constant 0 : index
    %0 = vector.load %arg1[%c0, %c0_0] : memref<14x2048xf32, #tpu.memory_space<vmem>>, vector<14x2048xf32>
    %1 = vector.extract_strided_slice %0 {offsets = [0, 0], sizes = [1, 2048], strides = [1, 1]} : vector<14x2048xf32> to vector<1x2048xf32>
    %2 = vector.extract_strided_slice %0 {offsets = [1, 0], sizes = [1, 2048], strides = [1, 1]} : vector<14x2048xf32> to vector<1x2048xf32>
    %3 = vector.extract_strided_slice %0 {offsets = [2, 0], sizes = [1, 2048], strides = [1, 1]} : vector<14x2048xf32> to vector<1x2048xf32>
    %4 = vector.extract_strided_slice %0 {offsets = [3, 0], sizes = [1, 2048], strides = [1, 1]} : vector<14x2048xf32> to vector<1x2048xf32>
    %5 = vector.extract_strided_slice %0 {offsets = [4, 0], sizes = [1, 2048], strides = [1, 1]} : vector<14x2048xf32> to vector<1x2048xf32>
    %6 = vector.extract_strided_slice %0 {offsets = [5, 0], sizes = [1, 2048], strides = [1, 1]} : vector<14x2048xf32> to vector<1x2048xf32>
    %7 = vector.extract_strided_slice %0 {offsets = [6, 0], sizes = [1, 2048], strides = [1, 1]} : vector<14x2048xf32> to vector<1x2048xf32>
    %8 = vector.extract_strided_slice %0 {offsets = [7, 0], sizes = [1, 2048], strides = [1, 1]} : vector<14x2048xf32> to vector<1x2048xf32>
    %9 = vector.extract_strided_slice %0 {offsets = [8, 0], sizes = [1, 2048], strides = [1, 1]} : vector<14x2048xf32> to vector<1x2048xf32>
    %10 = vector.extract_strided_slice %0 {offsets = [9, 0], sizes = [1, 2048], strides = [1, 1]} : vector<14x2048xf32> to vector<1x2048xf32>
    %11 = vector.extract_strided_slice %0 {offsets = [10, 0], sizes = [1, 2048], strides = [1, 1]} : vector<14x2048xf32> to vector<1x2048xf32>
    %12 = vector.extract_strided_slice %0 {offsets = [11, 0], sizes = [1, 2048], strides = [1, 1]} : vector<14x2048xf32> to vector<1x2048xf32>
    %13 = vector.extract_strided_slice %0 {offsets = [12, 0], sizes = [1, 2048], strides = [1, 1]} : vector<14x2048xf32> to vector<1x2048xf32>
    %14 = vector.extract_strided_slice %0 {offsets = [13, 0], sizes = [1, 2048], strides = [1, 1]} : vector<14x2048xf32> to vector<1x2048xf32>
    %15 = arith.subf %3, %1 : vector<1x2048xf32>
    %16 = arith.subf %4, %2 : vector<1x2048xf32>
    %cst = arith.constant 1.000000e-07 : f32
    %17 = vector.broadcast %cst : f32 to vector<1x2048xf32>
    %18 = arith.addf %16, %17 : vector<1x2048xf32>
    %19 = arith.subf %7, %5 : vector<1x2048xf32>
    %20 = arith.subf %8, %6 : vector<1x2048xf32>
    %cst_1 = arith.constant 1.000000e-07 : f32
    %21 = vector.broadcast %cst_1 : f32 to vector<1x2048xf32>
    %22 = arith.addf %20, %21 : vector<1x2048xf32>
    %23 = arith.minimumf %3, %7 : vector<1x2048xf32>
    %24 = arith.maximumf %1, %5 : vector<1x2048xf32>
    %25 = arith.subf %23, %24 : vector<1x2048xf32>
    %cst_2 = arith.constant 0.000000e+00 : f32
    %26 = vector.broadcast %cst_2 : f32 to vector<1x2048xf32>
    %27 = arith.maximumf %25, %26 : vector<1x2048xf32>
    %28 = arith.minimumf %4, %8 : vector<1x2048xf32>
    %29 = arith.maximumf %2, %6 : vector<1x2048xf32>
    %30 = arith.subf %28, %29 : vector<1x2048xf32>
    %cst_3 = arith.constant 0.000000e+00 : f32
    %31 = vector.broadcast %cst_3 : f32 to vector<1x2048xf32>
    %32 = arith.maximumf %30, %31 : vector<1x2048xf32>
    %33 = arith.mulf %27, %32 : vector<1x2048xf32>
    %34 = arith.mulf %15, %18 : vector<1x2048xf32>
    %35 = arith.mulf %19, %22 : vector<1x2048xf32>
    %36 = arith.addf %34, %35 : vector<1x2048xf32>
    %37 = arith.subf %36, %33 : vector<1x2048xf32>
    %cst_4 = arith.constant 1.000000e-07 : f32
    %38 = vector.broadcast %cst_4 : f32 to vector<1x2048xf32>
    %39 = arith.addf %37, %38 : vector<1x2048xf32>
    %40 = arith.divf %33, %39 : vector<1x2048xf32>
    %41 = arith.maximumf %3, %7 : vector<1x2048xf32>
    %42 = arith.minimumf %1, %5 : vector<1x2048xf32>
    %43 = arith.subf %41, %42 : vector<1x2048xf32>
    %44 = arith.maximumf %4, %8 : vector<1x2048xf32>
    %45 = arith.minimumf %2, %6 : vector<1x2048xf32>
    %46 = arith.subf %44, %45 : vector<1x2048xf32>
    %47 = arith.mulf %43, %43 : vector<1x2048xf32>
    %48 = arith.mulf %46, %46 : vector<1x2048xf32>
    %49 = arith.addf %47, %48 : vector<1x2048xf32>
    %cst_5 = arith.constant 1.000000e-07 : f32
    %50 = vector.broadcast %cst_5 : f32 to vector<1x2048xf32>
    %51 = arith.addf %49, %50 : vector<1x2048xf32>
    %52 = arith.addf %5, %7 : vector<1x2048xf32>
    %53 = arith.subf %52, %1 : vector<1x2048xf32>
    %54 = arith.subf %53, %3 : vector<1x2048xf32>
    %55 = arith.mulf %54, %54 : vector<1x2048xf32>
    %56 = arith.addf %6, %8 : vector<1x2048xf32>
    %57 = arith.subf %56, %2 : vector<1x2048xf32>
    %58 = arith.subf %57, %4 : vector<1x2048xf32>
    %59 = arith.mulf %58, %58 : vector<1x2048xf32>
    %60 = arith.addf %55, %59 : vector<1x2048xf32>
    %cst_6 = arith.constant 2.500000e-01 : f32
    %61 = vector.broadcast %cst_6 : f32 to vector<1x2048xf32>
    %62 = arith.mulf %60, %61 : vector<1x2048xf32>
    %63 = arith.subf %14, %40 : vector<1x2048xf32>
    %cst_7 = arith.constant 1.00000012 : f32
    %64 = vector.broadcast %cst_7 : f32 to vector<1x2048xf32>
    %65 = arith.addf %63, %64 : vector<1x2048xf32>
    %66 = arith.divf %14, %65 : vector<1x2048xf32>
    %67 = arith.divf %62, %51 : vector<1x2048xf32>
    %68 = arith.mulf %14, %66 : vector<1x2048xf32>
    %69 = arith.addf %67, %68 : vector<1x2048xf32>
    %70 = arith.subf %40, %69 : vector<1x2048xf32>
    %cst_8 = arith.constant 0.000000e+00 : f32
    %71 = vector.broadcast %cst_8 : f32 to vector<1x2048xf32>
    %72 = arith.cmpf ogt, %12, %71 : vector<1x2048xf32>
    %cst_9 = arith.constant 1.000000e+00 : f32
    %73 = vector.broadcast %cst_9 : f32 to vector<1x2048xf32>
    %74 = arith.subf %73, %70 : vector<1x2048xf32>
    %75 = arith.mulf %74, %11 : vector<1x2048xf32>
    %cst_10 = arith.constant 0.000000e+00 : f32
    %76 = vector.broadcast %cst_10 : f32 to vector<1x2048xf32>
    %77 = arith.select %72, %75, %76 : vector<1x2048xi1>, vector<1x2048xf32>
    %78 = arith.divf %9, %13 : vector<1x2048xf32>
    %79 = arith.divf %10, %13 : vector<1x2048xf32>
    %80 = arith.divf %5, %13 : vector<1x2048xf32>
    %81 = arith.divf %6, %13 : vector<1x2048xf32>
    %82 = arith.divf %7, %13 : vector<1x2048xf32>
    %83 = arith.divf %8, %13 : vector<1x2048xf32>
    %84 = arith.subf %78, %80 : vector<1x2048xf32>
    %cst_11 = arith.constant 0.000000e+00 : f32
    %85 = vector.broadcast %cst_11 : f32 to vector<1x2048xf32>
    %86 = arith.maximumf %84, %85 : vector<1x2048xf32>
    %cst_12 = arith.constant 1.599000e+01 : f32
    %87 = vector.broadcast %cst_12 : f32 to vector<1x2048xf32>
    %88 = arith.minimumf %86, %87 : vector<1x2048xf32>
    %89 = arith.subf %79, %81 : vector<1x2048xf32>
    %cst_13 = arith.constant 0.000000e+00 : f32
    %90 = vector.broadcast %cst_13 : f32 to vector<1x2048xf32>
    %91 = arith.maximumf %89, %90 : vector<1x2048xf32>
    %cst_14 = arith.constant 1.599000e+01 : f32
    %92 = vector.broadcast %cst_14 : f32 to vector<1x2048xf32>
    %93 = arith.minimumf %91, %92 : vector<1x2048xf32>
    %94 = arith.subf %82, %78 : vector<1x2048xf32>
    %cst_15 = arith.constant 0.000000e+00 : f32
    %95 = vector.broadcast %cst_15 : f32 to vector<1x2048xf32>
    %96 = arith.maximumf %94, %95 : vector<1x2048xf32>
    %cst_16 = arith.constant 1.599000e+01 : f32
    %97 = vector.broadcast %cst_16 : f32 to vector<1x2048xf32>
    %98 = arith.minimumf %96, %97 : vector<1x2048xf32>
    %99 = arith.subf %83, %79 : vector<1x2048xf32>
    %cst_17 = arith.constant 0.000000e+00 : f32
    %100 = vector.broadcast %cst_17 : f32 to vector<1x2048xf32>
    %101 = arith.maximumf %99, %100 : vector<1x2048xf32>
    %cst_18 = arith.constant 1.599000e+01 : f32
    %102 = vector.broadcast %cst_18 : f32 to vector<1x2048xf32>
    %103 = arith.minimumf %101, %102 : vector<1x2048xf32>
    %104 = tpu.iota {dimensions = array<i32: 0>} : vector<17x2048xi32>
    %105 = arith.sitofp %104 : vector<17x2048xi32> to vector<17x2048xf32>
    %cst_19 = arith.constant 0.000000e+00 : f32
    %106 = vector.broadcast %cst_19 : f32 to vector<1x2048xf32>
    %c0_20 = arith.constant 0 : index
    %c0_21 = arith.constant 0 : index
    %c0_22 = arith.constant 0 : index
    %107 = vector.load %arg2[%c0_20, %c0_21, %c0_22] : memref<4x17x2048xbf16, #tpu.memory_space<vmem>>, vector<1x17x2048xbf16>
    %108 = vector.shape_cast %107 : vector<1x17x2048xbf16> to vector<17x2048xbf16>
    %109 = arith.extf %108 : vector<17x2048xbf16> to vector<17x2048xf32>
    %cst_23 = arith.constant dense<0xFF800000> : vector<2048xf32>
    %110 = vector.multi_reduction <maximumf>, %109, %cst_23 [0] : vector<17x2048xf32> to vector<2048xf32>
    %111 = vector.shape_cast %110 : vector<2048xf32> to vector<1x2048xf32>
    %112 = vector.broadcast %111 : vector<1x2048xf32> to vector<17x2048xf32>
    %113 = arith.subf %109, %112 : vector<17x2048xf32>
    %114 = math.exp %113 : vector<17x2048xf32>
    %cst_24 = arith.constant dense<0.000000e+00> : vector<2048xf32>
    %115 = vector.multi_reduction <add>, %114, %cst_24 [0] : vector<17x2048xf32> to vector<2048xf32>
    %116 = vector.shape_cast %115 : vector<2048xf32> to vector<1x2048xf32>
    %117 = math.log %116 : vector<1x2048xf32>
    %118 = arith.addf %111, %117 : vector<1x2048xf32>
    %119 = vector.broadcast %88 : vector<1x2048xf32> to vector<17x2048xf32>
    %120 = arith.subf %119, %105 : vector<17x2048xf32>
    %121 = math.absf %120 : vector<17x2048xf32>
    %cst_25 = arith.constant 1.000000e+00 : f32
    %122 = vector.broadcast %cst_25 : f32 to vector<17x2048xf32>
    %123 = arith.subf %122, %121 : vector<17x2048xf32>
    %cst_26 = arith.constant 0.000000e+00 : f32
    %124 = vector.broadcast %cst_26 : f32 to vector<17x2048xf32>
    %125 = arith.maximumf %123, %124 : vector<17x2048xf32>
    %126 = arith.mulf %125, %109 : vector<17x2048xf32>
    %cst_27 = arith.constant dense<0.000000e+00> : vector<2048xf32>
    %127 = vector.multi_reduction <add>, %126, %cst_27 [0] : vector<17x2048xf32> to vector<2048xf32>
    %128 = vector.shape_cast %127 : vector<2048xf32> to vector<1x2048xf32>
    %129 = arith.subf %118, %128 : vector<1x2048xf32>
    %130 = arith.addf %106, %129 : vector<1x2048xf32>
    %c1 = arith.constant 1 : index
    %c0_28 = arith.constant 0 : index
    %c0_29 = arith.constant 0 : index
    %131 = vector.load %arg2[%c1, %c0_28, %c0_29] : memref<4x17x2048xbf16, #tpu.memory_space<vmem>>, vector<1x17x2048xbf16>
    %132 = vector.shape_cast %131 : vector<1x17x2048xbf16> to vector<17x2048xbf16>
    %133 = arith.extf %132 : vector<17x2048xbf16> to vector<17x2048xf32>
    %cst_30 = arith.constant dense<0xFF800000> : vector<2048xf32>
    %134 = vector.multi_reduction <maximumf>, %133, %cst_30 [0] : vector<17x2048xf32> to vector<2048xf32>
    %135 = vector.shape_cast %134 : vector<2048xf32> to vector<1x2048xf32>
    %136 = vector.broadcast %135 : vector<1x2048xf32> to vector<17x2048xf32>
    %137 = arith.subf %133, %136 : vector<17x2048xf32>
    %138 = math.exp %137 : vector<17x2048xf32>
    %cst_31 = arith.constant dense<0.000000e+00> : vector<2048xf32>
    %139 = vector.multi_reduction <add>, %138, %cst_31 [0] : vector<17x2048xf32> to vector<2048xf32>
    %140 = vector.shape_cast %139 : vector<2048xf32> to vector<1x2048xf32>
    %141 = math.log %140 : vector<1x2048xf32>
    %142 = arith.addf %135, %141 : vector<1x2048xf32>
    %143 = vector.broadcast %93 : vector<1x2048xf32> to vector<17x2048xf32>
    %144 = arith.subf %143, %105 : vector<17x2048xf32>
    %145 = math.absf %144 : vector<17x2048xf32>
    %cst_32 = arith.constant 1.000000e+00 : f32
    %146 = vector.broadcast %cst_32 : f32 to vector<17x2048xf32>
    %147 = arith.subf %146, %145 : vector<17x2048xf32>
    %cst_33 = arith.constant 0.000000e+00 : f32
    %148 = vector.broadcast %cst_33 : f32 to vector<17x2048xf32>
    %149 = arith.maximumf %147, %148 : vector<17x2048xf32>
    %150 = arith.mulf %149, %133 : vector<17x2048xf32>
    %cst_34 = arith.constant dense<0.000000e+00> : vector<2048xf32>
    %151 = vector.multi_reduction <add>, %150, %cst_34 [0] : vector<17x2048xf32> to vector<2048xf32>
    %152 = vector.shape_cast %151 : vector<2048xf32> to vector<1x2048xf32>
    %153 = arith.subf %142, %152 : vector<1x2048xf32>
    %154 = arith.addf %130, %153 : vector<1x2048xf32>
    %c2 = arith.constant 2 : index
    %c0_35 = arith.constant 0 : index
    %c0_36 = arith.constant 0 : index
    %155 = vector.load %arg2[%c2, %c0_35, %c0_36] : memref<4x17x2048xbf16, #tpu.memory_space<vmem>>, vector<1x17x2048xbf16>
    %156 = vector.shape_cast %155 : vector<1x17x2048xbf16> to vector<17x2048xbf16>
    %157 = arith.extf %156 : vector<17x2048xbf16> to vector<17x2048xf32>
    %cst_37 = arith.constant dense<0xFF800000> : vector<2048xf32>
    %158 = vector.multi_reduction <maximumf>, %157, %cst_37 [0] : vector<17x2048xf32> to vector<2048xf32>
    %159 = vector.shape_cast %158 : vector<2048xf32> to vector<1x2048xf32>
    %160 = vector.broadcast %159 : vector<1x2048xf32> to vector<17x2048xf32>
    %161 = arith.subf %157, %160 : vector<17x2048xf32>
    %162 = math.exp %161 : vector<17x2048xf32>
    %cst_38 = arith.constant dense<0.000000e+00> : vector<2048xf32>
    %163 = vector.multi_reduction <add>, %162, %cst_38 [0] : vector<17x2048xf32> to vector<2048xf32>
    %164 = vector.shape_cast %163 : vector<2048xf32> to vector<1x2048xf32>
    %165 = math.log %164 : vector<1x2048xf32>
    %166 = arith.addf %159, %165 : vector<1x2048xf32>
    %167 = vector.broadcast %98 : vector<1x2048xf32> to vector<17x2048xf32>
    %168 = arith.subf %167, %105 : vector<17x2048xf32>
    %169 = math.absf %168 : vector<17x2048xf32>
    %cst_39 = arith.constant 1.000000e+00 : f32
    %170 = vector.broadcast %cst_39 : f32 to vector<17x2048xf32>
    %171 = arith.subf %170, %169 : vector<17x2048xf32>
    %cst_40 = arith.constant 0.000000e+00 : f32
    %172 = vector.broadcast %cst_40 : f32 to vector<17x2048xf32>
    %173 = arith.maximumf %171, %172 : vector<17x2048xf32>
    %174 = arith.mulf %173, %157 : vector<17x2048xf32>
    %cst_41 = arith.constant dense<0.000000e+00> : vector<2048xf32>
    %175 = vector.multi_reduction <add>, %174, %cst_41 [0] : vector<17x2048xf32> to vector<2048xf32>
    %176 = vector.shape_cast %175 : vector<2048xf32> to vector<1x2048xf32>
    %177 = arith.subf %166, %176 : vector<1x2048xf32>
    %178 = arith.addf %154, %177 : vector<1x2048xf32>
    %c3 = arith.constant 3 : index
    %c0_42 = arith.constant 0 : index
    %c0_43 = arith.constant 0 : index
    %179 = vector.load %arg2[%c3, %c0_42, %c0_43] : memref<4x17x2048xbf16, #tpu.memory_space<vmem>>, vector<1x17x2048xbf16>
    %180 = vector.shape_cast %179 : vector<1x17x2048xbf16> to vector<17x2048xbf16>
    %181 = arith.extf %180 : vector<17x2048xbf16> to vector<17x2048xf32>
    %cst_44 = arith.constant dense<0xFF800000> : vector<2048xf32>
    %182 = vector.multi_reduction <maximumf>, %181, %cst_44 [0] : vector<17x2048xf32> to vector<2048xf32>
    %183 = vector.shape_cast %182 : vector<2048xf32> to vector<1x2048xf32>
    %184 = vector.broadcast %183 : vector<1x2048xf32> to vector<17x2048xf32>
    %185 = arith.subf %181, %184 : vector<17x2048xf32>
    %186 = math.exp %185 : vector<17x2048xf32>
    %cst_45 = arith.constant dense<0.000000e+00> : vector<2048xf32>
    %187 = vector.multi_reduction <add>, %186, %cst_45 [0] : vector<17x2048xf32> to vector<2048xf32>
    %188 = vector.shape_cast %187 : vector<2048xf32> to vector<1x2048xf32>
    %189 = math.log %188 : vector<1x2048xf32>
    %190 = arith.addf %183, %189 : vector<1x2048xf32>
    %191 = vector.broadcast %103 : vector<1x2048xf32> to vector<17x2048xf32>
    %192 = arith.subf %191, %105 : vector<17x2048xf32>
    %193 = math.absf %192 : vector<17x2048xf32>
    %cst_46 = arith.constant 1.000000e+00 : f32
    %194 = vector.broadcast %cst_46 : f32 to vector<17x2048xf32>
    %195 = arith.subf %194, %193 : vector<17x2048xf32>
    %cst_47 = arith.constant 0.000000e+00 : f32
    %196 = vector.broadcast %cst_47 : f32 to vector<17x2048xf32>
    %197 = arith.maximumf %195, %196 : vector<17x2048xf32>
    %198 = arith.mulf %197, %181 : vector<17x2048xf32>
    %cst_48 = arith.constant dense<0.000000e+00> : vector<2048xf32>
    %199 = vector.multi_reduction <add>, %198, %cst_48 [0] : vector<17x2048xf32> to vector<2048xf32>
    %200 = vector.shape_cast %199 : vector<2048xf32> to vector<1x2048xf32>
    %201 = arith.subf %190, %200 : vector<1x2048xf32>
    %202 = arith.addf %178, %201 : vector<1x2048xf32>
    %cst_49 = arith.constant 2.500000e-01 : f32
    %203 = vector.broadcast %cst_49 : f32 to vector<1x2048xf32>
    %204 = arith.mulf %202, %203 : vector<1x2048xf32>
    %205 = arith.mulf %204, %11 : vector<1x2048xf32>
    %cst_50 = arith.constant 0.000000e+00 : f32
    %206 = vector.broadcast %cst_50 : f32 to vector<1x2048xf32>
    %207 = arith.select %72, %205, %206 : vector<1x2048xi1>, vector<1x2048xf32>
    %208 = tpu.concatenate %77, %207 in 0 : vector<1x2048xf32>, vector<1x2048xf32> -> vector<2x2048xf32>
    %c0_51 = arith.constant 0 : index
    %c0_52 = arith.constant 0 : index
    %209 = vector.load %arg3[%c0_51, %c0_52] : memref<2x2048xf32, #tpu.memory_space<vmem>>, vector<2x2048xf32>
    tpu.vector_store %arg3[%c0_51, %c0_52], %208 {strides = array<i32>} : memref<2x2048xf32, #tpu.memory_space<vmem>>, vector<2x2048xf32>,
    return
  }
  func.func @transform_0(%arg0: i32) -> (i32, i32) {
    %c0_i32 = arith.constant 0 : i32
    %c0_i32_0 = arith.constant 0 : i32
    return %c0_i32, %arg0 : i32, i32
  }
  func.func @transform_1(%arg0: i32) -> (i32, i32, i32) {
    %c0_i32 = arith.constant 0 : i32
    %c0_i32_0 = arith.constant 0 : i32
    %c0_i32_1 = arith.constant 0 : i32
    return %c0_i32, %c0_i32_0, %arg0 : i32, i32, i32
  }
  func.func @transform_2(%arg0: i32) -> (i32, i32) {
    %c0_i32 = arith.constant 0 : i32
    %c0_i32_0 = arith.constant 0 : i32
    return %c0_i32, %arg0 : i32, i32
  }
}

</mosaic_0001>

<llo_original>
// kernel: tpu_custom_call.1
$region0: #{tpu_custom_call.1}
  #allocation0 [shape = 'u32[]', space=smem, size = 0x4, offset = 0x4, fixed_abs, tag = 'smem constant byte address 0x4 - core index']
  #allocation1 [shape = 'u32[72,128]{1,0:T(1,128)}', space=vmem, size = 0x9000, scoped, tag = 'internal scratch']
  %s0 = inlined_call_operand.vmem [shape: f32[14,2048], index: 0, kind: input, shape index: {}]
  %s1 = inlined_call_operand.vmem [shape: bf16[4,17,2048], index: 1, kind: input, shape index: {}]
  %s2 = inlined_call_operand.hbm [shape: f32[2,2048], index: 2, kind: output, shape index: {}]
  %s3 = sld [smem:[#allocation0]]
  $region18: #{tpu_custom_call.1} parent=0
    _
  %s5 = ssub.s32 1, %s3
  %s6 = scalar_select 0, %s5, %s3
  $region1: #{tpu_custom_call.1} parent=0
    #allocation2 [shape = 'u8[16384]{0}', space=vmem, size = 0x4000, scoped, tag = 'output window, operand 0, single buffered']
    #allocation3 [shape = 's32[1]{0}', space=sflag, size = 0x4, scoped, tag = 'scoped memory for tpu_custom_call.1']
    %7 = vsyncpa [#allocation3], 0
    // Predicated region
    $region2: #{tpu_custom_call.1} parent=1 // pred_check
      _
    $region3: #{tpu_custom_call.1} parent=1 // pred_check_branch
      %9 = sbr.rel (0) target = $region5
    $region4: #{tpu_custom_call.1} parent=1 // pred_region
      _
    $region5: #{tpu_custom_call.1} parent=1 // pred_fallthru
      _
    // Predicated region
    $region6: #{tpu_custom_call.1} parent=1 // pred_check
      _
    $region7: #{tpu_custom_call.1} parent=1 // pred_check_branch
      %11 = sbr.rel (0) target = $region9
    $region8: #{tpu_custom_call.1} parent=1 // pred_region
      _
    $region9: #{tpu_custom_call.1} parent=1 // pred_fallthru
      _
    %v12 = vld [vmem:[%s0] sm:$0xff]
    %v13 = vld [vmem:[%s0 + $0x8] sm:$0xff]
    %v14 = vld [vmem:[%s0 + $0x10] sm:$0xff]
    %v15 = vld [vmem:[%s0 + $0x18] sm:$0xff]
    %v16 = vld [vmem:[%s0 + $0x20] sm:$0xff]
    %v17 = vld [vmem:[%s0 + $0x28] sm:$0xff]
    %v18 = vld [vmem:[%s0 + $0x30] sm:$0xff]
    %v19 = vld [vmem:[%s0 + $0x38] sm:$0xff]
    %v20 = vld [vmem:[%s0 + $0x40] sm:$0xff]
    %v21 = vld [vmem:[%s0 + $0x48] sm:$0xff]
    %v22 = vld [vmem:[%s0 + $0x50] sm:$0xff]
    %v23 = vld [vmem:[%s0 + $0x58] sm:$0xff]
    %v24 = vld [vmem:[%s0 + $0x60] sm:$0xff]
    %v25 = vld [vmem:[%s0 + $0x68] sm:$0xff]
    %v26 = vld [vmem:[%s0 + $0x70] sm:$0xff]
    %v27 = vld [vmem:[%s0 + $0x78] sm:$0xff]
    %v28 = vld [vmem:[%s0 + $0x80] sm:$0x3f]
    %v29 = vld [vmem:[%s0 + $0x88] sm:$0x3f]
    %v30 = vld [vmem:[%s0 + $0x90] sm:$0x3f]
    %v31 = vld [vmem:[%s0 + $0x98] sm:$0x3f]
    %v32 = vld [vmem:[%s0 + $0xa0] sm:$0x3f]
    %v33 = vld [vmem:[%s0 + $0xa8] sm:$0x3f]
    %v34 = vld [vmem:[%s0 + $0xb0] sm:$0x3f]
    %v35 = vld [vmem:[%s0 + $0xb8] sm:$0x3f]
    %v36 = vld [vmem:[%s0 + $0xc0] sm:$0x3f]
    %v37 = vld [vmem:[%s0 + $0xc8] sm:$0x3f]
    %v38 = vld [vmem:[%s0 + $0xd0] sm:$0x3f]
    %v39 = vld [vmem:[%s0 + $0xd8] sm:$0x3f]
    %v40 = vld [vmem:[%s0 + $0xe0] sm:$0x3f]
    %v41 = vld [vmem:[%s0 + $0xe8] sm:$0x3f]
    %v42 = vld [vmem:[%s0 + $0xf0] sm:$0x3f]
    %v43 = vld [vmem:[%s0 + $0xf8] sm:$0x3f]
    %v60 = vrot.slane %v12, 6
    %v61 = vrot.slane %v13, 6
    %v62 = vrot.slane %v14, 6
    %v63 = vrot.slane %v15, 6
    %v64 = vrot.slane %v16, 6
    %v65 = vrot.slane %v17, 6
    %v66 = vrot.slane %v18, 6
    %v67 = vrot.slane %v19, 6
    %v68 = vrot.slane %v20, 6
    %v69 = vrot.slane %v21, 6
    %v70 = vrot.slane %v22, 6
    %v71 = vrot.slane %v23, 6
    %v72 = vrot.slane %v24, 6
    %v73 = vrot.slane %v25, 6
    %v74 = vrot.slane %v26, 6
    %v75 = vrot.slane %v27, 6
    %v92 = vsub.f32 %v12, %v60
    %v93 = vsub.f32 %v13, %v61
    %v94 = vsub.f32 %v14, %v62
    %v95 = vsub.f32 %v15, %v63
    %v96 = vsub.f32 %v16, %v64
    %v97 = vsub.f32 %v17, %v65
    %v98 = vsub.f32 %v18, %v66
    %v99 = vsub.f32 %v19, %v67
    %v100 = vsub.f32 %v20, %v68
    %v101 = vsub.f32 %v21, %v69
    %v102 = vsub.f32 %v22, %v70
    %v103 = vsub.f32 %v23, %v71
    %v104 = vsub.f32 %v24, %v72
    %v105 = vsub.f32 %v25, %v73
    %v106 = vsub.f32 %v26, %v74
    %v107 = vsub.f32 %v27, %v75
    %v108 = vadd.f32 %v92, 1e-07
    %v109 = vadd.f32 %v93, 1e-07
    %v110 = vadd.f32 %v94, 1e-07
    %v111 = vadd.f32 %v95, 1e-07
    %v112 = vadd.f32 %v96, 1e-07
    %v113 = vadd.f32 %v97, 1e-07
    %v114 = vadd.f32 %v98, 1e-07
    %v115 = vadd.f32 %v99, 1e-07
    %v116 = vadd.f32 %v100, 1e-07
    %v117 = vadd.f32 %v101, 1e-07
    %v118 = vadd.f32 %v102, 1e-07
    %v119 = vadd.f32 %v103, 1e-07
    %v120 = vadd.f32 %v104, 1e-07
    %v121 = vadd.f32 %v105, 1e-07
    %v122 = vadd.f32 %v106, 1e-07
    %v123 = vadd.f32 %v107, 1e-07
    %v124 = vrot.slane %v12, 4
    %v125 = vrot.slane %v13, 4
    %v126 = vrot.slane %v14, 4
    %v127 = vrot.slane %v15, 4
    %v128 = vrot.slane %v16, 4
    %v129 = vrot.slane %v17, 4
    %v130 = vrot.slane %v18, 4
    %v131 = vrot.slane %v19, 4
    %v132 = vrot.slane %v20, 4
    %v133 = vrot.slane %v21, 4
    %v134 = vrot.slane %v22, 4
    %v135 = vrot.slane %v23, 4
    %v136 = vrot.slane %v24, 4
    %v137 = vrot.slane %v25, 4
    %v138 = vrot.slane %v26, 4
    %v139 = vrot.slane %v27, 4
    %v156 = vmin.f32 %v12, %v124
    %v157 = vmin.f32 %v13, %v125
    %v158 = vmin.f32 %v14, %v126
    %v159 = vmin.f32 %v15, %v127
    %v160 = vmin.f32 %v16, %v128
    %v161 = vmin.f32 %v17, %v129
    %v162 = vmin.f32 %v18, %v130
    %v163 = vmin.f32 %v19, %v131
    %v164 = vmin.f32 %v20, %v132
    %v165 = vmin.f32 %v21, %v133
    %v166 = vmin.f32 %v22, %v134
    %v167 = vmin.f32 %v23, %v135
    %v168 = vmin.f32 %v24, %v136
    %v169 = vmin.f32 %v25, %v137
    %v170 = vmin.f32 %v26, %v138
    %v171 = vmin.f32 %v27, %v139
    %v172 = vmax.f32 %v12, %v124
    %v173 = vmax.f32 %v13, %v125
    %v174 = vmax.f32 %v14, %v126
    %v175 = vmax.f32 %v15, %v127
    %v176 = vmax.f32 %v16, %v128
    %v177 = vmax.f32 %v17, %v129
    %v178 = vmax.f32 %v18, %v130
    %v179 = vmax.f32 %v19, %v131
    %v180 = vmax.f32 %v20, %v132
    %v181 = vmax.f32 %v21, %v133
    %v182 = vmax.f32 %v22, %v134
    %v183 = vmax.f32 %v23, %v135
    %v184 = vmax.f32 %v24, %v136
    %v185 = vmax.f32 %v25, %v137
    %v186 = vmax.f32 %v26, %v138
    %v187 = vmax.f32 %v27, %v139
    %v204 = vrot.slane %v172, 6
    %v205 = vrot.slane %v173, 6
    %v206 = vrot.slane %v174, 6
    %v207 = vrot.slane %v175, 6
    %v208 = vrot.slane %v176, 6
    %v209 = vrot.slane %v177, 6
    %v210 = vrot.slane %v178, 6
    %v211 = vrot.slane %v179, 6
    %v212 = vrot.slane %v180, 6
    %v213 = vrot.slane %v181, 6
    %v214 = vrot.slane %v182, 6
    %v215 = vrot.slane %v183, 6
    %v216 = vrot.slane %v184, 6
    %v217 = vrot.slane %v185, 6
    %v218 = vrot.slane %v186, 6
    %v219 = vrot.slane %v187, 6
    %v236 = vsub.f32 %v156, %v204
    %v237 = vsub.f32 %v157, %v205
    %v238 = vsub.f32 %v158, %v206
    %v239 = vsub.f32 %v159, %v207
    %v240 = vsub.f32 %v160, %v208
    %v241 = vsub.f32 %v161, %v209
    %v242 = vsub.f32 %v162, %v210
    %v243 = vsub.f32 %v163, %v211
    %v244 = vsub.f32 %v164, %v212
    %v245 = vsub.f32 %v165, %v213
    %v246 = vsub.f32 %v166, %v214
    %v247 = vsub.f32 %v167, %v215
    %v248 = vsub.f32 %v168, %v216
    %v249 = vsub.f32 %v169, %v217
    %v250 = vsub.f32 %v170, %v218
    %v251 = vsub.f32 %v171, %v219
    %v252 = vmax.f32 %v236, 0.0
    %v253 = vmax.f32 %v237, 0.0
    %v254 = vmax.f32 %v238, 0.0
    %v255 = vmax.f32 %v239, 0.0
    %v256 = vmax.f32 %v240, 0.0
    %v257 = vmax.f32 %v241, 0.0
    %v258 = vmax.f32 %v242, 0.0
    %v259 = vmax.f32 %v243, 0.0
    %v260 = vmax.f32 %v244, 0.0
    %v261 = vmax.f32 %v245, 0.0
    %v262 = vmax.f32 %v246, 0.0
    %v263 = vmax.f32 %v247, 0.0
    %v264 = vmax.f32 %v248, 0.0
    %v265 = vmax.f32 %v249, 0.0
    %v266 = vmax.f32 %v250, 0.0
    %v267 = vmax.f32 %v251, 0.0
    %v284 = vrot.slane %v252, 1
    %v285 = vrot.slane %v253, 1
    %v286 = vrot.slane %v254, 1
    %v287 = vrot.slane %v255, 1
    %v288 = vrot.slane %v256, 1
    %v289 = vrot.slane %v257, 1
    %v290 = vrot.slane %v258, 1
    %v291 = vrot.slane %v259, 1
    %v292 = vrot.slane %v260, 1
    %v293 = vrot.slane %v261, 1
    %v294 = vrot.slane %v262, 1
    %v295 = vrot.slane %v263, 1
    %v296 = vrot.slane %v264, 1
    %v297 = vrot.slane %v265, 1
    %v298 = vrot.slane %v266, 1
    %v299 = vrot.slane %v267, 1
    %v316 = vmul.f32 %v252, %v284
    %v317 = vmul.f32 %v253, %v285
    %v318 = vmul.f32 %v254, %v286
    %v319 = vmul.f32 %v255, %v287
    %v320 = vmul.f32 %v256, %v288
    %v321 = vmul.f32 %v257, %v289
    %v322 = vmul.f32 %v258, %v290
    %v323 = vmul.f32 %v259, %v291
    %v324 = vmul.f32 %v260, %v292
    %v325 = vmul.f32 %v261, %v293
    %v326 = vmul.f32 %v262, %v294
    %v327 = vmul.f32 %v263, %v295
    %v328 = vmul.f32 %v264, %v296
    %v329 = vmul.f32 %v265, %v297
    %v330 = vmul.f32 %v266, %v298
    %v331 = vmul.f32 %v267, %v299
    %v348 = vrot.slane %v108, 1
    %v349 = vrot.slane %v109, 1
    %v350 = vrot.slane %v110, 1
    %v351 = vrot.slane %v111, 1
    %v352 = vrot.slane %v112, 1
    %v353 = vrot.slane %v113, 1
    %v354 = vrot.slane %v114, 1
    %v355 = vrot.slane %v115, 1
    %v356 = vrot.slane %v116, 1
    %v357 = vrot.slane %v117, 1
    %v358 = vrot.slane %v118, 1
    %v359 = vrot.slane %v119, 1
    %v360 = vrot.slane %v120, 1
    %v361 = vrot.slane %v121, 1
    %v362 = vrot.slane %v122, 1
    %v363 = vrot.slane %v123, 1
    %v380 = vmul.f32 %v92, %v348
    %v381 = vmul.f32 %v93, %v349
    %v382 = vmul.f32 %v94, %v350
    %v383 = vmul.f32 %v95, %v351
    %v384 = vmul.f32 %v96, %v352
    %v385 = vmul.f32 %v97, %v353
    %v386 = vmul.f32 %v98, %v354
    %v387 = vmul.f32 %v99, %v355
    %v388 = vmul.f32 %v100, %v356
    %v389 = vmul.f32 %v101, %v357
    %v390 = vmul.f32 %v102, %v358
    %v391 = vmul.f32 %v103, %v359
    %v392 = vmul.f32 %v104, %v360
    %v393 = vmul.f32 %v105, %v361
    %v394 = vmul.f32 %v106, %v362
    %v395 = vmul.f32 %v107, %v363
    %v412 = vrot.slane %v380, 4
    %v413 = vrot.slane %v381, 4
    %v414 = vrot.slane %v382, 4
    %v415 = vrot.slane %v383, 4
    %v416 = vrot.slane %v384, 4
    %v417 = vrot.slane %v385, 4
    %v418 = vrot.slane %v386, 4
    %v419 = vrot.slane %v387, 4
    %v420 = vrot.slane %v388, 4
    %v421 = vrot.slane %v389, 4
    %v422 = vrot.slane %v390, 4
    %v423 = vrot.slane %v391, 4
    %v424 = vrot.slane %v392, 4
    %v425 = vrot.slane %v393, 4
    %v426 = vrot.slane %v394, 4
    %v427 = vrot.slane %v395, 4
    %v444 = vadd.f32 %v380, %v412
    %v445 = vadd.f32 %v381, %v413
    %v446 = vadd.f32 %v382, %v414
    %v447 = vadd.f32 %v383, %v415
    %v448 = vadd.f32 %v384, %v416
    %v449 = vadd.f32 %v385, %v417
    %v450 = vadd.f32 %v386, %v418
    %v451 = vadd.f32 %v387, %v419
    %v452 = vadd.f32 %v388, %v420
    %v453 = vadd.f32 %v389, %v421
    %v454 = vadd.f32 %v390, %v422
    %v455 = vadd.f32 %v391, %v423
    %v456 = vadd.f32 %v392, %v424
    %v457 = vadd.f32 %v393, %v425
    %v458 = vadd.f32 %v394, %v426
    %v459 = vadd.f32 %v395, %v427
    %v460 = vsub.f32 %v444, %v316
    %v461 = vsub.f32 %v445, %v317
    %v462 = vsub.f32 %v446, %v318
    %v463 = vsub.f32 %v447, %v319
    %v464 = vsub.f32 %v448, %v320
    %v465 = vsub.f32 %v449, %v321
    %v466 = vsub.f32 %v450, %v322
    %v467 = vsub.f32 %v451, %v323
    %v468 = vsub.f32 %v452, %v324
    %v469 = vsub.f32 %v453, %v325
    %v470 = vsub.f32 %v454, %v326
    %v471 = vsub.f32 %v455, %v327
    %v472 = vsub.f32 %v456, %v328
    %v473 = vsub.f32 %v457, %v329
    %v474 = vsub.f32 %v458, %v330
    %v475 = vsub.f32 %v459, %v331
    %v476 = vadd.f32 %v460, 1e-07
    %v477 = vadd.f32 %v461, 1e-07
    %v478 = vadd.f32 %v462, 1e-07
    %v479 = vadd.f32 %v463, 1e-07
    %v480 = vadd.f32 %v464, 1e-07
    %v481 = vadd.f32 %v465, 1e-07
    %v482 = vadd.f32 %v466, 1e-07
    %v483 = vadd.f32 %v467, 1e-07
    %v484 = vadd.f32 %v468, 1e-07
    %v485 = vadd.f32 %v469, 1e-07
    %v486 = vadd.f32 %v470, 1e-07
    %v487 = vadd.f32 %v471, 1e-07
    %v488 = vadd.f32 %v472, 1e-07
    %v489 = vadd.f32 %v473, 1e-07
    %v490 = vadd.f32 %v474, 1e-07
    %v491 = vadd.f32 %v475, 1e-07
    %v492 = vrcp.pop %v476
    %v493 = vmul.f32 %v476, %v492
    %v494 = vsub.f32 1.0, %v493
    %v495 = vmul.f32 %v492, %v494
    %v496 = vadd.f32 %v492, %v495
    %vm497 = vweird.f32 %v476
    %vm498 = vweird.f32 %v492
    %vm499 = vmor %vm497, %vm498
    %v500 = vsel %vm499, %v492, %v496
    %v501 = vand.u32 2147483647, %v476
    %vm502 = vcmp.eq.f32.partialorder %v501, 8.507059e+37
    %v503 = vand.u32 %v476, 2147483648
    %v504 = vor.u32 1.1754944e-38, %v503
    %v505 = vsel %vm502, %v504, %v500
    %v506 = vmul.f32 %v316, %v505
    %v507 = vrcp.pop %v477
    %v508 = vmul.f32 %v477, %v507
    %v509 = vsub.f32 1.0, %v508
    %v510 = vmul.f32 %v507, %v509
    %v511 = vadd.f32 %v507, %v510
    %vm512 = vweird.f32 %v477
    %vm513 = vweird.f32 %v507
    %vm514 = vmor %vm512, %vm513
    %v515 = vsel %vm514, %v507, %v511
    %v516 = vand.u32 2147483647, %v477
    %vm517 = vcmp.eq.f32.partialorder %v516, 8.507059e+37
    %v518 = vand.u32 %v477, 2147483648
    %v519 = vor.u32 1.1754944e-38, %v518
    %v520 = vsel %vm517, %v519, %v515
    %v521 = vmul.f32 %v317, %v520
    %v522 = vrcp.pop %v478
    %v523 = vmul.f32 %v478, %v522
    %v524 = vsub.f32 1.0, %v523
    %v525 = vmul.f32 %v522, %v524
    %v526 = vadd.f32 %v522, %v525
    %vm527 = vweird.f32 %v478
    %vm528 = vweird.f32 %v522
    %vm529 = vmor %vm527, %vm528
    %v530 = vsel %vm529, %v522, %v526
    %v531 = vand.u32 2147483647, %v478
    %vm532 = vcmp.eq.f32.partialorder %v531, 8.507059e+37
    %v533 = vand.u32 %v478, 2147483648
    %v534 = vor.u32 1.1754944e-38, %v533
    %v535 = vsel %vm532, %v534, %v530
    %v536 = vmul.f32 %v318, %v535
    %v537 = vrcp.pop %v479
    %v538 = vmul.f32 %v479, %v537
    %v539 = vsub.f32 1.0, %v538
    %v540 = vmul.f32 %v537, %v539
    %v541 = vadd.f32 %v537, %v540
    %vm542 = vweird.f32 %v479
    %vm543 = vweird.f32 %v537
    %vm544 = vmor %vm542, %vm543
    %v545 = vsel %vm544, %v537, %v541
    %v546 = vand.u32 2147483647, %v479
    %vm547 = vcmp.eq.f32.partialorder %v546, 8.507059e+37
    %v548 = vand.u32 %v479, 2147483648
    %v549 = vor.u32 1.1754944e-38, %v548
    %v550 = vsel %vm547, %v549, %v545
    %v551 = vmul.f32 %v319, %v550
    %v552 = vrcp.pop %v480
    %v553 = vmul.f32 %v480, %v552
    %v554 = vsub.f32 1.0, %v553
    %v555 = vmul.f32 %v552, %v554
    %v556 = vadd.f32 %v552, %v555
    %vm557 = vweird.f32 %v480
    %vm558 = vweird.f32 %v552
    %vm559 = vmor %vm557, %vm558
    %v560 = vsel %vm559, %v552, %v556
    %v561 = vand.u32 2147483647, %v480
    %vm562 = vcmp.eq.f32.partialorder %v561, 8.507059e+37
    %v563 = vand.u32 %v480, 2147483648
    %v564 = vor.u32 1.1754944e-38, %v563
    %v565 = vsel %vm562, %v564, %v560
    %v566 = vmul.f32 %v320, %v565
    %v567 = vrcp.pop %v481
    %v568 = vmul.f32 %v481, %v567
    %v569 = vsub.f32 1.0, %v568
    %v570 = vmul.f32 %v567, %v569
    %v571 = vadd.f32 %v567, %v570
    %vm572 = vweird.f32 %v481
    %vm573 = vweird.f32 %v567
    %vm574 = vmor %vm572, %vm573
    %v575 = vsel %vm574, %v567, %v571
    %v576 = vand.u32 2147483647, %v481
    %vm577 = vcmp.eq.f32.partialorder %v576, 8.507059e+37
    %v578 = vand.u32 %v481, 2147483648
    %v579 = vor.u32 1.1754944e-38, %v578
    %v580 = vsel %vm577, %v579, %v575
    %v581 = vmul.f32 %v321, %v580
    %v582 = vrcp.pop %v482
    %v583 = vmul.f32 %v482, %v582
    %v584 = vsub.f32 1.0, %v583
    %v585 = vmul.f32 %v582, %v584
    %v586 = vadd.f32 %v582, %v585
    %vm587 = vweird.f32 %v482
    %vm588 = vweird.f32 %v582
    %vm589 = vmor %vm587, %vm588
    %v590 = vsel %vm589, %v582, %v586
    %v591 = vand.u32 2147483647, %v482
    %vm592 = vcmp.eq.f32.partialorder %v591, 8.507059e+37
    %v593 = vand.u32 %v482, 2147483648
    %v594 = vor.u32 1.1754944e-38, %v593
    %v595 = vsel %vm592, %v594, %v590
    %v596 = vmul.f32 %v322, %v595
    %v597 = vrcp.pop %v483
    %v598 = vmul.f32 %v483, %v597
    %v599 = vsub.f32 1.0, %v598
    %v600 = vmul.f32 %v597, %v599
    %v601 = vadd.f32 %v597, %v600
    %vm602 = vweird.f32 %v483
    %vm603 = vweird.f32 %v597
    %vm604 = vmor %vm602, %vm603
    %v605 = vsel %vm604, %v597, %v601
    %v606 = vand.u32 2147483647, %v483
    %vm607 = vcmp.eq.f32.partialorder %v606, 8.507059e+37
    %v608 = vand.u32 %v483, 2147483648
    %v609 = vor.u32 1.1754944e-38, %v608
    %v610 = vsel %vm607, %v609, %v605
    %v611 = vmul.f32 %v323, %v610
    %v612 = vrcp.pop %v484
    %v613 = vmul.f32 %v484, %v612
    %v614 = vsub.f32 1.0, %v613
    %v615 = vmul.f32 %v612, %v614
    %v616 = vadd.f32 %v612, %v615
    %vm617 = vweird.f32 %v484
    %vm618 = vweird.f32 %v612
    %vm619 = vmor %vm617, %vm618
    %v620 = vsel %vm619, %v612, %v616
    %v621 = vand.u32 2147483647, %v484
    %vm622 = vcmp.eq.f32.partialorder %v621, 8.507059e+37
    %v623 = vand.u32 %v484, 2147483648
    %v624 = vor.u32 1.1754944e-38, %v623
    %v625 = vsel %vm622, %v624, %v620
    %v626 = vmul.f32 %v324, %v625
    %v627 = vrcp.pop %v485
    %v628 = vmul.f32 %v485, %v627
    %v629 = vsub.f32 1.0, %v628
    %v630 = vmul.f32 %v627, %v629
    %v631 = vadd.f32 %v627, %v630
    %vm632 = vweird.f32 %v485
    %vm633 = vweird.f32 %v627
    %vm634 = vmor %vm632, %vm633
    %v635 = vsel %vm634, %v627, %v631
    %v636 = vand.u32 2147483647, %v485
    %vm637 = vcmp.eq.f32.partialorder %v636, 8.507059e+37
    %v638 = vand.u32 %v485, 2147483648
    %v639 = vor.u32 1.1754944e-38, %v638
    %v640 = vsel %vm637, %v639, %v635
    %v641 = vmul.f32 %v325, %v640
    %v642 = vrcp.pop %v486
    %v643 = vmul.f32 %v486, %v642
    %v644 = vsub.f32 1.0, %v643
    %v645 = vmul.f32 %v642, %v644
    %v646 = vadd.f32 %v642, %v645
    %vm647 = vweird.f32 %v486
    %vm648 = vweird.f32 %v642
    %vm649 = vmor %vm647, %vm648
    %v650 = vsel %vm649, %v642, %v646
    %v651 = vand.u32 2147483647, %v486
    %vm652 = vcmp.eq.f32.partialorder %v651, 8.507059e+37
    %v653 = vand.u32 %v486, 2147483648
    %v654 = vor.u32 1.1754944e-38, %v653
    %v655 = vsel %vm652, %v654, %v650
    %v656 = vmul.f32 %v326, %v655
    %v657 = vrcp.pop %v487
    %v658 = vmul.f32 %v487, %v657
    %v659 = vsub.f32 1.0, %v658
    %v660 = vmul.f32 %v657, %v659
    %v661 = vadd.f32 %v657, %v660
    %vm662 = vweird.f32 %v487
    %vm663 = vweird.f32 %v657
    %vm664 = vmor %vm662, %vm663
    %v665 = vsel %vm664, %v657, %v661
    %v666 = vand.u32 2147483647, %v487
    %vm667 = vcmp.eq.f32.partialorder %v666, 8.507059e+37
    %v668 = vand.u32 %v487, 2147483648
    %v669 = vor.u32 1.1754944e-38, %v668
    %v670 = vsel %vm667, %v669, %v665
    %v671 = vmul.f32 %v327, %v670
    %v672 = vrcp.pop %v488
    %v673 = vmul.f32 %v488, %v672
    %v674 = vsub.f32 1.0, %v673
    %v675 = vmul.f32 %v672, %v674
    %v676 = vadd.f32 %v672, %v675
    %vm677 = vweird.f32 %v488
    %vm678 = vweird.f32 %v672
    %vm679 = vmor %vm677, %vm678
    %v680 = vsel %vm679, %v672, %v676
    %v681 = vand.u32 2147483647, %v488
    %vm682 = vcmp.eq.f32.partialorder %v681, 8.507059e+37
    %v683 = vand.u32 %v488, 2147483648
    %v684 = vor.u32 1.1754944e-38, %v683
    %v685 = vsel %vm682, %v684, %v680
    %v686 = vmul.f32 %v328, %v685
    %v687 = vrcp.pop %v489
    %v688 = vmul.f32 %v489, %v687
    %v689 = vsub.f32 1.0, %v688
    %v690 = vmul.f32 %v687, %v689
    %v691 = vadd.f32 %v687, %v690
    %vm692 = vweird.f32 %v489
    %vm693 = vweird.f32 %v687
    %vm694 = vmor %vm692, %vm693
    %v695 = vsel %vm694, %v687, %v691
    %v696 = vand.u32 2147483647, %v489
    %vm697 = vcmp.eq.f32.partialorder %v696, 8.507059e+37
    %v698 = vand.u32 %v489, 2147483648
    %v699 = vor.u32 1.1754944e-38, %v698
    %v700 = vsel %vm697, %v699, %v695
    %v701 = vmul.f32 %v329, %v700
    %v702 = vrcp.pop %v490
    %v703 = vmul.f32 %v490, %v702
    %v704 = vsub.f32 1.0, %v703
    %v705 = vmul.f32 %v702, %v704
    %v706 = vadd.f32 %v702, %v705
    %vm707 = vweird.f32 %v490
    %vm708 = vweird.f32 %v702
    %vm709 = vmor %vm707, %vm708
    %v710 = vsel %vm709, %v702, %v706
    %v711 = vand.u32 2147483647, %v490
    %vm712 = vcmp.eq.f32.partialorder %v711, 8.507059e+37
    %v713 = vand.u32 %v490, 2147483648
    %v714 = vor.u32 1.1754944e-38, %v713
    %v715 = vsel %vm712, %v714, %v710
    %v716 = vmul.f32 %v330, %v715
    %v717 = vrcp.pop %v491
    %v718 = vmul.f32 %v491, %v717
    %v719 = vsub.f32 1.0, %v718
    %v720 = vmul.f32 %v717, %v719
    %v721 = vadd.f32 %v717, %v720
    %vm722 = vweird.f32 %v491
    %vm723 = vweird.f32 %v717
    %vm724 = vmor %vm722, %vm723
    %v725 = vsel %vm724, %v717, %v721
    %v726 = vand.u32 2147483647, %v491
    %vm727 = vcmp.eq.f32.partialorder %v726, 8.507059e+37
    %v728 = vand.u32 %v491, 2147483648
    %v729 = vor.u32 1.1754944e-38, %v728
    %v730 = vsel %vm727, %v729, %v725
    %v731 = vmul.f32 %v331, %v730
    %v748 = vrot.slane %v156, 6
    %v749 = vrot.slane %v157, 6
    %v750 = vrot.slane %v158, 6
    %v751 = vrot.slane %v159, 6
    %v752 = vrot.slane %v160, 6
    %v753 = vrot.slane %v161, 6
    %v754 = vrot.slane %v162, 6
    %v755 = vrot.slane %v163, 6
    %v756 = vrot.slane %v164, 6
    %v757 = vrot.slane %v165, 6
    %v758 = vrot.slane %v166, 6
    %v759 = vrot.slane %v167, 6
    %v760 = vrot.slane %v168, 6
    %v761 = vrot.slane %v169, 6
    %v762 = vrot.slane %v170, 6
    %v763 = vrot.slane %v171, 6
    %v780 = vsub.f32 %v172, %v748
    %v781 = vsub.f32 %v173, %v749
    %v782 = vsub.f32 %v174, %v750
    %v783 = vsub.f32 %v175, %v751
    %v784 = vsub.f32 %v176, %v752
    %v785 = vsub.f32 %v177, %v753
    %v786 = vsub.f32 %v178, %v754
    %v787 = vsub.f32 %v179, %v755
    %v788 = vsub.f32 %v180, %v756
    %v789 = vsub.f32 %v181, %v757
    %v790 = vsub.f32 %v182, %v758
    %v791 = vsub.f32 %v183, %v759
    %v792 = vsub.f32 %v184, %v760
    %v793 = vsub.f32 %v185, %v761
    %v794 = vsub.f32 %v186, %v762
    %v795 = vsub.f32 %v187, %v763
    %v796 = vmul.f32 %v780, %v780
    %v797 = vmul.f32 %v781, %v781
    %v798 = vmul.f32 %v782, %v782
    %v799 = vmul.f32 %v783, %v783
    %v800 = vmul.f32 %v784, %v784
    %v801 = vmul.f32 %v785, %v785
    %v802 = vmul.f32 %v786, %v786
    %v803 = vmul.f32 %v787, %v787
    %v804 = vmul.f32 %v788, %v788
    %v805 = vmul.f32 %v789, %v789
    %v806 = vmul.f32 %v790, %v790
    %v807 = vmul.f32 %v791, %v791
    %v808 = vmul.f32 %v792, %v792
    %v809 = vmul.f32 %v793, %v793
    %v810 = vmul.f32 %v794, %v794
    %v811 = vmul.f32 %v795, %v795
    %v828 = vrot.slane %v796, 1
    %v829 = vrot.slane %v797, 1
    %v830 = vrot.slane %v798, 1
    %v831 = vrot.slane %v799, 1
    %v832 = vrot.slane %v800, 1
    %v833 = vrot.slane %v801, 1
    %v834 = vrot.slane %v802, 1
    %v835 = vrot.slane %v803, 1
    %v836 = vrot.slane %v804, 1
    %v837 = vrot.slane %v805, 1
    %v838 = vrot.slane %v806, 1
    %v839 = vrot.slane %v807, 1
    %v840 = vrot.slane %v808, 1
    %v841 = vrot.slane %v809, 1
    %v842 = vrot.slane %v810, 1
    %v843 = vrot.slane %v811, 1
    %v860 = vadd.f32 %v796, %v828
    %v861 = vadd.f32 %v797, %v829
    %v862 = vadd.f32 %v798, %v830
    %v863 = vadd.f32 %v799, %v831
    %v864 = vadd.f32 %v800, %v832
    %v865 = vadd.f32 %v801, %v833
    %v866 = vadd.f32 %v802, %v834
    %v867 = vadd.f32 %v803, %v835
    %v868 = vadd.f32 %v804, %v836
    %v869 = vadd.f32 %v805, %v837
    %v870 = vadd.f32 %v806, %v838
    %v871 = vadd.f32 %v807, %v839
    %v872 = vadd.f32 %v808, %v840
    %v873 = vadd.f32 %v809, %v841
    %v874 = vadd.f32 %v810, %v842
    %v875 = vadd.f32 %v811, %v843
    %v876 = vadd.f32 %v860, 1e-07
    %v877 = vadd.f32 %v861, 1e-07
    %v878 = vadd.f32 %v862, 1e-07
    %v879 = vadd.f32 %v863, 1e-07
    %v880 = vadd.f32 %v864, 1e-07
    %v881 = vadd.f32 %v865, 1e-07
    %v882 = vadd.f32 %v866, 1e-07
    %v883 = vadd.f32 %v867, 1e-07
    %v884 = vadd.f32 %v868, 1e-07
    %v885 = vadd.f32 %v869, 1e-07
    %v886 = vadd.f32 %v870, 1e-07
    %v887 = vadd.f32 %v871, 1e-07
    %v888 = vadd.f32 %v872, 1e-07
    %v889 = vadd.f32 %v873, 1e-07
    %v890 = vadd.f32 %v874, 1e-07
    %v891 = vadd.f32 %v875, 1e-07
    %v892 = vrot.slane %v12, 2
    %v893 = vrot.slane %v13, 2
    %v894 = vrot.slane %v14, 2
    %v895 = vrot.slane %v15, 2
    %v896 = vrot.slane %v16, 2
    %v897 = vrot.slane %v17, 2
    %v898 = vrot.slane %v18, 2
    %v899 = vrot.slane %v19, 2
    %v900 = vrot.slane %v20, 2
    %v901 = vrot.slane %v21, 2
    %v902 = vrot.slane %v22, 2
    %v903 = vrot.slane %v23, 2
    %v904 = vrot.slane %v24, 2
    %v905 = vrot.slane %v25, 2
    %v906 = vrot.slane %v26, 2
    %v907 = vrot.slane %v27, 2
    %v924 = vadd.f32 %v12, %v892
    %v925 = vadd.f32 %v13, %v893
    %v926 = vadd.f32 %v14, %v894
    %v927 = vadd.f32 %v15, %v895
    %v928 = vadd.f32 %v16, %v896
    %v929 = vadd.f32 %v17, %v897
    %v930 = vadd.f32 %v18, %v898
    %v931 = vadd.f32 %v19, %v899
    %v932 = vadd.f32 %v20, %v900
    %v933 = vadd.f32 %v21, %v901
    %v934 = vadd.f32 %v22, %v902
    %v935 = vadd.f32 %v23, %v903
    %v936 = vadd.f32 %v24, %v904
    %v937 = vadd.f32 %v25, %v905
    %v938 = vadd.f32 %v26, %v906
    %v939 = vadd.f32 %v27, %v907
    %v940 = vsub.f32 %v924, %v124
    %v941 = vsub.f32 %v925, %v125
    %v942 = vsub.f32 %v926, %v126
    %v943 = vsub.f32 %v927, %v127
    %v944 = vsub.f32 %v928, %v128
    %v945 = vsub.f32 %v929, %v129
    %v946 = vsub.f32 %v930, %v130
    %v947 = vsub.f32 %v931, %v131
    %v948 = vsub.f32 %v932, %v132
    %v949 = vsub.f32 %v933, %v133
    %v950 = vsub.f32 %v934, %v134
    %v951 = vsub.f32 %v935, %v135
    %v952 = vsub.f32 %v936, %v136
    %v953 = vsub.f32 %v937, %v137
    %v954 = vsub.f32 %v938, %v138
    %v955 = vsub.f32 %v939, %v139
    %v956 = vsub.f32 %v940, %v60
    %v957 = vsub.f32 %v941, %v61
    %v958 = vsub.f32 %v942, %v62
    %v959 = vsub.f32 %v943, %v63
    %v960 = vsub.f32 %v944, %v64
    %v961 = vsub.f32 %v945, %v65
    %v962 = vsub.f32 %v946, %v66
    %v963 = vsub.f32 %v947, %v67
    %v964 = vsub.f32 %v948, %v68
    %v965 = vsub.f32 %v949, %v69
    %v966 = vsub.f32 %v950, %v70
    %v967 = vsub.f32 %v951, %v71
    %v968 = vsub.f32 %v952, %v72
    %v969 = vsub.f32 %v953, %v73
    %v970 = vsub.f32 %v954, %v74
    %v971 = vsub.f32 %v955, %v75
    %v972 = vmul.f32 %v956, %v956
    %v973 = vmul.f32 %v957, %v957
    %v974 = vmul.f32 %v958, %v958
    %v975 = vmul.f32 %v959, %v959
    %v976 = vmul.f32 %v960, %v960
    %v977 = vmul.f32 %v961, %v961
    %v978 = vmul.f32 %v962, %v962
    %v979 = vmul.f32 %v963, %v963
    %v980 = vmul.f32 %v964, %v964
    %v981 = vmul.f32 %v965, %v965
    %v982 = vmul.f32 %v966, %v966
    %v983 = vmul.f32 %v967, %v967
    %v984 = vmul.f32 %v968, %v968
    %v985 = vmul.f32 %v969, %v969
    %v986 = vmul.f32 %v970, %v970
    %v987 = vmul.f32 %v971, %v971
    %v1004 = vrot.slane %v972, 1
    %v1005 = vrot.slane %v973, 1
    %v1006 = vrot.slane %v974, 1
    %v1007 = vrot.slane %v975, 1
    %v1008 = vrot.slane %v976, 1
    %v1009 = vrot.slane %v977, 1
    %v1010 = vrot.slane %v978, 1
    %v1011 = vrot.slane %v979, 1
    %v1012 = vrot.slane %v980, 1
    %v1013 = vrot.slane %v981, 1
    %v1014 = vrot.slane %v982, 1
    %v1015 = vrot.slane %v983, 1
    %v1016 = vrot.slane %v984, 1
    %v1017 = vrot.slane %v985, 1
    %v1018 = vrot.slane %v986, 1
    %v1019 = vrot.slane %v987, 1
    %v1036 = vadd.f32 %v972, %v1004
    %v1037 = vadd.f32 %v973, %v1005
    %v1038 = vadd.f32 %v974, %v1006
    %v1039 = vadd.f32 %v975, %v1007
    %v1040 = vadd.f32 %v976, %v1008
    %v1041 = vadd.f32 %v977, %v1009
    %v1042 = vadd.f32 %v978, %v1010
    %v1043 = vadd.f32 %v979, %v1011
    %v1044 = vadd.f32 %v980, %v1012
    %v1045 = vadd.f32 %v981, %v1013
    %v1046 = vadd.f32 %v982, %v1014
    %v1047 = vadd.f32 %v983, %v1015
    %v1048 = vadd.f32 %v984, %v1016
    %v1049 = vadd.f32 %v985, %v1017
    %v1050 = vadd.f32 %v986, %v1018
    %v1051 = vadd.f32 %v987, %v1019
    %v1052 = vmul.f32 %v1036, 0.25
    %v1053 = vmul.f32 %v1037, 0.25
    %v1054 = vmul.f32 %v1038, 0.25
    %v1055 = vmul.f32 %v1039, 0.25
    %v1056 = vmul.f32 %v1040, 0.25
    %v1057 = vmul.f32 %v1041, 0.25
    %v1058 = vmul.f32 %v1042, 0.25
    %v1059 = vmul.f32 %v1043, 0.25
    %v1060 = vmul.f32 %v1044, 0.25
    %v1061 = vmul.f32 %v1045, 0.25
    %v1062 = vmul.f32 %v1046, 0.25
    %v1063 = vmul.f32 %v1047, 0.25
    %v1064 = vmul.f32 %v1048, 0.25
    %v1065 = vmul.f32 %v1049, 0.25
    %v1066 = vmul.f32 %v1050, 0.25
    %v1067 = vmul.f32 %v1051, 0.25
    %v1084 = vrot.slane %v506, 5
    %v1085 = vrot.slane %v521, 5
    %v1086 = vrot.slane %v536, 5
    %v1087 = vrot.slane %v551, 5
    %v1088 = vrot.slane %v566, 5
    %v1089 = vrot.slane %v581, 5
    %v1090 = vrot.slane %v596, 5
    %v1091 = vrot.slane %v611, 5
    %v1092 = vrot.slane %v626, 5
    %v1093 = vrot.slane %v641, 5
    %v1094 = vrot.slane %v656, 5
    %v1095 = vrot.slane %v671, 5
    %v1096 = vrot.slane %v686, 5
    %v1097 = vrot.slane %v701, 5
    %v1098 = vrot.slane %v716, 5
    %v1099 = vrot.slane %v731, 5
    %v1116 = vsub.f32 %v28, %v1084
    %v1117 = vsub.f32 %v29, %v1085
    %v1118 = vsub.f32 %v30, %v1086
    %v1119 = vsub.f32 %v31, %v1087
    %v1120 = vsub.f32 %v32, %v1088
    %v1121 = vsub.f32 %v33, %v1089
    %v1122 = vsub.f32 %v34, %v1090
    %v1123 = vsub.f32 %v35, %v1091
    %v1124 = vsub.f32 %v36, %v1092
    %v1125 = vsub.f32 %v37, %v1093
    %v1126 = vsub.f32 %v38, %v1094
    %v1127 = vsub.f32 %v39, %v1095
    %v1128 = vsub.f32 %v40, %v1096
    %v1129 = vsub.f32 %v41, %v1097
    %v1130 = vsub.f32 %v42, %v1098
    %v1131 = vsub.f32 %v43, %v1099
    %v1132 = vadd.f32 %v1116, 1.0000001
    %v1133 = vadd.f32 %v1117, 1.0000001
    %v1134 = vadd.f32 %v1118, 1.0000001
    %v1135 = vadd.f32 %v1119, 1.0000001
    %v1136 = vadd.f32 %v1120, 1.0000001
    %v1137 = vadd.f32 %v1121, 1.0000001
    %v1138 = vadd.f32 %v1122, 1.0000001
    %v1139 = vadd.f32 %v1123, 1.0000001
    %v1140 = vadd.f32 %v1124, 1.0000001
    %v1141 = vadd.f32 %v1125, 1.0000001
    %v1142 = vadd.f32 %v1126, 1.0000001
    %v1143 = vadd.f32 %v1127, 1.0000001
    %v1144 = vadd.f32 %v1128, 1.0000001
    %v1145 = vadd.f32 %v1129, 1.0000001
    %v1146 = vadd.f32 %v1130, 1.0000001
    %v1147 = vadd.f32 %v1131, 1.0000001
    %v1148 = vrcp.pop %v1132
    %v1149 = vmul.f32 %v1132, %v1148
    %v1150 = vsub.f32 1.0, %v1149
    %v1151 = vmul.f32 %v1148, %v1150
    %v1152 = vadd.f32 %v1148, %v1151
    %vm1153 = vweird.f32 %v1132
    %vm1154 = vweird.f32 %v1148
    %vm1155 = vmor %vm1153, %vm1154
    %v1156 = vsel %vm1155, %v1148, %v1152
    %v1157 = vand.u32 2147483647, %v1132
    %vm1158 = vcmp.eq.f32.partialorder %v1157, 8.507059e+37
    %v1159 = vand.u32 %v1132, 2147483648
    %v1160 = vor.u32 1.1754944e-38, %v1159
    %v1161 = vsel %vm1158, %v1160, %v1156
    %v1162 = vmul.f32 %v28, %v1161
    %v1163 = vrcp.pop %v1133
    %v1164 = vmul.f32 %v1133, %v1163
    %v1165 = vsub.f32 1.0, %v1164
    %v1166 = vmul.f32 %v1163, %v1165
    %v1167 = vadd.f32 %v1163, %v1166
    %vm1168 = vweird.f32 %v1133
    %vm1169 = vweird.f32 %v1163
    %vm1170 = vmor %vm1168, %vm1169
    %v1171 = vsel %vm1170, %v1163, %v1167
    %v1172 = vand.u32 2147483647, %v1133
    %vm1173 = vcmp.eq.f32.partialorder %v1172, 8.507059e+37
    %v1174 = vand.u32 %v1133, 2147483648
    %v1175 = vor.u32 1.1754944e-38, %v1174
    %v1176 = vsel %vm1173, %v1175, %v1171
    %v1177 = vmul.f32 %v29, %v1176
    %v1178 = vrcp.pop %v1134
    %v1179 = vmul.f32 %v1134, %v1178
    %v1180 = vsub.f32 1.0, %v1179
    %v1181 = vmul.f32 %v1178, %v1180
    %v1182 = vadd.f32 %v1178, %v1181
    %vm1183 = vweird.f32 %v1134
    %vm1184 = vweird.f32 %v1178
    %vm1185 = vmor %vm1183, %vm1184
    %v1186 = vsel %vm1185, %v1178, %v1182
    %v1187 = vand.u32 2147483647, %v1134
    %vm1188 = vcmp.eq.f32.partialorder %v1187, 8.507059e+37
    %v1189 = vand.u32 %v1134, 2147483648
    %v1190 = vor.u32 1.1754944e-38, %v1189
    %v1191 = vsel %vm1188, %v1190, %v1186
    %v1192 = vmul.f32 %v30, %v1191
    %v1193 = vrcp.pop %v1135
    %v1194 = vmul.f32 %v1135, %v1193
    %v1195 = vsub.f32 1.0, %v1194
    %v1196 = vmul.f32 %v1193, %v1195
    %v1197 = vadd.f32 %v1193, %v1196
    %vm1198 = vweird.f32 %v1135
    %vm1199 = vweird.f32 %v1193
    %vm1200 = vmor %vm1198, %vm1199
    %v1201 = vsel %vm1200, %v1193, %v1197
    %v1202 = vand.u32 2147483647, %v1135
    %vm1203 = vcmp.eq.f32.partialorder %v1202, 8.507059e+37
    %v1204 = vand.u32 %v1135, 2147483648
    %v1205 = vor.u32 1.1754944e-38, %v1204
    %v1206 = vsel %vm1203, %v1205, %v1201
    %v1207 = vmul.f32 %v31, %v1206
    %v1208 = vrcp.pop %v1136
    %v1209 = vmul.f32 %v1136, %v1208
    %v1210 = vsub.f32 1.0, %v1209
    %v1211 = vmul.f32 %v1208, %v1210
    %v1212 = vadd.f32 %v1208, %v1211
    %vm1213 = vweird.f32 %v1136
    %vm1214 = vweird.f32 %v1208
    %vm1215 = vmor %vm1213, %vm1214
    %v1216 = vsel %vm1215, %v1208, %v1212
    %v1217 = vand.u32 2147483647, %v1136
    %vm1218 = vcmp.eq.f32.partialorder %v1217, 8.507059e+37
    %v1219 = vand.u32 %v1136, 2147483648
    %v1220 = vor.u32 1.1754944e-38, %v1219
    %v1221 = vsel %vm1218, %v1220, %v1216
    %v1222 = vmul.f32 %v32, %v1221
    %v1223 = vrcp.pop %v1137
    %v1224 = vmul.f32 %v1137, %v1223
    %v1225 = vsub.f32 1.0, %v1224
    %v1226 = vmul.f32 %v1223, %v1225
    %v1227 = vadd.f32 %v1223, %v1226
    %vm1228 = vweird.f32 %v1137
    %vm1229 = vweird.f32 %v1223
    %vm1230 = vmor %vm1228, %vm1229
    %v1231 = vsel %vm1230, %v1223, %v1227
    %v1232 = vand.u32 2147483647, %v1137
    %vm1233 = vcmp.eq.f32.partialorder %v1232, 8.507059e+37
    %v1234 = vand.u32 %v1137, 2147483648
    %v1235 = vor.u32 1.1754944e-38, %v1234
    %v1236 = vsel %vm1233, %v1235, %v1231
    %v1237 = vmul.f32 %v33, %v1236
    %v1238 = vrcp.pop %v1138
    %v1239 = vmul.f32 %v1138, %v1238
    %v1240 = vsub.f32 1.0, %v1239
    %v1241 = vmul.f32 %v1238, %v1240
    %v1242 = vadd.f32 %v1238, %v1241
    %vm1243 = vweird.f32 %v1138
    %vm1244 = vweird.f32 %v1238
    %vm1245 = vmor %vm1243, %vm1244
    %v1246 = vsel %vm1245, %v1238, %v1242
    %v1247 = vand.u32 2147483647, %v1138
    %vm1248 = vcmp.eq.f32.partialorder %v1247, 8.507059e+37
    %v1249 = vand.u32 %v1138, 2147483648
    %v1250 = vor.u32 1.1754944e-38, %v1249
    %v1251 = vsel %vm1248, %v1250, %v1246
    %v1252 = vmul.f32 %v34, %v1251
    %v1253 = vrcp.pop %v1139
    %v1254 = vmul.f32 %v1139, %v1253
    %v1255 = vsub.f32 1.0, %v1254
    %v1256 = vmul.f32 %v1253, %v1255
    %v1257 = vadd.f32 %v1253, %v1256
    %vm1258 = vweird.f32 %v1139
    %vm1259 = vweird.f32 %v1253
    %vm1260 = vmor %vm1258, %vm1259
    %v1261 = vsel %vm1260, %v1253, %v1257
    %v1262 = vand.u32 2147483647, %v1139
    %vm1263 = vcmp.eq.f32.partialorder %v1262, 8.507059e+37
    %v1264 = vand.u32 %v1139, 2147483648
    %v1265 = vor.u32 1.1754944e-38, %v1264
    %v1266 = vsel %vm1263, %v1265, %v1261
    %v1267 = vmul.f32 %v35, %v1266
    %v1268 = vrcp.pop %v1140
    %v1269 = vmul.f32 %v1140, %v1268
    %v1270 = vsub.f32 1.0, %v1269
    %v1271 = vmul.f32 %v1268, %v1270
    %v1272 = vadd.f32 %v1268, %v1271
    %vm1273 = vweird.f32 %v1140
    %vm1274 = vweird.f32 %v1268
    %vm1275 = vmor %vm1273, %vm1274
    %v1276 = vsel %vm1275, %v1268, %v1272
    %v1277 = vand.u32 2147483647, %v1140
    %vm1278 = vcmp.eq.f32.partialorder %v1277, 8.507059e+37
    %v1279 = vand.u32 %v1140, 2147483648
    %v1280 = vor.u32 1.1754944e-38, %v1279
    %v1281 = vsel %vm1278, %v1280, %v1276
    %v1282 = vmul.f32 %v36, %v1281
    %v1283 = vrcp.pop %v1141
    %v1284 = vmul.f32 %v1141, %v1283
    %v1285 = vsub.f32 1.0, %v1284
    %v1286 = vmul.f32 %v1283, %v1285
    %v1287 = vadd.f32 %v1283, %v1286
    %vm1288 = vweird.f32 %v1141
    %vm1289 = vweird.f32 %v1283
    %vm1290 = vmor %vm1288, %vm1289
    %v1291 = vsel %vm1290, %v1283, %v1287
    %v1292 = vand.u32 2147483647, %v1141
    %vm1293 = vcmp.eq.f32.partialorder %v1292, 8.507059e+37
    %v1294 = vand.u32 %v1141, 2147483648
    %v1295 = vor.u32 1.1754944e-38, %v1294
    %v1296 = vsel %vm1293, %v1295, %v1291
    %v1297 = vmul.f32 %v37, %v1296
    %v1298 = vrcp.pop %v1142
    %v1299 = vmul.f32 %v1142, %v1298
    %v1300 = vsub.f32 1.0, %v1299
    %v1301 = vmul.f32 %v1298, %v1300
    %v1302 = vadd.f32 %v1298, %v1301
    %vm1303 = vweird.f32 %v1142
    %vm1304 = vweird.f32 %v1298
    %vm1305 = vmor %vm1303, %vm1304
    %v1306 = vsel %vm1305, %v1298, %v1302
    %v1307 = vand.u32 2147483647, %v1142
    %vm1308 = vcmp.eq.f32.partialorder %v1307, 8.507059e+37
    %v1309 = vand.u32 %v1142, 2147483648
    %v1310 = vor.u32 1.1754944e-38, %v1309
    %v1311 = vsel %vm1308, %v1310, %v1306
    %v1312 = vmul.f32 %v38, %v1311
    %v1313 = vrcp.pop %v1143
    %v1314 = vmul.f32 %v1143, %v1313
    %v1315 = vsub.f32 1.0, %v1314
    %v1316 = vmul.f32 %v1313, %v1315
    %v1317 = vadd.f32 %v1313, %v1316
    %vm1318 = vweird.f32 %v1143
    %vm1319 = vweird.f32 %v1313
    %vm1320 = vmor %vm1318, %vm1319
    %v1321 = vsel %vm1320, %v1313, %v1317
    %v1322 = vand.u32 2147483647, %v1143
    %vm1323 = vcmp.eq.f32.partialorder %v1322, 8.507059e+37
    %v1324 = vand.u32 %v1143, 2147483648
    %v1325 = vor.u32 1.1754944e-38, %v1324
    %v1326 = vsel %vm1323, %v1325, %v1321
    %v1327 = vmul.f32 %v39, %v1326
    %v1328 = vrcp.pop %v1144
    %v1329 = vmul.f32 %v1144, %v1328
    %v1330 = vsub.f32 1.0, %v1329
    %v1331 = vmul.f32 %v1328, %v1330
    %v1332 = vadd.f32 %v1328, %v1331
    %vm1333 = vweird.f32 %v1144
    %vm1334 = vweird.f32 %v1328
    %vm1335 = vmor %vm1333, %vm1334
    %v1336 = vsel %vm1335, %v1328, %v1332
    %v1337 = vand.u32 2147483647, %v1144
    %vm1338 = vcmp.eq.f32.partialorder %v1337, 8.507059e+37
    %v1339 = vand.u32 %v1144, 2147483648
    %v1340 = vor.u32 1.1754944e-38, %v1339
    %v1341 = vsel %vm1338, %v1340, %v1336
    %v1342 = vmul.f32 %v40, %v1341
    %v1343 = vrcp.pop %v1145
    %v1344 = vmul.f32 %v1145, %v1343
    %v1345 = vsub.f32 1.0, %v1344
    %v1346 = vmul.f32 %v1343, %v1345
    %v1347 = vadd.f32 %v1343, %v1346
    %vm1348 = vweird.f32 %v1145
    %vm1349 = vweird.f32 %v1343
    %vm1350 = vmor %vm1348, %vm1349
    %v1351 = vsel %vm1350, %v1343, %v1347
    %v1352 = vand.u32 2147483647, %v1145
    %vm1353 = vcmp.eq.f32.partialorder %v1352, 8.507059e+37
    %v1354 = vand.u32 %v1145, 2147483648
    %v1355 = vor.u32 1.1754944e-38, %v1354
    %v1356 = vsel %vm1353, %v1355, %v1351
    %v1357 = vmul.f32 %v41, %v1356
    %v1358 = vrcp.pop %v1146
    %v1359 = vmul.f32 %v1146, %v1358
    %v1360 = vsub.f32 1.0, %v1359
    %v1361 = vmul.f32 %v1358, %v1360
    %v1362 = vadd.f32 %v1358, %v1361
    %vm1363 = vweird.f32 %v1146
    %vm1364 = vweird.f32 %v1358
    %vm1365 = vmor %vm1363, %vm1364
    %v1366 = vsel %vm1365, %v1358, %v1362
    %v1367 = vand.u32 2147483647, %v1146
    %vm1368 = vcmp.eq.f32.partialorder %v1367, 8.507059e+37
    %v1369 = vand.u32 %v1146, 2147483648
    %v1370 = vor.u32 1.1754944e-38, %v1369
    %v1371 = vsel %vm1368, %v1370, %v1366
    %v1372 = vmul.f32 %v42, %v1371
    %v1373 = vrcp.pop %v1147
    %v1374 = vmul.f32 %v1147, %v1373
    %v1375 = vsub.f32 1.0, %v1374
    %v1376 = vmul.f32 %v1373, %v1375
    %v1377 = vadd.f32 %v1373, %v1376
    %vm1378 = vweird.f32 %v1147
    %vm1379 = vweird.f32 %v1373
    %vm1380 = vmor %vm1378, %vm1379
    %v1381 = vsel %vm1380, %v1373, %v1377
    %v1382 = vand.u32 2147483647, %v1147
    %vm1383 = vcmp.eq.f32.partialorder %v1382, 8.507059e+37
    %v1384 = vand.u32 %v1147, 2147483648
    %v1385 = vor.u32 1.1754944e-38, %v1384
    %v1386 = vsel %vm1383, %v1385, %v1381
    %v1387 = vmul.f32 %v43, %v1386
    %v1404 = vrot.slane %v876, 6
    %v1405 = vrot.slane %v877, 6
    %v1406 = vrot.slane %v878, 6
    %v1407 = vrot.slane %v879, 6
    %v1408 = vrot.slane %v880, 6
    %v1409 = vrot.slane %v881, 6
    %v1410 = vrot.slane %v882, 6
    %v1411 = vrot.slane %v883, 6
    %v1412 = vrot.slane %v884, 6
    %v1413 = vrot.slane %v885, 6
    %v1414 = vrot.slane %v886, 6
    %v1415 = vrot.slane %v887, 6
    %v1416 = vrot.slane %v888, 6
    %v1417 = vrot.slane %v889, 6
    %v1418 = vrot.slane %v890, 6
    %v1419 = vrot.slane %v891, 6
    %v1436 = vrcp.pop %v1404
    %v1437 = vmul.f32 %v1404, %v1436
    %v1438 = vsub.f32 1.0, %v1437
    %v1439 = vmul.f32 %v1436, %v1438
    %v1440 = vadd.f32 %v1436, %v1439
    %vm1441 = vweird.f32 %v1404
    %vm1442 = vweird.f32 %v1436
    %vm1443 = vmor %vm1441, %vm1442
    %v1444 = vsel %vm1443, %v1436, %v1440
    %v1445 = vand.u32 2147483647, %v1404
    %vm1446 = vcmp.eq.f32.partialorder %v1445, 8.507059e+37
    %v1447 = vand.u32 %v1404, 2147483648
    %v1448 = vor.u32 1.1754944e-38, %v1447
    %v1449 = vsel %vm1446, %v1448, %v1444
    %v1450 = vmul.f32 %v1052, %v1449
    %v1451 = vrcp.pop %v1405
    %v1452 = vmul.f32 %v1405, %v1451
    %v1453 = vsub.f32 1.0, %v1452
    %v1454 = vmul.f32 %v1451, %v1453
    %v1455 = vadd.f32 %v1451, %v1454
    %vm1456 = vweird.f32 %v1405
    %vm1457 = vweird.f32 %v1451
    %vm1458 = vmor %vm1456, %vm1457
    %v1459 = vsel %vm1458, %v1451, %v1455
    %v1460 = vand.u32 2147483647, %v1405
    %vm1461 = vcmp.eq.f32.partialorder %v1460, 8.507059e+37
    %v1462 = vand.u32 %v1405, 2147483648
    %v1463 = vor.u32 1.1754944e-38, %v1462
    %v1464 = vsel %vm1461, %v1463, %v1459
    %v1465 = vmul.f32 %v1053, %v1464
    %v1466 = vrcp.pop %v1406
    %v1467 = vmul.f32 %v1406, %v1466
    %v1468 = vsub.f32 1.0, %v1467
    %v1469 = vmul.f32 %v1466, %v1468
    %v1470 = vadd.f32 %v1466, %v1469
    %vm1471 = vweird.f32 %v1406
    %vm1472 = vweird.f32 %v1466
    %vm1473 = vmor %vm1471, %vm1472
    %v1474 = vsel %vm1473, %v1466, %v1470
    %v1475 = vand.u32 2147483647, %v1406
    %vm1476 = vcmp.eq.f32.partialorder %v1475, 8.507059e+37
    %v1477 = vand.u32 %v1406, 2147483648
    %v1478 = vor.u32 1.1754944e-38, %v1477
    %v1479 = vsel %vm1476, %v1478, %v1474
    %v1480 = vmul.f32 %v1054, %v1479
    %v1481 = vrcp.pop %v1407
    %v1482 = vmul.f32 %v1407, %v1481
    %v1483 = vsub.f32 1.0, %v1482
    %v1484 = vmul.f32 %v1481, %v1483
    %v1485 = vadd.f32 %v1481, %v1484
    %vm1486 = vweird.f32 %v1407
    %vm1487 = vweird.f32 %v1481
    %vm1488 = vmor %vm1486, %vm1487
    %v1489 = vsel %vm1488, %v1481, %v1485
    %v1490 = vand.u32 2147483647, %v1407
    %vm1491 = vcmp.eq.f32.partialorder %v1490, 8.507059e+37
    %v1492 = vand.u32 %v1407, 2147483648
    %v1493 = vor.u32 1.1754944e-38, %v1492
    %v1494 = vsel %vm1491, %v1493, %v1489
    %v1495 = vmul.f32 %v1055, %v1494
    %v1496 = vrcp.pop %v1408
    %v1497 = vmul.f32 %v1408, %v1496
    %v1498 = vsub.f32 1.0, %v1497
    %v1499 = vmul.f32 %v1496, %v1498
    %v1500 = vadd.f32 %v1496, %v1499
    %vm1501 = vweird.f32 %v1408
    %vm1502 = vweird.f32 %v1496
    %vm1503 = vmor %vm1501, %vm1502
    %v1504 = vsel %vm1503, %v1496, %v1500
    %v1505 = vand.u32 2147483647, %v1408
    %vm1506 = vcmp.eq.f32.partialorder %v1505, 8.507059e+37
    %v1507 = vand.u32 %v1408, 2147483648
    %v1508 = vor.u32 1.1754944e-38, %v1507
    %v1509 = vsel %vm1506, %v1508, %v1504
    %v1510 = vmul.f32 %v1056, %v1509
    %v1511 = vrcp.pop %v1409
    %v1512 = vmul.f32 %v1409, %v1511
    %v1513 = vsub.f32 1.0, %v1512
    %v1514 = vmul.f32 %v1511, %v1513
    %v1515 = vadd.f32 %v1511, %v1514
    %vm1516 = vweird.f32 %v1409
    %vm1517 = vweird.f32 %v1511
    %vm1518 = vmor %vm1516, %vm1517
    %v1519 = vsel %vm1518, %v1511, %v1515
    %v1520 = vand.u32 2147483647, %v1409
    %vm1521 = vcmp.eq.f32.partialorder %v1520, 8.507059e+37
    %v1522 = vand.u32 %v1409, 2147483648
    %v1523 = vor.u32 1.1754944e-38, %v1522
    %v1524 = vsel %vm1521, %v1523, %v1519
    %v1525 = vmul.f32 %v1057, %v1524
    %v1526 = vrcp.pop %v1410
    %v1527 = vmul.f32 %v1410, %v1526
    %v1528 = vsub.f32 1.0, %v1527
    %v1529 = vmul.f32 %v1526, %v1528
    %v1530 = vadd.f32 %v1526, %v1529
    %vm1531 = vweird.f32 %v1410
    %vm1532 = vweird.f32 %v1526
    %vm1533 = vmor %vm1531, %vm1532
    %v1534 = vsel %vm1533, %v1526, %v1530
    %v1535 = vand.u32 2147483647, %v1410
    %vm1536 = vcmp.eq.f32.partialorder %v1535, 8.507059e+37
    %v1537 = vand.u32 %v1410, 2147483648
    %v1538 = vor.u32 1.1754944e-38, %v1537
    %v1539 = vsel %vm1536, %v1538, %v1534
    %v1540 = vmul.f32 %v1058, %v1539
    %v1541 = vrcp.pop %v1411
    %v1542 = vmul.f32 %v1411, %v1541
    %v1543 = vsub.f32 1.0, %v1542
    %v1544 = vmul.f32 %v1541, %v1543
    %v1545 = vadd.f32 %v1541, %v1544
    %vm1546 = vweird.f32 %v1411
    %vm1547 = vweird.f32 %v1541
    %vm1548 = vmor %vm1546, %vm1547
    %v1549 = vsel %vm1548, %v1541, %v1545
    %v1550 = vand.u32 2147483647, %v1411
    %vm1551 = vcmp.eq.f32.partialorder %v1550, 8.507059e+37
    %v1552 = vand.u32 %v1411, 2147483648
    %v1553 = vor.u32 1.1754944e-38, %v1552
    %v1554 = vsel %vm1551, %v1553, %v1549
    %v1555 = vmul.f32 %v1059, %v1554
    %v1556 = vrcp.pop %v1412
    %v1557 = vmul.f32 %v1412, %v1556
    %v1558 = vsub.f32 1.0, %v1557
    %v1559 = vmul.f32 %v1556, %v1558
    %v1560 = vadd.f32 %v1556, %v1559
    %vm1561 = vweird.f32 %v1412
    %vm1562 = vweird.f32 %v1556
    %vm1563 = vmor %vm1561, %vm1562
    %v1564 = vsel %vm1563, %v1556, %v1560
    %v1565 = vand.u32 2147483647, %v1412
    %vm1566 = vcmp.eq.f32.partialorder %v1565, 8.507059e+37
    %v1567 = vand.u32 %v1412, 2147483648
    %v1568 = vor.u32 1.1754944e-38, %v1567
    %v1569 = vsel %vm1566, %v1568, %v1564
    %v1570 = vmul.f32 %v1060, %v1569
    %v1571 = vrcp.pop %v1413
    %v1572 = vmul.f32 %v1413, %v1571
    %v1573 = vsub.f32 1.0, %v1572
    %v1574 = vmul.f32 %v1571, %v1573
    %v1575 = vadd.f32 %v1571, %v1574
    %vm1576 = vweird.f32 %v1413
    %vm1577 = vweird.f32 %v1571
    %vm1578 = vmor %vm1576, %vm1577
    %v1579 = vsel %vm1578, %v1571, %v1575
    %v1580 = vand.u32 2147483647, %v1413
    %vm1581 = vcmp.eq.f32.partialorder %v1580, 8.507059e+37
    %v1582 = vand.u32 %v1413, 2147483648
    %v1583 = vor.u32 1.1754944e-38, %v1582
    %v1584 = vsel %vm1581, %v1583, %v1579
    %v1585 = vmul.f32 %v1061, %v1584
    %v1586 = vrcp.pop %v1414
    %v1587 = vmul.f32 %v1414, %v1586
    %v1588 = vsub.f32 1.0, %v1587
    %v1589 = vmul.f32 %v1586, %v1588
    %v1590 = vadd.f32 %v1586, %v1589
    %vm1591 = vweird.f32 %v1414
    %vm1592 = vweird.f32 %v1586
    %vm1593 = vmor %vm1591, %vm1592
    %v1594 = vsel %vm1593, %v1586, %v1590
    %v1595 = vand.u32 2147483647, %v1414
    %vm1596 = vcmp.eq.f32.partialorder %v1595, 8.507059e+37
    %v1597 = vand.u32 %v1414, 2147483648
    %v1598 = vor.u32 1.1754944e-38, %v1597
    %v1599 = vsel %vm1596, %v1598, %v1594
    %v1600 = vmul.f32 %v1062, %v1599
    %v1601 = vrcp.pop %v1415
    %v1602 = vmul.f32 %v1415, %v1601
    %v1603 = vsub.f32 1.0, %v1602
    %v1604 = vmul.f32 %v1601, %v1603
    %v1605 = vadd.f32 %v1601, %v1604
    %vm1606 = vweird.f32 %v1415
    %vm1607 = vweird.f32 %v1601
    %vm1608 = vmor %vm1606, %vm1607
    %v1609 = vsel %vm1608, %v1601, %v1605
    %v1610 = vand.u32 2147483647, %v1415
    %vm1611 = vcmp.eq.f32.partialorder %v1610, 8.507059e+37
    %v1612 = vand.u32 %v1415, 2147483648
    %v1613 = vor.u32 1.1754944e-38, %v1612
    %v1614 = vsel %vm1611, %v1613, %v1609
    %v1615 = vmul.f32 %v1063, %v1614
    %v1616 = vrcp.pop %v1416
    %v1617 = vmul.f32 %v1416, %v1616
    %v1618 = vsub.f32 1.0, %v1617
    %v1619 = vmul.f32 %v1616, %v1618
    %v1620 = vadd.f32 %v1616, %v1619
    %vm1621 = vweird.f32 %v1416
    %vm1622 = vweird.f32 %v1616
    %vm1623 = vmor %vm1621, %vm1622
    %v1624 = vsel %vm1623, %v1616, %v1620
    %v1625 = vand.u32 2147483647, %v1416
    %vm1626 = vcmp.eq.f32.partialorder %v1625, 8.507059e+37
    %v1627 = vand.u32 %v1416, 2147483648
    %v1628 = vor.u32 1.1754944e-38, %v1627
    %v1629 = vsel %vm1626, %v1628, %v1624
    %v1630 = vmul.f32 %v1064, %v1629
    %v1631 = vrcp.pop %v1417
    %v1632 = vmul.f32 %v1417, %v1631
    %v1633 = vsub.f32 1.0, %v1632
    %v1634 = vmul.f32 %v1631, %v1633
    %v1635 = vadd.f32 %v1631, %v1634
    %vm1636 = vweird.f32 %v1417
    %vm1637 = vweird.f32 %v1631
    %vm1638 = vmor %vm1636, %vm1637
    %v1639 = vsel %vm1638, %v1631, %v1635
    %v1640 = vand.u32 2147483647, %v1417
    %vm1641 = vcmp.eq.f32.partialorder %v1640, 8.507059e+37
    %v1642 = vand.u32 %v1417, 2147483648
    %v1643 = vor.u32 1.1754944e-38, %v1642
    %v1644 = vsel %vm1641, %v1643, %v1639
    %v1645 = vmul.f32 %v1065, %v1644
    %v1646 = vrcp.pop %v1418
    %v1647 = vmul.f32 %v1418, %v1646
    %v1648 = vsub.f32 1.0, %v1647
    %v1649 = vmul.f32 %v1646, %v1648
    %v1650 = vadd.f32 %v1646, %v1649
    %vm1651 = vweird.f32 %v1418
    %vm1652 = vweird.f32 %v1646
    %vm1653 = vmor %vm1651, %vm1652
    %v1654 = vsel %vm1653, %v1646, %v1650
    %v1655 = vand.u32 2147483647, %v1418
    %vm1656 = vcmp.eq.f32.partialorder %v1655, 8.507059e+37
    %v1657 = vand.u32 %v1418, 2147483648
    %v1658 = vor.u32 1.1754944e-38, %v1657
    %v1659 = vsel %vm1656, %v1658, %v1654
    %v1660 = vmul.f32 %v1066, %v1659
    %v1661 = vrcp.pop %v1419
    %v1662 = vmul.f32 %v1419, %v1661
    %v1663 = vsub.f32 1.0, %v1662
    %v1664 = vmul.f32 %v1661, %v1663
    %v1665 = vadd.f32 %v1661, %v1664
    %vm1666 = vweird.f32 %v1419
    %vm1667 = vweird.f32 %v1661
    %vm1668 = vmor %vm1666, %vm1667
    %v1669 = vsel %vm1668, %v1661, %v1665
    %v1670 = vand.u32 2147483647, %v1419
    %vm1671 = vcmp.eq.f32.partialorder %v1670, 8.507059e+37
    %v1672 = vand.u32 %v1419, 2147483648
    %v1673 = vor.u32 1.1754944e-38, %v1672
    %v1674 = vsel %vm1671, %v1673, %v1669
    %v1675 = vmul.f32 %v1067, %v1674
    %v1676 = vmul.f32 %v28, %v1162
    %v1677 = vmul.f32 %v29, %v1177
    %v1678 = vmul.f32 %v30, %v1192
    %v1679 = vmul.f32 %v31, %v1207
    %v1680 = vmul.f32 %v32, %v1222
    %v1681 = vmul.f32 %v33, %v1237
    %v1682 = vmul.f32 %v34, %v1252
    %v1683 = vmul.f32 %v35, %v1267
    %v1684 = vmul.f32 %v36, %v1282
    %v1685 = vmul.f32 %v37, %v1297
    %v1686 = vmul.f32 %v38, %v1312
    %v1687 = vmul.f32 %v39, %v1327
    %v1688 = vmul.f32 %v40, %v1342
    %v1689 = vmul.f32 %v41, %v1357
    %v1690 = vmul.f32 %v42, %v1372
    %v1691 = vmul.f32 %v43, %v1387
    %v1708 = vrot.slane %v1676, 1
    %v1709 = vrot.slane %v1677, 1
    %v1710 = vrot.slane %v1678, 1
    %v1711 = vrot.slane %v1679, 1
    %v1712 = vrot.slane %v1680, 1
    %v1713 = vrot.slane %v1681, 1
    %v1714 = vrot.slane %v1682, 1
    %v1715 = vrot.slane %v1683, 1
    %v1716 = vrot.slane %v1684, 1
    %v1717 = vrot.slane %v1685, 1
    %v1718 = vrot.slane %v1686, 1
    %v1719 = vrot.slane %v1687, 1
    %v1720 = vrot.slane %v1688, 1
    %v1721 = vrot.slane %v1689, 1
    %v1722 = vrot.slane %v1690, 1
    %v1723 = vrot.slane %v1691, 1
    %v1740 = vadd.f32 %v1450, %v1708
    %v1741 = vadd.f32 %v1465, %v1709
    %v1742 = vadd.f32 %v1480, %v1710
    %v1743 = vadd.f32 %v1495, %v1711
    %v1744 = vadd.f32 %v1510, %v1712
    %v1745 = vadd.f32 %v1525, %v1713
    %v1746 = vadd.f32 %v1540, %v1714
    %v1747 = vadd.f32 %v1555, %v1715
    %v1748 = vadd.f32 %v1570, %v1716
    %v1749 = vadd.f32 %v1585, %v1717
    %v1750 = vadd.f32 %v1600, %v1718
    %v1751 = vadd.f32 %v1615, %v1719
    %v1752 = vadd.f32 %v1630, %v1720
    %v1753 = vadd.f32 %v1645, %v1721
    %v1754 = vadd.f32 %v1660, %v1722
    %v1755 = vadd.f32 %v1675, %v1723
    %v1772 = vrot.slane %v1740, 2
    %v1773 = vrot.slane %v1741, 2
    %v1774 = vrot.slane %v1742, 2
    %v1775 = vrot.slane %v1743, 2
    %v1776 = vrot.slane %v1744, 2
    %v1777 = vrot.slane %v1745, 2
    %v1778 = vrot.slane %v1746, 2
    %v1779 = vrot.slane %v1747, 2
    %v1780 = vrot.slane %v1748, 2
    %v1781 = vrot.slane %v1749, 2
    %v1782 = vrot.slane %v1750, 2
    %v1783 = vrot.slane %v1751, 2
    %v1784 = vrot.slane %v1752, 2
    %v1785 = vrot.slane %v1753, 2
    %v1786 = vrot.slane %v1754, 2
    %v1787 = vrot.slane %v1755, 2
    %v1804 = vsub.f32 %v506, %v1772
    %v1805 = vsub.f32 %v521, %v1773
    %v1806 = vsub.f32 %v536, %v1774
    %v1807 = vsub.f32 %v551, %v1775
    %v1808 = vsub.f32 %v566, %v1776
    %v1809 = vsub.f32 %v581, %v1777
    %v1810 = vsub.f32 %v596, %v1778
    %v1811 = vsub.f32 %v611, %v1779
    %v1812 = vsub.f32 %v626, %v1780
    %v1813 = vsub.f32 %v641, %v1781
    %v1814 = vsub.f32 %v656, %v1782
    %v1815 = vsub.f32 %v671, %v1783
    %v1816 = vsub.f32 %v686, %v1784
    %v1817 = vsub.f32 %v701, %v1785
    %v1818 = vsub.f32 %v716, %v1786
    %v1819 = vsub.f32 %v731, %v1787
    %vm1820 = vcmp.gt.f32.partialorder %v28, 0.0
    %vm1821 = vcmp.gt.f32.partialorder %v29, 0.0
    %vm1822 = vcmp.gt.f32.partialorder %v30, 0.0
    %vm1823 = vcmp.gt.f32.partialorder %v31, 0.0
    %vm1824 = vcmp.gt.f32.partialorder %v32, 0.0
    %vm1825 = vcmp.gt.f32.partialorder %v33, 0.0
    %vm1826 = vcmp.gt.f32.partialorder %v34, 0.0
    %vm1827 = vcmp.gt.f32.partialorder %v35, 0.0
    %vm1828 = vcmp.gt.f32.partialorder %v36, 0.0
    %vm1829 = vcmp.gt.f32.partialorder %v37, 0.0
    %vm1830 = vcmp.gt.f32.partialorder %v38, 0.0
    %vm1831 = vcmp.gt.f32.partialorder %v39, 0.0
    %vm1832 = vcmp.gt.f32.partialorder %v40, 0.0
    %vm1833 = vcmp.gt.f32.partialorder %v41, 0.0
    %vm1834 = vcmp.gt.f32.partialorder %v42, 0.0
    %vm1835 = vcmp.gt.f32.partialorder %v43, 0.0
    %v1836 = vsub.f32 1.0, %v1804
    %v1837 = vsub.f32 1.0, %v1805
    %v1838 = vsub.f32 1.0, %v1806
    %v1839 = vsub.f32 1.0, %v1807
    %v1840 = vsub.f32 1.0, %v1808
    %v1841 = vsub.f32 1.0, %v1809
    %v1842 = vsub.f32 1.0, %v1810
    %v1843 = vsub.f32 1.0, %v1811
    %v1844 = vsub.f32 1.0, %v1812
    %v1845 = vsub.f32 1.0, %v1813
    %v1846 = vsub.f32 1.0, %v1814
    %v1847 = vsub.f32 1.0, %v1815
    %v1848 = vsub.f32 1.0, %v1816
    %v1849 = vsub.f32 1.0, %v1817
    %v1850 = vsub.f32 1.0, %v1818
    %v1851 = vsub.f32 1.0, %v1819
    %v1852 = vmul.f32 %v1836, %v28
    %v1853 = vmul.f32 %v1837, %v29
    %v1854 = vmul.f32 %v1838, %v30
    %v1855 = vmul.f32 %v1839, %v31
    %v1856 = vmul.f32 %v1840, %v32
    %v1857 = vmul.f32 %v1841, %v33
    %v1858 = vmul.f32 %v1842, %v34
    %v1859 = vmul.f32 %v1843, %v35
    %v1860 = vmul.f32 %v1844, %v36
    %v1861 = vmul.f32 %v1845, %v37
    %v1862 = vmul.f32 %v1846, %v38
    %v1863 = vmul.f32 %v1847, %v39
    %v1864 = vmul.f32 %v1848, %v40
    %v1865 = vmul.f32 %v1849, %v41
    %v1866 = vmul.f32 %v1850, %v42
    %v1867 = vmul.f32 %v1851, %v43
    %v1884 = vrot.slane %v1852, 7
    %v1885 = vrot.slane %v1853, 7
    %v1886 = vrot.slane %v1854, 7
    %v1887 = vrot.slane %v1855, 7
    %v1888 = vrot.slane %v1856, 7
    %v1889 = vrot.slane %v1857, 7
    %v1890 = vrot.slane %v1858, 7
    %v1891 = vrot.slane %v1859, 7
    %v1892 = vrot.slane %v1860, 7
    %v1893 = vrot.slane %v1861, 7
    %v1894 = vrot.slane %v1862, 7
    %v1895 = vrot.slane %v1863, 7
    %v1896 = vrot.slane %v1864, 7
    %v1897 = vrot.slane %v1865, 7
    %v1898 = vrot.slane %v1866, 7
    %v1899 = vrot.slane %v1867, 7
    %v1916 = vsel %vm1820, %v1884, 0.0
    %v1917 = vsel %vm1821, %v1885, 0.0
    %v1918 = vsel %vm1822, %v1886, 0.0
    %v1919 = vsel %vm1823, %v1887, 0.0
    %v1920 = vsel %vm1824, %v1888, 0.0
    %v1921 = vsel %vm1825, %v1889, 0.0
    %v1922 = vsel %vm1826, %v1890, 0.0
    %v1923 = vsel %vm1827, %v1891, 0.0
    %v1924 = vsel %vm1828, %v1892, 0.0
    %v1925 = vsel %vm1829, %v1893, 0.0
    %v1926 = vsel %vm1830, %v1894, 0.0
    %v1927 = vsel %vm1831, %v1895, 0.0
    %v1928 = vsel %vm1832, %v1896, 0.0
    %v1929 = vsel %vm1833, %v1897, 0.0
    %v1930 = vsel %vm1834, %v1898, 0.0
    %v1931 = vsel %vm1835, %v1899, 0.0
    %v1948 = vrot.slane %v28, 4
    %v1949 = vrot.slane %v29, 4
    %v1950 = vrot.slane %v30, 4
    %v1951 = vrot.slane %v31, 4
    %v1952 = vrot.slane %v32, 4
    %v1953 = vrot.slane %v33, 4
    %v1954 = vrot.slane %v34, 4
    %v1955 = vrot.slane %v35, 4
    %v1956 = vrot.slane %v36, 4
    %v1957 = vrot.slane %v37, 4
    %v1958 = vrot.slane %v38, 4
    %v1959 = vrot.slane %v39, 4
    %v1960 = vrot.slane %v40, 4
    %v1961 = vrot.slane %v41, 4
    %v1962 = vrot.slane %v42, 4
    %v1963 = vrot.slane %v43, 4
    %v1980 = vrcp.pop %v1948
    %v1981 = vmul.f32 %v1948, %v1980
    %v1982 = vsub.f32 1.0, %v1981
    %v1983 = vmul.f32 %v1980, %v1982
    %v1984 = vadd.f32 %v1980, %v1983
    %vm1985 = vweird.f32 %v1948
    %vm1986 = vweird.f32 %v1980
    %vm1987 = vmor %vm1985, %vm1986
    %v1988 = vsel %vm1987, %v1980, %v1984
    %v1989 = vand.u32 2147483647, %v1948
    %vm1990 = vcmp.eq.f32.partialorder %v1989, 8.507059e+37
    %v1991 = vand.u32 %v1948, 2147483648
    %v1992 = vor.u32 1.1754944e-38, %v1991
    %v1993 = vsel %vm1990, %v1992, %v1988
    %v1994 = vmul.f32 %v28, %v1993
    %v1995 = vrcp.pop %v1949
    %v1996 = vmul.f32 %v1949, %v1995
    %v1997 = vsub.f32 1.0, %v1996
    %v1998 = vmul.f32 %v1995, %v1997
    %v1999 = vadd.f32 %v1995, %v1998
    %vm2000 = vweird.f32 %v1949
    %vm2001 = vweird.f32 %v1995
    %vm2002 = vmor %vm2000, %vm2001
    %v2003 = vsel %vm2002, %v1995, %v1999
    %v2004 = vand.u32 2147483647, %v1949
    %vm2005 = vcmp.eq.f32.partialorder %v2004, 8.507059e+37
    %v2006 = vand.u32 %v1949, 2147483648
    %v2007 = vor.u32 1.1754944e-38, %v2006
    %v2008 = vsel %vm2005, %v2007, %v2003
    %v2009 = vmul.f32 %v29, %v2008
    %v2010 = vrcp.pop %v1950
    %v2011 = vmul.f32 %v1950, %v2010
    %v2012 = vsub.f32 1.0, %v2011
    %v2013 = vmul.f32 %v2010, %v2012
    %v2014 = vadd.f32 %v2010, %v2013
    %vm2015 = vweird.f32 %v1950
    %vm2016 = vweird.f32 %v2010
    %vm2017 = vmor %vm2015, %vm2016
    %v2018 = vsel %vm2017, %v2010, %v2014
    %v2019 = vand.u32 2147483647, %v1950
    %vm2020 = vcmp.eq.f32.partialorder %v2019, 8.507059e+37
    %v2021 = vand.u32 %v1950, 2147483648
    %v2022 = vor.u32 1.1754944e-38, %v2021
    %v2023 = vsel %vm2020, %v2022, %v2018
    %v2024 = vmul.f32 %v30, %v2023
    %v2025 = vrcp.pop %v1951
    %v2026 = vmul.f32 %v1951, %v2025
    %v2027 = vsub.f32 1.0, %v2026
    %v2028 = vmul.f32 %v2025, %v2027
    %v2029 = vadd.f32 %v2025, %v2028
    %vm2030 = vweird.f32 %v1951
    %vm2031 = vweird.f32 %v2025
    %vm2032 = vmor %vm2030, %vm2031
    %v2033 = vsel %vm2032, %v2025, %v2029
    %v2034 = vand.u32 2147483647, %v1951
    %vm2035 = vcmp.eq.f32.partialorder %v2034, 8.507059e+37
    %v2036 = vand.u32 %v1951, 2147483648
    %v2037 = vor.u32 1.1754944e-38, %v2036
    %v2038 = vsel %vm2035, %v2037, %v2033
    %v2039 = vmul.f32 %v31, %v2038
    %v2040 = vrcp.pop %v1952
    %v2041 = vmul.f32 %v1952, %v2040
    %v2042 = vsub.f32 1.0, %v2041
    %v2043 = vmul.f32 %v2040, %v2042
    %v2044 = vadd.f32 %v2040, %v2043
    %vm2045 = vweird.f32 %v1952
    %vm2046 = vweird.f32 %v2040
    %vm2047 = vmor %vm2045, %vm2046
    %v2048 = vsel %vm2047, %v2040, %v2044
    %v2049 = vand.u32 2147483647, %v1952
    %vm2050 = vcmp.eq.f32.partialorder %v2049, 8.507059e+37
    %v2051 = vand.u32 %v1952, 2147483648
    %v2052 = vor.u32 1.1754944e-38, %v2051
    %v2053 = vsel %vm2050, %v2052, %v2048
    %v2054 = vmul.f32 %v32, %v2053
    %v2055 = vrcp.pop %v1953
    %v2056 = vmul.f32 %v1953, %v2055
    %v2057 = vsub.f32 1.0, %v2056
    %v2058 = vmul.f32 %v2055, %v2057
    %v2059 = vadd.f32 %v2055, %v2058
    %vm2060 = vweird.f32 %v1953
    %vm2061 = vweird.f32 %v2055
    %vm2062 = vmor %vm2060, %vm2061
    %v2063 = vsel %vm2062, %v2055, %v2059
    %v2064 = vand.u32 2147483647, %v1953
    %vm2065 = vcmp.eq.f32.partialorder %v2064, 8.507059e+37
    %v2066 = vand.u32 %v1953, 2147483648
    %v2067 = vor.u32 1.1754944e-38, %v2066
    %v2068 = vsel %vm2065, %v2067, %v2063
    %v2069 = vmul.f32 %v33, %v2068
    %v2070 = vrcp.pop %v1954
    %v2071 = vmul.f32 %v1954, %v2070
    %v2072 = vsub.f32 1.0, %v2071
    %v2073 = vmul.f32 %v2070, %v2072
    %v2074 = vadd.f32 %v2070, %v2073
    %vm2075 = vweird.f32 %v1954
    %vm2076 = vweird.f32 %v2070
    %vm2077 = vmor %vm2075, %vm2076
    %v2078 = vsel %vm2077, %v2070, %v2074
    %v2079 = vand.u32 2147483647, %v1954
    %vm2080 = vcmp.eq.f32.partialorder %v2079, 8.507059e+37
    %v2081 = vand.u32 %v1954, 2147483648
    %v2082 = vor.u32 1.1754944e-38, %v2081
    %v2083 = vsel %vm2080, %v2082, %v2078
    %v2084 = vmul.f32 %v34, %v2083
    %v2085 = vrcp.pop %v1955
    %v2086 = vmul.f32 %v1955, %v2085
    %v2087 = vsub.f32 1.0, %v2086
    %v2088 = vmul.f32 %v2085, %v2087
    %v2089 = vadd.f32 %v2085, %v2088
    %vm2090 = vweird.f32 %v1955
    %vm2091 = vweird.f32 %v2085
    %vm2092 = vmor %vm2090, %vm2091
    %v2093 = vsel %vm2092, %v2085, %v2089
    %v2094 = vand.u32 2147483647, %v1955
    %vm2095 = vcmp.eq.f32.partialorder %v2094, 8.507059e+37
    %v2096 = vand.u32 %v1955, 2147483648
    %v2097 = vor.u32 1.1754944e-38, %v2096
    %v2098 = vsel %vm2095, %v2097, %v2093
    %v2099 = vmul.f32 %v35, %v2098
    %v2100 = vrcp.pop %v1956
    %v2101 = vmul.f32 %v1956, %v2100
    %v2102 = vsub.f32 1.0, %v2101
    %v2103 = vmul.f32 %v2100, %v2102
    %v2104 = vadd.f32 %v2100, %v2103
    %vm2105 = vweird.f32 %v1956
    %vm2106 = vweird.f32 %v2100
    %vm2107 = vmor %vm2105, %vm2106
    %v2108 = vsel %vm2107, %v2100, %v2104
    %v2109 = vand.u32 2147483647, %v1956
    %vm2110 = vcmp.eq.f32.partialorder %v2109, 8.507059e+37
    %v2111 = vand.u32 %v1956, 2147483648
    %v2112 = vor.u32 1.1754944e-38, %v2111
    %v2113 = vsel %vm2110, %v2112, %v2108
    %v2114 = vmul.f32 %v36, %v2113
    %v2115 = vrcp.pop %v1957
    %v2116 = vmul.f32 %v1957, %v2115
    %v2117 = vsub.f32 1.0, %v2116
    %v2118 = vmul.f32 %v2115, %v2117
    %v2119 = vadd.f32 %v2115, %v2118
    %vm2120 = vweird.f32 %v1957
    %vm2121 = vweird.f32 %v2115
    %vm2122 = vmor %vm2120, %vm2121
    %v2123 = vsel %vm2122, %v2115, %v2119
    %v2124 = vand.u32 2147483647, %v1957
    %vm2125 = vcmp.eq.f32.partialorder %v2124, 8.507059e+37
    %v2126 = vand.u32 %v1957, 2147483648
    %v2127 = vor.u32 1.1754944e-38, %v2126
    %v2128 = vsel %vm2125, %v2127, %v2123
    %v2129 = vmul.f32 %v37, %v2128
    %v2130 = vrcp.pop %v1958
    %v2131 = vmul.f32 %v1958, %v2130
    %v2132 = vsub.f32 1.0, %v2131
    %v2133 = vmul.f32 %v2130, %v2132
    %v2134 = vadd.f32 %v2130, %v2133
    %vm2135 = vweird.f32 %v1958
    %vm2136 = vweird.f32 %v2130
    %vm2137 = vmor %vm2135, %vm2136
    %v2138 = vsel %vm2137, %v2130, %v2134
    %v2139 = vand.u32 2147483647, %v1958
    %vm2140 = vcmp.eq.f32.partialorder %v2139, 8.507059e+37
    %v2141 = vand.u32 %v1958, 2147483648
    %v2142 = vor.u32 1.1754944e-38, %v2141
    %v2143 = vsel %vm2140, %v2142, %v2138
    %v2144 = vmul.f32 %v38, %v2143
    %v2145 = vrcp.pop %v1959
    %v2146 = vmul.f32 %v1959, %v2145
    %v2147 = vsub.f32 1.0, %v2146
    %v2148 = vmul.f32 %v2145, %v2147
    %v2149 = vadd.f32 %v2145, %v2148
    %vm2150 = vweird.f32 %v1959
    %vm2151 = vweird.f32 %v2145
    %vm2152 = vmor %vm2150, %vm2151
    %v2153 = vsel %vm2152, %v2145, %v2149
    %v2154 = vand.u32 2147483647, %v1959
    %vm2155 = vcmp.eq.f32.partialorder %v2154, 8.507059e+37
    %v2156 = vand.u32 %v1959, 2147483648
    %v2157 = vor.u32 1.1754944e-38, %v2156
    %v2158 = vsel %vm2155, %v2157, %v2153
    %v2159 = vmul.f32 %v39, %v2158
    %v2160 = vrcp.pop %v1960
    %v2161 = vmul.f32 %v1960, %v2160
    %v2162 = vsub.f32 1.0, %v2161
    %v2163 = vmul.f32 %v2160, %v2162
    %v2164 = vadd.f32 %v2160, %v2163
    %vm2165 = vweird.f32 %v1960
    %vm2166 = vweird.f32 %v2160
    %vm2167 = vmor %vm2165, %vm2166
    %v2168 = vsel %vm2167, %v2160, %v2164
    %v2169 = vand.u32 2147483647, %v1960
    %vm2170 = vcmp.eq.f32.partialorder %v2169, 8.507059e+37
    %v2171 = vand.u32 %v1960, 2147483648
    %v2172 = vor.u32 1.1754944e-38, %v2171
    %v2173 = vsel %vm2170, %v2172, %v2168
    %v2174 = vmul.f32 %v40, %v2173
    %v2175 = vrcp.pop %v1961
    %v2176 = vmul.f32 %v1961, %v2175
    %v2177 = vsub.f32 1.0, %v2176
    %v2178 = vmul.f32 %v2175, %v2177
    %v2179 = vadd.f32 %v2175, %v2178
    %vm2180 = vweird.f32 %v1961
    %vm2181 = vweird.f32 %v2175
    %vm2182 = vmor %vm2180, %vm2181
    %v2183 = vsel %vm2182, %v2175, %v2179
    %v2184 = vand.u32 2147483647, %v1961
    %vm2185 = vcmp.eq.f32.partialorder %v2184, 8.507059e+37
    %v2186 = vand.u32 %v1961, 2147483648
    %v2187 = vor.u32 1.1754944e-38, %v2186
    %v2188 = vsel %vm2185, %v2187, %v2183
    %v2189 = vmul.f32 %v41, %v2188
    %v2190 = vrcp.pop %v1962
    %v2191 = vmul.f32 %v1962, %v2190
    %v2192 = vsub.f32 1.0, %v2191
    %v2193 = vmul.f32 %v2190, %v2192
    %v2194 = vadd.f32 %v2190, %v2193
    %vm2195 = vweird.f32 %v1962
    %vm2196 = vweird.f32 %v2190
    %vm2197 = vmor %vm2195, %vm2196
    %v2198 = vsel %vm2197, %v2190, %v2194
    %v2199 = vand.u32 2147483647, %v1962
    %vm2200 = vcmp.eq.f32.partialorder %v2199, 8.507059e+37
    %v2201 = vand.u32 %v1962, 2147483648
    %v2202 = vor.u32 1.1754944e-38, %v2201
    %v2203 = vsel %vm2200, %v2202, %v2198
    %v2204 = vmul.f32 %v42, %v2203
    %v2205 = vrcp.pop %v1963
    %v2206 = vmul.f32 %v1963, %v2205
    %v2207 = vsub.f32 1.0, %v2206
    %v2208 = vmul.f32 %v2205, %v2207
    %v2209 = vadd.f32 %v2205, %v2208
    %vm2210 = vweird.f32 %v1963
    %vm2211 = vweird.f32 %v2205
    %vm2212 = vmor %vm2210, %vm2211
    %v2213 = vsel %vm2212, %v2205, %v2209
    %v2214 = vand.u32 2147483647, %v1963
    %vm2215 = vcmp.eq.f32.partialorder %v2214, 8.507059e+37
    %v2216 = vand.u32 %v1963, 2147483648
    %v2217 = vor.u32 1.1754944e-38, %v2216
    %v2218 = vsel %vm2215, %v2217, %v2213
    %v2219 = vmul.f32 %v43, %v2218
    %v2220 = vrot.slane %v28, 3
    %v2221 = vrot.slane %v29, 3
    %v2222 = vrot.slane %v30, 3
    %v2223 = vrot.slane %v31, 3
    %v2224 = vrot.slane %v32, 3
    %v2225 = vrot.slane %v33, 3
    %v2226 = vrot.slane %v34, 3
    %v2227 = vrot.slane %v35, 3
    %v2228 = vrot.slane %v36, 3
    %v2229 = vrot.slane %v37, 3
    %v2230 = vrot.slane %v38, 3
    %v2231 = vrot.slane %v39, 3
    %v2232 = vrot.slane %v40, 3
    %v2233 = vrot.slane %v41, 3
    %v2234 = vrot.slane %v42, 3
    %v2235 = vrot.slane %v43, 3
    %v2252 = vrcp.pop %v2220
    %v2253 = vmul.f32 %v2220, %v2252
    %v2254 = vsub.f32 1.0, %v2253
    %v2255 = vmul.f32 %v2252, %v2254
    %v2256 = vadd.f32 %v2252, %v2255
    %vm2257 = vweird.f32 %v2220
    %vm2258 = vweird.f32 %v2252
    %vm2259 = vmor %vm2257, %vm2258
    %v2260 = vsel %vm2259, %v2252, %v2256
    %v2261 = vand.u32 2147483647, %v2220
    %vm2262 = vcmp.eq.f32.partialorder %v2261, 8.507059e+37
    %v2263 = vand.u32 %v2220, 2147483648
    %v2264 = vor.u32 1.1754944e-38, %v2263
    %v2265 = vsel %vm2262, %v2264, %v2260
    %v2266 = vmul.f32 %v28, %v2265
    %v2267 = vrcp.pop %v2221
    %v2268 = vmul.f32 %v2221, %v2267
    %v2269 = vsub.f32 1.0, %v2268
    %v2270 = vmul.f32 %v2267, %v2269
    %v2271 = vadd.f32 %v2267, %v2270
    %vm2272 = vweird.f32 %v2221
    %vm2273 = vweird.f32 %v2267
    %vm2274 = vmor %vm2272, %vm2273
    %v2275 = vsel %vm2274, %v2267, %v2271
    %v2276 = vand.u32 2147483647, %v2221
    %vm2277 = vcmp.eq.f32.partialorder %v2276, 8.507059e+37
    %v2278 = vand.u32 %v2221, 2147483648
    %v2279 = vor.u32 1.1754944e-38, %v2278
    %v2280 = vsel %vm2277, %v2279, %v2275
    %v2281 = vmul.f32 %v29, %v2280
    %v2282 = vrcp.pop %v2222
    %v2283 = vmul.f32 %v2222, %v2282
    %v2284 = vsub.f32 1.0, %v2283
    %v2285 = vmul.f32 %v2282, %v2284
    %v2286 = vadd.f32 %v2282, %v2285
    %vm2287 = vweird.f32 %v2222
    %vm2288 = vweird.f32 %v2282
    %vm2289 = vmor %vm2287, %vm2288
    %v2290 = vsel %vm2289, %v2282, %v2286
    %v2291 = vand.u32 2147483647, %v2222
    %vm2292 = vcmp.eq.f32.partialorder %v2291, 8.507059e+37
    %v2293 = vand.u32 %v2222, 2147483648
    %v2294 = vor.u32 1.1754944e-38, %v2293
    %v2295 = vsel %vm2292, %v2294, %v2290
    %v2296 = vmul.f32 %v30, %v2295
    %v2297 = vrcp.pop %v2223
    %v2298 = vmul.f32 %v2223, %v2297
    %v2299 = vsub.f32 1.0, %v2298
    %v2300 = vmul.f32 %v2297, %v2299
    %v2301 = vadd.f32 %v2297, %v2300
    %vm2302 = vweird.f32 %v2223
    %vm2303 = vweird.f32 %v2297
    %vm2304 = vmor %vm2302, %vm2303
    %v2305 = vsel %vm2304, %v2297, %v2301
    %v2306 = vand.u32 2147483647, %v2223
    %vm2307 = vcmp.eq.f32.partialorder %v2306, 8.507059e+37
    %v2308 = vand.u32 %v2223, 2147483648
    %v2309 = vor.u32 1.1754944e-38, %v2308
    %v2310 = vsel %vm2307, %v2309, %v2305
    %v2311 = vmul.f32 %v31, %v2310
    %v2312 = vrcp.pop %v2224
    %v2313 = vmul.f32 %v2224, %v2312
    %v2314 = vsub.f32 1.0, %v2313
    %v2315 = vmul.f32 %v2312, %v2314
    %v2316 = vadd.f32 %v2312, %v2315
    %vm2317 = vweird.f32 %v2224
    %vm2318 = vweird.f32 %v2312
    %vm2319 = vmor %vm2317, %vm2318
    %v2320 = vsel %vm2319, %v2312, %v2316
    %v2321 = vand.u32 2147483647, %v2224
    %vm2322 = vcmp.eq.f32.partialorder %v2321, 8.507059e+37
    %v2323 = vand.u32 %v2224, 2147483648
    %v2324 = vor.u32 1.1754944e-38, %v2323
    %v2325 = vsel %vm2322, %v2324, %v2320
    %v2326 = vmul.f32 %v32, %v2325
    %v2327 = vrcp.pop %v2225
    %v2328 = vmul.f32 %v2225, %v2327
    %v2329 = vsub.f32 1.0, %v2328
    %v2330 = vmul.f32 %v2327, %v2329
    %v2331 = vadd.f32 %v2327, %v2330
    %vm2332 = vweird.f32 %v2225
    %vm2333 = vweird.f32 %v2327
    %vm2334 = vmor %vm2332, %vm2333
    %v2335 = vsel %vm2334, %v2327, %v2331
    %v2336 = vand.u32 2147483647, %v2225
    %vm2337 = vcmp.eq.f32.partialorder %v2336, 8.507059e+37
    %v2338 = vand.u32 %v2225, 2147483648
    %v2339 = vor.u32 1.1754944e-38, %v2338
    %v2340 = vsel %vm2337, %v2339, %v2335
    %v2341 = vmul.f32 %v33, %v2340
    %v2342 = vrcp.pop %v2226
    %v2343 = vmul.f32 %v2226, %v2342
    %v2344 = vsub.f32 1.0, %v2343
    %v2345 = vmul.f32 %v2342, %v2344
    %v2346 = vadd.f32 %v2342, %v2345
    %vm2347 = vweird.f32 %v2226
    %vm2348 = vweird.f32 %v2342
    %vm2349 = vmor %vm2347, %vm2348
    %v2350 = vsel %vm2349, %v2342, %v2346
    %v2351 = vand.u32 2147483647, %v2226
    %vm2352 = vcmp.eq.f32.partialorder %v2351, 8.507059e+37
    %v2353 = vand.u32 %v2226, 2147483648
    %v2354 = vor.u32 1.1754944e-38, %v2353
    %v2355 = vsel %vm2352, %v2354, %v2350
    %v2356 = vmul.f32 %v34, %v2355
    %v2357 = vrcp.pop %v2227
    %v2358 = vmul.f32 %v2227, %v2357
    %v2359 = vsub.f32 1.0, %v2358
    %v2360 = vmul.f32 %v2357, %v2359
    %v2361 = vadd.f32 %v2357, %v2360
    %vm2362 = vweird.f32 %v2227
    %vm2363 = vweird.f32 %v2357
    %vm2364 = vmor %vm2362, %vm2363
    %v2365 = vsel %vm2364, %v2357, %v2361
    %v2366 = vand.u32 2147483647, %v2227
    %vm2367 = vcmp.eq.f32.partialorder %v2366, 8.507059e+37
    %v2368 = vand.u32 %v2227, 2147483648
    %v2369 = vor.u32 1.1754944e-38, %v2368
    %v2370 = vsel %vm2367, %v2369, %v2365
    %v2371 = vmul.f32 %v35, %v2370
    %v2372 = vrcp.pop %v2228
    %v2373 = vmul.f32 %v2228, %v2372
    %v2374 = vsub.f32 1.0, %v2373
    %v2375 = vmul.f32 %v2372, %v2374
    %v2376 = vadd.f32 %v2372, %v2375
    %vm2377 = vweird.f32 %v2228
    %vm2378 = vweird.f32 %v2372
    %vm2379 = vmor %vm2377, %vm2378
    %v2380 = vsel %vm2379, %v2372, %v2376
    %v2381 = vand.u32 2147483647, %v2228
    %vm2382 = vcmp.eq.f32.partialorder %v2381, 8.507059e+37
    %v2383 = vand.u32 %v2228, 2147483648
    %v2384 = vor.u32 1.1754944e-38, %v2383
    %v2385 = vsel %vm2382, %v2384, %v2380
    %v2386 = vmul.f32 %v36, %v2385
    %v2387 = vrcp.pop %v2229
    %v2388 = vmul.f32 %v2229, %v2387
    %v2389 = vsub.f32 1.0, %v2388
    %v2390 = vmul.f32 %v2387, %v2389
    %v2391 = vadd.f32 %v2387, %v2390
    %vm2392 = vweird.f32 %v2229
    %vm2393 = vweird.f32 %v2387
    %vm2394 = vmor %vm2392, %vm2393
    %v2395 = vsel %vm2394, %v2387, %v2391
    %v2396 = vand.u32 2147483647, %v2229
    %vm2397 = vcmp.eq.f32.partialorder %v2396, 8.507059e+37
    %v2398 = vand.u32 %v2229, 2147483648
    %v2399 = vor.u32 1.1754944e-38, %v2398
    %v2400 = vsel %vm2397, %v2399, %v2395
    %v2401 = vmul.f32 %v37, %v2400
    %v2402 = vrcp.pop %v2230
    %v2403 = vmul.f32 %v2230, %v2402
    %v2404 = vsub.f32 1.0, %v2403
    %v2405 = vmul.f32 %v2402, %v2404
    %v2406 = vadd.f32 %v2402, %v2405
    %vm2407 = vweird.f32 %v2230
    %vm2408 = vweird.f32 %v2402
    %vm2409 = vmor %vm2407, %vm2408
    %v2410 = vsel %vm2409, %v2402, %v2406
    %v2411 = vand.u32 2147483647, %v2230
    %vm2412 = vcmp.eq.f32.partialorder %v2411, 8.507059e+37
    %v2413 = vand.u32 %v2230, 2147483648
    %v2414 = vor.u32 1.1754944e-38, %v2413
    %v2415 = vsel %vm2412, %v2414, %v2410
    %v2416 = vmul.f32 %v38, %v2415
    %v2417 = vrcp.pop %v2231
    %v2418 = vmul.f32 %v2231, %v2417
    %v2419 = vsub.f32 1.0, %v2418
    %v2420 = vmul.f32 %v2417, %v2419
    %v2421 = vadd.f32 %v2417, %v2420
    %vm2422 = vweird.f32 %v2231
    %vm2423 = vweird.f32 %v2417
    %vm2424 = vmor %vm2422, %vm2423
    %v2425 = vsel %vm2424, %v2417, %v2421
    %v2426 = vand.u32 2147483647, %v2231
    %vm2427 = vcmp.eq.f32.partialorder %v2426, 8.507059e+37
    %v2428 = vand.u32 %v2231, 2147483648
    %v2429 = vor.u32 1.1754944e-38, %v2428
    %v2430 = vsel %vm2427, %v2429, %v2425
    %v2431 = vmul.f32 %v39, %v2430
    %v2432 = vrcp.pop %v2232
    %v2433 = vmul.f32 %v2232, %v2432
    %v2434 = vsub.f32 1.0, %v2433
    %v2435 = vmul.f32 %v2432, %v2434
    %v2436 = vadd.f32 %v2432, %v2435
    %vm2437 = vweird.f32 %v2232
    %vm2438 = vweird.f32 %v2432
    %vm2439 = vmor %vm2437, %vm2438
    %v2440 = vsel %vm2439, %v2432, %v2436
    %v2441 = vand.u32 2147483647, %v2232
    %vm2442 = vcmp.eq.f32.partialorder %v2441, 8.507059e+37
    %v2443 = vand.u32 %v2232, 2147483648
    %v2444 = vor.u32 1.1754944e-38, %v2443
    %v2445 = vsel %vm2442, %v2444, %v2440
    %v2446 = vmul.f32 %v40, %v2445
    %v2447 = vrcp.pop %v2233
    %v2448 = vmul.f32 %v2233, %v2447
    %v2449 = vsub.f32 1.0, %v2448
    %v2450 = vmul.f32 %v2447, %v2449
    %v2451 = vadd.f32 %v2447, %v2450
    %vm2452 = vweird.f32 %v2233
    %vm2453 = vweird.f32 %v2447
    %vm2454 = vmor %vm2452, %vm2453
    %v2455 = vsel %vm2454, %v2447, %v2451
    %v2456 = vand.u32 2147483647, %v2233
    %vm2457 = vcmp.eq.f32.partialorder %v2456, 8.507059e+37
    %v2458 = vand.u32 %v2233, 2147483648
    %v2459 = vor.u32 1.1754944e-38, %v2458
    %v2460 = vsel %vm2457, %v2459, %v2455
    %v2461 = vmul.f32 %v41, %v2460
    %v2462 = vrcp.pop %v2234
    %v2463 = vmul.f32 %v2234, %v2462
    %v2464 = vsub.f32 1.0, %v2463
    %v2465 = vmul.f32 %v2462, %v2464
    %v2466 = vadd.f32 %v2462, %v2465
    %vm2467 = vweird.f32 %v2234
    %vm2468 = vweird.f32 %v2462
    %vm2469 = vmor %vm2467, %vm2468
    %v2470 = vsel %vm2469, %v2462, %v2466
    %v2471 = vand.u32 2147483647, %v2234
    %vm2472 = vcmp.eq.f32.partialorder %v2471, 8.507059e+37
    %v2473 = vand.u32 %v2234, 2147483648
    %v2474 = vor.u32 1.1754944e-38, %v2473
    %v2475 = vsel %vm2472, %v2474, %v2470
    %v2476 = vmul.f32 %v42, %v2475
    %v2477 = vrcp.pop %v2235
    %v2478 = vmul.f32 %v2235, %v2477
    %v2479 = vsub.f32 1.0, %v2478
    %v2480 = vmul.f32 %v2477, %v2479
    %v2481 = vadd.f32 %v2477, %v2480
    %vm2482 = vweird.f32 %v2235
    %vm2483 = vweird.f32 %v2477
    %vm2484 = vmor %vm2482, %vm2483
    %v2485 = vsel %vm2484, %v2477, %v2481
    %v2486 = vand.u32 2147483647, %v2235
    %vm2487 = vcmp.eq.f32.partialorder %v2486, 8.507059e+37
    %v2488 = vand.u32 %v2235, 2147483648
    %v2489 = vor.u32 1.1754944e-38, %v2488
    %v2490 = vsel %vm2487, %v2489, %v2485
    %v2491 = vmul.f32 %v43, %v2490
    %v2492 = vrcp.pop %v28
    %v2493 = vmul.f32 %v28, %v2492
    %v2494 = vsub.f32 1.0, %v2493
    %v2495 = vmul.f32 %v2492, %v2494
    %v2496 = vadd.f32 %v2492, %v2495
    %vm2497 = vweird.f32 %v28
    %vm2498 = vweird.f32 %v2492
    %vm2499 = vmor %vm2497, %vm2498
    %v2500 = vsel %vm2499, %v2492, %v2496
    %v2501 = vand.u32 2147483647, %v28
    %vm2502 = vcmp.eq.f32.partialorder %v2501, 8.507059e+37
    %v2503 = vand.u32 %v28, 2147483648
    %v2504 = vor.u32 1.1754944e-38, %v2503
    %v2505 = vsel %vm2502, %v2504, %v2500
    %v2506 = vmul.f32 %v12, %v2505
    %v2507 = vrcp.pop %v29
    %v2508 = vmul.f32 %v29, %v2507
    %v2509 = vsub.f32 1.0, %v2508
    %v2510 = vmul.f32 %v2507, %v2509
    %v2511 = vadd.f32 %v2507, %v2510
    %vm2512 = vweird.f32 %v29
    %vm2513 = vweird.f32 %v2507
    %vm2514 = vmor %vm2512, %vm2513
    %v2515 = vsel %vm2514, %v2507, %v2511
    %v2516 = vand.u32 2147483647, %v29
    %vm2517 = vcmp.eq.f32.partialorder %v2516, 8.507059e+37
    %v2518 = vand.u32 %v29, 2147483648
    %v2519 = vor.u32 1.1754944e-38, %v2518
    %v2520 = vsel %vm2517, %v2519, %v2515
    %v2521 = vmul.f32 %v13, %v2520
    %v2522 = vrcp.pop %v30
    %v2523 = vmul.f32 %v30, %v2522
    %v2524 = vsub.f32 1.0, %v2523
    %v2525 = vmul.f32 %v2522, %v2524
    %v2526 = vadd.f32 %v2522, %v2525
    %vm2527 = vweird.f32 %v30
    %vm2528 = vweird.f32 %v2522
    %vm2529 = vmor %vm2527, %vm2528
    %v2530 = vsel %vm2529, %v2522, %v2526
    %v2531 = vand.u32 2147483647, %v30
    %vm2532 = vcmp.eq.f32.partialorder %v2531, 8.507059e+37
    %v2533 = vand.u32 %v30, 2147483648
    %v2534 = vor.u32 1.1754944e-38, %v2533
    %v2535 = vsel %vm2532, %v2534, %v2530
    %v2536 = vmul.f32 %v14, %v2535
    %v2537 = vrcp.pop %v31
    %v2538 = vmul.f32 %v31, %v2537
    %v2539 = vsub.f32 1.0, %v2538
    %v2540 = vmul.f32 %v2537, %v2539
    %v2541 = vadd.f32 %v2537, %v2540
    %vm2542 = vweird.f32 %v31
    %vm2543 = vweird.f32 %v2537
    %vm2544 = vmor %vm2542, %vm2543
    %v2545 = vsel %vm2544, %v2537, %v2541
    %v2546 = vand.u32 2147483647, %v31
    %vm2547 = vcmp.eq.f32.partialorder %v2546, 8.507059e+37
    %v2548 = vand.u32 %v31, 2147483648
    %v2549 = vor.u32 1.1754944e-38, %v2548
    %v2550 = vsel %vm2547, %v2549, %v2545
    %v2551 = vmul.f32 %v15, %v2550
    %v2552 = vrcp.pop %v32
    %v2553 = vmul.f32 %v32, %v2552
    %v2554 = vsub.f32 1.0, %v2553
    %v2555 = vmul.f32 %v2552, %v2554
    %v2556 = vadd.f32 %v2552, %v2555
    %vm2557 = vweird.f32 %v32
    %vm2558 = vweird.f32 %v2552
    %vm2559 = vmor %vm2557, %vm2558
    %v2560 = vsel %vm2559, %v2552, %v2556
    %v2561 = vand.u32 2147483647, %v32
    %vm2562 = vcmp.eq.f32.partialorder %v2561, 8.507059e+37
    %v2563 = vand.u32 %v32, 2147483648
    %v2564 = vor.u32 1.1754944e-38, %v2563
    %v2565 = vsel %vm2562, %v2564, %v2560
    %v2566 = vmul.f32 %v16, %v2565
    %v2567 = vrcp.pop %v33
    %v2568 = vmul.f32 %v33, %v2567
    %v2569 = vsub.f32 1.0, %v2568
    %v2570 = vmul.f32 %v2567, %v2569
    %v2571 = vadd.f32 %v2567, %v2570
    %vm2572 = vweird.f32 %v33
    %vm2573 = vweird.f32 %v2567
    %vm2574 = vmor %vm2572, %vm2573
    %v2575 = vsel %vm2574, %v2567, %v2571
    %v2576 = vand.u32 2147483647, %v33
    %vm2577 = vcmp.eq.f32.partialorder %v2576, 8.507059e+37
    %v2578 = vand.u32 %v33, 2147483648
    %v2579 = vor.u32 1.1754944e-38, %v2578
    %v2580 = vsel %vm2577, %v2579, %v2575
    %v2581 = vmul.f32 %v17, %v2580
    %v2582 = vrcp.pop %v34
    %v2583 = vmul.f32 %v34, %v2582
    %v2584 = vsub.f32 1.0, %v2583
    %v2585 = vmul.f32 %v2582, %v2584
    %v2586 = vadd.f32 %v2582, %v2585
    %vm2587 = vweird.f32 %v34
    %vm2588 = vweird.f32 %v2582
    %vm2589 = vmor %vm2587, %vm2588
    %v2590 = vsel %vm2589, %v2582, %v2586
    %v2591 = vand.u32 2147483647, %v34
    %vm2592 = vcmp.eq.f32.partialorder %v2591, 8.507059e+37
    %v2593 = vand.u32 %v34, 2147483648
    %v2594 = vor.u32 1.1754944e-38, %v2593
    %v2595 = vsel %vm2592, %v2594, %v2590
    %v2596 = vmul.f32 %v18, %v2595
    %v2597 = vrcp.pop %v35
    %v2598 = vmul.f32 %v35, %v2597
    %v2599 = vsub.f32 1.0, %v2598
    %v2600 = vmul.f32 %v2597, %v2599
    %v2601 = vadd.f32 %v2597, %v2600
    %vm2602 = vweird.f32 %v35
    %vm2603 = vweird.f32 %v2597
    %vm2604 = vmor %vm2602, %vm2603
    %v2605 = vsel %vm2604, %v2597, %v2601
    %v2606 = vand.u32 2147483647, %v35
    %vm2607 = vcmp.eq.f32.partialorder %v2606, 8.507059e+37
    %v2608 = vand.u32 %v35, 2147483648
    %v2609 = vor.u32 1.1754944e-38, %v2608
    %v2610 = vsel %vm2607, %v2609, %v2605
    %v2611 = vmul.f32 %v19, %v2610
    %v2612 = vrcp.pop %v36
    %v2613 = vmul.f32 %v36, %v2612
    %v2614 = vsub.f32 1.0, %v2613
    %v2615 = vmul.f32 %v2612, %v2614
    %v2616 = vadd.f32 %v2612, %v2615
    %vm2617 = vweird.f32 %v36
    %vm2618 = vweird.f32 %v2612
    %vm2619 = vmor %vm2617, %vm2618
    %v2620 = vsel %vm2619, %v2612, %v2616
    %v2621 = vand.u32 2147483647, %v36
    %vm2622 = vcmp.eq.f32.partialorder %v2621, 8.507059e+37
    %v2623 = vand.u32 %v36, 2147483648
    %v2624 = vor.u32 1.1754944e-38, %v2623
    %v2625 = vsel %vm2622, %v2624, %v2620
    %v2626 = vmul.f32 %v20, %v2625
    %v2627 = vrcp.pop %v37
    %v2628 = vmul.f32 %v37, %v2627
    %v2629 = vsub.f32 1.0, %v2628
    %v2630 = vmul.f32 %v2627, %v2629
    %v2631 = vadd.f32 %v2627, %v2630
    %vm2632 = vweird.f32 %v37
    %vm2633 = vweird.f32 %v2627
    %vm2634 = vmor %vm2632, %vm2633
    %v2635 = vsel %vm2634, %v2627, %v2631
    %v2636 = vand.u32 2147483647, %v37
    %vm2637 = vcmp.eq.f32.partialorder %v2636, 8.507059e+37
    %v2638 = vand.u32 %v37, 2147483648
    %v2639 = vor.u32 1.1754944e-38, %v2638
    %v2640 = vsel %vm2637, %v2639, %v2635
    %v2641 = vmul.f32 %v21, %v2640
    %v2642 = vrcp.pop %v38
    %v2643 = vmul.f32 %v38, %v2642
    %v2644 = vsub.f32 1.0, %v2643
    %v2645 = vmul.f32 %v2642, %v2644
    %v2646 = vadd.f32 %v2642, %v2645
    %vm2647 = vweird.f32 %v38
    %vm2648 = vweird.f32 %v2642
    %vm2649 = vmor %vm2647, %vm2648
    %v2650 = vsel %vm2649, %v2642, %v2646
    %v2651 = vand.u32 2147483647, %v38
    %vm2652 = vcmp.eq.f32.partialorder %v2651, 8.507059e+37
    %v2653 = vand.u32 %v38, 2147483648
    %v2654 = vor.u32 1.1754944e-38, %v2653
    %v2655 = vsel %vm2652, %v2654, %v2650
    %v2656 = vmul.f32 %v22, %v2655
    %v2657 = vrcp.pop %v39
    %v2658 = vmul.f32 %v39, %v2657
    %v2659 = vsub.f32 1.0, %v2658
    %v2660 = vmul.f32 %v2657, %v2659
    %v2661 = vadd.f32 %v2657, %v2660
    %vm2662 = vweird.f32 %v39
    %vm2663 = vweird.f32 %v2657
    %vm2664 = vmor %vm2662, %vm2663
    %v2665 = vsel %vm2664, %v2657, %v2661
    %v2666 = vand.u32 2147483647, %v39
    %vm2667 = vcmp.eq.f32.partialorder %v2666, 8.507059e+37
    %v2668 = vand.u32 %v39, 2147483648
    %v2669 = vor.u32 1.1754944e-38, %v2668
    %v2670 = vsel %vm2667, %v2669, %v2665
    %v2671 = vmul.f32 %v23, %v2670
    %v2672 = vrcp.pop %v40
    %v2673 = vmul.f32 %v40, %v2672
    %v2674 = vsub.f32 1.0, %v2673
    %v2675 = vmul.f32 %v2672, %v2674
    %v2676 = vadd.f32 %v2672, %v2675
    %vm2677 = vweird.f32 %v40
    %vm2678 = vweird.f32 %v2672
    %vm2679 = vmor %vm2677, %vm2678
    %v2680 = vsel %vm2679, %v2672, %v2676
    %v2681 = vand.u32 2147483647, %v40
    %vm2682 = vcmp.eq.f32.partialorder %v2681, 8.507059e+37
    %v2683 = vand.u32 %v40, 2147483648
    %v2684 = vor.u32 1.1754944e-38, %v2683
    %v2685 = vsel %vm2682, %v2684, %v2680
    %v2686 = vmul.f32 %v24, %v2685
    %v2687 = vrcp.pop %v41
    %v2688 = vmul.f32 %v41, %v2687
    %v2689 = vsub.f32 1.0, %v2688
    %v2690 = vmul.f32 %v2687, %v2689
    %v2691 = vadd.f32 %v2687, %v2690
    %vm2692 = vweird.f32 %v41
    %vm2693 = vweird.f32 %v2687
    %vm2694 = vmor %vm2692, %vm2693
    %v2695 = vsel %vm2694, %v2687, %v2691
    %v2696 = vand.u32 2147483647, %v41
    %vm2697 = vcmp.eq.f32.partialorder %v2696, 8.507059e+37
    %v2698 = vand.u32 %v41, 2147483648
    %v2699 = vor.u32 1.1754944e-38, %v2698
    %v2700 = vsel %vm2697, %v2699, %v2695
    %v2701 = vmul.f32 %v25, %v2700
    %v2702 = vrcp.pop %v42
    %v2703 = vmul.f32 %v42, %v2702
    %v2704 = vsub.f32 1.0, %v2703
    %v2705 = vmul.f32 %v2702, %v2704
    %v2706 = vadd.f32 %v2702, %v2705
    %vm2707 = vweird.f32 %v42
    %vm2708 = vweird.f32 %v2702
    %vm2709 = vmor %vm2707, %vm2708
    %v2710 = vsel %vm2709, %v2702, %v2706
    %v2711 = vand.u32 2147483647, %v42
    %vm2712 = vcmp.eq.f32.partialorder %v2711, 8.507059e+37
    %v2713 = vand.u32 %v42, 2147483648
    %v2714 = vor.u32 1.1754944e-38, %v2713
    %v2715 = vsel %vm2712, %v2714, %v2710
    %v2716 = vmul.f32 %v26, %v2715
    %v2717 = vrcp.pop %v43
    %v2718 = vmul.f32 %v43, %v2717
    %v2719 = vsub.f32 1.0, %v2718
    %v2720 = vmul.f32 %v2717, %v2719
    %v2721 = vadd.f32 %v2717, %v2720
    %vm2722 = vweird.f32 %v43
    %vm2723 = vweird.f32 %v2717
    %vm2724 = vmor %vm2722, %vm2723
    %v2725 = vsel %vm2724, %v2717, %v2721
    %v2726 = vand.u32 2147483647, %v43
    %vm2727 = vcmp.eq.f32.partialorder %v2726, 8.507059e+37
    %v2728 = vand.u32 %v43, 2147483648
    %v2729 = vor.u32 1.1754944e-38, %v2728
    %v2730 = vsel %vm2727, %v2729, %v2725
    %v2731 = vmul.f32 %v27, %v2730
    %v2732 = vrot.slane %v28, 7
    %v2733 = vrot.slane %v29, 7
    %v2734 = vrot.slane %v30, 7
    %v2735 = vrot.slane %v31, 7
    %v2736 = vrot.slane %v32, 7
    %v2737 = vrot.slane %v33, 7
    %v2738 = vrot.slane %v34, 7
    %v2739 = vrot.slane %v35, 7
    %v2740 = vrot.slane %v36, 7
    %v2741 = vrot.slane %v37, 7
    %v2742 = vrot.slane %v38, 7
    %v2743 = vrot.slane %v39, 7
    %v2744 = vrot.slane %v40, 7
    %v2745 = vrot.slane %v41, 7
    %v2746 = vrot.slane %v42, 7
    %v2747 = vrot.slane %v43, 7
    %v2764 = vrcp.pop %v2732
    %v2765 = vmul.f32 %v2732, %v2764
    %v2766 = vsub.f32 1.0, %v2765
    %v2767 = vmul.f32 %v2764, %v2766
    %v2768 = vadd.f32 %v2764, %v2767
    %vm2769 = vweird.f32 %v2732
    %vm2770 = vweird.f32 %v2764
    %vm2771 = vmor %vm2769, %vm2770
    %v2772 = vsel %vm2771, %v2764, %v2768
    %v2773 = vand.u32 2147483647, %v2732
    %vm2774 = vcmp.eq.f32.partialorder %v2773, 8.507059e+37
    %v2775 = vand.u32 %v2732, 2147483648
    %v2776 = vor.u32 1.1754944e-38, %v2775
    %v2777 = vsel %vm2774, %v2776, %v2772
    %v2778 = vmul.f32 %v12, %v2777
    %v2779 = vrcp.pop %v2733
    %v2780 = vmul.f32 %v2733, %v2779
    %v2781 = vsub.f32 1.0, %v2780
    %v2782 = vmul.f32 %v2779, %v2781
    %v2783 = vadd.f32 %v2779, %v2782
    %vm2784 = vweird.f32 %v2733
    %vm2785 = vweird.f32 %v2779
    %vm2786 = vmor %vm2784, %vm2785
    %v2787 = vsel %vm2786, %v2779, %v2783
    %v2788 = vand.u32 2147483647, %v2733
    %vm2789 = vcmp.eq.f32.partialorder %v2788, 8.507059e+37
    %v2790 = vand.u32 %v2733, 2147483648
    %v2791 = vor.u32 1.1754944e-38, %v2790
    %v2792 = vsel %vm2789, %v2791, %v2787
    %v2793 = vmul.f32 %v13, %v2792
    %v2794 = vrcp.pop %v2734
    %v2795 = vmul.f32 %v2734, %v2794
    %v2796 = vsub.f32 1.0, %v2795
    %v2797 = vmul.f32 %v2794, %v2796
    %v2798 = vadd.f32 %v2794, %v2797
    %vm2799 = vweird.f32 %v2734
    %vm2800 = vweird.f32 %v2794
    %vm2801 = vmor %vm2799, %vm2800
    %v2802 = vsel %vm2801, %v2794, %v2798
    %v2803 = vand.u32 2147483647, %v2734
    %vm2804 = vcmp.eq.f32.partialorder %v2803, 8.507059e+37
    %v2805 = vand.u32 %v2734, 2147483648
    %v2806 = vor.u32 1.1754944e-38, %v2805
    %v2807 = vsel %vm2804, %v2806, %v2802
    %v2808 = vmul.f32 %v14, %v2807
    %v2809 = vrcp.pop %v2735
    %v2810 = vmul.f32 %v2735, %v2809
    %v2811 = vsub.f32 1.0, %v2810
    %v2812 = vmul.f32 %v2809, %v2811
    %v2813 = vadd.f32 %v2809, %v2812
    %vm2814 = vweird.f32 %v2735
    %vm2815 = vweird.f32 %v2809
    %vm2816 = vmor %vm2814, %vm2815
    %v2817 = vsel %vm2816, %v2809, %v2813
    %v2818 = vand.u32 2147483647, %v2735
    %vm2819 = vcmp.eq.f32.partialorder %v2818, 8.507059e+37
    %v2820 = vand.u32 %v2735, 2147483648
    %v2821 = vor.u32 1.1754944e-38, %v2820
    %v2822 = vsel %vm2819, %v2821, %v2817
    %v2823 = vmul.f32 %v15, %v2822
    %v2824 = vrcp.pop %v2736
    %v2825 = vmul.f32 %v2736, %v2824
    %v2826 = vsub.f32 1.0, %v2825
    %v2827 = vmul.f32 %v2824, %v2826
    %v2828 = vadd.f32 %v2824, %v2827
    %vm2829 = vweird.f32 %v2736
    %vm2830 = vweird.f32 %v2824
    %vm2831 = vmor %vm2829, %vm2830
    %v2832 = vsel %vm2831, %v2824, %v2828
    %v2833 = vand.u32 2147483647, %v2736
    %vm2834 = vcmp.eq.f32.partialorder %v2833, 8.507059e+37
    %v2835 = vand.u32 %v2736, 2147483648
    %v2836 = vor.u32 1.1754944e-38, %v2835
    %v2837 = vsel %vm2834, %v2836, %v2832
    %v2838 = vmul.f32 %v16, %v2837
    %v2839 = vrcp.pop %v2737
    %v2840 = vmul.f32 %v2737, %v2839
    %v2841 = vsub.f32 1.0, %v2840
    %v2842 = vmul.f32 %v2839, %v2841
    %v2843 = vadd.f32 %v2839, %v2842
    %vm2844 = vweird.f32 %v2737
    %vm2845 = vweird.f32 %v2839
    %vm2846 = vmor %vm2844, %vm2845
    %v2847 = vsel %vm2846, %v2839, %v2843
    %v2848 = vand.u32 2147483647, %v2737
    %vm2849 = vcmp.eq.f32.partialorder %v2848, 8.507059e+37
    %v2850 = vand.u32 %v2737, 2147483648
    %v2851 = vor.u32 1.1754944e-38, %v2850
    %v2852 = vsel %vm2849, %v2851, %v2847
    %v2853 = vmul.f32 %v17, %v2852
    %v2854 = vrcp.pop %v2738
    %v2855 = vmul.f32 %v2738, %v2854
    %v2856 = vsub.f32 1.0, %v2855
    %v2857 = vmul.f32 %v2854, %v2856
    %v2858 = vadd.f32 %v2854, %v2857
    %vm2859 = vweird.f32 %v2738
    %vm2860 = vweird.f32 %v2854
    %vm2861 = vmor %vm2859, %vm2860
    %v2862 = vsel %vm2861, %v2854, %v2858
    %v2863 = vand.u32 2147483647, %v2738
    %vm2864 = vcmp.eq.f32.partialorder %v2863, 8.507059e+37
    %v2865 = vand.u32 %v2738, 2147483648
    %v2866 = vor.u32 1.1754944e-38, %v2865
    %v2867 = vsel %vm2864, %v2866, %v2862
    %v2868 = vmul.f32 %v18, %v2867
    %v2869 = vrcp.pop %v2739
    %v2870 = vmul.f32 %v2739, %v2869
    %v2871 = vsub.f32 1.0, %v2870
    %v2872 = vmul.f32 %v2869, %v2871
    %v2873 = vadd.f32 %v2869, %v2872
    %vm2874 = vweird.f32 %v2739
    %vm2875 = vweird.f32 %v2869
    %vm2876 = vmor %vm2874, %vm2875
    %v2877 = vsel %vm2876, %v2869, %v2873
    %v2878 = vand.u32 2147483647, %v2739
    %vm2879 = vcmp.eq.f32.partialorder %v2878, 8.507059e+37
    %v2880 = vand.u32 %v2739, 2147483648
    %v2881 = vor.u32 1.1754944e-38, %v2880
    %v2882 = vsel %vm2879, %v2881, %v2877
    %v2883 = vmul.f32 %v19, %v2882
    %v2884 = vrcp.pop %v2740
    %v2885 = vmul.f32 %v2740, %v2884
    %v2886 = vsub.f32 1.0, %v2885
    %v2887 = vmul.f32 %v2884, %v2886
    %v2888 = vadd.f32 %v2884, %v2887
    %vm2889 = vweird.f32 %v2740
    %vm2890 = vweird.f32 %v2884
    %vm2891 = vmor %vm2889, %vm2890
    %v2892 = vsel %vm2891, %v2884, %v2888
    %v2893 = vand.u32 2147483647, %v2740
    %vm2894 = vcmp.eq.f32.partialorder %v2893, 8.507059e+37
    %v2895 = vand.u32 %v2740, 2147483648
    %v2896 = vor.u32 1.1754944e-38, %v2895
    %v2897 = vsel %vm2894, %v2896, %v2892
    %v2898 = vmul.f32 %v20, %v2897
    %v2899 = vrcp.pop %v2741
    %v2900 = vmul.f32 %v2741, %v2899
    %v2901 = vsub.f32 1.0, %v2900
    %v2902 = vmul.f32 %v2899, %v2901
    %v2903 = vadd.f32 %v2899, %v2902
    %vm2904 = vweird.f32 %v2741
    %vm2905 = vweird.f32 %v2899
    %vm2906 = vmor %vm2904, %vm2905
    %v2907 = vsel %vm2906, %v2899, %v2903
    %v2908 = vand.u32 2147483647, %v2741
    %vm2909 = vcmp.eq.f32.partialorder %v2908, 8.507059e+37
    %v2910 = vand.u32 %v2741, 2147483648
    %v2911 = vor.u32 1.1754944e-38, %v2910
    %v2912 = vsel %vm2909, %v2911, %v2907
    %v2913 = vmul.f32 %v21, %v2912
    %v2914 = vrcp.pop %v2742
    %v2915 = vmul.f32 %v2742, %v2914
    %v2916 = vsub.f32 1.0, %v2915
    %v2917 = vmul.f32 %v2914, %v2916
    %v2918 = vadd.f32 %v2914, %v2917
    %vm2919 = vweird.f32 %v2742
    %vm2920 = vweird.f32 %v2914
    %vm2921 = vmor %vm2919, %vm2920
    %v2922 = vsel %vm2921, %v2914, %v2918
    %v2923 = vand.u32 2147483647, %v2742
    %vm2924 = vcmp.eq.f32.partialorder %v2923, 8.507059e+37
    %v2925 = vand.u32 %v2742, 2147483648
    %v2926 = vor.u32 1.1754944e-38, %v2925
    %v2927 = vsel %vm2924, %v2926, %v2922
    %v2928 = vmul.f32 %v22, %v2927
    %v2929 = vrcp.pop %v2743
    %v2930 = vmul.f32 %v2743, %v2929
    %v2931 = vsub.f32 1.0, %v2930
    %v2932 = vmul.f32 %v2929, %v2931
    %v2933 = vadd.f32 %v2929, %v2932
    %vm2934 = vweird.f32 %v2743
    %vm2935 = vweird.f32 %v2929
    %vm2936 = vmor %vm2934, %vm2935
    %v2937 = vsel %vm2936, %v2929, %v2933
    %v2938 = vand.u32 2147483647, %v2743
    %vm2939 = vcmp.eq.f32.partialorder %v2938, 8.507059e+37
    %v2940 = vand.u32 %v2743, 2147483648
    %v2941 = vor.u32 1.1754944e-38, %v2940
    %v2942 = vsel %vm2939, %v2941, %v2937
    %v2943 = vmul.f32 %v23, %v2942
    %v2944 = vrcp.pop %v2744
    %v2945 = vmul.f32 %v2744, %v2944
    %v2946 = vsub.f32 1.0, %v2945
    %v2947 = vmul.f32 %v2944, %v2946
    %v2948 = vadd.f32 %v2944, %v2947
    %vm2949 = vweird.f32 %v2744
    %vm2950 = vweird.f32 %v2944
    %vm2951 = vmor %vm2949, %vm2950
    %v2952 = vsel %vm2951, %v2944, %v2948
    %v2953 = vand.u32 2147483647, %v2744
    %vm2954 = vcmp.eq.f32.partialorder %v2953, 8.507059e+37
    %v2955 = vand.u32 %v2744, 2147483648
    %v2956 = vor.u32 1.1754944e-38, %v2955
    %v2957 = vsel %vm2954, %v2956, %v2952
    %v2958 = vmul.f32 %v24, %v2957
    %v2959 = vrcp.pop %v2745
    %v2960 = vmul.f32 %v2745, %v2959
    %v2961 = vsub.f32 1.0, %v2960
    %v2962 = vmul.f32 %v2959, %v2961
    %v2963 = vadd.f32 %v2959, %v2962
    %vm2964 = vweird.f32 %v2745
    %vm2965 = vweird.f32 %v2959
    %vm2966 = vmor %vm2964, %vm2965
    %v2967 = vsel %vm2966, %v2959, %v2963
    %v2968 = vand.u32 2147483647, %v2745
    %vm2969 = vcmp.eq.f32.partialorder %v2968, 8.507059e+37
    %v2970 = vand.u32 %v2745, 2147483648
    %v2971 = vor.u32 1.1754944e-38, %v2970
    %v2972 = vsel %vm2969, %v2971, %v2967
    %v2973 = vmul.f32 %v25, %v2972
    %v2974 = vrcp.pop %v2746
    %v2975 = vmul.f32 %v2746, %v2974
    %v2976 = vsub.f32 1.0, %v2975
    %v2977 = vmul.f32 %v2974, %v2976
    %v2978 = vadd.f32 %v2974, %v2977
    %vm2979 = vweird.f32 %v2746
    %vm2980 = vweird.f32 %v2974
    %vm2981 = vmor %vm2979, %vm2980
    %v2982 = vsel %vm2981, %v2974, %v2978
    %v2983 = vand.u32 2147483647, %v2746
    %vm2984 = vcmp.eq.f32.partialorder %v2983, 8.507059e+37
    %v2985 = vand.u32 %v2746, 2147483648
    %v2986 = vor.u32 1.1754944e-38, %v2985
    %v2987 = vsel %vm2984, %v2986, %v2982
    %v2988 = vmul.f32 %v26, %v2987
    %v2989 = vrcp.pop %v2747
    %v2990 = vmul.f32 %v2747, %v2989
    %v2991 = vsub.f32 1.0, %v2990
    %v2992 = vmul.f32 %v2989, %v2991
    %v2993 = vadd.f32 %v2989, %v2992
    %vm2994 = vweird.f32 %v2747
    %vm2995 = vweird.f32 %v2989
    %vm2996 = vmor %vm2994, %vm2995
    %v2997 = vsel %vm2996, %v2989, %v2993
    %v2998 = vand.u32 2147483647, %v2747
    %vm2999 = vcmp.eq.f32.partialorder %v2998, 8.507059e+37
    %v3000 = vand.u32 %v2747, 2147483648
    %v3001 = vor.u32 1.1754944e-38, %v3000
    %v3002 = vsel %vm2999, %v3001, %v2997
    %v3003 = vmul.f32 %v27, %v3002
    %v3004 = vrot.slane %v28, 6
    %v3005 = vrot.slane %v29, 6
    %v3006 = vrot.slane %v30, 6
    %v3007 = vrot.slane %v31, 6
    %v3008 = vrot.slane %v32, 6
    %v3009 = vrot.slane %v33, 6
    %v3010 = vrot.slane %v34, 6
    %v3011 = vrot.slane %v35, 6
    %v3012 = vrot.slane %v36, 6
    %v3013 = vrot.slane %v37, 6
    %v3014 = vrot.slane %v38, 6
    %v3015 = vrot.slane %v39, 6
    %v3016 = vrot.slane %v40, 6
    %v3017 = vrot.slane %v41, 6
    %v3018 = vrot.slane %v42, 6
    %v3019 = vrot.slane %v43, 6
    %v3036 = vrcp.pop %v3004
    %v3037 = vmul.f32 %v3004, %v3036
    %v3038 = vsub.f32 1.0, %v3037
    %v3039 = vmul.f32 %v3036, %v3038
    %v3040 = vadd.f32 %v3036, %v3039
    %vm3041 = vweird.f32 %v3004
    %vm3042 = vweird.f32 %v3036
    %vm3043 = vmor %vm3041, %vm3042
    %v3044 = vsel %vm3043, %v3036, %v3040
    %v3045 = vand.u32 2147483647, %v3004
    %vm3046 = vcmp.eq.f32.partialorder %v3045, 8.507059e+37
    %v3047 = vand.u32 %v3004, 2147483648
    %v3048 = vor.u32 1.1754944e-38, %v3047
    %v3049 = vsel %vm3046, %v3048, %v3044
    %v3050 = vmul.f32 %v12, %v3049
    %v3051 = vrcp.pop %v3005
    %v3052 = vmul.f32 %v3005, %v3051
    %v3053 = vsub.f32 1.0, %v3052
    %v3054 = vmul.f32 %v3051, %v3053
    %v3055 = vadd.f32 %v3051, %v3054
    %vm3056 = vweird.f32 %v3005
    %vm3057 = vweird.f32 %v3051
    %vm3058 = vmor %vm3056, %vm3057
    %v3059 = vsel %vm3058, %v3051, %v3055
    %v3060 = vand.u32 2147483647, %v3005
    %vm3061 = vcmp.eq.f32.partialorder %v3060, 8.507059e+37
    %v3062 = vand.u32 %v3005, 2147483648
    %v3063 = vor.u32 1.1754944e-38, %v3062
    %v3064 = vsel %vm3061, %v3063, %v3059
    %v3065 = vmul.f32 %v13, %v3064
    %v3066 = vrcp.pop %v3006
    %v3067 = vmul.f32 %v3006, %v3066
    %v3068 = vsub.f32 1.0, %v3067
    %v3069 = vmul.f32 %v3066, %v3068
    %v3070 = vadd.f32 %v3066, %v3069
    %vm3071 = vweird.f32 %v3006
    %vm3072 = vweird.f32 %v3066
    %vm3073 = vmor %vm3071, %vm3072
    %v3074 = vsel %vm3073, %v3066, %v3070
    %v3075 = vand.u32 2147483647, %v3006
    %vm3076 = vcmp.eq.f32.partialorder %v3075, 8.507059e+37
    %v3077 = vand.u32 %v3006, 2147483648
    %v3078 = vor.u32 1.1754944e-38, %v3077
    %v3079 = vsel %vm3076, %v3078, %v3074
    %v3080 = vmul.f32 %v14, %v3079
    %v3081 = vrcp.pop %v3007
    %v3082 = vmul.f32 %v3007, %v3081
    %v3083 = vsub.f32 1.0, %v3082
    %v3084 = vmul.f32 %v3081, %v3083
    %v3085 = vadd.f32 %v3081, %v3084
    %vm3086 = vweird.f32 %v3007
    %vm3087 = vweird.f32 %v3081
    %vm3088 = vmor %vm3086, %vm3087
    %v3089 = vsel %vm3088, %v3081, %v3085
    %v3090 = vand.u32 2147483647, %v3007
    %vm3091 = vcmp.eq.f32.partialorder %v3090, 8.507059e+37
    %v3092 = vand.u32 %v3007, 2147483648
    %v3093 = vor.u32 1.1754944e-38, %v3092
    %v3094 = vsel %vm3091, %v3093, %v3089
    %v3095 = vmul.f32 %v15, %v3094
    %v3096 = vrcp.pop %v3008
    %v3097 = vmul.f32 %v3008, %v3096
    %v3098 = vsub.f32 1.0, %v3097
    %v3099 = vmul.f32 %v3096, %v3098
    %v3100 = vadd.f32 %v3096, %v3099
    %vm3101 = vweird.f32 %v3008
    %vm3102 = vweird.f32 %v3096
    %vm3103 = vmor %vm3101, %vm3102
    %v3104 = vsel %vm3103, %v3096, %v3100
    %v3105 = vand.u32 2147483647, %v3008
    %vm3106 = vcmp.eq.f32.partialorder %v3105, 8.507059e+37
    %v3107 = vand.u32 %v3008, 2147483648
    %v3108 = vor.u32 1.1754944e-38, %v3107
    %v3109 = vsel %vm3106, %v3108, %v3104
    %v3110 = vmul.f32 %v16, %v3109
    %v3111 = vrcp.pop %v3009
    %v3112 = vmul.f32 %v3009, %v3111
    %v3113 = vsub.f32 1.0, %v3112
    %v3114 = vmul.f32 %v3111, %v3113
    %v3115 = vadd.f32 %v3111, %v3114
    %vm3116 = vweird.f32 %v3009
    %vm3117 = vweird.f32 %v3111
    %vm3118 = vmor %vm3116, %vm3117
    %v3119 = vsel %vm3118, %v3111, %v3115
    %v3120 = vand.u32 2147483647, %v3009
    %vm3121 = vcmp.eq.f32.partialorder %v3120, 8.507059e+37
    %v3122 = vand.u32 %v3009, 2147483648
    %v3123 = vor.u32 1.1754944e-38, %v3122
    %v3124 = vsel %vm3121, %v3123, %v3119
    %v3125 = vmul.f32 %v17, %v3124
    %v3126 = vrcp.pop %v3010
    %v3127 = vmul.f32 %v3010, %v3126
    %v3128 = vsub.f32 1.0, %v3127
    %v3129 = vmul.f32 %v3126, %v3128
    %v3130 = vadd.f32 %v3126, %v3129
    %vm3131 = vweird.f32 %v3010
    %vm3132 = vweird.f32 %v3126
    %vm3133 = vmor %vm3131, %vm3132
    %v3134 = vsel %vm3133, %v3126, %v3130
    %v3135 = vand.u32 2147483647, %v3010
    %vm3136 = vcmp.eq.f32.partialorder %v3135, 8.507059e+37
    %v3137 = vand.u32 %v3010, 2147483648
    %v3138 = vor.u32 1.1754944e-38, %v3137
    %v3139 = vsel %vm3136, %v3138, %v3134
    %v3140 = vmul.f32 %v18, %v3139
    %v3141 = vrcp.pop %v3011
    %v3142 = vmul.f32 %v3011, %v3141
    %v3143 = vsub.f32 1.0, %v3142
    %v3144 = vmul.f32 %v3141, %v3143
    %v3145 = vadd.f32 %v3141, %v3144
    %vm3146 = vweird.f32 %v3011
    %vm3147 = vweird.f32 %v3141
    %vm3148 = vmor %vm3146, %vm3147
    %v3149 = vsel %vm3148, %v3141, %v3145
    %v3150 = vand.u32 2147483647, %v3011
    %vm3151 = vcmp.eq.f32.partialorder %v3150, 8.507059e+37
    %v3152 = vand.u32 %v3011, 2147483648
    %v3153 = vor.u32 1.1754944e-38, %v3152
    %v3154 = vsel %vm3151, %v3153, %v3149
    %v3155 = vmul.f32 %v19, %v3154
    %v3156 = vrcp.pop %v3012
    %v3157 = vmul.f32 %v3012, %v3156
    %v3158 = vsub.f32 1.0, %v3157
    %v3159 = vmul.f32 %v3156, %v3158
    %v3160 = vadd.f32 %v3156, %v3159
    %vm3161 = vweird.f32 %v3012
    %vm3162 = vweird.f32 %v3156
    %vm3163 = vmor %vm3161, %vm3162
    %v3164 = vsel %vm3163, %v3156, %v3160
    %v3165 = vand.u32 2147483647, %v3012
    %vm3166 = vcmp.eq.f32.partialorder %v3165, 8.507059e+37
    %v3167 = vand.u32 %v3012, 2147483648
    %v3168 = vor.u32 1.1754944e-38, %v3167
    %v3169 = vsel %vm3166, %v3168, %v3164
    %v3170 = vmul.f32 %v20, %v3169
    %v3171 = vrcp.pop %v3013
    %v3172 = vmul.f32 %v3013, %v3171
    %v3173 = vsub.f32 1.0, %v3172
    %v3174 = vmul.f32 %v3171, %v3173
    %v3175 = vadd.f32 %v3171, %v3174
    %vm3176 = vweird.f32 %v3013
    %vm3177 = vweird.f32 %v3171
    %vm3178 = vmor %vm3176, %vm3177
    %v3179 = vsel %vm3178, %v3171, %v3175
    %v3180 = vand.u32 2147483647, %v3013
    %vm3181 = vcmp.eq.f32.partialorder %v3180, 8.507059e+37
    %v3182 = vand.u32 %v3013, 2147483648
    %v3183 = vor.u32 1.1754944e-38, %v3182
    %v3184 = vsel %vm3181, %v3183, %v3179
    %v3185 = vmul.f32 %v21, %v3184
    %v3186 = vrcp.pop %v3014
    %v3187 = vmul.f32 %v3014, %v3186
    %v3188 = vsub.f32 1.0, %v3187
    %v3189 = vmul.f32 %v3186, %v3188
    %v3190 = vadd.f32 %v3186, %v3189
    %vm3191 = vweird.f32 %v3014
    %vm3192 = vweird.f32 %v3186
    %vm3193 = vmor %vm3191, %vm3192
    %v3194 = vsel %vm3193, %v3186, %v3190
    %v3195 = vand.u32 2147483647, %v3014
    %vm3196 = vcmp.eq.f32.partialorder %v3195, 8.507059e+37
    %v3197 = vand.u32 %v3014, 2147483648
    %v3198 = vor.u32 1.1754944e-38, %v3197
    %v3199 = vsel %vm3196, %v3198, %v3194
    %v3200 = vmul.f32 %v22, %v3199
    %v3201 = vrcp.pop %v3015
    %v3202 = vmul.f32 %v3015, %v3201
    %v3203 = vsub.f32 1.0, %v3202
    %v3204 = vmul.f32 %v3201, %v3203
    %v3205 = vadd.f32 %v3201, %v3204
    %vm3206 = vweird.f32 %v3015
    %vm3207 = vweird.f32 %v3201
    %vm3208 = vmor %vm3206, %vm3207
    %v3209 = vsel %vm3208, %v3201, %v3205
    %v3210 = vand.u32 2147483647, %v3015
    %vm3211 = vcmp.eq.f32.partialorder %v3210, 8.507059e+37
    %v3212 = vand.u32 %v3015, 2147483648
    %v3213 = vor.u32 1.1754944e-38, %v3212
    %v3214 = vsel %vm3211, %v3213, %v3209
    %v3215 = vmul.f32 %v23, %v3214
    %v3216 = vrcp.pop %v3016
    %v3217 = vmul.f32 %v3016, %v3216
    %v3218 = vsub.f32 1.0, %v3217
    %v3219 = vmul.f32 %v3216, %v3218
    %v3220 = vadd.f32 %v3216, %v3219
    %vm3221 = vweird.f32 %v3016
    %vm3222 = vweird.f32 %v3216
    %vm3223 = vmor %vm3221, %vm3222
    %v3224 = vsel %vm3223, %v3216, %v3220
    %v3225 = vand.u32 2147483647, %v3016
    %vm3226 = vcmp.eq.f32.partialorder %v3225, 8.507059e+37
    %v3227 = vand.u32 %v3016, 2147483648
    %v3228 = vor.u32 1.1754944e-38, %v3227
    %v3229 = vsel %vm3226, %v3228, %v3224
    %v3230 = vmul.f32 %v24, %v3229
    %v3231 = vrcp.pop %v3017
    %v3232 = vmul.f32 %v3017, %v3231
    %v3233 = vsub.f32 1.0, %v3232
    %v3234 = vmul.f32 %v3231, %v3233
    %v3235 = vadd.f32 %v3231, %v3234
    %vm3236 = vweird.f32 %v3017
    %vm3237 = vweird.f32 %v3231
    %vm3238 = vmor %vm3236, %vm3237
    %v3239 = vsel %vm3238, %v3231, %v3235
    %v3240 = vand.u32 2147483647, %v3017
    %vm3241 = vcmp.eq.f32.partialorder %v3240, 8.507059e+37
    %v3242 = vand.u32 %v3017, 2147483648
    %v3243 = vor.u32 1.1754944e-38, %v3242
    %v3244 = vsel %vm3241, %v3243, %v3239
    %v3245 = vmul.f32 %v25, %v3244
    %v3246 = vrcp.pop %v3018
    %v3247 = vmul.f32 %v3018, %v3246
    %v3248 = vsub.f32 1.0, %v3247
    %v3249 = vmul.f32 %v3246, %v3248
    %v3250 = vadd.f32 %v3246, %v3249
    %vm3251 = vweird.f32 %v3018
    %vm3252 = vweird.f32 %v3246
    %vm3253 = vmor %vm3251, %vm3252
    %v3254 = vsel %vm3253, %v3246, %v3250
    %v3255 = vand.u32 2147483647, %v3018
    %vm3256 = vcmp.eq.f32.partialorder %v3255, 8.507059e+37
    %v3257 = vand.u32 %v3018, 2147483648
    %v3258 = vor.u32 1.1754944e-38, %v3257
    %v3259 = vsel %vm3256, %v3258, %v3254
    %v3260 = vmul.f32 %v26, %v3259
    %v3261 = vrcp.pop %v3019
    %v3262 = vmul.f32 %v3019, %v3261
    %v3263 = vsub.f32 1.0, %v3262
    %v3264 = vmul.f32 %v3261, %v3263
    %v3265 = vadd.f32 %v3261, %v3264
    %vm3266 = vweird.f32 %v3019
    %vm3267 = vweird.f32 %v3261
    %vm3268 = vmor %vm3266, %vm3267
    %v3269 = vsel %vm3268, %v3261, %v3265
    %v3270 = vand.u32 2147483647, %v3019
    %vm3271 = vcmp.eq.f32.partialorder %v3270, 8.507059e+37
    %v3272 = vand.u32 %v3019, 2147483648
    %v3273 = vor.u32 1.1754944e-38, %v3272
    %v3274 = vsel %vm3271, %v3273, %v3269
    %v3275 = vmul.f32 %v27, %v3274
    %v3276 = vrot.slane %v28, 5
    %v3277 = vrot.slane %v29, 5
    %v3278 = vrot.slane %v30, 5
    %v3279 = vrot.slane %v31, 5
    %v3280 = vrot.slane %v32, 5
    %v3281 = vrot.slane %v33, 5
    %v3282 = vrot.slane %v34, 5
    %v3283 = vrot.slane %v35, 5
    %v3284 = vrot.slane %v36, 5
    %v3285 = vrot.slane %v37, 5
    %v3286 = vrot.slane %v38, 5
    %v3287 = vrot.slane %v39, 5
    %v3288 = vrot.slane %v40, 5
    %v3289 = vrot.slane %v41, 5
    %v3290 = vrot.slane %v42, 5
    %v3291 = vrot.slane %v43, 5
    %v3308 = vrcp.pop %v3276
    %v3309 = vmul.f32 %v3276, %v3308
    %v3310 = vsub.f32 1.0, %v3309
    %v3311 = vmul.f32 %v3308, %v3310
    %v3312 = vadd.f32 %v3308, %v3311
    %vm3313 = vweird.f32 %v3276
    %vm3314 = vweird.f32 %v3308
    %vm3315 = vmor %vm3313, %vm3314
    %v3316 = vsel %vm3315, %v3308, %v3312
    %v3317 = vand.u32 2147483647, %v3276
    %vm3318 = vcmp.eq.f32.partialorder %v3317, 8.507059e+37
    %v3319 = vand.u32 %v3276, 2147483648
    %v3320 = vor.u32 1.1754944e-38, %v3319
    %v3321 = vsel %vm3318, %v3320, %v3316
    %v3322 = vmul.f32 %v12, %v3321
    %v3323 = vrcp.pop %v3277
    %v3324 = vmul.f32 %v3277, %v3323
    %v3325 = vsub.f32 1.0, %v3324
    %v3326 = vmul.f32 %v3323, %v3325
    %v3327 = vadd.f32 %v3323, %v3326
    %vm3328 = vweird.f32 %v3277
    %vm3329 = vweird.f32 %v3323
    %vm3330 = vmor %vm3328, %vm3329
    %v3331 = vsel %vm3330, %v3323, %v3327
    %v3332 = vand.u32 2147483647, %v3277
    %vm3333 = vcmp.eq.f32.partialorder %v3332, 8.507059e+37
    %v3334 = vand.u32 %v3277, 2147483648
    %v3335 = vor.u32 1.1754944e-38, %v3334
    %v3336 = vsel %vm3333, %v3335, %v3331
    %v3337 = vmul.f32 %v13, %v3336
    %v3338 = vrcp.pop %v3278
    %v3339 = vmul.f32 %v3278, %v3338
    %v3340 = vsub.f32 1.0, %v3339
    %v3341 = vmul.f32 %v3338, %v3340
    %v3342 = vadd.f32 %v3338, %v3341
    %vm3343 = vweird.f32 %v3278
    %vm3344 = vweird.f32 %v3338
    %vm3345 = vmor %vm3343, %vm3344
    %v3346 = vsel %vm3345, %v3338, %v3342
    %v3347 = vand.u32 2147483647, %v3278
    %vm3348 = vcmp.eq.f32.partialorder %v3347, 8.507059e+37
    %v3349 = vand.u32 %v3278, 2147483648
    %v3350 = vor.u32 1.1754944e-38, %v3349
    %v3351 = vsel %vm3348, %v3350, %v3346
    %v3352 = vmul.f32 %v14, %v3351
    %v3353 = vrcp.pop %v3279
    %v3354 = vmul.f32 %v3279, %v3353
    %v3355 = vsub.f32 1.0, %v3354
    %v3356 = vmul.f32 %v3353, %v3355
    %v3357 = vadd.f32 %v3353, %v3356
    %vm3358 = vweird.f32 %v3279
    %vm3359 = vweird.f32 %v3353
    %vm3360 = vmor %vm3358, %vm3359
    %v3361 = vsel %vm3360, %v3353, %v3357
    %v3362 = vand.u32 2147483647, %v3279
    %vm3363 = vcmp.eq.f32.partialorder %v3362, 8.507059e+37
    %v3364 = vand.u32 %v3279, 2147483648
    %v3365 = vor.u32 1.1754944e-38, %v3364
    %v3366 = vsel %vm3363, %v3365, %v3361
    %v3367 = vmul.f32 %v15, %v3366
    %v3368 = vrcp.pop %v3280
    %v3369 = vmul.f32 %v3280, %v3368
    %v3370 = vsub.f32 1.0, %v3369
    %v3371 = vmul.f32 %v3368, %v3370
    %v3372 = vadd.f32 %v3368, %v3371
    %vm3373 = vweird.f32 %v3280
    %vm3374 = vweird.f32 %v3368
    %vm3375 = vmor %vm3373, %vm3374
    %v3376 = vsel %vm3375, %v3368, %v3372
    %v3377 = vand.u32 2147483647, %v3280
    %vm3378 = vcmp.eq.f32.partialorder %v3377, 8.507059e+37
    %v3379 = vand.u32 %v3280, 2147483648
    %v3380 = vor.u32 1.1754944e-38, %v3379
    %v3381 = vsel %vm3378, %v3380, %v3376
    %v3382 = vmul.f32 %v16, %v3381
    %v3383 = vrcp.pop %v3281
    %v3384 = vmul.f32 %v3281, %v3383
    %v3385 = vsub.f32 1.0, %v3384
    %v3386 = vmul.f32 %v3383, %v3385
    %v3387 = vadd.f32 %v3383, %v3386
    %vm3388 = vweird.f32 %v3281
    %vm3389 = vweird.f32 %v3383
    %vm3390 = vmor %vm3388, %vm3389
    %v3391 = vsel %vm3390, %v3383, %v3387
    %v3392 = vand.u32 2147483647, %v3281
    %vm3393 = vcmp.eq.f32.partialorder %v3392, 8.507059e+37
    %v3394 = vand.u32 %v3281, 2147483648
    %v3395 = vor.u32 1.1754944e-38, %v3394
    %v3396 = vsel %vm3393, %v3395, %v3391
    %v3397 = vmul.f32 %v17, %v3396
    %v3398 = vrcp.pop %v3282
    %v3399 = vmul.f32 %v3282, %v3398
    %v3400 = vsub.f32 1.0, %v3399
    %v3401 = vmul.f32 %v3398, %v3400
    %v3402 = vadd.f32 %v3398, %v3401
    %vm3403 = vweird.f32 %v3282
    %vm3404 = vweird.f32 %v3398
    %vm3405 = vmor %vm3403, %vm3404
    %v3406 = vsel %vm3405, %v3398, %v3402
    %v3407 = vand.u32 2147483647, %v3282
    %vm3408 = vcmp.eq.f32.partialorder %v3407, 8.507059e+37
    %v3409 = vand.u32 %v3282, 2147483648
    %v3410 = vor.u32 1.1754944e-38, %v3409
    %v3411 = vsel %vm3408, %v3410, %v3406
    %v3412 = vmul.f32 %v18, %v3411
    %v3413 = vrcp.pop %v3283
    %v3414 = vmul.f32 %v3283, %v3413
    %v3415 = vsub.f32 1.0, %v3414
    %v3416 = vmul.f32 %v3413, %v3415
    %v3417 = vadd.f32 %v3413, %v3416
    %vm3418 = vweird.f32 %v3283
    %vm3419 = vweird.f32 %v3413
    %vm3420 = vmor %vm3418, %vm3419
    %v3421 = vsel %vm3420, %v3413, %v3417
    %v3422 = vand.u32 2147483647, %v3283
    %vm3423 = vcmp.eq.f32.partialorder %v3422, 8.507059e+37
    %v3424 = vand.u32 %v3283, 2147483648
    %v3425 = vor.u32 1.1754944e-38, %v3424
    %v3426 = vsel %vm3423, %v3425, %v3421
    %v3427 = vmul.f32 %v19, %v3426
    %v3428 = vrcp.pop %v3284
    %v3429 = vmul.f32 %v3284, %v3428
    %v3430 = vsub.f32 1.0, %v3429
    %v3431 = vmul.f32 %v3428, %v3430
    %v3432 = vadd.f32 %v3428, %v3431
    %vm3433 = vweird.f32 %v3284
    %vm3434 = vweird.f32 %v3428
    %vm3435 = vmor %vm3433, %vm3434
    %v3436 = vsel %vm3435, %v3428, %v3432
    %v3437 = vand.u32 2147483647, %v3284
    %vm3438 = vcmp.eq.f32.partialorder %v3437, 8.507059e+37
    %v3439 = vand.u32 %v3284, 2147483648
    %v3440 = vor.u32 1.1754944e-38, %v3439
    %v3441 = vsel %vm3438, %v3440, %v3436
    %v3442 = vmul.f32 %v20, %v3441
    %v3443 = vrcp.pop %v3285
    %v3444 = vmul.f32 %v3285, %v3443
    %v3445 = vsub.f32 1.0, %v3444
    %v3446 = vmul.f32 %v3443, %v3445
    %v3447 = vadd.f32 %v3443, %v3446
    %vm3448 = vweird.f32 %v3285
    %vm3449 = vweird.f32 %v3443
    %vm3450 = vmor %vm3448, %vm3449
    %v3451 = vsel %vm3450, %v3443, %v3447
    %v3452 = vand.u32 2147483647, %v3285
    %vm3453 = vcmp.eq.f32.partialorder %v3452, 8.507059e+37
    %v3454 = vand.u32 %v3285, 2147483648
    %v3455 = vor.u32 1.1754944e-38, %v3454
    %v3456 = vsel %vm3453, %v3455, %v3451
    %v3457 = vmul.f32 %v21, %v3456
    %v3458 = vrcp.pop %v3286
    %v3459 = vmul.f32 %v3286, %v3458
    %v3460 = vsub.f32 1.0, %v3459
    %v3461 = vmul.f32 %v3458, %v3460
    %v3462 = vadd.f32 %v3458, %v3461
    %vm3463 = vweird.f32 %v3286
    %vm3464 = vweird.f32 %v3458
    %vm3465 = vmor %vm3463, %vm3464
    %v3466 = vsel %vm3465, %v3458, %v3462
    %v3467 = vand.u32 2147483647, %v3286
    %vm3468 = vcmp.eq.f32.partialorder %v3467, 8.507059e+37
    %v3469 = vand.u32 %v3286, 2147483648
    %v3470 = vor.u32 1.1754944e-38, %v3469
    %v3471 = vsel %vm3468, %v3470, %v3466
    %v3472 = vmul.f32 %v22, %v3471
    %v3473 = vrcp.pop %v3287
    %v3474 = vmul.f32 %v3287, %v3473
    %v3475 = vsub.f32 1.0, %v3474
    %v3476 = vmul.f32 %v3473, %v3475
    %v3477 = vadd.f32 %v3473, %v3476
    %vm3478 = vweird.f32 %v3287
    %vm3479 = vweird.f32 %v3473
    %vm3480 = vmor %vm3478, %vm3479
    %v3481 = vsel %vm3480, %v3473, %v3477
    %v3482 = vand.u32 2147483647, %v3287
    %vm3483 = vcmp.eq.f32.partialorder %v3482, 8.507059e+37
    %v3484 = vand.u32 %v3287, 2147483648
    %v3485 = vor.u32 1.1754944e-38, %v3484
    %v3486 = vsel %vm3483, %v3485, %v3481
    %v3487 = vmul.f32 %v23, %v3486
    %v3488 = vrcp.pop %v3288
    %v3489 = vmul.f32 %v3288, %v3488
    %v3490 = vsub.f32 1.0, %v3489
    %v3491 = vmul.f32 %v3488, %v3490
    %v3492 = vadd.f32 %v3488, %v3491
    %vm3493 = vweird.f32 %v3288
    %vm3494 = vweird.f32 %v3488
    %vm3495 = vmor %vm3493, %vm3494
    %v3496 = vsel %vm3495, %v3488, %v3492
    %v3497 = vand.u32 2147483647, %v3288
    %vm3498 = vcmp.eq.f32.partialorder %v3497, 8.507059e+37
    %v3499 = vand.u32 %v3288, 2147483648
    %v3500 = vor.u32 1.1754944e-38, %v3499
    %v3501 = vsel %vm3498, %v3500, %v3496
    %v3502 = vmul.f32 %v24, %v3501
    %v3503 = vrcp.pop %v3289
    %v3504 = vmul.f32 %v3289, %v3503
    %v3505 = vsub.f32 1.0, %v3504
    %v3506 = vmul.f32 %v3503, %v3505
    %v3507 = vadd.f32 %v3503, %v3506
    %vm3508 = vweird.f32 %v3289
    %vm3509 = vweird.f32 %v3503
    %vm3510 = vmor %vm3508, %vm3509
    %v3511 = vsel %vm3510, %v3503, %v3507
    %v3512 = vand.u32 2147483647, %v3289
    %vm3513 = vcmp.eq.f32.partialorder %v3512, 8.507059e+37
    %v3514 = vand.u32 %v3289, 2147483648
    %v3515 = vor.u32 1.1754944e-38, %v3514
    %v3516 = vsel %vm3513, %v3515, %v3511
    %v3517 = vmul.f32 %v25, %v3516
    %v3518 = vrcp.pop %v3290
    %v3519 = vmul.f32 %v3290, %v3518
    %v3520 = vsub.f32 1.0, %v3519
    %v3521 = vmul.f32 %v3518, %v3520
    %v3522 = vadd.f32 %v3518, %v3521
    %vm3523 = vweird.f32 %v3290
    %vm3524 = vweird.f32 %v3518
    %vm3525 = vmor %vm3523, %vm3524
    %v3526 = vsel %vm3525, %v3518, %v3522
    %v3527 = vand.u32 2147483647, %v3290
    %vm3528 = vcmp.eq.f32.partialorder %v3527, 8.507059e+37
    %v3529 = vand.u32 %v3290, 2147483648
    %v3530 = vor.u32 1.1754944e-38, %v3529
    %v3531 = vsel %vm3528, %v3530, %v3526
    %v3532 = vmul.f32 %v26, %v3531
    %v3533 = vrcp.pop %v3291
    %v3534 = vmul.f32 %v3291, %v3533
    %v3535 = vsub.f32 1.0, %v3534
    %v3536 = vmul.f32 %v3533, %v3535
    %v3537 = vadd.f32 %v3533, %v3536
    %vm3538 = vweird.f32 %v3291
    %vm3539 = vweird.f32 %v3533
    %vm3540 = vmor %vm3538, %vm3539
    %v3541 = vsel %vm3540, %v3533, %v3537
    %v3542 = vand.u32 2147483647, %v3291
    %vm3543 = vcmp.eq.f32.partialorder %v3542, 8.507059e+37
    %v3544 = vand.u32 %v3291, 2147483648
    %v3545 = vor.u32 1.1754944e-38, %v3544
    %v3546 = vsel %vm3543, %v3545, %v3541
    %v3547 = vmul.f32 %v27, %v3546
    %v3564 = vrot.slane %v2506, 4
    %v3565 = vrot.slane %v2521, 4
    %v3566 = vrot.slane %v2536, 4
    %v3567 = vrot.slane %v2551, 4
    %v3568 = vrot.slane %v2566, 4
    %v3569 = vrot.slane %v2581, 4
    %v3570 = vrot.slane %v2596, 4
    %v3571 = vrot.slane %v2611, 4
    %v3572 = vrot.slane %v2626, 4
    %v3573 = vrot.slane %v2641, 4
    %v3574 = vrot.slane %v2656, 4
    %v3575 = vrot.slane %v2671, 4
    %v3576 = vrot.slane %v2686, 4
    %v3577 = vrot.slane %v2701, 4
    %v3578 = vrot.slane %v2716, 4
    %v3579 = vrot.slane %v2731, 4
    %v3596 = vsub.f32 %v1994, %v3564
    %v3597 = vsub.f32 %v2009, %v3565
    %v3598 = vsub.f32 %v2024, %v3566
    %v3599 = vsub.f32 %v2039, %v3567
    %v3600 = vsub.f32 %v2054, %v3568
    %v3601 = vsub.f32 %v2069, %v3569
    %v3602 = vsub.f32 %v2084, %v3570
    %v3603 = vsub.f32 %v2099, %v3571
    %v3604 = vsub.f32 %v2114, %v3572
    %v3605 = vsub.f32 %v2129, %v3573
    %v3606 = vsub.f32 %v2144, %v3574
    %v3607 = vsub.f32 %v2159, %v3575
    %v3608 = vsub.f32 %v2174, %v3576
    %v3609 = vsub.f32 %v2189, %v3577
    %v3610 = vsub.f32 %v2204, %v3578
    %v3611 = vsub.f32 %v2219, %v3579
    %v3612 = vmax.f32 %v3596, 0.0
    %v3613 = vmax.f32 %v3597, 0.0
    %v3614 = vmax.f32 %v3598, 0.0
    %v3615 = vmax.f32 %v3599, 0.0
    %v3616 = vmax.f32 %v3600, 0.0
    %v3617 = vmax.f32 %v3601, 0.0
    %v3618 = vmax.f32 %v3602, 0.0
    %v3619 = vmax.f32 %v3603, 0.0
    %v3620 = vmax.f32 %v3604, 0.0
    %v3621 = vmax.f32 %v3605, 0.0
    %v3622 = vmax.f32 %v3606, 0.0
    %v3623 = vmax.f32 %v3607, 0.0
    %v3624 = vmax.f32 %v3608, 0.0
    %v3625 = vmax.f32 %v3609, 0.0
    %v3626 = vmax.f32 %v3610, 0.0
    %v3627 = vmax.f32 %v3611, 0.0
    %v3628 = vmin.f32 %v3612, 15.99
    %v3629 = vmin.f32 %v3613, 15.99
    %v3630 = vmin.f32 %v3614, 15.99
    %v3631 = vmin.f32 %v3615, 15.99
    %v3632 = vmin.f32 %v3616, 15.99
    %v3633 = vmin.f32 %v3617, 15.99
    %v3634 = vmin.f32 %v3618, 15.99
    %v3635 = vmin.f32 %v3619, 15.99
    %v3636 = vmin.f32 %v3620, 15.99
    %v3637 = vmin.f32 %v3621, 15.99
    %v3638 = vmin.f32 %v3622, 15.99
    %v3639 = vmin.f32 %v3623, 15.99
    %v3640 = vmin.f32 %v3624, 15.99
    %v3641 = vmin.f32 %v3625, 15.99
    %v3642 = vmin.f32 %v3626, 15.99
    %v3643 = vmin.f32 %v3627, 15.99
    %v3660 = vrot.slane %v2778, 4
    %v3661 = vrot.slane %v2793, 4
    %v3662 = vrot.slane %v2808, 4
    %v3663 = vrot.slane %v2823, 4
    %v3664 = vrot.slane %v2838, 4
    %v3665 = vrot.slane %v2853, 4
    %v3666 = vrot.slane %v2868, 4
    %v3667 = vrot.slane %v2883, 4
    %v3668 = vrot.slane %v2898, 4
    %v3669 = vrot.slane %v2913, 4
    %v3670 = vrot.slane %v2928, 4
    %v3671 = vrot.slane %v2943, 4
    %v3672 = vrot.slane %v2958, 4
    %v3673 = vrot.slane %v2973, 4
    %v3674 = vrot.slane %v2988, 4
    %v3675 = vrot.slane %v3003, 4
    %v3692 = vsub.f32 %v2266, %v3660
    %v3693 = vsub.f32 %v2281, %v3661
    %v3694 = vsub.f32 %v2296, %v3662
    %v3695 = vsub.f32 %v2311, %v3663
    %v3696 = vsub.f32 %v2326, %v3664
    %v3697 = vsub.f32 %v2341, %v3665
    %v3698 = vsub.f32 %v2356, %v3666
    %v3699 = vsub.f32 %v2371, %v3667
    %v3700 = vsub.f32 %v2386, %v3668
    %v3701 = vsub.f32 %v2401, %v3669
    %v3702 = vsub.f32 %v2416, %v3670
    %v3703 = vsub.f32 %v2431, %v3671
    %v3704 = vsub.f32 %v2446, %v3672
    %v3705 = vsub.f32 %v2461, %v3673
    %v3706 = vsub.f32 %v2476, %v3674
    %v3707 = vsub.f32 %v2491, %v3675
    %v3708 = vmax.f32 %v3692, 0.0
    %v3709 = vmax.f32 %v3693, 0.0
    %v3710 = vmax.f32 %v3694, 0.0
    %v3711 = vmax.f32 %v3695, 0.0
    %v3712 = vmax.f32 %v3696, 0.0
    %v3713 = vmax.f32 %v3697, 0.0
    %v3714 = vmax.f32 %v3698, 0.0
    %v3715 = vmax.f32 %v3699, 0.0
    %v3716 = vmax.f32 %v3700, 0.0
    %v3717 = vmax.f32 %v3701, 0.0
    %v3718 = vmax.f32 %v3702, 0.0
    %v3719 = vmax.f32 %v3703, 0.0
    %v3720 = vmax.f32 %v3704, 0.0
    %v3721 = vmax.f32 %v3705, 0.0
    %v3722 = vmax.f32 %v3706, 0.0
    %v3723 = vmax.f32 %v3707, 0.0
    %v3724 = vmin.f32 %v3708, 15.99
    %v3725 = vmin.f32 %v3709, 15.99
    %v3726 = vmin.f32 %v3710, 15.99
    %v3727 = vmin.f32 %v3711, 15.99
    %v3728 = vmin.f32 %v3712, 15.99
    %v3729 = vmin.f32 %v3713, 15.99
    %v3730 = vmin.f32 %v3714, 15.99
    %v3731 = vmin.f32 %v3715, 15.99
    %v3732 = vmin.f32 %v3716, 15.99
    %v3733 = vmin.f32 %v3717, 15.99
    %v3734 = vmin.f32 %v3718, 15.99
    %v3735 = vmin.f32 %v3719, 15.99
    %v3736 = vmin.f32 %v3720, 15.99
    %v3737 = vmin.f32 %v3721, 15.99
    %v3738 = vmin.f32 %v3722, 15.99
    %v3739 = vmin.f32 %v3723, 15.99
    %v3756 = vrot.slane %v1994, 2
    %v3757 = vrot.slane %v2009, 2
    %v3758 = vrot.slane %v2024, 2
    %v3759 = vrot.slane %v2039, 2
    %v3760 = vrot.slane %v2054, 2
    %v3761 = vrot.slane %v2069, 2
    %v3762 = vrot.slane %v2084, 2
    %v3763 = vrot.slane %v2099, 2
    %v3764 = vrot.slane %v2114, 2
    %v3765 = vrot.slane %v2129, 2
    %v3766 = vrot.slane %v2144, 2
    %v3767 = vrot.slane %v2159, 2
    %v3768 = vrot.slane %v2174, 2
    %v3769 = vrot.slane %v2189, 2
    %v3770 = vrot.slane %v2204, 2
    %v3771 = vrot.slane %v2219, 2
    %v3788 = vsub.f32 %v3050, %v3756
    %v3789 = vsub.f32 %v3065, %v3757
    %v3790 = vsub.f32 %v3080, %v3758
    %v3791 = vsub.f32 %v3095, %v3759
    %v3792 = vsub.f32 %v3110, %v3760
    %v3793 = vsub.f32 %v3125, %v3761
    %v3794 = vsub.f32 %v3140, %v3762
    %v3795 = vsub.f32 %v3155, %v3763
    %v3796 = vsub.f32 %v3170, %v3764
    %v3797 = vsub.f32 %v3185, %v3765
    %v3798 = vsub.f32 %v3200, %v3766
    %v3799 = vsub.f32 %v3215, %v3767
    %v3800 = vsub.f32 %v3230, %v3768
    %v3801 = vsub.f32 %v3245, %v3769
    %v3802 = vsub.f32 %v3260, %v3770
    %v3803 = vsub.f32 %v3275, %v3771
    %v3804 = vmax.f32 %v3788, 0.0
    %v3805 = vmax.f32 %v3789, 0.0
    %v3806 = vmax.f32 %v3790, 0.0
    %v3807 = vmax.f32 %v3791, 0.0
    %v3808 = vmax.f32 %v3792, 0.0
    %v3809 = vmax.f32 %v3793, 0.0
    %v3810 = vmax.f32 %v3794, 0.0
    %v3811 = vmax.f32 %v3795, 0.0
    %v3812 = vmax.f32 %v3796, 0.0
    %v3813 = vmax.f32 %v3797, 0.0
    %v3814 = vmax.f32 %v3798, 0.0
    %v3815 = vmax.f32 %v3799, 0.0
    %v3816 = vmax.f32 %v3800, 0.0
    %v3817 = vmax.f32 %v3801, 0.0
    %v3818 = vmax.f32 %v3802, 0.0
    %v3819 = vmax.f32 %v3803, 0.0
    %v3820 = vmin.f32 %v3804, 15.99
    %v3821 = vmin.f32 %v3805, 15.99
    %v3822 = vmin.f32 %v3806, 15.99
    %v3823 = vmin.f32 %v3807, 15.99
    %v3824 = vmin.f32 %v3808, 15.99
    %v3825 = vmin.f32 %v3809, 15.99
    %v3826 = vmin.f32 %v3810, 15.99
    %v3827 = vmin.f32 %v3811, 15.99
    %v3828 = vmin.f32 %v3812, 15.99
    %v3829 = vmin.f32 %v3813, 15.99
    %v3830 = vmin.f32 %v3814, 15.99
    %v3831 = vmin.f32 %v3815, 15.99
    %v3832 = vmin.f32 %v3816, 15.99
    %v3833 = vmin.f32 %v3817, 15.99
    %v3834 = vmin.f32 %v3818, 15.99
    %v3835 = vmin.f32 %v3819, 15.99
    %v3852 = vrot.slane %v2266, 2
    %v3853 = vrot.slane %v2281, 2
    %v3854 = vrot.slane %v2296, 2
    %v3855 = vrot.slane %v2311, 2
    %v3856 = vrot.slane %v2326, 2
    %v3857 = vrot.slane %v2341, 2
    %v3858 = vrot.slane %v2356, 2
    %v3859 = vrot.slane %v2371, 2
    %v3860 = vrot.slane %v2386, 2
    %v3861 = vrot.slane %v2401, 2
    %v3862 = vrot.slane %v2416, 2
    %v3863 = vrot.slane %v2431, 2
    %v3864 = vrot.slane %v2446, 2
    %v3865 = vrot.slane %v2461, 2
    %v3866 = vrot.slane %v2476, 2
    %v3867 = vrot.slane %v2491, 2
    %v3884 = vsub.f32 %v3322, %v3852
    %v3885 = vsub.f32 %v3337, %v3853
    %v3886 = vsub.f32 %v3352, %v3854
    %v3887 = vsub.f32 %v3367, %v3855
    %v3888 = vsub.f32 %v3382, %v3856
    %v3889 = vsub.f32 %v3397, %v3857
    %v3890 = vsub.f32 %v3412, %v3858
    %v3891 = vsub.f32 %v3427, %v3859
    %v3892 = vsub.f32 %v3442, %v3860
    %v3893 = vsub.f32 %v3457, %v3861
    %v3894 = vsub.f32 %v3472, %v3862
    %v3895 = vsub.f32 %v3487, %v3863
    %v3896 = vsub.f32 %v3502, %v3864
    %v3897 = vsub.f32 %v3517, %v3865
    %v3898 = vsub.f32 %v3532, %v3866
    %v3899 = vsub.f32 %v3547, %v3867
    %v3900 = vmax.f32 %v3884, 0.0
    %v3901 = vmax.f32 %v3885, 0.0
    %v3902 = vmax.f32 %v3886, 0.0
    %v3903 = vmax.f32 %v3887, 0.0
    %v3904 = vmax.f32 %v3888, 0.0
    %v3905 = vmax.f32 %v3889, 0.0
    %v3906 = vmax.f32 %v3890, 0.0
    %v3907 = vmax.f32 %v3891, 0.0
    %v3908 = vmax.f32 %v3892, 0.0
    %v3909 = vmax.f32 %v3893, 0.0
    %v3910 = vmax.f32 %v3894, 0.0
    %v3911 = vmax.f32 %v3895, 0.0
    %v3912 = vmax.f32 %v3896, 0.0
    %v3913 = vmax.f32 %v3897, 0.0
    %v3914 = vmax.f32 %v3898, 0.0
    %v3915 = vmax.f32 %v3899, 0.0
    %v3916 = vmin.f32 %v3900, 15.99
    %v3917 = vmin.f32 %v3901, 15.99
    %v3918 = vmin.f32 %v3902, 15.99
    %v3919 = vmin.f32 %v3903, 15.99
    %v3920 = vmin.f32 %v3904, 15.99
    %v3921 = vmin.f32 %v3905, 15.99
    %v3922 = vmin.f32 %v3906, 15.99
    %v3923 = vmin.f32 %v3907, 15.99
    %v3924 = vmin.f32 %v3908, 15.99
    %v3925 = vmin.f32 %v3909, 15.99
    %v3926 = vmin.f32 %v3910, 15.99
    %v3927 = vmin.f32 %v3911, 15.99
    %v3928 = vmin.f32 %v3912, 15.99
    %v3929 = vmin.f32 %v3913, 15.99
    %v3930 = vmin.f32 %v3914, 15.99
    %v3931 = vmin.f32 %v3915, 15.99
    %v3932 = vlaneseq
    %v3933 = vshrl.u32 %v3932, 7
    %v3934 = vadd.s32 %v3933, 8
    %v3935 = vadd.s32 %v3933, 16
    %v3936 = vcvt.s32.f32 %v3933
    %v3937 = vcvt.s32.f32 %v3934
    %v3938 = vcvt.s32.f32 %v3935
    %v3939 = vld [vmem:[%s1] sm:$0xff]
    %v3940 = vld [vmem:[%s1 + $0x8] sm:$0xff]
    %v3941 = vld [vmem:[%s1 + $0x10] sm:$0xff]
    %v3942 = vld [vmem:[%s1 + $0x18] sm:$0xff]
    %v3943 = vld [vmem:[%s1 + $0x20] sm:$0xff]
    %v3944 = vld [vmem:[%s1 + $0x28] sm:$0xff]
    %v3945 = vld [vmem:[%s1 + $0x30] sm:$0xff]
    %v3946 = vld [vmem:[%s1 + $0x38] sm:$0xff]
    %v3947 = vld [vmem:[%s1 + $0x40] sm:$0xff]
    %v3948 = vld [vmem:[%s1 + $0x48] sm:$0xff]
    %v3949 = vld [vmem:[%s1 + $0x50] sm:$0xff]
    %v3950 = vld [vmem:[%s1 + $0x58] sm:$0xff]
    %v3951 = vld [vmem:[%s1 + $0x60] sm:$0xff]
    %v3952 = vld [vmem:[%s1 + $0x68] sm:$0xff]
    %v3953 = vld [vmem:[%s1 + $0x70] sm:$0xff]
    %v3954 = vld [vmem:[%s1 + $0x78] sm:$0xff]
    %v3955 = vld [vmem:[%s1 + $0x80] sm:$0x11]
    %v3956 = vld [vmem:[%s1 + $0x88] sm:$0x11]
    %v3957 = vld [vmem:[%s1 + $0x90] sm:$0x11]
    %v3958 = vld [vmem:[%s1 + $0x98] sm:$0x11]
    %v3959 = vld [vmem:[%s1 + $0xa0] sm:$0x11]
    %v3960 = vld [vmem:[%s1 + $0xa8] sm:$0x11]
    %v3961 = vld [vmem:[%s1 + $0xb0] sm:$0x11]
    %v3962 = vld [vmem:[%s1 + $0xb8] sm:$0x11]
    %v3963 = vunpack.c.l.bf16 %v3939
    %v3964 = vunpack.c.h.bf16 %v3939
    %v3965 = vunpack.c.l.bf16 %v3940
    %v3966 = vunpack.c.h.bf16 %v3940
    %v3967 = vunpack.c.l.bf16 %v3941
    %v3968 = vunpack.c.h.bf16 %v3941
    %v3969 = vunpack.c.l.bf16 %v3942
    %v3970 = vunpack.c.h.bf16 %v3942
    %v3971 = vunpack.c.l.bf16 %v3943
    %v3972 = vunpack.c.h.bf16 %v3943
    %v3973 = vunpack.c.l.bf16 %v3944
    %v3974 = vunpack.c.h.bf16 %v3944
    %v3975 = vunpack.c.l.bf16 %v3945
    %v3976 = vunpack.c.h.bf16 %v3945
    %v3977 = vunpack.c.l.bf16 %v3946
    %v3978 = vunpack.c.h.bf16 %v3946
    %v3979 = vunpack.c.l.bf16 %v3947
    %v3980 = vunpack.c.h.bf16 %v3947
    %v3981 = vunpack.c.l.bf16 %v3948
    %v3982 = vunpack.c.h.bf16 %v3948
    %v3983 = vunpack.c.l.bf16 %v3949
    %v3984 = vunpack.c.h.bf16 %v3949
    %v3985 = vunpack.c.l.bf16 %v3950
    %v3986 = vunpack.c.h.bf16 %v3950
    %v3987 = vunpack.c.l.bf16 %v3951
    %v3988 = vunpack.c.h.bf16 %v3951
    %v3989 = vunpack.c.l.bf16 %v3952
    %v3990 = vunpack.c.h.bf16 %v3952
    %v3991 = vunpack.c.l.bf16 %v3953
    %v3992 = vunpack.c.h.bf16 %v3953
    %v3993 = vunpack.c.l.bf16 %v3954
    %v3994 = vunpack.c.h.bf16 %v3954
    %v3995 = vunpack.c.l.bf16 %v3955
    %v3996 = vunpack.c.h.bf16 %v3955
    %v3997 = vunpack.c.l.bf16 %v3956
    %v3998 = vunpack.c.h.bf16 %v3956
    %v3999 = vunpack.c.l.bf16 %v3957
    %v4000 = vunpack.c.h.bf16 %v3957
    %v4001 = vunpack.c.l.bf16 %v3958
    %v4002 = vunpack.c.h.bf16 %v3958
    %v4003 = vunpack.c.l.bf16 %v3959
    %v4004 = vunpack.c.h.bf16 %v3959
    %v4005 = vunpack.c.l.bf16 %v3960
    %v4006 = vunpack.c.h.bf16 %v3960
    %v4007 = vunpack.c.l.bf16 %v3961
    %v4008 = vunpack.c.h.bf16 %v3961
    %v4009 = vunpack.c.l.bf16 %v3962
    %v4010 = vunpack.c.h.bf16 %v3962
    %v4011 = vmax.f32 %v3963, %v3979
    %vm4012 = vcmask 1040384
    %v4013 = vsel %vm4012, %v3995, -inf
    %v4014 = vmax.f32 %v4011, %v4013
    %v4015 = vrot.slane %v4014, 4
    %v4016 = vmax.f32 %v4014, %v4015
    %v4017 = vrot.slane %v4016, 2
    %v4018 = vmax.f32 %v4016, %v4017
    %v4019 = vrot.slane %v4018, 1
    %v4020 = vmax.f32 %v4018, %v4019
    %v4021 = vmax.f32 %v3964, %v3980
    %v4022 = vsel %vm4012, %v3996, -inf
    %v4023 = vmax.f32 %v4021, %v4022
    %v4024 = vrot.slane %v4023, 4
    %v4025 = vmax.f32 %v4023, %v4024
    %v4026 = vrot.slane %v4025, 2
    %v4027 = vmax.f32 %v4025, %v4026
    %v4028 = vrot.slane %v4027, 1
    %v4029 = vmax.f32 %v4027, %v4028
    %v4030 = vmax.f32 %v3965, %v3981
    %v4031 = vsel %vm4012, %v3997, -inf
    %v4032 = vmax.f32 %v4030, %v4031
    %v4033 = vrot.slane %v4032, 4
    %v4034 = vmax.f32 %v4032, %v4033
    %v4035 = vrot.slane %v4034, 2
    %v4036 = vmax.f32 %v4034, %v4035
    %v4037 = vrot.slane %v4036, 1
    %v4038 = vmax.f32 %v4036, %v4037
    %v4039 = vmax.f32 %v3966, %v3982
    %v4040 = vsel %vm4012, %v3998, -inf
    %v4041 = vmax.f32 %v4039, %v4040
    %v4042 = vrot.slane %v4041, 4
    %v4043 = vmax.f32 %v4041, %v4042
    %v4044 = vrot.slane %v4043, 2
    %v4045 = vmax.f32 %v4043, %v4044
    %v4046 = vrot.slane %v4045, 1
    %v4047 = vmax.f32 %v4045, %v4046
    %v4048 = vmax.f32 %v3967, %v3983
    %v4049 = vsel %vm4012, %v3999, -inf
    %v4050 = vmax.f32 %v4048, %v4049
    %v4051 = vrot.slane %v4050, 4
    %v4052 = vmax.f32 %v4050, %v4051
    %v4053 = vrot.slane %v4052, 2
    %v4054 = vmax.f32 %v4052, %v4053
    %v4055 = vrot.slane %v4054, 1
    %v4056 = vmax.f32 %v4054, %v4055
    %v4057 = vmax.f32 %v3968, %v3984
    %v4058 = vsel %vm4012, %v4000, -inf
    %v4059 = vmax.f32 %v4057, %v4058
    %v4060 = vrot.slane %v4059, 4
    %v4061 = vmax.f32 %v4059, %v4060
    %v4062 = vrot.slane %v4061, 2
    %v4063 = vmax.f32 %v4061, %v4062
    %v4064 = vrot.slane %v4063, 1
    %v4065 = vmax.f32 %v4063, %v4064
    %v4066 = vmax.f32 %v3969, %v3985
    %v4067 = vsel %vm4012, %v4001, -inf
    %v4068 = vmax.f32 %v4066, %v4067
    %v4069 = vrot.slane %v4068, 4
    %v4070 = vmax.f32 %v4068, %v4069
    %v4071 = vrot.slane %v4070, 2
    %v4072 = vmax.f32 %v4070, %v4071
    %v4073 = vrot.slane %v4072, 1
    %v4074 = vmax.f32 %v4072, %v4073
    %v4075 = vmax.f32 %v3970, %v3986
    %v4076 = vsel %vm4012, %v4002, -inf
    %v4077 = vmax.f32 %v4075, %v4076
    %v4078 = vrot.slane %v4077, 4
    %v4079 = vmax.f32 %v4077, %v4078
    %v4080 = vrot.slane %v4079, 2
    %v4081 = vmax.f32 %v4079, %v4080
    %v4082 = vrot.slane %v4081, 1
    %v4083 = vmax.f32 %v4081, %v4082
    %v4084 = vmax.f32 %v3971, %v3987
    %v4085 = vsel %vm4012, %v4003, -inf
    %v4086 = vmax.f32 %v4084, %v4085
    %v4087 = vrot.slane %v4086, 4
    %v4088 = vmax.f32 %v4086, %v4087
    %v4089 = vrot.slane %v4088, 2
    %v4090 = vmax.f32 %v4088, %v4089
    %v4091 = vrot.slane %v4090, 1
    %v4092 = vmax.f32 %v4090, %v4091
    %v4093 = vmax.f32 %v3972, %v3988
    %v4094 = vsel %vm4012, %v4004, -inf
    %v4095 = vmax.f32 %v4093, %v4094
    %v4096 = vrot.slane %v4095, 4
    %v4097 = vmax.f32 %v4095, %v4096
    %v4098 = vrot.slane %v4097, 2
    %v4099 = vmax.f32 %v4097, %v4098
    %v4100 = vrot.slane %v4099, 1
    %v4101 = vmax.f32 %v4099, %v4100
    %v4102 = vmax.f32 %v3973, %v3989
    %v4103 = vsel %vm4012, %v4005, -inf
    %v4104 = vmax.f32 %v4102, %v4103
    %v4105 = vrot.slane %v4104, 4
    %v4106 = vmax.f32 %v4104, %v4105
    %v4107 = vrot.slane %v4106, 2
    %v4108 = vmax.f32 %v4106, %v4107
    %v4109 = vrot.slane %v4108, 1
    %v4110 = vmax.f32 %v4108, %v4109
    %v4111 = vmax.f32 %v3974, %v3990
    %v4112 = vsel %vm4012, %v4006, -inf
    %v4113 = vmax.f32 %v4111, %v4112
    %v4114 = vrot.slane %v4113, 4
    %v4115 = vmax.f32 %v4113, %v4114
    %v4116 = vrot.slane %v4115, 2
    %v4117 = vmax.f32 %v4115, %v4116
    %v4118 = vrot.slane %v4117, 1
    %v4119 = vmax.f32 %v4117, %v4118
    %v4120 = vmax.f32 %v3975, %v3991
    %v4121 = vsel %vm4012, %v4007, -inf
    %v4122 = vmax.f32 %v4120, %v4121
    %v4123 = vrot.slane %v4122, 4
    %v4124 = vmax.f32 %v4122, %v4123
    %v4125 = vrot.slane %v4124, 2
    %v4126 = vmax.f32 %v4124, %v4125
    %v4127 = vrot.slane %v4126, 1
    %v4128 = vmax.f32 %v4126, %v4127
    %v4129 = vmax.f32 %v3976, %v3992
    %v4130 = vsel %vm4012, %v4008, -inf
    %v4131 = vmax.f32 %v4129, %v4130
    %v4132 = vrot.slane %v4131, 4
    %v4133 = vmax.f32 %v4131, %v4132
    %v4134 = vrot.slane %v4133, 2
    %v4135 = vmax.f32 %v4133, %v4134
    %v4136 = vrot.slane %v4135, 1
    %v4137 = vmax.f32 %v4135, %v4136
    %v4138 = vmax.f32 %v3977, %v3993
    %v4139 = vsel %vm4012, %v4009, -inf
    %v4140 = vmax.f32 %v4138, %v4139
    %v4141 = vrot.slane %v4140, 4
    %v4142 = vmax.f32 %v4140, %v4141
    %v4143 = vrot.slane %v4142, 2
    %v4144 = vmax.f32 %v4142, %v4143
    %v4145 = vrot.slane %v4144, 1
    %v4146 = vmax.f32 %v4144, %v4145
    %v4147 = vmax.f32 %v3978, %v3994
    %v4148 = vsel %vm4012, %v4010, -inf
    %v4149 = vmax.f32 %v4147, %v4148
    %v4150 = vrot.slane %v4149, 4
    %v4151 = vmax.f32 %v4149, %v4150
    %v4152 = vrot.slane %v4151, 2
    %v4153 = vmax.f32 %v4151, %v4152
    %v4154 = vrot.slane %v4153, 1
    %v4155 = vmax.f32 %v4153, %v4154
    %v4156 = vsub.f32 %v3963, %v4020
    %v4157 = vsub.f32 %v3964, %v4029
    %v4158 = vsub.f32 %v3965, %v4038
    %v4159 = vsub.f32 %v3966, %v4047
    %v4160 = vsub.f32 %v3967, %v4056
    %v4161 = vsub.f32 %v3968, %v4065
    %v4162 = vsub.f32 %v3969, %v4074
    %v4163 = vsub.f32 %v3970, %v4083
    %v4164 = vsub.f32 %v3971, %v4092
    %v4165 = vsub.f32 %v3972, %v4101
    %v4166 = vsub.f32 %v3973, %v4110
    %v4167 = vsub.f32 %v3974, %v4119
    %v4168 = vsub.f32 %v3975, %v4128
    %v4169 = vsub.f32 %v3976, %v4137
    %v4170 = vsub.f32 %v3977, %v4146
    %v4171 = vsub.f32 %v3978, %v4155
    %v4172 = vsub.f32 %v3979, %v4020
    %v4173 = vsub.f32 %v3980, %v4029
    %v4174 = vsub.f32 %v3981, %v4038
    %v4175 = vsub.f32 %v3982, %v4047
    %v4176 = vsub.f32 %v3983, %v4056
    %v4177 = vsub.f32 %v3984, %v4065
    %v4178 = vsub.f32 %v3985, %v4074
    %v4179 = vsub.f32 %v3986, %v4083
    %v4180 = vsub.f32 %v3987, %v4092
    %v4181 = vsub.f32 %v3988, %v4101
    %v4182 = vsub.f32 %v3989, %v4110
    %v4183 = vsub.f32 %v3990, %v4119
    %v4184 = vsub.f32 %v3991, %v4128
    %v4185 = vsub.f32 %v3992, %v4137
    %v4186 = vsub.f32 %v3993, %v4146
    %v4187 = vsub.f32 %v3994, %v4155
    %v4188 = vsub.f32 %v3995, %v4020
    %v4189 = vsub.f32 %v3996, %v4029
    %v4190 = vsub.f32 %v3997, %v4038
    %v4191 = vsub.f32 %v3998, %v4047
    %v4192 = vsub.f32 %v3999, %v4056
    %v4193 = vsub.f32 %v4000, %v4065
    %v4194 = vsub.f32 %v4001, %v4074
    %v4195 = vsub.f32 %v4002, %v4083
    %v4196 = vsub.f32 %v4003, %v4092
    %v4197 = vsub.f32 %v4004, %v4101
    %v4198 = vsub.f32 %v4005, %v4110
    %v4199 = vsub.f32 %v4006, %v4119
    %v4200 = vsub.f32 %v4007, %v4128
    %v4201 = vsub.f32 %v4008, %v4137
    %v4202 = vsub.f32 %v4009, %v4146
    %v4203 = vsub.f32 %v4010, %v4155
    %v4204 = vmul.f32 %v4156, 1.442695
    %v4205 = vpow.pop %v4204
    %v4206 = vmul.f32 %v4157, 1.442695
    %v4207 = vpow.pop %v4206
    %v4208 = vmul.f32 %v4158, 1.442695
    %v4209 = vpow.pop %v4208
    %v4210 = vmul.f32 %v4159, 1.442695
    %v4211 = vpow.pop %v4210
    %v4212 = vmul.f32 %v4160, 1.442695
    %v4213 = vpow.pop %v4212
    %v4214 = vmul.f32 %v4161, 1.442695
    %v4215 = vpow.pop %v4214
    %v4216 = vmul.f32 %v4162, 1.442695
    %v4217 = vpow.pop %v4216
    %v4218 = vmul.f32 %v4163, 1.442695
    %v4219 = vpow.pop %v4218
    %v4220 = vmul.f32 %v4164, 1.442695
    %v4221 = vpow.pop %v4220
    %v4222 = vmul.f32 %v4165, 1.442695
    %v4223 = vpow.pop %v4222
    %v4224 = vmul.f32 %v4166, 1.442695
    %v4225 = vpow.pop %v4224
    %v4226 = vmul.f32 %v4167, 1.442695
    %v4227 = vpow.pop %v4226
    %v4228 = vmul.f32 %v4168, 1.442695
    %v4229 = vpow.pop %v4228
    %v4230 = vmul.f32 %v4169, 1.442695
    %v4231 = vpow.pop %v4230
    %v4232 = vmul.f32 %v4170, 1.442695
    %v4233 = vpow.pop %v4232
    %v4234 = vmul.f32 %v4171, 1.442695
    %v4235 = vpow.pop %v4234
    %v4236 = vmul.f32 %v4172, 1.442695
    %v4237 = vpow.pop %v4236
    %v4238 = vmul.f32 %v4173, 1.442695
    %v4239 = vpow.pop %v4238
    %v4240 = vmul.f32 %v4174, 1.442695
    %v4241 = vpow.pop %v4240
    %v4242 = vmul.f32 %v4175, 1.442695
    %v4243 = vpow.pop %v4242
    %v4244 = vmul.f32 %v4176, 1.442695
    %v4245 = vpow.pop %v4244
    %v4246 = vmul.f32 %v4177, 1.442695
    %v4247 = vpow.pop %v4246
    %v4248 = vmul.f32 %v4178, 1.442695
    %v4249 = vpow.pop %v4248
    %v4250 = vmul.f32 %v4179, 1.442695
    %v4251 = vpow.pop %v4250
    %v4252 = vmul.f32 %v4180, 1.442695
    %v4253 = vpow.pop %v4252
    %v4254 = vmul.f32 %v4181, 1.442695
    %v4255 = vpow.pop %v4254
    %v4256 = vmul.f32 %v4182, 1.442695
    %v4257 = vpow.pop %v4256
    %v4258 = vmul.f32 %v4183, 1.442695
    %v4259 = vpow.pop %v4258
    %v4260 = vmul.f32 %v4184, 1.442695
    %v4261 = vpow.pop %v4260
    %v4262 = vmul.f32 %v4185, 1.442695
    %v4263 = vpow.pop %v4262
    %v4264 = vmul.f32 %v4186, 1.442695
    %v4265 = vpow.pop %v4264
    %v4266 = vmul.f32 %v4187, 1.442695
    %v4267 = vpow.pop %v4266
    %v4268 = vmul.f32 %v4188, 1.442695
    %v4269 = vpow.pop %v4268
    %v4270 = vmul.f32 %v4189, 1.442695
    %v4271 = vpow.pop %v4270
    %v4272 = vmul.f32 %v4190, 1.442695
    %v4273 = vpow.pop %v4272
    %v4274 = vmul.f32 %v4191, 1.442695
    %v4275 = vpow.pop %v4274
    %v4276 = vmul.f32 %v4192, 1.442695
    %v4277 = vpow.pop %v4276
    %v4278 = vmul.f32 %v4193, 1.442695
    %v4279 = vpow.pop %v4278
    %v4280 = vmul.f32 %v4194, 1.442695
    %v4281 = vpow.pop %v4280
    %v4282 = vmul.f32 %v4195, 1.442695
    %v4283 = vpow.pop %v4282
    %v4284 = vmul.f32 %v4196, 1.442695
    %v4285 = vpow.pop %v4284
    %v4286 = vmul.f32 %v4197, 1.442695
    %v4287 = vpow.pop %v4286
    %v4288 = vmul.f32 %v4198, 1.442695
    %v4289 = vpow.pop %v4288
    %v4290 = vmul.f32 %v4199, 1.442695
    %v4291 = vpow.pop %v4290
    %v4292 = vmul.f32 %v4200, 1.442695
    %v4293 = vpow.pop %v4292
    %v4294 = vmul.f32 %v4201, 1.442695
    %v4295 = vpow.pop %v4294
    %v4296 = vmul.f32 %v4202, 1.442695
    %v4297 = vpow.pop %v4296
    %v4298 = vmul.f32 %v4203, 1.442695
    %v4299 = vpow.pop %v4298
    %v4300 = vadd.f32 %v4205, %v4237
    %v4301 = vsel %vm4012, %v4269, 0.0
    %v4302 = vadd.f32 %v4300, %v4301
    %v4303 = vrot.slane %v4302, 4
    %v4304 = vadd.f32 %v4302, %v4303
    %v4305 = vrot.slane %v4304, 2
    %v4306 = vadd.f32 %v4304, %v4305
    %v4307 = vrot.slane %v4306, 1
    %v4308 = vadd.f32 %v4306, %v4307
    %v4309 = vadd.f32 %v4207, %v4239
    %v4310 = vsel %vm4012, %v4271, 0.0
    %v4311 = vadd.f32 %v4309, %v4310
    %v4312 = vrot.slane %v4311, 4
    %v4313 = vadd.f32 %v4311, %v4312
    %v4314 = vrot.slane %v4313, 2
    %v4315 = vadd.f32 %v4313, %v4314
    %v4316 = vrot.slane %v4315, 1
    %v4317 = vadd.f32 %v4315, %v4316
    %v4318 = vadd.f32 %v4209, %v4241
    %v4319 = vsel %vm4012, %v4273, 0.0
    %v4320 = vadd.f32 %v4318, %v4319
    %v4321 = vrot.slane %v4320, 4
    %v4322 = vadd.f32 %v4320, %v4321
    %v4323 = vrot.slane %v4322, 2
    %v4324 = vadd.f32 %v4322, %v4323
    %v4325 = vrot.slane %v4324, 1
    %v4326 = vadd.f32 %v4324, %v4325
    %v4327 = vadd.f32 %v4211, %v4243
    %v4328 = vsel %vm4012, %v4275, 0.0
    %v4329 = vadd.f32 %v4327, %v4328
    %v4330 = vrot.slane %v4329, 4
    %v4331 = vadd.f32 %v4329, %v4330
    %v4332 = vrot.slane %v4331, 2
    %v4333 = vadd.f32 %v4331, %v4332
    %v4334 = vrot.slane %v4333, 1
    %v4335 = vadd.f32 %v4333, %v4334
    %v4336 = vadd.f32 %v4213, %v4245
    %v4337 = vsel %vm4012, %v4277, 0.0
    %v4338 = vadd.f32 %v4336, %v4337
    %v4339 = vrot.slane %v4338, 4
    %v4340 = vadd.f32 %v4338, %v4339
    %v4341 = vrot.slane %v4340, 2
    %v4342 = vadd.f32 %v4340, %v4341
    %v4343 = vrot.slane %v4342, 1
    %v4344 = vadd.f32 %v4342, %v4343
    %v4345 = vadd.f32 %v4215, %v4247
    %v4346 = vsel %vm4012, %v4279, 0.0
    %v4347 = vadd.f32 %v4345, %v4346
    %v4348 = vrot.slane %v4347, 4
    %v4349 = vadd.f32 %v4347, %v4348
    %v4350 = vrot.slane %v4349, 2
    %v4351 = vadd.f32 %v4349, %v4350
    %v4352 = vrot.slane %v4351, 1
    %v4353 = vadd.f32 %v4351, %v4352
    %v4354 = vadd.f32 %v4217, %v4249
    %v4355 = vsel %vm4012, %v4281, 0.0
    %v4356 = vadd.f32 %v4354, %v4355
    %v4357 = vrot.slane %v4356, 4
    %v4358 = vadd.f32 %v4356, %v4357
    %v4359 = vrot.slane %v4358, 2
    %v4360 = vadd.f32 %v4358, %v4359
    %v4361 = vrot.slane %v4360, 1
    %v4362 = vadd.f32 %v4360, %v4361
    %v4363 = vadd.f32 %v4219, %v4251
    %v4364 = vsel %vm4012, %v4283, 0.0
    %v4365 = vadd.f32 %v4363, %v4364
    %v4366 = vrot.slane %v4365, 4
    %v4367 = vadd.f32 %v4365, %v4366
    %v4368 = vrot.slane %v4367, 2
    %v4369 = vadd.f32 %v4367, %v4368
    %v4370 = vrot.slane %v4369, 1
    %v4371 = vadd.f32 %v4369, %v4370
    %v4372 = vadd.f32 %v4221, %v4253
    %v4373 = vsel %vm4012, %v4285, 0.0
    %v4374 = vadd.f32 %v4372, %v4373
    %v4375 = vrot.slane %v4374, 4
    %v4376 = vadd.f32 %v4374, %v4375
    %v4377 = vrot.slane %v4376, 2
    %v4378 = vadd.f32 %v4376, %v4377
    %v4379 = vrot.slane %v4378, 1
    %v4380 = vadd.f32 %v4378, %v4379
    %v4381 = vadd.f32 %v4223, %v4255
    %v4382 = vsel %vm4012, %v4287, 0.0
    %v4383 = vadd.f32 %v4381, %v4382
    %v4384 = vrot.slane %v4383, 4
    %v4385 = vadd.f32 %v4383, %v4384
    %v4386 = vrot.slane %v4385, 2
    %v4387 = vadd.f32 %v4385, %v4386
    %v4388 = vrot.slane %v4387, 1
    %v4389 = vadd.f32 %v4387, %v4388
    %v4390 = vadd.f32 %v4225, %v4257
    %v4391 = vsel %vm4012, %v4289, 0.0
    %v4392 = vadd.f32 %v4390, %v4391
    %v4393 = vrot.slane %v4392, 4
    %v4394 = vadd.f32 %v4392, %v4393
    %v4395 = vrot.slane %v4394, 2
    %v4396 = vadd.f32 %v4394, %v4395
    %v4397 = vrot.slane %v4396, 1
    %v4398 = vadd.f32 %v4396, %v4397
    %v4399 = vadd.f32 %v4227, %v4259
    %v4400 = vsel %vm4012, %v4291, 0.0
    %v4401 = vadd.f32 %v4399, %v4400
    %v4402 = vrot.slane %v4401, 4
    %v4403 = vadd.f32 %v4401, %v4402
    %v4404 = vrot.slane %v4403, 2
    %v4405 = vadd.f32 %v4403, %v4404
    %v4406 = vrot.slane %v4405, 1
    %v4407 = vadd.f32 %v4405, %v4406
    %v4408 = vadd.f32 %v4229, %v4261
    %v4409 = vsel %vm4012, %v4293, 0.0
    %v4410 = vadd.f32 %v4408, %v4409
    %v4411 = vrot.slane %v4410, 4
    %v4412 = vadd.f32 %v4410, %v4411
    %v4413 = vrot.slane %v4412, 2
    %v4414 = vadd.f32 %v4412, %v4413
    %v4415 = vrot.slane %v4414, 1
    %v4416 = vadd.f32 %v4414, %v4415
    %v4417 = vadd.f32 %v4231, %v4263
    %v4418 = vsel %vm4012, %v4295, 0.0
    %v4419 = vadd.f32 %v4417, %v4418
    %v4420 = vrot.slane %v4419, 4
    %v4421 = vadd.f32 %v4419, %v4420
    %v4422 = vrot.slane %v4421, 2
    %v4423 = vadd.f32 %v4421, %v4422
    %v4424 = vrot.slane %v4423, 1
    %v4425 = vadd.f32 %v4423, %v4424
    %v4426 = vadd.f32 %v4233, %v4265
    %v4427 = vsel %vm4012, %v4297, 0.0
    %v4428 = vadd.f32 %v4426, %v4427
    %v4429 = vrot.slane %v4428, 4
    %v4430 = vadd.f32 %v4428, %v4429
    %v4431 = vrot.slane %v4430, 2
    %v4432 = vadd.f32 %v4430, %v4431
    %v4433 = vrot.slane %v4432, 1
    %v4434 = vadd.f32 %v4432, %v4433
    %v4435 = vadd.f32 %v4235, %v4267
    %v4436 = vsel %vm4012, %v4299, 0.0
    %v4437 = vadd.f32 %v4435, %v4436
    %v4438 = vrot.slane %v4437, 4
    %v4439 = vadd.f32 %v4437, %v4438
    %v4440 = vrot.slane %v4439, 2
    %v4441 = vadd.f32 %v4439, %v4440
    %v4442 = vrot.slane %v4441, 1
    %v4443 = vadd.f32 %v4441, %v4442
    %v4444 = vlog2.pop %v4308
    %v4445 = vmul.f32 %v4444, 0.6931472
    %v4446 = vlog2.pop %v4317
    %v4447 = vmul.f32 %v4446, 0.6931472
    %v4448 = vlog2.pop %v4326
    %v4449 = vmul.f32 %v4448, 0.6931472
    %v4450 = vlog2.pop %v4335
    %v4451 = vmul.f32 %v4450, 0.6931472
    %v4452 = vlog2.pop %v4344
    %v4453 = vmul.f32 %v4452, 0.6931472
    %v4454 = vlog2.pop %v4353
    %v4455 = vmul.f32 %v4454, 0.6931472
    %v4456 = vlog2.pop %v4362
    %v4457 = vmul.f32 %v4456, 0.6931472
    %v4458 = vlog2.pop %v4371
    %v4459 = vmul.f32 %v4458, 0.6931472
    %v4460 = vlog2.pop %v4380
    %v4461 = vmul.f32 %v4460, 0.6931472
    %v4462 = vlog2.pop %v4389
    %v4463 = vmul.f32 %v4462, 0.6931472
    %v4464 = vlog2.pop %v4398
    %v4465 = vmul.f32 %v4464, 0.6931472
    %v4466 = vlog2.pop %v4407
    %v4467 = vmul.f32 %v4466, 0.6931472
    %v4468 = vlog2.pop %v4416
    %v4469 = vmul.f32 %v4468, 0.6931472
    %v4470 = vlog2.pop %v4425
    %v4471 = vmul.f32 %v4470, 0.6931472
    %v4472 = vlog2.pop %v4434
    %v4473 = vmul.f32 %v4472, 0.6931472
    %v4474 = vlog2.pop %v4443
    %v4475 = vmul.f32 %v4474, 0.6931472
    %v4476 = vadd.f32 %v4020, %v4445
    %v4477 = vadd.f32 %v4029, %v4447
    %v4478 = vadd.f32 %v4038, %v4449
    %v4479 = vadd.f32 %v4047, %v4451
    %v4480 = vadd.f32 %v4056, %v4453
    %v4481 = vadd.f32 %v4065, %v4455
    %v4482 = vadd.f32 %v4074, %v4457
    %v4483 = vadd.f32 %v4083, %v4459
    %v4484 = vadd.f32 %v4092, %v4461
    %v4485 = vadd.f32 %v4101, %v4463
    %v4486 = vadd.f32 %v4110, %v4465
    %v4487 = vadd.f32 %v4119, %v4467
    %v4488 = vadd.f32 %v4128, %v4469
    %v4489 = vadd.f32 %v4137, %v4471
    %v4490 = vadd.f32 %v4146, %v4473
    %v4491 = vadd.f32 %v4155, %v4475
    %v4492 = vperm.slane %v3628, 0
    %v4493 = vperm.slane %v3629, 0
    %v4494 = vperm.slane %v3630, 0
    %v4495 = vperm.slane %v3631, 0
    %v4496 = vperm.slane %v3632, 0
    %v4497 = vperm.slane %v3633, 0
    %v4498 = vperm.slane %v3634, 0
    %v4499 = vperm.slane %v3635, 0
    %v4500 = vperm.slane %v3636, 0
    %v4501 = vperm.slane %v3637, 0
    %v4502 = vperm.slane %v3638, 0
    %v4503 = vperm.slane %v3639, 0
    %v4504 = vperm.slane %v3640, 0
    %v4505 = vperm.slane %v3641, 0
    %v4506 = vperm.slane %v3642, 0
    %v4507 = vperm.slane %v3643, 0
    %v4508 = vsub.f32 %v4492, %v3936
    %v4509 = vsub.f32 %v4493, %v3936
    %v4510 = vsub.f32 %v4494, %v3936
    %v4511 = vsub.f32 %v4495, %v3936
    %v4512 = vsub.f32 %v4496, %v3936
    %v4513 = vsub.f32 %v4497, %v3936
    %v4514 = vsub.f32 %v4498, %v3936
    %v4515 = vsub.f32 %v4499, %v3936
    %v4516 = vsub.f32 %v4500, %v3936
    %v4517 = vsub.f32 %v4501, %v3936
    %v4518 = vsub.f32 %v4502, %v3936
    %v4519 = vsub.f32 %v4503, %v3936
    %v4520 = vsub.f32 %v4504, %v3936
    %v4521 = vsub.f32 %v4505, %v3936
    %v4522 = vsub.f32 %v4506, %v3936
    %v4523 = vsub.f32 %v4507, %v3936
    %v4524 = vsub.f32 %v4492, %v3937
    %v4525 = vsub.f32 %v4493, %v3937
    %v4526 = vsub.f32 %v4494, %v3937
    %v4527 = vsub.f32 %v4495, %v3937
    %v4528 = vsub.f32 %v4496, %v3937
    %v4529 = vsub.f32 %v4497, %v3937
    %v4530 = vsub.f32 %v4498, %v3937
    %v4531 = vsub.f32 %v4499, %v3937
    %v4532 = vsub.f32 %v4500, %v3937
    %v4533 = vsub.f32 %v4501, %v3937
    %v4534 = vsub.f32 %v4502, %v3937
    %v4535 = vsub.f32 %v4503, %v3937
    %v4536 = vsub.f32 %v4504, %v3937
    %v4537 = vsub.f32 %v4505, %v3937
    %v4538 = vsub.f32 %v4506, %v3937
    %v4539 = vsub.f32 %v4507, %v3937
    %v4540 = vsub.f32 %v4492, %v3938
    %v4541 = vsub.f32 %v4493, %v3938
    %v4542 = vsub.f32 %v4494, %v3938
    %v4543 = vsub.f32 %v4495, %v3938
    %v4544 = vsub.f32 %v4496, %v3938
    %v4545 = vsub.f32 %v4497, %v3938
    %v4546 = vsub.f32 %v4498, %v3938
    %v4547 = vsub.f32 %v4499, %v3938
    %v4548 = vsub.f32 %v4500, %v3938
    %v4549 = vsub.f32 %v4501, %v3938
    %v4550 = vsub.f32 %v4502, %v3938
    %v4551 = vsub.f32 %v4503, %v3938
    %v4552 = vsub.f32 %v4504, %v3938
    %v4553 = vsub.f32 %v4505, %v3938
    %v4554 = vsub.f32 %v4506, %v3938
    %v4555 = vsub.f32 %v4507, %v3938
    %v4556 = vand.u32 2147483647, %v4508
    %v4557 = vand.u32 2147483647, %v4509
    %v4558 = vand.u32 2147483647, %v4510
    %v4559 = vand.u32 2147483647, %v4511
    %v4560 = vand.u32 2147483647, %v4512
    %v4561 = vand.u32 2147483647, %v4513
    %v4562 = vand.u32 2147483647, %v4514
    %v4563 = vand.u32 2147483647, %v4515
    %v4564 = vand.u32 2147483647, %v4516
    %v4565 = vand.u32 2147483647, %v4517
    %v4566 = vand.u32 2147483647, %v4518
    %v4567 = vand.u32 2147483647, %v4519
    %v4568 = vand.u32 2147483647, %v4520
    %v4569 = vand.u32 2147483647, %v4521
    %v4570 = vand.u32 2147483647, %v4522
    %v4571 = vand.u32 2147483647, %v4523
    %v4572 = vand.u32 2147483647, %v4524
    %v4573 = vand.u32 2147483647, %v4525
    %v4574 = vand.u32 2147483647, %v4526
    %v4575 = vand.u32 2147483647, %v4527
    %v4576 = vand.u32 2147483647, %v4528
    %v4577 = vand.u32 2147483647, %v4529
    %v4578 = vand.u32 2147483647, %v4530
    %v4579 = vand.u32 2147483647, %v4531
    %v4580 = vand.u32 2147483647, %v4532
    %v4581 = vand.u32 2147483647, %v4533
    %v4582 = vand.u32 2147483647, %v4534
    %v4583 = vand.u32 2147483647, %v4535
    %v4584 = vand.u32 2147483647, %v4536
    %v4585 = vand.u32 2147483647, %v4537
    %v4586 = vand.u32 2147483647, %v4538
    %v4587 = vand.u32 2147483647, %v4539
    %v4588 = vand.u32 2147483647, %v4540
    %v4589 = vand.u32 2147483647, %v4541
    %v4590 = vand.u32 2147483647, %v4542
    %v4591 = vand.u32 2147483647, %v4543
    %v4592 = vand.u32 2147483647, %v4544
    %v4593 = vand.u32 2147483647, %v4545
    %v4594 = vand.u32 2147483647, %v4546
    %v4595 = vand.u32 2147483647, %v4547
    %v4596 = vand.u32 2147483647, %v4548
    %v4597 = vand.u32 2147483647, %v4549
    %v4598 = vand.u32 2147483647, %v4550
    %v4599 = vand.u32 2147483647, %v4551
    %v4600 = vand.u32 2147483647, %v4552
    %v4601 = vand.u32 2147483647, %v4553
    %v4602 = vand.u32 2147483647, %v4554
    %v4603 = vand.u32 2147483647, %v4555
    %v4604 = vsub.f32 1.0, %v4556
    %v4605 = vsub.f32 1.0, %v4557
    %v4606 = vsub.f32 1.0, %v4558
    %v4607 = vsub.f32 1.0, %v4559
    %v4608 = vsub.f32 1.0, %v4560
    %v4609 = vsub.f32 1.0, %v4561
    %v4610 = vsub.f32 1.0, %v4562
    %v4611 = vsub.f32 1.0, %v4563
    %v4612 = vsub.f32 1.0, %v4564
    %v4613 = vsub.f32 1.0, %v4565
    %v4614 = vsub.f32 1.0, %v4566
    %v4615 = vsub.f32 1.0, %v4567
    %v4616 = vsub.f32 1.0, %v4568
    %v4617 = vsub.f32 1.0, %v4569
    %v4618 = vsub.f32 1.0, %v4570
    %v4619 = vsub.f32 1.0, %v4571
    %v4620 = vsub.f32 1.0, %v4572
    %v4621 = vsub.f32 1.0, %v4573
    %v4622 = vsub.f32 1.0, %v4574
    %v4623 = vsub.f32 1.0, %v4575
    %v4624 = vsub.f32 1.0, %v4576
    %v4625 = vsub.f32 1.0, %v4577
    %v4626 = vsub.f32 1.0, %v4578
    %v4627 = vsub.f32 1.0, %v4579
    %v4628 = vsub.f32 1.0, %v4580
    %v4629 = vsub.f32 1.0, %v4581
    %v4630 = vsub.f32 1.0, %v4582
    %v4631 = vsub.f32 1.0, %v4583
    %v4632 = vsub.f32 1.0, %v4584
    %v4633 = vsub.f32 1.0, %v4585
    %v4634 = vsub.f32 1.0, %v4586
    %v4635 = vsub.f32 1.0, %v4587
    %v4636 = vsub.f32 1.0, %v4588
    %v4637 = vsub.f32 1.0, %v4589
    %v4638 = vsub.f32 1.0, %v4590
    %v4639 = vsub.f32 1.0, %v4591
    %v4640 = vsub.f32 1.0, %v4592
    %v4641 = vsub.f32 1.0, %v4593
    %v4642 = vsub.f32 1.0, %v4594
    %v4643 = vsub.f32 1.0, %v4595
    %v4644 = vsub.f32 1.0, %v4596
    %v4645 = vsub.f32 1.0, %v4597
    %v4646 = vsub.f32 1.0, %v4598
    %v4647 = vsub.f32 1.0, %v4599
    %v4648 = vsub.f32 1.0, %v4600
    %v4649 = vsub.f32 1.0, %v4601
    %v4650 = vsub.f32 1.0, %v4602
    %v4651 = vsub.f32 1.0, %v4603
    %v4652 = vmax.f32 %v4604, 0.0
    %v4653 = vmax.f32 %v4605, 0.0
    %v4654 = vmax.f32 %v4606, 0.0
    %v4655 = vmax.f32 %v4607, 0.0
    %v4656 = vmax.f32 %v4608, 0.0
    %v4657 = vmax.f32 %v4609, 0.0
    %v4658 = vmax.f32 %v4610, 0.0
    %v4659 = vmax.f32 %v4611, 0.0
    %v4660 = vmax.f32 %v4612, 0.0
    %v4661 = vmax.f32 %v4613, 0.0
    %v4662 = vmax.f32 %v4614, 0.0
    %v4663 = vmax.f32 %v4615, 0.0
    %v4664 = vmax.f32 %v4616, 0.0
    %v4665 = vmax.f32 %v4617, 0.0
    %v4666 = vmax.f32 %v4618, 0.0
    %v4667 = vmax.f32 %v4619, 0.0
    %v4668 = vmax.f32 %v4620, 0.0
    %v4669 = vmax.f32 %v4621, 0.0
    %v4670 = vmax.f32 %v4622, 0.0
    %v4671 = vmax.f32 %v4623, 0.0
    %v4672 = vmax.f32 %v4624, 0.0
    %v4673 = vmax.f32 %v4625, 0.0
    %v4674 = vmax.f32 %v4626, 0.0
    %v4675 = vmax.f32 %v4627, 0.0
    %v4676 = vmax.f32 %v4628, 0.0
    %v4677 = vmax.f32 %v4629, 0.0
    %v4678 = vmax.f32 %v4630, 0.0
    %v4679 = vmax.f32 %v4631, 0.0
    %v4680 = vmax.f32 %v4632, 0.0
    %v4681 = vmax.f32 %v4633, 0.0
    %v4682 = vmax.f32 %v4634, 0.0
    %v4683 = vmax.f32 %v4635, 0.0
    %v4684 = vmax.f32 %v4636, 0.0
    %v4685 = vmax.f32 %v4637, 0.0
    %v4686 = vmax.f32 %v4638, 0.0
    %v4687 = vmax.f32 %v4639, 0.0
    %v4688 = vmax.f32 %v4640, 0.0
    %v4689 = vmax.f32 %v4641, 0.0
    %v4690 = vmax.f32 %v4642, 0.0
    %v4691 = vmax.f32 %v4643, 0.0
    %v4692 = vmax.f32 %v4644, 0.0
    %v4693 = vmax.f32 %v4645, 0.0
    %v4694 = vmax.f32 %v4646, 0.0
    %v4695 = vmax.f32 %v4647, 0.0
    %v4696 = vmax.f32 %v4648, 0.0
    %v4697 = vmax.f32 %v4649, 0.0
    %v4698 = vmax.f32 %v4650, 0.0
    %v4699 = vmax.f32 %v4651, 0.0
    %v4700 = vmul.f32 %v4652, %v3963
    %v4701 = vmul.f32 %v4653, %v3964
    %v4702 = vmul.f32 %v4654, %v3965
    %v4703 = vmul.f32 %v4655, %v3966
    %v4704 = vmul.f32 %v4656, %v3967
    %v4705 = vmul.f32 %v4657, %v3968
    %v4706 = vmul.f32 %v4658, %v3969
    %v4707 = vmul.f32 %v4659, %v3970
    %v4708 = vmul.f32 %v4660, %v3971
    %v4709 = vmul.f32 %v4661, %v3972
    %v4710 = vmul.f32 %v4662, %v3973
    %v4711 = vmul.f32 %v4663, %v3974
    %v4712 = vmul.f32 %v4664, %v3975
    %v4713 = vmul.f32 %v4665, %v3976
    %v4714 = vmul.f32 %v4666, %v3977
    %v4715 = vmul.f32 %v4667, %v3978
    %v4716 = vmul.f32 %v4668, %v3979
    %v4717 = vmul.f32 %v4669, %v3980
    %v4718 = vmul.f32 %v4670, %v3981
    %v4719 = vmul.f32 %v4671, %v3982
    %v4720 = vmul.f32 %v4672, %v3983
    %v4721 = vmul.f32 %v4673, %v3984
    %v4722 = vmul.f32 %v4674, %v3985
    %v4723 = vmul.f32 %v4675, %v3986
    %v4724 = vmul.f32 %v4676, %v3987
    %v4725 = vmul.f32 %v4677, %v3988
    %v4726 = vmul.f32 %v4678, %v3989
    %v4727 = vmul.f32 %v4679, %v3990
    %v4728 = vmul.f32 %v4680, %v3991
    %v4729 = vmul.f32 %v4681, %v3992
    %v4730 = vmul.f32 %v4682, %v3993
    %v4731 = vmul.f32 %v4683, %v3994
    %v4732 = vmul.f32 %v4684, %v3995
    %v4733 = vmul.f32 %v4685, %v3996
    %v4734 = vmul.f32 %v4686, %v3997
    %v4735 = vmul.f32 %v4687, %v3998
    %v4736 = vmul.f32 %v4688, %v3999
    %v4737 = vmul.f32 %v4689, %v4000
    %v4738 = vmul.f32 %v4690, %v4001
    %v4739 = vmul.f32 %v4691, %v4002
    %v4740 = vmul.f32 %v4692, %v4003
    %v4741 = vmul.f32 %v4693, %v4004
    %v4742 = vmul.f32 %v4694, %v4005
    %v4743 = vmul.f32 %v4695, %v4006
    %v4744 = vmul.f32 %v4696, %v4007
    %v4745 = vmul.f32 %v4697, %v4008
    %v4746 = vmul.f32 %v4698, %v4009
    %v4747 = vmul.f32 %v4699, %v4010
    %v4748 = vadd.f32 %v4700, %v4716
    %v4749 = vsel %vm4012, %v4732, 0.0
    %v4750 = vadd.f32 %v4748, %v4749
    %v4751 = vrot.slane %v4750, 4
    %v4752 = vadd.f32 %v4750, %v4751
    %v4753 = vrot.slane %v4752, 2
    %v4754 = vadd.f32 %v4752, %v4753
    %v4755 = vrot.slane %v4754, 1
    %v4756 = vadd.f32 %v4754, %v4755
    %v4757 = vadd.f32 %v4701, %v4717
    %v4758 = vsel %vm4012, %v4733, 0.0
    %v4759 = vadd.f32 %v4757, %v4758
    %v4760 = vrot.slane %v4759, 4
    %v4761 = vadd.f32 %v4759, %v4760
    %v4762 = vrot.slane %v4761, 2
    %v4763 = vadd.f32 %v4761, %v4762
    %v4764 = vrot.slane %v4763, 1
    %v4765 = vadd.f32 %v4763, %v4764
    %v4766 = vadd.f32 %v4702, %v4718
    %v4767 = vsel %vm4012, %v4734, 0.0
    %v4768 = vadd.f32 %v4766, %v4767
    %v4769 = vrot.slane %v4768, 4
    %v4770 = vadd.f32 %v4768, %v4769
    %v4771 = vrot.slane %v4770, 2
    %v4772 = vadd.f32 %v4770, %v4771
    %v4773 = vrot.slane %v4772, 1
    %v4774 = vadd.f32 %v4772, %v4773
    %v4775 = vadd.f32 %v4703, %v4719
    %v4776 = vsel %vm4012, %v4735, 0.0
    %v4777 = vadd.f32 %v4775, %v4776
    %v4778 = vrot.slane %v4777, 4
    %v4779 = vadd.f32 %v4777, %v4778
    %v4780 = vrot.slane %v4779, 2
    %v4781 = vadd.f32 %v4779, %v4780
    %v4782 = vrot.slane %v4781, 1
    %v4783 = vadd.f32 %v4781, %v4782
    %v4784 = vadd.f32 %v4704, %v4720
    %v4785 = vsel %vm4012, %v4736, 0.0
    %v4786 = vadd.f32 %v4784, %v4785
    %v4787 = vrot.slane %v4786, 4
    %v4788 = vadd.f32 %v4786, %v4787
    %v4789 = vrot.slane %v4788, 2
    %v4790 = vadd.f32 %v4788, %v4789
    %v4791 = vrot.slane %v4790, 1
    %v4792 = vadd.f32 %v4790, %v4791
    %v4793 = vadd.f32 %v4705, %v4721
    %v4794 = vsel %vm4012, %v4737, 0.0
    %v4795 = vadd.f32 %v4793, %v4794
    %v4796 = vrot.slane %v4795, 4
    %v4797 = vadd.f32 %v4795, %v4796
    %v4798 = vrot.slane %v4797, 2
    %v4799 = vadd.f32 %v4797, %v4798
    %v4800 = vrot.slane %v4799, 1
    %v4801 = vadd.f32 %v4799, %v4800
    %v4802 = vadd.f32 %v4706, %v4722
    %v4803 = vsel %vm4012, %v4738, 0.0
    %v4804 = vadd.f32 %v4802, %v4803
    %v4805 = vrot.slane %v4804, 4
    %v4806 = vadd.f32 %v4804, %v4805
    %v4807 = vrot.slane %v4806, 2
    %v4808 = vadd.f32 %v4806, %v4807
    %v4809 = vrot.slane %v4808, 1
    %v4810 = vadd.f32 %v4808, %v4809
    %v4811 = vadd.f32 %v4707, %v4723
    %v4812 = vsel %vm4012, %v4739, 0.0
    %v4813 = vadd.f32 %v4811, %v4812
    %v4814 = vrot.slane %v4813, 4
    %v4815 = vadd.f32 %v4813, %v4814
    %v4816 = vrot.slane %v4815, 2
    %v4817 = vadd.f32 %v4815, %v4816
    %v4818 = vrot.slane %v4817, 1
    %v4819 = vadd.f32 %v4817, %v4818
    %v4820 = vadd.f32 %v4708, %v4724
    %v4821 = vsel %vm4012, %v4740, 0.0
    %v4822 = vadd.f32 %v4820, %v4821
    %v4823 = vrot.slane %v4822, 4
    %v4824 = vadd.f32 %v4822, %v4823
    %v4825 = vrot.slane %v4824, 2
    %v4826 = vadd.f32 %v4824, %v4825
    %v4827 = vrot.slane %v4826, 1
    %v4828 = vadd.f32 %v4826, %v4827
    %v4829 = vadd.f32 %v4709, %v4725
    %v4830 = vsel %vm4012, %v4741, 0.0
    %v4831 = vadd.f32 %v4829, %v4830
    %v4832 = vrot.slane %v4831, 4
    %v4833 = vadd.f32 %v4831, %v4832
    %v4834 = vrot.slane %v4833, 2
    %v4835 = vadd.f32 %v4833, %v4834
    %v4836 = vrot.slane %v4835, 1
    %v4837 = vadd.f32 %v4835, %v4836
    %v4838 = vadd.f32 %v4710, %v4726
    %v4839 = vsel %vm4012, %v4742, 0.0
    %v4840 = vadd.f32 %v4838, %v4839
    %v4841 = vrot.slane %v4840, 4
    %v4842 = vadd.f32 %v4840, %v4841
    %v4843 = vrot.slane %v4842, 2
    %v4844 = vadd.f32 %v4842, %v4843
    %v4845 = vrot.slane %v4844, 1
    %v4846 = vadd.f32 %v4844, %v4845
    %v4847 = vadd.f32 %v4711, %v4727
    %v4848 = vsel %vm4012, %v4743, 0.0
    %v4849 = vadd.f32 %v4847, %v4848
    %v4850 = vrot.slane %v4849, 4
    %v4851 = vadd.f32 %v4849, %v4850
    %v4852 = vrot.slane %v4851, 2
    %v4853 = vadd.f32 %v4851, %v4852
    %v4854 = vrot.slane %v4853, 1
    %v4855 = vadd.f32 %v4853, %v4854
    %v4856 = vadd.f32 %v4712, %v4728
    %v4857 = vsel %vm4012, %v4744, 0.0
    %v4858 = vadd.f32 %v4856, %v4857
    %v4859 = vrot.slane %v4858, 4
    %v4860 = vadd.f32 %v4858, %v4859
    %v4861 = vrot.slane %v4860, 2
    %v4862 = vadd.f32 %v4860, %v4861
    %v4863 = vrot.slane %v4862, 1
    %v4864 = vadd.f32 %v4862, %v4863
    %v4865 = vadd.f32 %v4713, %v4729
    %v4866 = vsel %vm4012, %v4745, 0.0
    %v4867 = vadd.f32 %v4865, %v4866
    %v4868 = vrot.slane %v4867, 4
    %v4869 = vadd.f32 %v4867, %v4868
    %v4870 = vrot.slane %v4869, 2
    %v4871 = vadd.f32 %v4869, %v4870
    %v4872 = vrot.slane %v4871, 1
    %v4873 = vadd.f32 %v4871, %v4872
    %v4874 = vadd.f32 %v4714, %v4730
    %v4875 = vsel %vm4012, %v4746, 0.0
    %v4876 = vadd.f32 %v4874, %v4875
    %v4877 = vrot.slane %v4876, 4
    %v4878 = vadd.f32 %v4876, %v4877
    %v4879 = vrot.slane %v4878, 2
    %v4880 = vadd.f32 %v4878, %v4879
    %v4881 = vrot.slane %v4880, 1
    %v4882 = vadd.f32 %v4880, %v4881
    %v4883 = vadd.f32 %v4715, %v4731
    %v4884 = vsel %vm4012, %v4747, 0.0
    %v4885 = vadd.f32 %v4883, %v4884
    %v4886 = vrot.slane %v4885, 4
    %v4887 = vadd.f32 %v4885, %v4886
    %v4888 = vrot.slane %v4887, 2
    %v4889 = vadd.f32 %v4887, %v4888
    %v4890 = vrot.slane %v4889, 1
    %v4891 = vadd.f32 %v4889, %v4890
    %v4892 = vsub.f32 %v4476, %v4756
    %v4893 = vsub.f32 %v4477, %v4765
    %v4894 = vsub.f32 %v4478, %v4774
    %v4895 = vsub.f32 %v4479, %v4783
    %v4896 = vsub.f32 %v4480, %v4792
    %v4897 = vsub.f32 %v4481, %v4801
    %v4898 = vsub.f32 %v4482, %v4810
    %v4899 = vsub.f32 %v4483, %v4819
    %v4900 = vsub.f32 %v4484, %v4828
    %v4901 = vsub.f32 %v4485, %v4837
    %v4902 = vsub.f32 %v4486, %v4846
    %v4903 = vsub.f32 %v4487, %v4855
    %v4904 = vsub.f32 %v4488, %v4864
    %v4905 = vsub.f32 %v4489, %v4873
    %v4906 = vsub.f32 %v4490, %v4882
    %v4907 = vsub.f32 %v4491, %v4891
    %v4908 = vadd.f32 %v4892, 0.0
    %v4909 = vadd.f32 %v4893, 0.0
    %v4910 = vadd.f32 %v4894, 0.0
    %v4911 = vadd.f32 %v4895, 0.0
    %v4912 = vadd.f32 %v4896, 0.0
    %v4913 = vadd.f32 %v4897, 0.0
    %v4914 = vadd.f32 %v4898, 0.0
    %v4915 = vadd.f32 %v4899, 0.0
    %v4916 = vadd.f32 %v4900, 0.0
    %v4917 = vadd.f32 %v4901, 0.0
    %v4918 = vadd.f32 %v4902, 0.0
    %v4919 = vadd.f32 %v4903, 0.0
    %v4920 = vadd.f32 %v4904, 0.0
    %v4921 = vadd.f32 %v4905, 0.0
    %v4922 = vadd.f32 %v4906, 0.0
    %v4923 = vadd.f32 %v4907, 0.0
    %s4924 = scalar_lea.vmem %s1, 192
    %v4925 = vld [vmem:[%s4924] sm:$0xff]
    %v4926 = vld [vmem:[%s4924 + $0x8] sm:$0xff]
    %v4927 = vld [vmem:[%s4924 + $0x10] sm:$0xff]
    %v4928 = vld [vmem:[%s4924 + $0x18] sm:$0xff]
    %v4929 = vld [vmem:[%s4924 + $0x20] sm:$0xff]
    %v4930 = vld [vmem:[%s4924 + $0x28] sm:$0xff]
    %v4931 = vld [vmem:[%s4924 + $0x30] sm:$0xff]
    %v4932 = vld [vmem:[%s4924 + $0x38] sm:$0xff]
    %v4933 = vld [vmem:[%s4924 + $0x40] sm:$0xff]
    %v4934 = vld [vmem:[%s4924 + $0x48] sm:$0xff]
    %v4935 = vld [vmem:[%s4924 + $0x50] sm:$0xff]
    %v4936 = vld [vmem:[%s4924 + $0x58] sm:$0xff]
    %v4937 = vld [vmem:[%s4924 + $0x60] sm:$0xff]
    %v4938 = vld [vmem:[%s4924 + $0x68] sm:$0xff]
    %v4939 = vld [vmem:[%s4924 + $0x70] sm:$0xff]
    %v4940 = vld [vmem:[%s4924 + $0x78] sm:$0xff]
    %v4941 = vld [vmem:[%s4924 + $0x80] sm:$0x11]
    %v4942 = vld [vmem:[%s4924 + $0x88] sm:$0x11]
    %v4943 = vld [vmem:[%s4924 + $0x90] sm:$0x11]
    %v4944 = vld [vmem:[%s4924 + $0x98] sm:$0x11]
    %v4945 = vld [vmem:[%s4924 + $0xa0] sm:$0x11]
    %v4946 = vld [vmem:[%s4924 + $0xa8] sm:$0x11]
    %v4947 = vld [vmem:[%s4924 + $0xb0] sm:$0x11]
    %v4948 = vld [vmem:[%s4924 + $0xb8] sm:$0x11]
    %v4949 = vunpack.c.l.bf16 %v4925
    %v4950 = vunpack.c.h.bf16 %v4925
    %v4951 = vunpack.c.l.bf16 %v4926
    %v4952 = vunpack.c.h.bf16 %v4926
    %v4953 = vunpack.c.l.bf16 %v4927
    %v4954 = vunpack.c.h.bf16 %v4927
    %v4955 = vunpack.c.l.bf16 %v4928
    %v4956 = vunpack.c.h.bf16 %v4928
    %v4957 = vunpack.c.l.bf16 %v4929
    %v4958 = vunpack.c.h.bf16 %v4929
    %v4959 = vunpack.c.l.bf16 %v4930
    %v4960 = vunpack.c.h.bf16 %v4930
    %v4961 = vunpack.c.l.bf16 %v4931
    %v4962 = vunpack.c.h.bf16 %v4931
    %v4963 = vunpack.c.l.bf16 %v4932
    %v4964 = vunpack.c.h.bf16 %v4932
    %v4965 = vunpack.c.l.bf16 %v4933
    %v4966 = vunpack.c.h.bf16 %v4933
    %v4967 = vunpack.c.l.bf16 %v4934
    %v4968 = vunpack.c.h.bf16 %v4934
    %v4969 = vunpack.c.l.bf16 %v4935
    %v4970 = vunpack.c.h.bf16 %v4935
    %v4971 = vunpack.c.l.bf16 %v4936
    %v4972 = vunpack.c.h.bf16 %v4936
    %v4973 = vunpack.c.l.bf16 %v4937
    %v4974 = vunpack.c.h.bf16 %v4937
    %v4975 = vunpack.c.l.bf16 %v4938
    %v4976 = vunpack.c.h.bf16 %v4938
    %v4977 = vunpack.c.l.bf16 %v4939
    %v4978 = vunpack.c.h.bf16 %v4939
    %v4979 = vunpack.c.l.bf16 %v4940
    %v4980 = vunpack.c.h.bf16 %v4940
    %v4981 = vunpack.c.l.bf16 %v4941
    %v4982 = vunpack.c.h.bf16 %v4941
    %v4983 = vunpack.c.l.bf16 %v4942
    %v4984 = vunpack.c.h.bf16 %v4942
    %v4985 = vunpack.c.l.bf16 %v4943
    %v4986 = vunpack.c.h.bf16 %v4943
    %v4987 = vunpack.c.l.bf16 %v4944
    %v4988 = vunpack.c.h.bf16 %v4944
    %v4989 = vunpack.c.l.bf16 %v4945
    %v4990 = vunpack.c.h.bf16 %v4945
    %v4991 = vunpack.c.l.bf16 %v4946
    %v4992 = vunpack.c.h.bf16 %v4946
    %v4993 = vunpack.c.l.bf16 %v4947
    %v4994 = vunpack.c.h.bf16 %v4947
    %v4995 = vunpack.c.l.bf16 %v4948
    %v4996 = vunpack.c.h.bf16 %v4948
    %v4997 = vmax.f32 %v4949, %v4965
    %v4998 = vsel %vm4012, %v4981, -inf
    %v4999 = vmax.f32 %v4997, %v4998
    %v5000 = vrot.slane %v4999, 4
    %v5001 = vmax.f32 %v4999, %v5000
    %v5002 = vrot.slane %v5001, 2
    %v5003 = vmax.f32 %v5001, %v5002
    %v5004 = vrot.slane %v5003, 1
    %v5005 = vmax.f32 %v5003, %v5004
    %v5006 = vmax.f32 %v4950, %v4966
    %v5007 = vsel %vm4012, %v4982, -inf
    %v5008 = vmax.f32 %v5006, %v5007
    %v5009 = vrot.slane %v5008, 4
    %v5010 = vmax.f32 %v5008, %v5009
    %v5011 = vrot.slane %v5010, 2
    %v5012 = vmax.f32 %v5010, %v5011
    %v5013 = vrot.slane %v5012, 1
    %v5014 = vmax.f32 %v5012, %v5013
    %v5015 = vmax.f32 %v4951, %v4967
    %v5016 = vsel %vm4012, %v4983, -inf
    %v5017 = vmax.f32 %v5015, %v5016
    %v5018 = vrot.slane %v5017, 4
    %v5019 = vmax.f32 %v5017, %v5018
    %v5020 = vrot.slane %v5019, 2
    %v5021 = vmax.f32 %v5019, %v5020
    %v5022 = vrot.slane %v5021, 1
    %v5023 = vmax.f32 %v5021, %v5022
    %v5024 = vmax.f32 %v4952, %v4968
    %v5025 = vsel %vm4012, %v4984, -inf
    %v5026 = vmax.f32 %v5024, %v5025
    %v5027 = vrot.slane %v5026, 4
    %v5028 = vmax.f32 %v5026, %v5027
    %v5029 = vrot.slane %v5028, 2
    %v5030 = vmax.f32 %v5028, %v5029
    %v5031 = vrot.slane %v5030, 1
    %v5032 = vmax.f32 %v5030, %v5031
    %v5033 = vmax.f32 %v4953, %v4969
    %v5034 = vsel %vm4012, %v4985, -inf
    %v5035 = vmax.f32 %v5033, %v5034
    %v5036 = vrot.slane %v5035, 4
    %v5037 = vmax.f32 %v5035, %v5036
    %v5038 = vrot.slane %v5037, 2
    %v5039 = vmax.f32 %v5037, %v5038
    %v5040 = vrot.slane %v5039, 1
    %v5041 = vmax.f32 %v5039, %v5040
    %v5042 = vmax.f32 %v4954, %v4970
    %v5043 = vsel %vm4012, %v4986, -inf
    %v5044 = vmax.f32 %v5042, %v5043
    %v5045 = vrot.slane %v5044, 4
    %v5046 = vmax.f32 %v5044, %v5045
    %v5047 = vrot.slane %v5046, 2
    %v5048 = vmax.f32 %v5046, %v5047
    %v5049 = vrot.slane %v5048, 1
    %v5050 = vmax.f32 %v5048, %v5049
    %v5051 = vmax.f32 %v4955, %v4971
    %v5052 = vsel %vm4012, %v4987, -inf
    %v5053 = vmax.f32 %v5051, %v5052
    %v5054 = vrot.slane %v5053, 4
    %v5055 = vmax.f32 %v5053, %v5054
    %v5056 = vrot.slane %v5055, 2
    %v5057 = vmax.f32 %v5055, %v5056
    %v5058 = vrot.slane %v5057, 1
    %v5059 = vmax.f32 %v5057, %v5058
    %v5060 = vmax.f32 %v4956, %v4972
    %v5061 = vsel %vm4012, %v4988, -inf
    %v5062 = vmax.f32 %v5060, %v5061
    %v5063 = vrot.slane %v5062, 4
    %v5064 = vmax.f32 %v5062, %v5063
    %v5065 = vrot.slane %v5064, 2
    %v5066 = vmax.f32 %v5064, %v5065
    %v5067 = vrot.slane %v5066, 1
    %v5068 = vmax.f32 %v5066, %v5067
    %v5069 = vmax.f32 %v4957, %v4973
    %v5070 = vsel %vm4012, %v4989, -inf
    %v5071 = vmax.f32 %v5069, %v5070
    %v5072 = vrot.slane %v5071, 4
    %v5073 = vmax.f32 %v5071, %v5072
    %v5074 = vrot.slane %v5073, 2
    %v5075 = vmax.f32 %v5073, %v5074
    %v5076 = vrot.slane %v5075, 1
    %v5077 = vmax.f32 %v5075, %v5076
    %v5078 = vmax.f32 %v4958, %v4974
    %v5079 = vsel %vm4012, %v4990, -inf
    %v5080 = vmax.f32 %v5078, %v5079
    %v5081 = vrot.slane %v5080, 4
    %v5082 = vmax.f32 %v5080, %v5081
    %v5083 = vrot.slane %v5082, 2
    %v5084 = vmax.f32 %v5082, %v5083
    %v5085 = vrot.slane %v5084, 1
    %v5086 = vmax.f32 %v5084, %v5085
    %v5087 = vmax.f32 %v4959, %v4975
    %v5088 = vsel %vm4012, %v4991, -inf
    %v5089 = vmax.f32 %v5087, %v5088
    %v5090 = vrot.slane %v5089, 4
    %v5091 = vmax.f32 %v5089, %v5090
    %v5092 = vrot.slane %v5091, 2
    %v5093 = vmax.f32 %v5091, %v5092
    %v5094 = vrot.slane %v5093, 1
    %v5095 = vmax.f32 %v5093, %v5094
    %v5096 = vmax.f32 %v4960, %v4976
    %v5097 = vsel %vm4012, %v4992, -inf
    %v5098 = vmax.f32 %v5096, %v5097
    %v5099 = vrot.slane %v5098, 4
    %v5100 = vmax.f32 %v5098, %v5099
    %v5101 = vrot.slane %v5100, 2
    %v5102 = vmax.f32 %v5100, %v5101
    %v5103 = vrot.slane %v5102, 1
    %v5104 = vmax.f32 %v5102, %v5103
    %v5105 = vmax.f32 %v4961, %v4977
    %v5106 = vsel %vm4012, %v4993, -inf
    %v5107 = vmax.f32 %v5105, %v5106
    %v5108 = vrot.slane %v5107, 4
    %v5109 = vmax.f32 %v5107, %v5108
    %v5110 = vrot.slane %v5109, 2
    %v5111 = vmax.f32 %v5109, %v5110
    %v5112 = vrot.slane %v5111, 1
    %v5113 = vmax.f32 %v5111, %v5112
    %v5114 = vmax.f32 %v4962, %v4978
    %v5115 = vsel %vm4012, %v4994, -inf
    %v5116 = vmax.f32 %v5114, %v5115
    %v5117 = vrot.slane %v5116, 4
    %v5118 = vmax.f32 %v5116, %v5117
    %v5119 = vrot.slane %v5118, 2
    %v5120 = vmax.f32 %v5118, %v5119
    %v5121 = vrot.slane %v5120, 1
    %v5122 = vmax.f32 %v5120, %v5121
    %v5123 = vmax.f32 %v4963, %v4979
    %v5124 = vsel %vm4012, %v4995, -inf
    %v5125 = vmax.f32 %v5123, %v5124
    %v5126 = vrot.slane %v5125, 4
    %v5127 = vmax.f32 %v5125, %v5126
    %v5128 = vrot.slane %v5127, 2
    %v5129 = vmax.f32 %v5127, %v5128
    %v5130 = vrot.slane %v5129, 1
    %v5131 = vmax.f32 %v5129, %v5130
    %v5132 = vmax.f32 %v4964, %v4980
    %v5133 = vsel %vm4012, %v4996, -inf
    %v5134 = vmax.f32 %v5132, %v5133
    %v5135 = vrot.slane %v5134, 4
    %v5136 = vmax.f32 %v5134, %v5135
    %v5137 = vrot.slane %v5136, 2
    %v5138 = vmax.f32 %v5136, %v5137
    %v5139 = vrot.slane %v5138, 1
    %v5140 = vmax.f32 %v5138, %v5139
    %v5141 = vsub.f32 %v4949, %v5005
    %v5142 = vsub.f32 %v4950, %v5014
    %v5143 = vsub.f32 %v4951, %v5023
    %v5144 = vsub.f32 %v4952, %v5032
    %v5145 = vsub.f32 %v4953, %v5041
    %v5146 = vsub.f32 %v4954, %v5050
    %v5147 = vsub.f32 %v4955, %v5059
    %v5148 = vsub.f32 %v4956, %v5068
    %v5149 = vsub.f32 %v4957, %v5077
    %v5150 = vsub.f32 %v4958, %v5086
    %v5151 = vsub.f32 %v4959, %v5095
    %v5152 = vsub.f32 %v4960, %v5104
    %v5153 = vsub.f32 %v4961, %v5113
    %v5154 = vsub.f32 %v4962, %v5122
    %v5155 = vsub.f32 %v4963, %v5131
    %v5156 = vsub.f32 %v4964, %v5140
    %v5157 = vsub.f32 %v4965, %v5005
    %v5158 = vsub.f32 %v4966, %v5014
    %v5159 = vsub.f32 %v4967, %v5023
    %v5160 = vsub.f32 %v4968, %v5032
    %v5161 = vsub.f32 %v4969, %v5041
    %v5162 = vsub.f32 %v4970, %v5050
    %v5163 = vsub.f32 %v4971, %v5059
    %v5164 = vsub.f32 %v4972, %v5068
    %v5165 = vsub.f32 %v4973, %v5077
    %v5166 = vsub.f32 %v4974, %v5086
    %v5167 = vsub.f32 %v4975, %v5095
    %v5168 = vsub.f32 %v4976, %v5104
    %v5169 = vsub.f32 %v4977, %v5113
    %v5170 = vsub.f32 %v4978, %v5122
    %v5171 = vsub.f32 %v4979, %v5131
    %v5172 = vsub.f32 %v4980, %v5140
    %v5173 = vsub.f32 %v4981, %v5005
    %v5174 = vsub.f32 %v4982, %v5014
    %v5175 = vsub.f32 %v4983, %v5023
    %v5176 = vsub.f32 %v4984, %v5032
    %v5177 = vsub.f32 %v4985, %v5041
    %v5178 = vsub.f32 %v4986, %v5050
    %v5179 = vsub.f32 %v4987, %v5059
    %v5180 = vsub.f32 %v4988, %v5068
    %v5181 = vsub.f32 %v4989, %v5077
    %v5182 = vsub.f32 %v4990, %v5086
    %v5183 = vsub.f32 %v4991, %v5095
    %v5184 = vsub.f32 %v4992, %v5104
    %v5185 = vsub.f32 %v4993, %v5113
    %v5186 = vsub.f32 %v4994, %v5122
    %v5187 = vsub.f32 %v4995, %v5131
    %v5188 = vsub.f32 %v4996, %v5140
    %v5189 = vmul.f32 %v5141, 1.442695
    %v5190 = vpow.pop %v5189
    %v5191 = vmul.f32 %v5142, 1.442695
    %v5192 = vpow.pop %v5191
    %v5193 = vmul.f32 %v5143, 1.442695
    %v5194 = vpow.pop %v5193
    %v5195 = vmul.f32 %v5144, 1.442695
    %v5196 = vpow.pop %v5195
    %v5197 = vmul.f32 %v5145, 1.442695
    %v5198 = vpow.pop %v5197
    %v5199 = vmul.f32 %v5146, 1.442695
    %v5200 = vpow.pop %v5199
    %v5201 = vmul.f32 %v5147, 1.442695
    %v5202 = vpow.pop %v5201
    %v5203 = vmul.f32 %v5148, 1.442695
    %v5204 = vpow.pop %v5203
    %v5205 = vmul.f32 %v5149, 1.442695
    %v5206 = vpow.pop %v5205
    %v5207 = vmul.f32 %v5150, 1.442695
    %v5208 = vpow.pop %v5207
    %v5209 = vmul.f32 %v5151, 1.442695
    %v5210 = vpow.pop %v5209
    %v5211 = vmul.f32 %v5152, 1.442695
    %v5212 = vpow.pop %v5211
    %v5213 = vmul.f32 %v5153, 1.442695
    %v5214 = vpow.pop %v5213
    %v5215 = vmul.f32 %v5154, 1.442695
    %v5216 = vpow.pop %v5215
    %v5217 = vmul.f32 %v5155, 1.442695
    %v5218 = vpow.pop %v5217
    %v5219 = vmul.f32 %v5156, 1.442695
    %v5220 = vpow.pop %v5219
    %v5221 = vmul.f32 %v5157, 1.442695
    %v5222 = vpow.pop %v5221
    %v5223 = vmul.f32 %v5158, 1.442695
    %v5224 = vpow.pop %v5223
    %v5225 = vmul.f32 %v5159, 1.442695
    %v5226 = vpow.pop %v5225
    %v5227 = vmul.f32 %v5160, 1.442695
    %v5228 = vpow.pop %v5227
    %v5229 = vmul.f32 %v5161, 1.442695
    %v5230 = vpow.pop %v5229
    %v5231 = vmul.f32 %v5162, 1.442695
    %v5232 = vpow.pop %v5231
    %v5233 = vmul.f32 %v5163, 1.442695
    %v5234 = vpow.pop %v5233
    %v5235 = vmul.f32 %v5164, 1.442695
    %v5236 = vpow.pop %v5235
    %v5237 = vmul.f32 %v5165, 1.442695
    %v5238 = vpow.pop %v5237
    %v5239 = vmul.f32 %v5166, 1.442695
    %v5240 = vpow.pop %v5239
    %v5241 = vmul.f32 %v5167, 1.442695
    %v5242 = vpow.pop %v5241
    %v5243 = vmul.f32 %v5168, 1.442695
    %v5244 = vpow.pop %v5243
    %v5245 = vmul.f32 %v5169, 1.442695
    %v5246 = vpow.pop %v5245
    %v5247 = vmul.f32 %v5170, 1.442695
    %v5248 = vpow.pop %v5247
    %v5249 = vmul.f32 %v5171, 1.442695
    %v5250 = vpow.pop %v5249
    %v5251 = vmul.f32 %v5172, 1.442695
    %v5252 = vpow.pop %v5251
    %v5253 = vmul.f32 %v5173, 1.442695
    %v5254 = vpow.pop %v5253
    %v5255 = vmul.f32 %v5174, 1.442695
    %v5256 = vpow.pop %v5255
    %v5257 = vmul.f32 %v5175, 1.442695
    %v5258 = vpow.pop %v5257
    %v5259 = vmul.f32 %v5176, 1.442695
    %v5260 = vpow.pop %v5259
    %v5261 = vmul.f32 %v5177, 1.442695
    %v5262 = vpow.pop %v5261
    %v5263 = vmul.f32 %v5178, 1.442695
    %v5264 = vpow.pop %v5263
    %v5265 = vmul.f32 %v5179, 1.442695
    %v5266 = vpow.pop %v5265
    %v5267 = vmul.f32 %v5180, 1.442695
    %v5268 = vpow.pop %v5267
    %v5269 = vmul.f32 %v5181, 1.442695
    %v5270 = vpow.pop %v5269
    %v5271 = vmul.f32 %v5182, 1.442695
    %v5272 = vpow.pop %v5271
    %v5273 = vmul.f32 %v5183, 1.442695
    %v5274 = vpow.pop %v5273
    %v5275 = vmul.f32 %v5184, 1.442695
    %v5276 = vpow.pop %v5275
    %v5277 = vmul.f32 %v5185, 1.442695
    %v5278 = vpow.pop %v5277
    %v5279 = vmul.f32 %v5186, 1.442695
    %v5280 = vpow.pop %v5279
    %v5281 = vmul.f32 %v5187, 1.442695
    %v5282 = vpow.pop %v5281
    %v5283 = vmul.f32 %v5188, 1.442695
    %v5284 = vpow.pop %v5283
    %v5285 = vadd.f32 %v5190, %v5222
    %v5286 = vsel %vm4012, %v5254, 0.0
    %v5287 = vadd.f32 %v5285, %v5286
    %v5288 = vrot.slane %v5287, 4
    %v5289 = vadd.f32 %v5287, %v5288
    %v5290 = vrot.slane %v5289, 2
    %v5291 = vadd.f32 %v5289, %v5290
    %v5292 = vrot.slane %v5291, 1
    %v5293 = vadd.f32 %v5291, %v5292
    %v5294 = vadd.f32 %v5192, %v5224
    %v5295 = vsel %vm4012, %v5256, 0.0
    %v5296 = vadd.f32 %v5294, %v5295
    %v5297 = vrot.slane %v5296, 4
    %v5298 = vadd.f32 %v5296, %v5297
    %v5299 = vrot.slane %v5298, 2
    %v5300 = vadd.f32 %v5298, %v5299
    %v5301 = vrot.slane %v5300, 1
    %v5302 = vadd.f32 %v5300, %v5301
    %v5303 = vadd.f32 %v5194, %v5226
    %v5304 = vsel %vm4012, %v5258, 0.0
    %v5305 = vadd.f32 %v5303, %v5304
    %v5306 = vrot.slane %v5305, 4
    %v5307 = vadd.f32 %v5305, %v5306
    %v5308 = vrot.slane %v5307, 2
    %v5309 = vadd.f32 %v5307, %v5308
    %v5310 = vrot.slane %v5309, 1
    %v5311 = vadd.f32 %v5309, %v5310
    %v5312 = vadd.f32 %v5196, %v5228
    %v5313 = vsel %vm4012, %v5260, 0.0
    %v5314 = vadd.f32 %v5312, %v5313
    %v5315 = vrot.slane %v5314, 4
    %v5316 = vadd.f32 %v5314, %v5315
    %v5317 = vrot.slane %v5316, 2
    %v5318 = vadd.f32 %v5316, %v5317
    %v5319 = vrot.slane %v5318, 1
    %v5320 = vadd.f32 %v5318, %v5319
    %v5321 = vadd.f32 %v5198, %v5230
    %v5322 = vsel %vm4012, %v5262, 0.0
    %v5323 = vadd.f32 %v5321, %v5322
    %v5324 = vrot.slane %v5323, 4
    %v5325 = vadd.f32 %v5323, %v5324
    %v5326 = vrot.slane %v5325, 2
    %v5327 = vadd.f32 %v5325, %v5326
    %v5328 = vrot.slane %v5327, 1
    %v5329 = vadd.f32 %v5327, %v5328
    %v5330 = vadd.f32 %v5200, %v5232
    %v5331 = vsel %vm4012, %v5264, 0.0
    %v5332 = vadd.f32 %v5330, %v5331
    %v5333 = vrot.slane %v5332, 4
    %v5334 = vadd.f32 %v5332, %v5333
    %v5335 = vrot.slane %v5334, 2
    %v5336 = vadd.f32 %v5334, %v5335
    %v5337 = vrot.slane %v5336, 1
    %v5338 = vadd.f32 %v5336, %v5337
    %v5339 = vadd.f32 %v5202, %v5234
    %v5340 = vsel %vm4012, %v5266, 0.0
    %v5341 = vadd.f32 %v5339, %v5340
    %v5342 = vrot.slane %v5341, 4
    %v5343 = vadd.f32 %v5341, %v5342
    %v5344 = vrot.slane %v5343, 2
    %v5345 = vadd.f32 %v5343, %v5344
    %v5346 = vrot.slane %v5345, 1
    %v5347 = vadd.f32 %v5345, %v5346
    %v5348 = vadd.f32 %v5204, %v5236
    %v5349 = vsel %vm4012, %v5268, 0.0
    %v5350 = vadd.f32 %v5348, %v5349
    %v5351 = vrot.slane %v5350, 4
    %v5352 = vadd.f32 %v5350, %v5351
    %v5353 = vrot.slane %v5352, 2
    %v5354 = vadd.f32 %v5352, %v5353
    %v5355 = vrot.slane %v5354, 1
    %v5356 = vadd.f32 %v5354, %v5355
    %v5357 = vadd.f32 %v5206, %v5238
    %v5358 = vsel %vm4012, %v5270, 0.0
    %v5359 = vadd.f32 %v5357, %v5358
    %v5360 = vrot.slane %v5359, 4
    %v5361 = vadd.f32 %v5359, %v5360
    %v5362 = vrot.slane %v5361, 2
    %v5363 = vadd.f32 %v5361, %v5362
    %v5364 = vrot.slane %v5363, 1
    %v5365 = vadd.f32 %v5363, %v5364
    %v5366 = vadd.f32 %v5208, %v5240
    %v5367 = vsel %vm4012, %v5272, 0.0
    %v5368 = vadd.f32 %v5366, %v5367
    %v5369 = vrot.slane %v5368, 4
    %v5370 = vadd.f32 %v5368, %v5369
    %v5371 = vrot.slane %v5370, 2
    %v5372 = vadd.f32 %v5370, %v5371
    %v5373 = vrot.slane %v5372, 1
    %v5374 = vadd.f32 %v5372, %v5373
    %v5375 = vadd.f32 %v5210, %v5242
    %v5376 = vsel %vm4012, %v5274, 0.0
    %v5377 = vadd.f32 %v5375, %v5376
    %v5378 = vrot.slane %v5377, 4
    %v5379 = vadd.f32 %v5377, %v5378
    %v5380 = vrot.slane %v5379, 2
    %v5381 = vadd.f32 %v5379, %v5380
    %v5382 = vrot.slane %v5381, 1
    %v5383 = vadd.f32 %v5381, %v5382
    %v5384 = vadd.f32 %v5212, %v5244
    %v5385 = vsel %vm4012, %v5276, 0.0
    %v5386 = vadd.f32 %v5384, %v5385
    %v5387 = vrot.slane %v5386, 4
    %v5388 = vadd.f32 %v5386, %v5387
    %v5389 = vrot.slane %v5388, 2
    %v5390 = vadd.f32 %v5388, %v5389
    %v5391 = vrot.slane %v5390, 1
    %v5392 = vadd.f32 %v5390, %v5391
    %v5393 = vadd.f32 %v5214, %v5246
    %v5394 = vsel %vm4012, %v5278, 0.0
    %v5395 = vadd.f32 %v5393, %v5394
    %v5396 = vrot.slane %v5395, 4
    %v5397 = vadd.f32 %v5395, %v5396
    %v5398 = vrot.slane %v5397, 2
    %v5399 = vadd.f32 %v5397, %v5398
    %v5400 = vrot.slane %v5399, 1
    %v5401 = vadd.f32 %v5399, %v5400
    %v5402 = vadd.f32 %v5216, %v5248
    %v5403 = vsel %vm4012, %v5280, 0.0
    %v5404 = vadd.f32 %v5402, %v5403
    %v5405 = vrot.slane %v5404, 4
    %v5406 = vadd.f32 %v5404, %v5405
    %v5407 = vrot.slane %v5406, 2
    %v5408 = vadd.f32 %v5406, %v5407
    %v5409 = vrot.slane %v5408, 1
    %v5410 = vadd.f32 %v5408, %v5409
    %v5411 = vadd.f32 %v5218, %v5250
    %v5412 = vsel %vm4012, %v5282, 0.0
    %v5413 = vadd.f32 %v5411, %v5412
    %v5414 = vrot.slane %v5413, 4
    %v5415 = vadd.f32 %v5413, %v5414
    %v5416 = vrot.slane %v5415, 2
    %v5417 = vadd.f32 %v5415, %v5416
    %v5418 = vrot.slane %v5417, 1
    %v5419 = vadd.f32 %v5417, %v5418
    %v5420 = vadd.f32 %v5220, %v5252
    %v5421 = vsel %vm4012, %v5284, 0.0
    %v5422 = vadd.f32 %v5420, %v5421
    %v5423 = vrot.slane %v5422, 4
    %v5424 = vadd.f32 %v5422, %v5423
    %v5425 = vrot.slane %v5424, 2
    %v5426 = vadd.f32 %v5424, %v5425
    %v5427 = vrot.slane %v5426, 1
    %v5428 = vadd.f32 %v5426, %v5427
    %v5429 = vlog2.pop %v5293
    %v5430 = vmul.f32 %v5429, 0.6931472
    %v5431 = vlog2.pop %v5302
    %v5432 = vmul.f32 %v5431, 0.6931472
    %v5433 = vlog2.pop %v5311
    %v5434 = vmul.f32 %v5433, 0.6931472
    %v5435 = vlog2.pop %v5320
    %v5436 = vmul.f32 %v5435, 0.6931472
    %v5437 = vlog2.pop %v5329
    %v5438 = vmul.f32 %v5437, 0.6931472
    %v5439 = vlog2.pop %v5338
    %v5440 = vmul.f32 %v5439, 0.6931472
    %v5441 = vlog2.pop %v5347
    %v5442 = vmul.f32 %v5441, 0.6931472
    %v5443 = vlog2.pop %v5356
    %v5444 = vmul.f32 %v5443, 0.6931472
    %v5445 = vlog2.pop %v5365
    %v5446 = vmul.f32 %v5445, 0.6931472
    %v5447 = vlog2.pop %v5374
    %v5448 = vmul.f32 %v5447, 0.6931472
    %v5449 = vlog2.pop %v5383
    %v5450 = vmul.f32 %v5449, 0.6931472
    %v5451 = vlog2.pop %v5392
    %v5452 = vmul.f32 %v5451, 0.6931472
    %v5453 = vlog2.pop %v5401
    %v5454 = vmul.f32 %v5453, 0.6931472
    %v5455 = vlog2.pop %v5410
    %v5456 = vmul.f32 %v5455, 0.6931472
    %v5457 = vlog2.pop %v5419
    %v5458 = vmul.f32 %v5457, 0.6931472
    %v5459 = vlog2.pop %v5428
    %v5460 = vmul.f32 %v5459, 0.6931472
    %v5461 = vadd.f32 %v5005, %v5430
    %v5462 = vadd.f32 %v5014, %v5432
    %v5463 = vadd.f32 %v5023, %v5434
    %v5464 = vadd.f32 %v5032, %v5436
    %v5465 = vadd.f32 %v5041, %v5438
    %v5466 = vadd.f32 %v5050, %v5440
    %v5467 = vadd.f32 %v5059, %v5442
    %v5468 = vadd.f32 %v5068, %v5444
    %v5469 = vadd.f32 %v5077, %v5446
    %v5470 = vadd.f32 %v5086, %v5448
    %v5471 = vadd.f32 %v5095, %v5450
    %v5472 = vadd.f32 %v5104, %v5452
    %v5473 = vadd.f32 %v5113, %v5454
    %v5474 = vadd.f32 %v5122, %v5456
    %v5475 = vadd.f32 %v5131, %v5458
    %v5476 = vadd.f32 %v5140, %v5460
    %v5477 = vperm.slane %v3724, 1
    %v5478 = vperm.slane %v3725, 1
    %v5479 = vperm.slane %v3726, 1
    %v5480 = vperm.slane %v3727, 1
    %v5481 = vperm.slane %v3728, 1
    %v5482 = vperm.slane %v3729, 1
    %v5483 = vperm.slane %v3730, 1
    %v5484 = vperm.slane %v3731, 1
    %v5485 = vperm.slane %v3732, 1
    %v5486 = vperm.slane %v3733, 1
    %v5487 = vperm.slane %v3734, 1
    %v5488 = vperm.slane %v3735, 1
    %v5489 = vperm.slane %v3736, 1
    %v5490 = vperm.slane %v3737, 1
    %v5491 = vperm.slane %v3738, 1
    %v5492 = vperm.slane %v3739, 1
    %v5493 = vsub.f32 %v5477, %v3936
    %v5494 = vsub.f32 %v5478, %v3936
    %v5495 = vsub.f32 %v5479, %v3936
    %v5496 = vsub.f32 %v5480, %v3936
    %v5497 = vsub.f32 %v5481, %v3936
    %v5498 = vsub.f32 %v5482, %v3936
    %v5499 = vsub.f32 %v5483, %v3936
    %v5500 = vsub.f32 %v5484, %v3936
    %v5501 = vsub.f32 %v5485, %v3936
    %v5502 = vsub.f32 %v5486, %v3936
    %v5503 = vsub.f32 %v5487, %v3936
    %v5504 = vsub.f32 %v5488, %v3936
    %v5505 = vsub.f32 %v5489, %v3936
    %v5506 = vsub.f32 %v5490, %v3936
    %v5507 = vsub.f32 %v5491, %v3936
    %v5508 = vsub.f32 %v5492, %v3936
    %v5509 = vsub.f32 %v5477, %v3937
    %v5510 = vsub.f32 %v5478, %v3937
    %v5511 = vsub.f32 %v5479, %v3937
    %v5512 = vsub.f32 %v5480, %v3937
    %v5513 = vsub.f32 %v5481, %v3937
    %v5514 = vsub.f32 %v5482, %v3937
    %v5515 = vsub.f32 %v5483, %v3937
    %v5516 = vsub.f32 %v5484, %v3937
    %v5517 = vsub.f32 %v5485, %v3937
    %v5518 = vsub.f32 %v5486, %v3937
    %v5519 = vsub.f32 %v5487, %v3937
    %v5520 = vsub.f32 %v5488, %v3937
    %v5521 = vsub.f32 %v5489, %v3937
    %v5522 = vsub.f32 %v5490, %v3937
    %v5523 = vsub.f32 %v5491, %v3937
    %v5524 = vsub.f32 %v5492, %v3937
    %v5525 = vsub.f32 %v5477, %v3938
    %v5526 = vsub.f32 %v5478, %v3938
    %v5527 = vsub.f32 %v5479, %v3938
    %v5528 = vsub.f32 %v5480, %v3938
    %v5529 = vsub.f32 %v5481, %v3938
    %v5530 = vsub.f32 %v5482, %v3938
    %v5531 = vsub.f32 %v5483, %v3938
    %v5532 = vsub.f32 %v5484, %v3938
    %v5533 = vsub.f32 %v5485, %v3938
    %v5534 = vsub.f32 %v5486, %v3938
    %v5535 = vsub.f32 %v5487, %v3938
    %v5536 = vsub.f32 %v5488, %v3938
    %v5537 = vsub.f32 %v5489, %v3938
    %v5538 = vsub.f32 %v5490, %v3938
    %v5539 = vsub.f32 %v5491, %v3938
    %v5540 = vsub.f32 %v5492, %v3938
    %v5541 = vand.u32 2147483647, %v5493
    %v5542 = vand.u32 2147483647, %v5494
    %v5543 = vand.u32 2147483647, %v5495
    %v5544 = vand.u32 2147483647, %v5496
    %v5545 = vand.u32 2147483647, %v5497
    %v5546 = vand.u32 2147483647, %v5498
    %v5547 = vand.u32 2147483647, %v5499
    %v5548 = vand.u32 2147483647, %v5500
    %v5549 = vand.u32 2147483647, %v5501
    %v5550 = vand.u32 2147483647, %v5502
    %v5551 = vand.u32 2147483647, %v5503
    %v5552 = vand.u32 2147483647, %v5504
    %v5553 = vand.u32 2147483647, %v5505
    %v5554 = vand.u32 2147483647, %v5506
    %v5555 = vand.u32 2147483647, %v5507
    %v5556 = vand.u32 2147483647, %v5508
    %v5557 = vand.u32 2147483647, %v5509
    %v5558 = vand.u32 2147483647, %v5510
    %v5559 = vand.u32 2147483647, %v5511
    %v5560 = vand.u32 2147483647, %v5512
    %v5561 = vand.u32 2147483647, %v5513
    %v5562 = vand.u32 2147483647, %v5514
    %v5563 = vand.u32 2147483647, %v5515
    %v5564 = vand.u32 2147483647, %v5516
    %v5565 = vand.u32 2147483647, %v5517
    %v5566 = vand.u32 2147483647, %v5518
    %v5567 = vand.u32 2147483647, %v5519
    %v5568 = vand.u32 2147483647, %v5520
    %v5569 = vand.u32 2147483647, %v5521
    %v5570 = vand.u32 2147483647, %v5522
    %v5571 = vand.u32 2147483647, %v5523
    %v5572 = vand.u32 2147483647, %v5524
    %v5573 = vand.u32 2147483647, %v5525
    %v5574 = vand.u32 2147483647, %v5526
    %v5575 = vand.u32 2147483647, %v5527
    %v5576 = vand.u32 2147483647, %v5528
    %v5577 = vand.u32 2147483647, %v5529
    %v5578 = vand.u32 2147483647, %v5530
    %v5579 = vand.u32 2147483647, %v5531
    %v5580 = vand.u32 2147483647, %v5532
    %v5581 = vand.u32 2147483647, %v5533
    %v5582 = vand.u32 2147483647, %v5534
    %v5583 = vand.u32 2147483647, %v5535
    %v5584 = vand.u32 2147483647, %v5536
    %v5585 = vand.u32 2147483647, %v5537
    %v5586 = vand.u32 2147483647, %v5538
    %v5587 = vand.u32 2147483647, %v5539
    %v5588 = vand.u32 2147483647, %v5540
    %v5589 = vsub.f32 1.0, %v5541
    %v5590 = vsub.f32 1.0, %v5542
    %v5591 = vsub.f32 1.0, %v5543
    %v5592 = vsub.f32 1.0, %v5544
    %v5593 = vsub.f32 1.0, %v5545
    %v5594 = vsub.f32 1.0, %v5546
    %v5595 = vsub.f32 1.0, %v5547
    %v5596 = vsub.f32 1.0, %v5548
    %v5597 = vsub.f32 1.0, %v5549
    %v5598 = vsub.f32 1.0, %v5550
    %v5599 = vsub.f32 1.0, %v5551
    %v5600 = vsub.f32 1.0, %v5552
    %v5601 = vsub.f32 1.0, %v5553
    %v5602 = vsub.f32 1.0, %v5554
    %v5603 = vsub.f32 1.0, %v5555
    %v5604 = vsub.f32 1.0, %v5556
    %v5605 = vsub.f32 1.0, %v5557
    %v5606 = vsub.f32 1.0, %v5558
    %v5607 = vsub.f32 1.0, %v5559
    %v5608 = vsub.f32 1.0, %v5560
    %v5609 = vsub.f32 1.0, %v5561
    %v5610 = vsub.f32 1.0, %v5562
    %v5611 = vsub.f32 1.0, %v5563
    %v5612 = vsub.f32 1.0, %v5564
    %v5613 = vsub.f32 1.0, %v5565
    %v5614 = vsub.f32 1.0, %v5566
    %v5615 = vsub.f32 1.0, %v5567
    %v5616 = vsub.f32 1.0, %v5568
    %v5617 = vsub.f32 1.0, %v5569
    %v5618 = vsub.f32 1.0, %v5570
    %v5619 = vsub.f32 1.0, %v5571
    %v5620 = vsub.f32 1.0, %v5572
    %v5621 = vsub.f32 1.0, %v5573
    %v5622 = vsub.f32 1.0, %v5574
    %v5623 = vsub.f32 1.0, %v5575
    %v5624 = vsub.f32 1.0, %v5576
    %v5625 = vsub.f32 1.0, %v5577
    %v5626 = vsub.f32 1.0, %v5578
    %v5627 = vsub.f32 1.0, %v5579
    %v5628 = vsub.f32 1.0, %v5580
    %v5629 = vsub.f32 1.0, %v5581
    %v5630 = vsub.f32 1.0, %v5582
    %v5631 = vsub.f32 1.0, %v5583
    %v5632 = vsub.f32 1.0, %v5584
    %v5633 = vsub.f32 1.0, %v5585
    %v5634 = vsub.f32 1.0, %v5586
    %v5635 = vsub.f32 1.0, %v5587
    %v5636 = vsub.f32 1.0, %v5588
    %v5637 = vmax.f32 %v5589, 0.0
    %v5638 = vmax.f32 %v5590, 0.0
    %v5639 = vmax.f32 %v5591, 0.0
    %v5640 = vmax.f32 %v5592, 0.0
    %v5641 = vmax.f32 %v5593, 0.0
    %v5642 = vmax.f32 %v5594, 0.0
    %v5643 = vmax.f32 %v5595, 0.0
    %v5644 = vmax.f32 %v5596, 0.0
    %v5645 = vmax.f32 %v5597, 0.0
    %v5646 = vmax.f32 %v5598, 0.0
    %v5647 = vmax.f32 %v5599, 0.0
    %v5648 = vmax.f32 %v5600, 0.0
    %v5649 = vmax.f32 %v5601, 0.0
    %v5650 = vmax.f32 %v5602, 0.0
    %v5651 = vmax.f32 %v5603, 0.0
    %v5652 = vmax.f32 %v5604, 0.0
    %v5653 = vmax.f32 %v5605, 0.0
    %v5654 = vmax.f32 %v5606, 0.0
    %v5655 = vmax.f32 %v5607, 0.0
    %v5656 = vmax.f32 %v5608, 0.0
    %v5657 = vmax.f32 %v5609, 0.0
    %v5658 = vmax.f32 %v5610, 0.0
    %v5659 = vmax.f32 %v5611, 0.0
    %v5660 = vmax.f32 %v5612, 0.0
    %v5661 = vmax.f32 %v5613, 0.0
    %v5662 = vmax.f32 %v5614, 0.0
    %v5663 = vmax.f32 %v5615, 0.0
    %v5664 = vmax.f32 %v5616, 0.0
    %v5665 = vmax.f32 %v5617, 0.0
    %v5666 = vmax.f32 %v5618, 0.0
    %v5667 = vmax.f32 %v5619, 0.0
    %v5668 = vmax.f32 %v5620, 0.0
    %v5669 = vmax.f32 %v5621, 0.0
    %v5670 = vmax.f32 %v5622, 0.0
    %v5671 = vmax.f32 %v5623, 0.0
    %v5672 = vmax.f32 %v5624, 0.0
    %v5673 = vmax.f32 %v5625, 0.0
    %v5674 = vmax.f32 %v5626, 0.0
    %v5675 = vmax.f32 %v5627, 0.0
    %v5676 = vmax.f32 %v5628, 0.0
    %v5677 = vmax.f32 %v5629, 0.0
    %v5678 = vmax.f32 %v5630, 0.0
    %v5679 = vmax.f32 %v5631, 0.0
    %v5680 = vmax.f32 %v5632, 0.0
    %v5681 = vmax.f32 %v5633, 0.0
    %v5682 = vmax.f32 %v5634, 0.0
    %v5683 = vmax.f32 %v5635, 0.0
    %v5684 = vmax.f32 %v5636, 0.0
    %v5685 = vmul.f32 %v5637, %v4949
    %v5686 = vmul.f32 %v5638, %v4950
    %v5687 = vmul.f32 %v5639, %v4951
    %v5688 = vmul.f32 %v5640, %v4952
    %v5689 = vmul.f32 %v5641, %v4953
    %v5690 = vmul.f32 %v5642, %v4954
    %v5691 = vmul.f32 %v5643, %v4955
    %v5692 = vmul.f32 %v5644, %v4956
    %v5693 = vmul.f32 %v5645, %v4957
    %v5694 = vmul.f32 %v5646, %v4958
    %v5695 = vmul.f32 %v5647, %v4959
    %v5696 = vmul.f32 %v5648, %v4960
    %v5697 = vmul.f32 %v5649, %v4961
    %v5698 = vmul.f32 %v5650, %v4962
    %v5699 = vmul.f32 %v5651, %v4963
    %v5700 = vmul.f32 %v5652, %v4964
    %v5701 = vmul.f32 %v5653, %v4965
    %v5702 = vmul.f32 %v5654, %v4966
    %v5703 = vmul.f32 %v5655, %v4967
    %v5704 = vmul.f32 %v5656, %v4968
    %v5705 = vmul.f32 %v5657, %v4969
    %v5706 = vmul.f32 %v5658, %v4970
    %v5707 = vmul.f32 %v5659, %v4971
    %v5708 = vmul.f32 %v5660, %v4972
    %v5709 = vmul.f32 %v5661, %v4973
    %v5710 = vmul.f32 %v5662, %v4974
    %v5711 = vmul.f32 %v5663, %v4975
    %v5712 = vmul.f32 %v5664, %v4976
    %v5713 = vmul.f32 %v5665, %v4977
    %v5714 = vmul.f32 %v5666, %v4978
    %v5715 = vmul.f32 %v5667, %v4979
    %v5716 = vmul.f32 %v5668, %v4980
    %v5717 = vmul.f32 %v5669, %v4981
    %v5718 = vmul.f32 %v5670, %v4982
    %v5719 = vmul.f32 %v5671, %v4983
    %v5720 = vmul.f32 %v5672, %v4984
    %v5721 = vmul.f32 %v5673, %v4985
    %v5722 = vmul.f32 %v5674, %v4986
    %v5723 = vmul.f32 %v5675, %v4987
    %v5724 = vmul.f32 %v5676, %v4988
    %v5725 = vmul.f32 %v5677, %v4989
    %v5726 = vmul.f32 %v5678, %v4990
    %v5727 = vmul.f32 %v5679, %v4991
    %v5728 = vmul.f32 %v5680, %v4992
    %v5729 = vmul.f32 %v5681, %v4993
    %v5730 = vmul.f32 %v5682, %v4994
    %v5731 = vmul.f32 %v5683, %v4995
    %v5732 = vmul.f32 %v5684, %v4996
    %v5733 = vadd.f32 %v5685, %v5701
    %v5734 = vsel %vm4012, %v5717, 0.0
    %v5735 = vadd.f32 %v5733, %v5734
    %v5736 = vrot.slane %v5735, 4
    %v5737 = vadd.f32 %v5735, %v5736
    %v5738 = vrot.slane %v5737, 2
    %v5739 = vadd.f32 %v5737, %v5738
    %v5740 = vrot.slane %v5739, 1
    %v5741 = vadd.f32 %v5739, %v5740
    %v5742 = vadd.f32 %v5686, %v5702
    %v5743 = vsel %vm4012, %v5718, 0.0
    %v5744 = vadd.f32 %v5742, %v5743
    %v5745 = vrot.slane %v5744, 4
    %v5746 = vadd.f32 %v5744, %v5745
    %v5747 = vrot.slane %v5746, 2
    %v5748 = vadd.f32 %v5746, %v5747
    %v5749 = vrot.slane %v5748, 1
    %v5750 = vadd.f32 %v5748, %v5749
    %v5751 = vadd.f32 %v5687, %v5703
    %v5752 = vsel %vm4012, %v5719, 0.0
    %v5753 = vadd.f32 %v5751, %v5752
    %v5754 = vrot.slane %v5753, 4
    %v5755 = vadd.f32 %v5753, %v5754
    %v5756 = vrot.slane %v5755, 2
    %v5757 = vadd.f32 %v5755, %v5756
    %v5758 = vrot.slane %v5757, 1
    %v5759 = vadd.f32 %v5757, %v5758
    %v5760 = vadd.f32 %v5688, %v5704
    %v5761 = vsel %vm4012, %v5720, 0.0
    %v5762 = vadd.f32 %v5760, %v5761
    %v5763 = vrot.slane %v5762, 4
    %v5764 = vadd.f32 %v5762, %v5763
    %v5765 = vrot.slane %v5764, 2
    %v5766 = vadd.f32 %v5764, %v5765
    %v5767 = vrot.slane %v5766, 1
    %v5768 = vadd.f32 %v5766, %v5767
    %v5769 = vadd.f32 %v5689, %v5705
    %v5770 = vsel %vm4012, %v5721, 0.0
    %v5771 = vadd.f32 %v5769, %v5770
    %v5772 = vrot.slane %v5771, 4
    %v5773 = vadd.f32 %v5771, %v5772
    %v5774 = vrot.slane %v5773, 2
    %v5775 = vadd.f32 %v5773, %v5774
    %v5776 = vrot.slane %v5775, 1
    %v5777 = vadd.f32 %v5775, %v5776
    %v5778 = vadd.f32 %v5690, %v5706
    %v5779 = vsel %vm4012, %v5722, 0.0
    %v5780 = vadd.f32 %v5778, %v5779
    %v5781 = vrot.slane %v5780, 4
    %v5782 = vadd.f32 %v5780, %v5781
    %v5783 = vrot.slane %v5782, 2
    %v5784 = vadd.f32 %v5782, %v5783
    %v5785 = vrot.slane %v5784, 1
    %v5786 = vadd.f32 %v5784, %v5785
    %v5787 = vadd.f32 %v5691, %v5707
    %v5788 = vsel %vm4012, %v5723, 0.0
    %v5789 = vadd.f32 %v5787, %v5788
    %v5790 = vrot.slane %v5789, 4
    %v5791 = vadd.f32 %v5789, %v5790
    %v5792 = vrot.slane %v5791, 2
    %v5793 = vadd.f32 %v5791, %v5792
    %v5794 = vrot.slane %v5793, 1
    %v5795 = vadd.f32 %v5793, %v5794
    %v5796 = vadd.f32 %v5692, %v5708
    %v5797 = vsel %vm4012, %v5724, 0.0
    %v5798 = vadd.f32 %v5796, %v5797
    %v5799 = vrot.slane %v5798, 4
    %v5800 = vadd.f32 %v5798, %v5799
    %v5801 = vrot.slane %v5800, 2
    %v5802 = vadd.f32 %v5800, %v5801
    %v5803 = vrot.slane %v5802, 1
    %v5804 = vadd.f32 %v5802, %v5803
    %v5805 = vadd.f32 %v5693, %v5709
    %v5806 = vsel %vm4012, %v5725, 0.0
    %v5807 = vadd.f32 %v5805, %v5806
    %v5808 = vrot.slane %v5807, 4
    %v5809 = vadd.f32 %v5807, %v5808
    %v5810 = vrot.slane %v5809, 2
    %v5811 = vadd.f32 %v5809, %v5810
    %v5812 = vrot.slane %v5811, 1
    %v5813 = vadd.f32 %v5811, %v5812
    %v5814 = vadd.f32 %v5694, %v5710
    %v5815 = vsel %vm4012, %v5726, 0.0
    %v5816 = vadd.f32 %v5814, %v5815
    %v5817 = vrot.slane %v5816, 4
    %v5818 = vadd.f32 %v5816, %v5817
    %v5819 = vrot.slane %v5818, 2
    %v5820 = vadd.f32 %v5818, %v5819
    %v5821 = vrot.slane %v5820, 1
    %v5822 = vadd.f32 %v5820, %v5821
    %v5823 = vadd.f32 %v5695, %v5711
    %v5824 = vsel %vm4012, %v5727, 0.0
    %v5825 = vadd.f32 %v5823, %v5824
    %v5826 = vrot.slane %v5825, 4
    %v5827 = vadd.f32 %v5825, %v5826
    %v5828 = vrot.slane %v5827, 2
    %v5829 = vadd.f32 %v5827, %v5828
    %v5830 = vrot.slane %v5829, 1
    %v5831 = vadd.f32 %v5829, %v5830
    %v5832 = vadd.f32 %v5696, %v5712
    %v5833 = vsel %vm4012, %v5728, 0.0
    %v5834 = vadd.f32 %v5832, %v5833
    %v5835 = vrot.slane %v5834, 4
    %v5836 = vadd.f32 %v5834, %v5835
    %v5837 = vrot.slane %v5836, 2
    %v5838 = vadd.f32 %v5836, %v5837
    %v5839 = vrot.slane %v5838, 1
    %v5840 = vadd.f32 %v5838, %v5839
    %v5841 = vadd.f32 %v5697, %v5713
    %v5842 = vsel %vm4012, %v5729, 0.0
    %v5843 = vadd.f32 %v5841, %v5842
    %v5844 = vrot.slane %v5843, 4
    %v5845 = vadd.f32 %v5843, %v5844
    %v5846 = vrot.slane %v5845, 2
    %v5847 = vadd.f32 %v5845, %v5846
    %v5848 = vrot.slane %v5847, 1
    %v5849 = vadd.f32 %v5847, %v5848
    %v5850 = vadd.f32 %v5698, %v5714
    %v5851 = vsel %vm4012, %v5730, 0.0
    %v5852 = vadd.f32 %v5850, %v5851
    %v5853 = vrot.slane %v5852, 4
    %v5854 = vadd.f32 %v5852, %v5853
    %v5855 = vrot.slane %v5854, 2
    %v5856 = vadd.f32 %v5854, %v5855
    %v5857 = vrot.slane %v5856, 1
    %v5858 = vadd.f32 %v5856, %v5857
    %v5859 = vadd.f32 %v5699, %v5715
    %v5860 = vsel %vm4012, %v5731, 0.0
    %v5861 = vadd.f32 %v5859, %v5860
    %v5862 = vrot.slane %v5861, 4
    %v5863 = vadd.f32 %v5861, %v5862
    %v5864 = vrot.slane %v5863, 2
    %v5865 = vadd.f32 %v5863, %v5864
    %v5866 = vrot.slane %v5865, 1
    %v5867 = vadd.f32 %v5865, %v5866
    %v5868 = vadd.f32 %v5700, %v5716
    %v5869 = vsel %vm4012, %v5732, 0.0
    %v5870 = vadd.f32 %v5868, %v5869
    %v5871 = vrot.slane %v5870, 4
    %v5872 = vadd.f32 %v5870, %v5871
    %v5873 = vrot.slane %v5872, 2
    %v5874 = vadd.f32 %v5872, %v5873
    %v5875 = vrot.slane %v5874, 1
    %v5876 = vadd.f32 %v5874, %v5875
    %v5877 = vsub.f32 %v5461, %v5741
    %v5878 = vsub.f32 %v5462, %v5750
    %v5879 = vsub.f32 %v5463, %v5759
    %v5880 = vsub.f32 %v5464, %v5768
    %v5881 = vsub.f32 %v5465, %v5777
    %v5882 = vsub.f32 %v5466, %v5786
    %v5883 = vsub.f32 %v5467, %v5795
    %v5884 = vsub.f32 %v5468, %v5804
    %v5885 = vsub.f32 %v5469, %v5813
    %v5886 = vsub.f32 %v5470, %v5822
    %v5887 = vsub.f32 %v5471, %v5831
    %v5888 = vsub.f32 %v5472, %v5840
    %v5889 = vsub.f32 %v5473, %v5849
    %v5890 = vsub.f32 %v5474, %v5858
    %v5891 = vsub.f32 %v5475, %v5867
    %v5892 = vsub.f32 %v5476, %v5876
    %v5893 = vadd.f32 %v4908, %v5877
    %v5894 = vadd.f32 %v4909, %v5878
    %v5895 = vadd.f32 %v4910, %v5879
    %v5896 = vadd.f32 %v4911, %v5880
    %v5897 = vadd.f32 %v4912, %v5881
    %v5898 = vadd.f32 %v4913, %v5882
    %v5899 = vadd.f32 %v4914, %v5883
    %v5900 = vadd.f32 %v4915, %v5884
    %v5901 = vadd.f32 %v4916, %v5885
    %v5902 = vadd.f32 %v4917, %v5886
    %v5903 = vadd.f32 %v4918, %v5887
    %v5904 = vadd.f32 %v4919, %v5888
    %v5905 = vadd.f32 %v4920, %v5889
    %v5906 = vadd.f32 %v4921, %v5890
    %v5907 = vadd.f32 %v4922, %v5891
    %v5908 = vadd.f32 %v4923, %v5892
    %s5909 = scalar_lea.vmem %s1, 384
    %v5910 = vld [vmem:[%s5909] sm:$0xff]
    %v5911 = vld [vmem:[%s5909 + $0x8] sm:$0xff]
    %v5912 = vld [vmem:[%s5909 + $0x10] sm:$0xff]
    %v5913 = vld [vmem:[%s5909 + $0x18] sm:$0xff]
    %v5914 = vld [vmem:[%s5909 + $0x20] sm:$0xff]
    %v5915 = vld [vmem:[%s5909 + $0x28] sm:$0xff]
    %v5916 = vld [vmem:[%s5909 + $0x30] sm:$0xff]
    %v5917 = vld [vmem:[%s5909 + $0x38] sm:$0xff]
    %v5918 = vld [vmem:[%s5909 + $0x40] sm:$0xff]
    %v5919 = vld [vmem:[%s5909 + $0x48] sm:$0xff]
    %v5920 = vld [vmem:[%s5909 + $0x50] sm:$0xff]
    %v5921 = vld [vmem:[%s5909 + $0x58] sm:$0xff]
    %v5922 = vld [vmem:[%s5909 + $0x60] sm:$0xff]
    %v5923 = vld [vmem:[%s5909 + $0x68] sm:$0xff]
    %v5924 = vld [vmem:[%s5909 + $0x70] sm:$0xff]
    %v5925 = vld [vmem:[%s5909 + $0x78] sm:$0xff]
    %v5926 = vld [vmem:[%s5909 + $0x80] sm:$0x11]
    %v5927 = vld [vmem:[%s5909 + $0x88] sm:$0x11]
    %v5928 = vld [vmem:[%s5909 + $0x90] sm:$0x11]
    %v5929 = vld [vmem:[%s5909 + $0x98] sm:$0x11]
    %v5930 = vld [vmem:[%s5909 + $0xa0] sm:$0x11]
    %v5931 = vld [vmem:[%s5909 + $0xa8] sm:$0x11]
    %v5932 = vld [vmem:[%s5909 + $0xb0] sm:$0x11]
    %v5933 = vld [vmem:[%s5909 + $0xb8] sm:$0x11]
    %v5934 = vunpack.c.l.bf16 %v5910
    %v5935 = vunpack.c.h.bf16 %v5910
    %v5936 = vunpack.c.l.bf16 %v5911
    %v5937 = vunpack.c.h.bf16 %v5911
    %v5938 = vunpack.c.l.bf16 %v5912
    %v5939 = vunpack.c.h.bf16 %v5912
    %v5940 = vunpack.c.l.bf16 %v5913
    %v5941 = vunpack.c.h.bf16 %v5913
    %v5942 = vunpack.c.l.bf16 %v5914
    %v5943 = vunpack.c.h.bf16 %v5914
    %v5944 = vunpack.c.l.bf16 %v5915
    %v5945 = vunpack.c.h.bf16 %v5915
    %v5946 = vunpack.c.l.bf16 %v5916
    %v5947 = vunpack.c.h.bf16 %v5916
    %v5948 = vunpack.c.l.bf16 %v5917
    %v5949 = vunpack.c.h.bf16 %v5917
    %v5950 = vunpack.c.l.bf16 %v5918
    %v5951 = vunpack.c.h.bf16 %v5918
    %v5952 = vunpack.c.l.bf16 %v5919
    %v5953 = vunpack.c.h.bf16 %v5919
    %v5954 = vunpack.c.l.bf16 %v5920
    %v5955 = vunpack.c.h.bf16 %v5920
    %v5956 = vunpack.c.l.bf16 %v5921
    %v5957 = vunpack.c.h.bf16 %v5921
    %v5958 = vunpack.c.l.bf16 %v5922
    %v5959 = vunpack.c.h.bf16 %v5922
    %v5960 = vunpack.c.l.bf16 %v5923
    %v5961 = vunpack.c.h.bf16 %v5923
    %v5962 = vunpack.c.l.bf16 %v5924
    %v5963 = vunpack.c.h.bf16 %v5924
    %v5964 = vunpack.c.l.bf16 %v5925
    %v5965 = vunpack.c.h.bf16 %v5925
    %v5966 = vunpack.c.l.bf16 %v5926
    %v5967 = vunpack.c.h.bf16 %v5926
    %v5968 = vunpack.c.l.bf16 %v5927
    %v5969 = vunpack.c.h.bf16 %v5927
    %v5970 = vunpack.c.l.bf16 %v5928
    %v5971 = vunpack.c.h.bf16 %v5928
    %v5972 = vunpack.c.l.bf16 %v5929
    %v5973 = vunpack.c.h.bf16 %v5929
    %v5974 = vunpack.c.l.bf16 %v5930
    %v5975 = vunpack.c.h.bf16 %v5930
    %v5976 = vunpack.c.l.bf16 %v5931
    %v5977 = vunpack.c.h.bf16 %v5931
    %v5978 = vunpack.c.l.bf16 %v5932
    %v5979 = vunpack.c.h.bf16 %v5932
    %v5980 = vunpack.c.l.bf16 %v5933
    %v5981 = vunpack.c.h.bf16 %v5933
    %v5982 = vmax.f32 %v5934, %v5950
    %v5983 = vsel %vm4012, %v5966, -inf
    %v5984 = vmax.f32 %v5982, %v5983
    %v5985 = vrot.slane %v5984, 4
    %v5986 = vmax.f32 %v5984, %v5985
    %v5987 = vrot.slane %v5986, 2
    %v5988 = vmax.f32 %v5986, %v5987
    %v5989 = vrot.slane %v5988, 1
    %v5990 = vmax.f32 %v5988, %v5989
    %v5991 = vmax.f32 %v5935, %v5951
    %v5992 = vsel %vm4012, %v5967, -inf
    %v5993 = vmax.f32 %v5991, %v5992
    %v5994 = vrot.slane %v5993, 4
    %v5995 = vmax.f32 %v5993, %v5994
    %v5996 = vrot.slane %v5995, 2
    %v5997 = vmax.f32 %v5995, %v5996
    %v5998 = vrot.slane %v5997, 1
    %v5999 = vmax.f32 %v5997, %v5998
    %v6000 = vmax.f32 %v5936, %v5952
    %v6001 = vsel %vm4012, %v5968, -inf
    %v6002 = vmax.f32 %v6000, %v6001
    %v6003 = vrot.slane %v6002, 4
    %v6004 = vmax.f32 %v6002, %v6003
    %v6005 = vrot.slane %v6004, 2
    %v6006 = vmax.f32 %v6004, %v6005
    %v6007 = vrot.slane %v6006, 1
    %v6008 = vmax.f32 %v6006, %v6007
    %v6009 = vmax.f32 %v5937, %v5953
    %v6010 = vsel %vm4012, %v5969, -inf
    %v6011 = vmax.f32 %v6009, %v6010
    %v6012 = vrot.slane %v6011, 4
    %v6013 = vmax.f32 %v6011, %v6012
    %v6014 = vrot.slane %v6013, 2
    %v6015 = vmax.f32 %v6013, %v6014
    %v6016 = vrot.slane %v6015, 1
    %v6017 = vmax.f32 %v6015, %v6016
    %v6018 = vmax.f32 %v5938, %v5954
    %v6019 = vsel %vm4012, %v5970, -inf
    %v6020 = vmax.f32 %v6018, %v6019
    %v6021 = vrot.slane %v6020, 4
    %v6022 = vmax.f32 %v6020, %v6021
    %v6023 = vrot.slane %v6022, 2
    %v6024 = vmax.f32 %v6022, %v6023
    %v6025 = vrot.slane %v6024, 1
    %v6026 = vmax.f32 %v6024, %v6025
    %v6027 = vmax.f32 %v5939, %v5955
    %v6028 = vsel %vm4012, %v5971, -inf
    %v6029 = vmax.f32 %v6027, %v6028
    %v6030 = vrot.slane %v6029, 4
    %v6031 = vmax.f32 %v6029, %v6030
    %v6032 = vrot.slane %v6031, 2
    %v6033 = vmax.f32 %v6031, %v6032
    %v6034 = vrot.slane %v6033, 1
    %v6035 = vmax.f32 %v6033, %v6034
    %v6036 = vmax.f32 %v5940, %v5956
    %v6037 = vsel %vm4012, %v5972, -inf
    %v6038 = vmax.f32 %v6036, %v6037
    %v6039 = vrot.slane %v6038, 4
    %v6040 = vmax.f32 %v6038, %v6039
    %v6041 = vrot.slane %v6040, 2
    %v6042 = vmax.f32 %v6040, %v6041
    %v6043 = vrot.slane %v6042, 1
    %v6044 = vmax.f32 %v6042, %v6043
    %v6045 = vmax.f32 %v5941, %v5957
    %v6046 = vsel %vm4012, %v5973, -inf
    %v6047 = vmax.f32 %v6045, %v6046
    %v6048 = vrot.slane %v6047, 4
    %v6049 = vmax.f32 %v6047, %v6048
    %v6050 = vrot.slane %v6049, 2
    %v6051 = vmax.f32 %v6049, %v6050
    %v6052 = vrot.slane %v6051, 1
    %v6053 = vmax.f32 %v6051, %v6052
    %v6054 = vmax.f32 %v5942, %v5958
    %v6055 = vsel %vm4012, %v5974, -inf
    %v6056 = vmax.f32 %v6054, %v6055
    %v6057 = vrot.slane %v6056, 4
    %v6058 = vmax.f32 %v6056, %v6057
    %v6059 = vrot.slane %v6058, 2
    %v6060 = vmax.f32 %v6058, %v6059
    %v6061 = vrot.slane %v6060, 1
    %v6062 = vmax.f32 %v6060, %v6061
    %v6063 = vmax.f32 %v5943, %v5959
    %v6064 = vsel %vm4012, %v5975, -inf
    %v6065 = vmax.f32 %v6063, %v6064
    %v6066 = vrot.slane %v6065, 4
    %v6067 = vmax.f32 %v6065, %v6066
    %v6068 = vrot.slane %v6067, 2
    %v6069 = vmax.f32 %v6067, %v6068
    %v6070 = vrot.slane %v6069, 1
    %v6071 = vmax.f32 %v6069, %v6070
    %v6072 = vmax.f32 %v5944, %v5960
    %v6073 = vsel %vm4012, %v5976, -inf
    %v6074 = vmax.f32 %v6072, %v6073
    %v6075 = vrot.slane %v6074, 4
    %v6076 = vmax.f32 %v6074, %v6075
    %v6077 = vrot.slane %v6076, 2
    %v6078 = vmax.f32 %v6076, %v6077
    %v6079 = vrot.slane %v6078, 1
    %v6080 = vmax.f32 %v6078, %v6079
    %v6081 = vmax.f32 %v5945, %v5961
    %v6082 = vsel %vm4012, %v5977, -inf
    %v6083 = vmax.f32 %v6081, %v6082
    %v6084 = vrot.slane %v6083, 4
    %v6085 = vmax.f32 %v6083, %v6084
    %v6086 = vrot.slane %v6085, 2
    %v6087 = vmax.f32 %v6085, %v6086
    %v6088 = vrot.slane %v6087, 1
    %v6089 = vmax.f32 %v6087, %v6088
    %v6090 = vmax.f32 %v5946, %v5962
    %v6091 = vsel %vm4012, %v5978, -inf
    %v6092 = vmax.f32 %v6090, %v6091
    %v6093 = vrot.slane %v6092, 4
    %v6094 = vmax.f32 %v6092, %v6093
    %v6095 = vrot.slane %v6094, 2
    %v6096 = vmax.f32 %v6094, %v6095
    %v6097 = vrot.slane %v6096, 1
    %v6098 = vmax.f32 %v6096, %v6097
    %v6099 = vmax.f32 %v5947, %v5963
    %v6100 = vsel %vm4012, %v5979, -inf
    %v6101 = vmax.f32 %v6099, %v6100
    %v6102 = vrot.slane %v6101, 4
    %v6103 = vmax.f32 %v6101, %v6102
    %v6104 = vrot.slane %v6103, 2
    %v6105 = vmax.f32 %v6103, %v6104
    %v6106 = vrot.slane %v6105, 1
    %v6107 = vmax.f32 %v6105, %v6106
    %v6108 = vmax.f32 %v5948, %v5964
    %v6109 = vsel %vm4012, %v5980, -inf
    %v6110 = vmax.f32 %v6108, %v6109
    %v6111 = vrot.slane %v6110, 4
    %v6112 = vmax.f32 %v6110, %v6111
    %v6113 = vrot.slane %v6112, 2
    %v6114 = vmax.f32 %v6112, %v6113
    %v6115 = vrot.slane %v6114, 1
    %v6116 = vmax.f32 %v6114, %v6115
    %v6117 = vmax.f32 %v5949, %v5965
    %v6118 = vsel %vm4012, %v5981, -inf
    %v6119 = vmax.f32 %v6117, %v6118
    %v6120 = vrot.slane %v6119, 4
    %v6121 = vmax.f32 %v6119, %v6120
    %v6122 = vrot.slane %v6121, 2
    %v6123 = vmax.f32 %v6121, %v6122
    %v6124 = vrot.slane %v6123, 1
    %v6125 = vmax.f32 %v6123, %v6124
    %v6126 = vsub.f32 %v5934, %v5990
    %v6127 = vsub.f32 %v5935, %v5999
    %v6128 = vsub.f32 %v5936, %v6008
    %v6129 = vsub.f32 %v5937, %v6017
    %v6130 = vsub.f32 %v5938, %v6026
    %v6131 = vsub.f32 %v5939, %v6035
    %v6132 = vsub.f32 %v5940, %v6044
    %v6133 = vsub.f32 %v5941, %v6053
    %v6134 = vsub.f32 %v5942, %v6062
    %v6135 = vsub.f32 %v5943, %v6071
    %v6136 = vsub.f32 %v5944, %v6080
    %v6137 = vsub.f32 %v5945, %v6089
    %v6138 = vsub.f32 %v5946, %v6098
    %v6139 = vsub.f32 %v5947, %v6107
    %v6140 = vsub.f32 %v5948, %v6116
    %v6141 = vsub.f32 %v5949, %v6125
    %v6142 = vsub.f32 %v5950, %v5990
    %v6143 = vsub.f32 %v5951, %v5999
    %v6144 = vsub.f32 %v5952, %v6008
    %v6145 = vsub.f32 %v5953, %v6017
    %v6146 = vsub.f32 %v5954, %v6026
    %v6147 = vsub.f32 %v5955, %v6035
    %v6148 = vsub.f32 %v5956, %v6044
    %v6149 = vsub.f32 %v5957, %v6053
    %v6150 = vsub.f32 %v5958, %v6062
    %v6151 = vsub.f32 %v5959, %v6071
    %v6152 = vsub.f32 %v5960, %v6080
    %v6153 = vsub.f32 %v5961, %v6089
    %v6154 = vsub.f32 %v5962, %v6098
    %v6155 = vsub.f32 %v5963, %v6107
    %v6156 = vsub.f32 %v5964, %v6116
    %v6157 = vsub.f32 %v5965, %v6125
    %v6158 = vsub.f32 %v5966, %v5990
    %v6159 = vsub.f32 %v5967, %v5999
    %v6160 = vsub.f32 %v5968, %v6008
    %v6161 = vsub.f32 %v5969, %v6017
    %v6162 = vsub.f32 %v5970, %v6026
    %v6163 = vsub.f32 %v5971, %v6035
    %v6164 = vsub.f32 %v5972, %v6044
    %v6165 = vsub.f32 %v5973, %v6053
    %v6166 = vsub.f32 %v5974, %v6062
    %v6167 = vsub.f32 %v5975, %v6071
    %v6168 = vsub.f32 %v5976, %v6080
    %v6169 = vsub.f32 %v5977, %v6089
    %v6170 = vsub.f32 %v5978, %v6098
    %v6171 = vsub.f32 %v5979, %v6107
    %v6172 = vsub.f32 %v5980, %v6116
    %v6173 = vsub.f32 %v5981, %v6125
    %v6174 = vmul.f32 %v6126, 1.442695
    %v6175 = vpow.pop %v6174
    %v6176 = vmul.f32 %v6127, 1.442695
    %v6177 = vpow.pop %v6176
    %v6178 = vmul.f32 %v6128, 1.442695
    %v6179 = vpow.pop %v6178
    %v6180 = vmul.f32 %v6129, 1.442695
    %v6181 = vpow.pop %v6180
    %v6182 = vmul.f32 %v6130, 1.442695
    %v6183 = vpow.pop %v6182
    %v6184 = vmul.f32 %v6131, 1.442695
    %v6185 = vpow.pop %v6184
    %v6186 = vmul.f32 %v6132, 1.442695
    %v6187 = vpow.pop %v6186
    %v6188 = vmul.f32 %v6133, 1.442695
    %v6189 = vpow.pop %v6188
    %v6190 = vmul.f32 %v6134, 1.442695
    %v6191 = vpow.pop %v6190
    %v6192 = vmul.f32 %v6135, 1.442695
    %v6193 = vpow.pop %v6192
    %v6194 = vmul.f32 %v6136, 1.442695
    %v6195 = vpow.pop %v6194
    %v6196 = vmul.f32 %v6137, 1.442695
    %v6197 = vpow.pop %v6196
    %v6198 = vmul.f32 %v6138, 1.442695
    %v6199 = vpow.pop %v6198
    %v6200 = vmul.f32 %v6139, 1.442695
    %v6201 = vpow.pop %v6200
    %v6202 = vmul.f32 %v6140, 1.442695
    %v6203 = vpow.pop %v6202
    %v6204 = vmul.f32 %v6141, 1.442695
    %v6205 = vpow.pop %v6204
    %v6206 = vmul.f32 %v6142, 1.442695
    %v6207 = vpow.pop %v6206
    %v6208 = vmul.f32 %v6143, 1.442695
    %v6209 = vpow.pop %v6208
    %v6210 = vmul.f32 %v6144, 1.442695
    %v6211 = vpow.pop %v6210
    %v6212 = vmul.f32 %v6145, 1.442695
    %v6213 = vpow.pop %v6212
    %v6214 = vmul.f32 %v6146, 1.442695
    %v6215 = vpow.pop %v6214
    %v6216 = vmul.f32 %v6147, 1.442695
    %v6217 = vpow.pop %v6216
    %v6218 = vmul.f32 %v6148, 1.442695
    %v6219 = vpow.pop %v6218
    %v6220 = vmul.f32 %v6149, 1.442695
    %v6221 = vpow.pop %v6220
    %v6222 = vmul.f32 %v6150, 1.442695
    %v6223 = vpow.pop %v6222
    %v6224 = vmul.f32 %v6151, 1.442695
    %v6225 = vpow.pop %v6224
    %v6226 = vmul.f32 %v6152, 1.442695
    %v6227 = vpow.pop %v6226
    %v6228 = vmul.f32 %v6153, 1.442695
    %v6229 = vpow.pop %v6228
    %v6230 = vmul.f32 %v6154, 1.442695
    %v6231 = vpow.pop %v6230
    %v6232 = vmul.f32 %v6155, 1.442695
    %v6233 = vpow.pop %v6232
    %v6234 = vmul.f32 %v6156, 1.442695
    %v6235 = vpow.pop %v6234
    %v6236 = vmul.f32 %v6157, 1.442695
    %v6237 = vpow.pop %v6236
    %v6238 = vmul.f32 %v6158, 1.442695
    %v6239 = vpow.pop %v6238
    %v6240 = vmul.f32 %v6159, 1.442695
    %v6241 = vpow.pop %v6240
    %v6242 = vmul.f32 %v6160, 1.442695
    %v6243 = vpow.pop %v6242
    %v6244 = vmul.f32 %v6161, 1.442695
    %v6245 = vpow.pop %v6244
    %v6246 = vmul.f32 %v6162, 1.442695
    %v6247 = vpow.pop %v6246
    %v6248 = vmul.f32 %v6163, 1.442695
    %v6249 = vpow.pop %v6248
    %v6250 = vmul.f32 %v6164, 1.442695
    %v6251 = vpow.pop %v6250
    %v6252 = vmul.f32 %v6165, 1.442695
    %v6253 = vpow.pop %v6252
    %v6254 = vmul.f32 %v6166, 1.442695
    %v6255 = vpow.pop %v6254
    %v6256 = vmul.f32 %v6167, 1.442695
    %v6257 = vpow.pop %v6256
    %v6258 = vmul.f32 %v6168, 1.442695
    %v6259 = vpow.pop %v6258
    %v6260 = vmul.f32 %v6169, 1.442695
    %v6261 = vpow.pop %v6260
    %v6262 = vmul.f32 %v6170, 1.442695
    %v6263 = vpow.pop %v6262
    %v6264 = vmul.f32 %v6171, 1.442695
    %v6265 = vpow.pop %v6264
    %v6266 = vmul.f32 %v6172, 1.442695
    %v6267 = vpow.pop %v6266
    %v6268 = vmul.f32 %v6173, 1.442695
    %v6269 = vpow.pop %v6268
    %v6270 = vadd.f32 %v6175, %v6207
    %v6271 = vsel %vm4012, %v6239, 0.0
    %v6272 = vadd.f32 %v6270, %v6271
    %v6273 = vrot.slane %v6272, 4
    %v6274 = vadd.f32 %v6272, %v6273
    %v6275 = vrot.slane %v6274, 2
    %v6276 = vadd.f32 %v6274, %v6275
    %v6277 = vrot.slane %v6276, 1
    %v6278 = vadd.f32 %v6276, %v6277
    %v6279 = vadd.f32 %v6177, %v6209
    %v6280 = vsel %vm4012, %v6241, 0.0
    %v6281 = vadd.f32 %v6279, %v6280
    %v6282 = vrot.slane %v6281, 4
    %v6283 = vadd.f32 %v6281, %v6282
    %v6284 = vrot.slane %v6283, 2
    %v6285 = vadd.f32 %v6283, %v6284
    %v6286 = vrot.slane %v6285, 1
    %v6287 = vadd.f32 %v6285, %v6286
    %v6288 = vadd.f32 %v6179, %v6211
    %v6289 = vsel %vm4012, %v6243, 0.0
    %v6290 = vadd.f32 %v6288, %v6289
    %v6291 = vrot.slane %v6290, 4
    %v6292 = vadd.f32 %v6290, %v6291
    %v6293 = vrot.slane %v6292, 2
    %v6294 = vadd.f32 %v6292, %v6293
    %v6295 = vrot.slane %v6294, 1
    %v6296 = vadd.f32 %v6294, %v6295
    %v6297 = vadd.f32 %v6181, %v6213
    %v6298 = vsel %vm4012, %v6245, 0.0
    %v6299 = vadd.f32 %v6297, %v6298
    %v6300 = vrot.slane %v6299, 4
    %v6301 = vadd.f32 %v6299, %v6300
    %v6302 = vrot.slane %v6301, 2
    %v6303 = vadd.f32 %v6301, %v6302
    %v6304 = vrot.slane %v6303, 1
    %v6305 = vadd.f32 %v6303, %v6304
    %v6306 = vadd.f32 %v6183, %v6215
    %v6307 = vsel %vm4012, %v6247, 0.0
    %v6308 = vadd.f32 %v6306, %v6307
    %v6309 = vrot.slane %v6308, 4
    %v6310 = vadd.f32 %v6308, %v6309
    %v6311 = vrot.slane %v6310, 2
    %v6312 = vadd.f32 %v6310, %v6311
    %v6313 = vrot.slane %v6312, 1
    %v6314 = vadd.f32 %v6312, %v6313
    %v6315 = vadd.f32 %v6185, %v6217
    %v6316 = vsel %vm4012, %v6249, 0.0
    %v6317 = vadd.f32 %v6315, %v6316
    %v6318 = vrot.slane %v6317, 4
    %v6319 = vadd.f32 %v6317, %v6318
    %v6320 = vrot.slane %v6319, 2
    %v6321 = vadd.f32 %v6319, %v6320
    %v6322 = vrot.slane %v6321, 1
    %v6323 = vadd.f32 %v6321, %v6322
    %v6324 = vadd.f32 %v6187, %v6219
    %v6325 = vsel %vm4012, %v6251, 0.0
    %v6326 = vadd.f32 %v6324, %v6325
    %v6327 = vrot.slane %v6326, 4
    %v6328 = vadd.f32 %v6326, %v6327
    %v6329 = vrot.slane %v6328, 2
    %v6330 = vadd.f32 %v6328, %v6329
    %v6331 = vrot.slane %v6330, 1
    %v6332 = vadd.f32 %v6330, %v6331
    %v6333 = vadd.f32 %v6189, %v6221
    %v6334 = vsel %vm4012, %v6253, 0.0
    %v6335 = vadd.f32 %v6333, %v6334
    %v6336 = vrot.slane %v6335, 4
    %v6337 = vadd.f32 %v6335, %v6336
    %v6338 = vrot.slane %v6337, 2
    %v6339 = vadd.f32 %v6337, %v6338
    %v6340 = vrot.slane %v6339, 1
    %v6341 = vadd.f32 %v6339, %v6340
    %v6342 = vadd.f32 %v6191, %v6223
    %v6343 = vsel %vm4012, %v6255, 0.0
    %v6344 = vadd.f32 %v6342, %v6343
    %v6345 = vrot.slane %v6344, 4
    %v6346 = vadd.f32 %v6344, %v6345
    %v6347 = vrot.slane %v6346, 2
    %v6348 = vadd.f32 %v6346, %v6347
    %v6349 = vrot.slane %v6348, 1
    %v6350 = vadd.f32 %v6348, %v6349
    %v6351 = vadd.f32 %v6193, %v6225
    %v6352 = vsel %vm4012, %v6257, 0.0
    %v6353 = vadd.f32 %v6351, %v6352
    %v6354 = vrot.slane %v6353, 4
    %v6355 = vadd.f32 %v6353, %v6354
    %v6356 = vrot.slane %v6355, 2
    %v6357 = vadd.f32 %v6355, %v6356
    %v6358 = vrot.slane %v6357, 1
    %v6359 = vadd.f32 %v6357, %v6358
    %v6360 = vadd.f32 %v6195, %v6227
    %v6361 = vsel %vm4012, %v6259, 0.0
    %v6362 = vadd.f32 %v6360, %v6361
    %v6363 = vrot.slane %v6362, 4
    %v6364 = vadd.f32 %v6362, %v6363
    %v6365 = vrot.slane %v6364, 2
    %v6366 = vadd.f32 %v6364, %v6365
    %v6367 = vrot.slane %v6366, 1
    %v6368 = vadd.f32 %v6366, %v6367
    %v6369 = vadd.f32 %v6197, %v6229
    %v6370 = vsel %vm4012, %v6261, 0.0
    %v6371 = vadd.f32 %v6369, %v6370
    %v6372 = vrot.slane %v6371, 4
    %v6373 = vadd.f32 %v6371, %v6372
    %v6374 = vrot.slane %v6373, 2
    %v6375 = vadd.f32 %v6373, %v6374
    %v6376 = vrot.slane %v6375, 1
    %v6377 = vadd.f32 %v6375, %v6376
    %v6378 = vadd.f32 %v6199, %v6231
    %v6379 = vsel %vm4012, %v6263, 0.0
    %v6380 = vadd.f32 %v6378, %v6379
    %v6381 = vrot.slane %v6380, 4
    %v6382 = vadd.f32 %v6380, %v6381
    %v6383 = vrot.slane %v6382, 2
    %v6384 = vadd.f32 %v6382, %v6383
    %v6385 = vrot.slane %v6384, 1
    %v6386 = vadd.f32 %v6384, %v6385
    %v6387 = vadd.f32 %v6201, %v6233
    %v6388 = vsel %vm4012, %v6265, 0.0
    %v6389 = vadd.f32 %v6387, %v6388
    %v6390 = vrot.slane %v6389, 4
    %v6391 = vadd.f32 %v6389, %v6390
    %v6392 = vrot.slane %v6391, 2
    %v6393 = vadd.f32 %v6391, %v6392
    %v6394 = vrot.slane %v6393, 1
    %v6395 = vadd.f32 %v6393, %v6394
    %v6396 = vadd.f32 %v6203, %v6235
    %v6397 = vsel %vm4012, %v6267, 0.0
    %v6398 = vadd.f32 %v6396, %v6397
    %v6399 = vrot.slane %v6398, 4
    %v6400 = vadd.f32 %v6398, %v6399
    %v6401 = vrot.slane %v6400, 2
    %v6402 = vadd.f32 %v6400, %v6401
    %v6403 = vrot.slane %v6402, 1
    %v6404 = vadd.f32 %v6402, %v6403
    %v6405 = vadd.f32 %v6205, %v6237
    %v6406 = vsel %vm4012, %v6269, 0.0
    %v6407 = vadd.f32 %v6405, %v6406
    %v6408 = vrot.slane %v6407, 4
    %v6409 = vadd.f32 %v6407, %v6408
    %v6410 = vrot.slane %v6409, 2
    %v6411 = vadd.f32 %v6409, %v6410
    %v6412 = vrot.slane %v6411, 1
    %v6413 = vadd.f32 %v6411, %v6412
    %v6414 = vlog2.pop %v6278
    %v6415 = vmul.f32 %v6414, 0.6931472
    %v6416 = vlog2.pop %v6287
    %v6417 = vmul.f32 %v6416, 0.6931472
    %v6418 = vlog2.pop %v6296
    %v6419 = vmul.f32 %v6418, 0.6931472
    %v6420 = vlog2.pop %v6305
    %v6421 = vmul.f32 %v6420, 0.6931472
    %v6422 = vlog2.pop %v6314
    %v6423 = vmul.f32 %v6422, 0.6931472
    %v6424 = vlog2.pop %v6323
    %v6425 = vmul.f32 %v6424, 0.6931472
    %v6426 = vlog2.pop %v6332
    %v6427 = vmul.f32 %v6426, 0.6931472
    %v6428 = vlog2.pop %v6341
    %v6429 = vmul.f32 %v6428, 0.6931472
    %v6430 = vlog2.pop %v6350
    %v6431 = vmul.f32 %v6430, 0.6931472
    %v6432 = vlog2.pop %v6359
    %v6433 = vmul.f32 %v6432, 0.6931472
    %v6434 = vlog2.pop %v6368
    %v6435 = vmul.f32 %v6434, 0.6931472
    %v6436 = vlog2.pop %v6377
    %v6437 = vmul.f32 %v6436, 0.6931472
    %v6438 = vlog2.pop %v6386
    %v6439 = vmul.f32 %v6438, 0.6931472
    %v6440 = vlog2.pop %v6395
    %v6441 = vmul.f32 %v6440, 0.6931472
    %v6442 = vlog2.pop %v6404
    %v6443 = vmul.f32 %v6442, 0.6931472
    %v6444 = vlog2.pop %v6413
    %v6445 = vmul.f32 %v6444, 0.6931472
    %v6446 = vadd.f32 %v5990, %v6415
    %v6447 = vadd.f32 %v5999, %v6417
    %v6448 = vadd.f32 %v6008, %v6419
    %v6449 = vadd.f32 %v6017, %v6421
    %v6450 = vadd.f32 %v6026, %v6423
    %v6451 = vadd.f32 %v6035, %v6425
    %v6452 = vadd.f32 %v6044, %v6427
    %v6453 = vadd.f32 %v6053, %v6429
    %v6454 = vadd.f32 %v6062, %v6431
    %v6455 = vadd.f32 %v6071, %v6433
    %v6456 = vadd.f32 %v6080, %v6435
    %v6457 = vadd.f32 %v6089, %v6437
    %v6458 = vadd.f32 %v6098, %v6439
    %v6459 = vadd.f32 %v6107, %v6441
    %v6460 = vadd.f32 %v6116, %v6443
    %v6461 = vadd.f32 %v6125, %v6445
    %v6462 = vperm.slane %v3820, 6
    %v6463 = vperm.slane %v3821, 6
    %v6464 = vperm.slane %v3822, 6
    %v6465 = vperm.slane %v3823, 6
    %v6466 = vperm.slane %v3824, 6
    %v6467 = vperm.slane %v3825, 6
    %v6468 = vperm.slane %v3826, 6
    %v6469 = vperm.slane %v3827, 6
    %v6470 = vperm.slane %v3828, 6
    %v6471 = vperm.slane %v3829, 6
    %v6472 = vperm.slane %v3830, 6
    %v6473 = vperm.slane %v3831, 6
    %v6474 = vperm.slane %v3832, 6
    %v6475 = vperm.slane %v3833, 6
    %v6476 = vperm.slane %v3834, 6
    %v6477 = vperm.slane %v3835, 6
    %v6478 = vsub.f32 %v6462, %v3936
    %v6479 = vsub.f32 %v6463, %v3936
    %v6480 = vsub.f32 %v6464, %v3936
    %v6481 = vsub.f32 %v6465, %v3936
    %v6482 = vsub.f32 %v6466, %v3936
    %v6483 = vsub.f32 %v6467, %v3936
    %v6484 = vsub.f32 %v6468, %v3936
    %v6485 = vsub.f32 %v6469, %v3936
    %v6486 = vsub.f32 %v6470, %v3936
    %v6487 = vsub.f32 %v6471, %v3936
    %v6488 = vsub.f32 %v6472, %v3936
    %v6489 = vsub.f32 %v6473, %v3936
    %v6490 = vsub.f32 %v6474, %v3936
    %v6491 = vsub.f32 %v6475, %v3936
    %v6492 = vsub.f32 %v6476, %v3936
    %v6493 = vsub.f32 %v6477, %v3936
    %v6494 = vsub.f32 %v6462, %v3937
    %v6495 = vsub.f32 %v6463, %v3937
    %v6496 = vsub.f32 %v6464, %v3937
    %v6497 = vsub.f32 %v6465, %v3937
    %v6498 = vsub.f32 %v6466, %v3937
    %v6499 = vsub.f32 %v6467, %v3937
    %v6500 = vsub.f32 %v6468, %v3937
    %v6501 = vsub.f32 %v6469, %v3937
    %v6502 = vsub.f32 %v6470, %v3937
    %v6503 = vsub.f32 %v6471, %v3937
    %v6504 = vsub.f32 %v6472, %v3937
    %v6505 = vsub.f32 %v6473, %v3937
    %v6506 = vsub.f32 %v6474, %v3937
    %v6507 = vsub.f32 %v6475, %v3937
    %v6508 = vsub.f32 %v6476, %v3937
    %v6509 = vsub.f32 %v6477, %v3937
    %v6510 = vsub.f32 %v6462, %v3938
    %v6511 = vsub.f32 %v6463, %v3938
    %v6512 = vsub.f32 %v6464, %v3938
    %v6513 = vsub.f32 %v6465, %v3938
    %v6514 = vsub.f32 %v6466, %v3938
    %v6515 = vsub.f32 %v6467, %v3938
    %v6516 = vsub.f32 %v6468, %v3938
    %v6517 = vsub.f32 %v6469, %v3938
    %v6518 = vsub.f32 %v6470, %v3938
    %v6519 = vsub.f32 %v6471, %v3938
    %v6520 = vsub.f32 %v6472, %v3938
    %v6521 = vsub.f32 %v6473, %v3938
    %v6522 = vsub.f32 %v6474, %v3938
    %v6523 = vsub.f32 %v6475, %v3938
    %v6524 = vsub.f32 %v6476, %v3938
    %v6525 = vsub.f32 %v6477, %v3938
    %v6526 = vand.u32 2147483647, %v6478
    %v6527 = vand.u32 2147483647, %v6479
    %v6528 = vand.u32 2147483647, %v6480
    %v6529 = vand.u32 2147483647, %v6481
    %v6530 = vand.u32 2147483647, %v6482
    %v6531 = vand.u32 2147483647, %v6483
    %v6532 = vand.u32 2147483647, %v6484
    %v6533 = vand.u32 2147483647, %v6485
    %v6534 = vand.u32 2147483647, %v6486
    %v6535 = vand.u32 2147483647, %v6487
    %v6536 = vand.u32 2147483647, %v6488
    %v6537 = vand.u32 2147483647, %v6489
    %v6538 = vand.u32 2147483647, %v6490
    %v6539 = vand.u32 2147483647, %v6491
    %v6540 = vand.u32 2147483647, %v6492
    %v6541 = vand.u32 2147483647, %v6493
    %v6542 = vand.u32 2147483647, %v6494
    %v6543 = vand.u32 2147483647, %v6495
    %v6544 = vand.u32 2147483647, %v6496
    %v6545 = vand.u32 2147483647, %v6497
    %v6546 = vand.u32 2147483647, %v6498
    %v6547 = vand.u32 2147483647, %v6499
    %v6548 = vand.u32 2147483647, %v6500
    %v6549 = vand.u32 2147483647, %v6501
    %v6550 = vand.u32 2147483647, %v6502
    %v6551 = vand.u32 2147483647, %v6503
    %v6552 = vand.u32 2147483647, %v6504
    %v6553 = vand.u32 2147483647, %v6505
    %v6554 = vand.u32 2147483647, %v6506
    %v6555 = vand.u32 2147483647, %v6507
    %v6556 = vand.u32 2147483647, %v6508
    %v6557 = vand.u32 2147483647, %v6509
    %v6558 = vand.u32 2147483647, %v6510
    %v6559 = vand.u32 2147483647, %v6511
    %v6560 = vand.u32 2147483647, %v6512
    %v6561 = vand.u32 2147483647, %v6513
    %v6562 = vand.u32 2147483647, %v6514
    %v6563 = vand.u32 2147483647, %v6515
    %v6564 = vand.u32 2147483647, %v6516
    %v6565 = vand.u32 2147483647, %v6517
    %v6566 = vand.u32 2147483647, %v6518
    %v6567 = vand.u32 2147483647, %v6519
    %v6568 = vand.u32 2147483647, %v6520
    %v6569 = vand.u32 2147483647, %v6521
    %v6570 = vand.u32 2147483647, %v6522
    %v6571 = vand.u32 2147483647, %v6523
    %v6572 = vand.u32 2147483647, %v6524
    %v6573 = vand.u32 2147483647, %v6525
    %v6574 = vsub.f32 1.0, %v6526
    %v6575 = vsub.f32 1.0, %v6527
    %v6576 = vsub.f32 1.0, %v6528
    %v6577 = vsub.f32 1.0, %v6529
    %v6578 = vsub.f32 1.0, %v6530
    %v6579 = vsub.f32 1.0, %v6531
    %v6580 = vsub.f32 1.0, %v6532
    %v6581 = vsub.f32 1.0, %v6533
    %v6582 = vsub.f32 1.0, %v6534
    %v6583 = vsub.f32 1.0, %v6535
    %v6584 = vsub.f32 1.0, %v6536
    %v6585 = vsub.f32 1.0, %v6537
    %v6586 = vsub.f32 1.0, %v6538
    %v6587 = vsub.f32 1.0, %v6539
    %v6588 = vsub.f32 1.0, %v6540
    %v6589 = vsub.f32 1.0, %v6541
    %v6590 = vsub.f32 1.0, %v6542
    %v6591 = vsub.f32 1.0, %v6543
    %v6592 = vsub.f32 1.0, %v6544
    %v6593 = vsub.f32 1.0, %v6545
    %v6594 = vsub.f32 1.0, %v6546
    %v6595 = vsub.f32 1.0, %v6547
    %v6596 = vsub.f32 1.0, %v6548
    %v6597 = vsub.f32 1.0, %v6549
    %v6598 = vsub.f32 1.0, %v6550
    %v6599 = vsub.f32 1.0, %v6551
    %v6600 = vsub.f32 1.0, %v6552
    %v6601 = vsub.f32 1.0, %v6553
    %v6602 = vsub.f32 1.0, %v6554
    %v6603 = vsub.f32 1.0, %v6555
    %v6604 = vsub.f32 1.0, %v6556
    %v6605 = vsub.f32 1.0, %v6557
    %v6606 = vsub.f32 1.0, %v6558
    %v6607 = vsub.f32 1.0, %v6559
    %v6608 = vsub.f32 1.0, %v6560
    %v6609 = vsub.f32 1.0, %v6561
    %v6610 = vsub.f32 1.0, %v6562
    %v6611 = vsub.f32 1.0, %v6563
    %v6612 = vsub.f32 1.0, %v6564
    %v6613 = vsub.f32 1.0, %v6565
    %v6614 = vsub.f32 1.0, %v6566
    %v6615 = vsub.f32 1.0, %v6567
    %v6616 = vsub.f32 1.0, %v6568
    %v6617 = vsub.f32 1.0, %v6569
    %v6618 = vsub.f32 1.0, %v6570
    %v6619 = vsub.f32 1.0, %v6571
    %v6620 = vsub.f32 1.0, %v6572
    %v6621 = vsub.f32 1.0, %v6573
    %v6622 = vmax.f32 %v6574, 0.0
    %v6623 = vmax.f32 %v6575, 0.0
    %v6624 = vmax.f32 %v6576, 0.0
    %v6625 = vmax.f32 %v6577, 0.0
    %v6626 = vmax.f32 %v6578, 0.0
    %v6627 = vmax.f32 %v6579, 0.0
    %v6628 = vmax.f32 %v6580, 0.0
    %v6629 = vmax.f32 %v6581, 0.0
    %v6630 = vmax.f32 %v6582, 0.0
    %v6631 = vmax.f32 %v6583, 0.0
    %v6632 = vmax.f32 %v6584, 0.0
    %v6633 = vmax.f32 %v6585, 0.0
    %v6634 = vmax.f32 %v6586, 0.0
    %v6635 = vmax.f32 %v6587, 0.0
    %v6636 = vmax.f32 %v6588, 0.0
    %v6637 = vmax.f32 %v6589, 0.0
    %v6638 = vmax.f32 %v6590, 0.0
    %v6639 = vmax.f32 %v6591, 0.0
    %v6640 = vmax.f32 %v6592, 0.0
    %v6641 = vmax.f32 %v6593, 0.0
    %v6642 = vmax.f32 %v6594, 0.0
    %v6643 = vmax.f32 %v6595, 0.0
    %v6644 = vmax.f32 %v6596, 0.0
    %v6645 = vmax.f32 %v6597, 0.0
    %v6646 = vmax.f32 %v6598, 0.0
    %v6647 = vmax.f32 %v6599, 0.0
    %v6648 = vmax.f32 %v6600, 0.0
    %v6649 = vmax.f32 %v6601, 0.0
    %v6650 = vmax.f32 %v6602, 0.0
    %v6651 = vmax.f32 %v6603, 0.0
    %v6652 = vmax.f32 %v6604, 0.0
    %v6653 = vmax.f32 %v6605, 0.0
    %v6654 = vmax.f32 %v6606, 0.0
    %v6655 = vmax.f32 %v6607, 0.0
    %v6656 = vmax.f32 %v6608, 0.0
    %v6657 = vmax.f32 %v6609, 0.0
    %v6658 = vmax.f32 %v6610, 0.0
    %v6659 = vmax.f32 %v6611, 0.0
    %v6660 = vmax.f32 %v6612, 0.0
    %v6661 = vmax.f32 %v6613, 0.0
    %v6662 = vmax.f32 %v6614, 0.0
    %v6663 = vmax.f32 %v6615, 0.0
    %v6664 = vmax.f32 %v6616, 0.0
    %v6665 = vmax.f32 %v6617, 0.0
    %v6666 = vmax.f32 %v6618, 0.0
    %v6667 = vmax.f32 %v6619, 0.0
    %v6668 = vmax.f32 %v6620, 0.0
    %v6669 = vmax.f32 %v6621, 0.0
    %v6670 = vmul.f32 %v6622, %v5934
    %v6671 = vmul.f32 %v6623, %v5935
    %v6672 = vmul.f32 %v6624, %v5936
    %v6673 = vmul.f32 %v6625, %v5937
    %v6674 = vmul.f32 %v6626, %v5938
    %v6675 = vmul.f32 %v6627, %v5939
    %v6676 = vmul.f32 %v6628, %v5940
    %v6677 = vmul.f32 %v6629, %v5941
    %v6678 = vmul.f32 %v6630, %v5942
    %v6679 = vmul.f32 %v6631, %v5943
    %v6680 = vmul.f32 %v6632, %v5944
    %v6681 = vmul.f32 %v6633, %v5945
    %v6682 = vmul.f32 %v6634, %v5946
    %v6683 = vmul.f32 %v6635, %v5947
    %v6684 = vmul.f32 %v6636, %v5948
    %v6685 = vmul.f32 %v6637, %v5949
    %v6686 = vmul.f32 %v6638, %v5950
    %v6687 = vmul.f32 %v6639, %v5951
    %v6688 = vmul.f32 %v6640, %v5952
    %v6689 = vmul.f32 %v6641, %v5953
    %v6690 = vmul.f32 %v6642, %v5954
    %v6691 = vmul.f32 %v6643, %v5955
    %v6692 = vmul.f32 %v6644, %v5956
    %v6693 = vmul.f32 %v6645, %v5957
    %v6694 = vmul.f32 %v6646, %v5958
    %v6695 = vmul.f32 %v6647, %v5959
    %v6696 = vmul.f32 %v6648, %v5960
    %v6697 = vmul.f32 %v6649, %v5961
    %v6698 = vmul.f32 %v6650, %v5962
    %v6699 = vmul.f32 %v6651, %v5963
    %v6700 = vmul.f32 %v6652, %v5964
    %v6701 = vmul.f32 %v6653, %v5965
    %v6702 = vmul.f32 %v6654, %v5966
    %v6703 = vmul.f32 %v6655, %v5967
    %v6704 = vmul.f32 %v6656, %v5968
    %v6705 = vmul.f32 %v6657, %v5969
    %v6706 = vmul.f32 %v6658, %v5970
    %v6707 = vmul.f32 %v6659, %v5971
    %v6708 = vmul.f32 %v6660, %v5972
    %v6709 = vmul.f32 %v6661, %v5973
    %v6710 = vmul.f32 %v6662, %v5974
    %v6711 = vmul.f32 %v6663, %v5975
    %v6712 = vmul.f32 %v6664, %v5976
    %v6713 = vmul.f32 %v6665, %v5977
    %v6714 = vmul.f32 %v6666, %v5978
    %v6715 = vmul.f32 %v6667, %v5979
    %v6716 = vmul.f32 %v6668, %v5980
    %v6717 = vmul.f32 %v6669, %v5981
    %v6718 = vadd.f32 %v6670, %v6686
    %v6719 = vsel %vm4012, %v6702, 0.0
    %v6720 = vadd.f32 %v6718, %v6719
    %v6721 = vrot.slane %v6720, 4
    %v6722 = vadd.f32 %v6720, %v6721
    %v6723 = vrot.slane %v6722, 2
    %v6724 = vadd.f32 %v6722, %v6723
    %v6725 = vrot.slane %v6724, 1
    %v6726 = vadd.f32 %v6724, %v6725
    %v6727 = vadd.f32 %v6671, %v6687
    %v6728 = vsel %vm4012, %v6703, 0.0
    %v6729 = vadd.f32 %v6727, %v6728
    %v6730 = vrot.slane %v6729, 4
    %v6731 = vadd.f32 %v6729, %v6730
    %v6732 = vrot.slane %v6731, 2
    %v6733 = vadd.f32 %v6731, %v6732
    %v6734 = vrot.slane %v6733, 1
    %v6735 = vadd.f32 %v6733, %v6734
    %v6736 = vadd.f32 %v6672, %v6688
    %v6737 = vsel %vm4012, %v6704, 0.0
    %v6738 = vadd.f32 %v6736, %v6737
    %v6739 = vrot.slane %v6738, 4
    %v6740 = vadd.f32 %v6738, %v6739
    %v6741 = vrot.slane %v6740, 2
    %v6742 = vadd.f32 %v6740, %v6741
    %v6743 = vrot.slane %v6742, 1
    %v6744 = vadd.f32 %v6742, %v6743
    %v6745 = vadd.f32 %v6673, %v6689
    %v6746 = vsel %vm4012, %v6705, 0.0
    %v6747 = vadd.f32 %v6745, %v6746
    %v6748 = vrot.slane %v6747, 4
    %v6749 = vadd.f32 %v6747, %v6748
    %v6750 = vrot.slane %v6749, 2
    %v6751 = vadd.f32 %v6749, %v6750
    %v6752 = vrot.slane %v6751, 1
    %v6753 = vadd.f32 %v6751, %v6752
    %v6754 = vadd.f32 %v6674, %v6690
    %v6755 = vsel %vm4012, %v6706, 0.0
    %v6756 = vadd.f32 %v6754, %v6755
    %v6757 = vrot.slane %v6756, 4
    %v6758 = vadd.f32 %v6756, %v6757
    %v6759 = vrot.slane %v6758, 2
    %v6760 = vadd.f32 %v6758, %v6759
    %v6761 = vrot.slane %v6760, 1
    %v6762 = vadd.f32 %v6760, %v6761
    %v6763 = vadd.f32 %v6675, %v6691
    %v6764 = vsel %vm4012, %v6707, 0.0
    %v6765 = vadd.f32 %v6763, %v6764
    %v6766 = vrot.slane %v6765, 4
    %v6767 = vadd.f32 %v6765, %v6766
    %v6768 = vrot.slane %v6767, 2
    %v6769 = vadd.f32 %v6767, %v6768
    %v6770 = vrot.slane %v6769, 1
    %v6771 = vadd.f32 %v6769, %v6770
    %v6772 = vadd.f32 %v6676, %v6692
    %v6773 = vsel %vm4012, %v6708, 0.0
    %v6774 = vadd.f32 %v6772, %v6773
    %v6775 = vrot.slane %v6774, 4
    %v6776 = vadd.f32 %v6774, %v6775
    %v6777 = vrot.slane %v6776, 2
    %v6778 = vadd.f32 %v6776, %v6777
    %v6779 = vrot.slane %v6778, 1
    %v6780 = vadd.f32 %v6778, %v6779
    %v6781 = vadd.f32 %v6677, %v6693
    %v6782 = vsel %vm4012, %v6709, 0.0
    %v6783 = vadd.f32 %v6781, %v6782
    %v6784 = vrot.slane %v6783, 4
    %v6785 = vadd.f32 %v6783, %v6784
    %v6786 = vrot.slane %v6785, 2
    %v6787 = vadd.f32 %v6785, %v6786
    %v6788 = vrot.slane %v6787, 1
    %v6789 = vadd.f32 %v6787, %v6788
    %v6790 = vadd.f32 %v6678, %v6694
    %v6791 = vsel %vm4012, %v6710, 0.0
    %v6792 = vadd.f32 %v6790, %v6791
    %v6793 = vrot.slane %v6792, 4
    %v6794 = vadd.f32 %v6792, %v6793
    %v6795 = vrot.slane %v6794, 2
    %v6796 = vadd.f32 %v6794, %v6795
    %v6797 = vrot.slane %v6796, 1
    %v6798 = vadd.f32 %v6796, %v6797
    %v6799 = vadd.f32 %v6679, %v6695
    %v6800 = vsel %vm4012, %v6711, 0.0
    %v6801 = vadd.f32 %v6799, %v6800
    %v6802 = vrot.slane %v6801, 4
    %v6803 = vadd.f32 %v6801, %v6802
    %v6804 = vrot.slane %v6803, 2
    %v6805 = vadd.f32 %v6803, %v6804
    %v6806 = vrot.slane %v6805, 1
    %v6807 = vadd.f32 %v6805, %v6806
    %v6808 = vadd.f32 %v6680, %v6696
    %v6809 = vsel %vm4012, %v6712, 0.0
    %v6810 = vadd.f32 %v6808, %v6809
    %v6811 = vrot.slane %v6810, 4
    %v6812 = vadd.f32 %v6810, %v6811
    %v6813 = vrot.slane %v6812, 2
    %v6814 = vadd.f32 %v6812, %v6813
    %v6815 = vrot.slane %v6814, 1
    %v6816 = vadd.f32 %v6814, %v6815
    %v6817 = vadd.f32 %v6681, %v6697
    %v6818 = vsel %vm4012, %v6713, 0.0
    %v6819 = vadd.f32 %v6817, %v6818
    %v6820 = vrot.slane %v6819, 4
    %v6821 = vadd.f32 %v6819, %v6820
    %v6822 = vrot.slane %v6821, 2
    %v6823 = vadd.f32 %v6821, %v6822
    %v6824 = vrot.slane %v6823, 1
    %v6825 = vadd.f32 %v6823, %v6824
    %v6826 = vadd.f32 %v6682, %v6698
    %v6827 = vsel %vm4012, %v6714, 0.0
    %v6828 = vadd.f32 %v6826, %v6827
    %v6829 = vrot.slane %v6828, 4
    %v6830 = vadd.f32 %v6828, %v6829
    %v6831 = vrot.slane %v6830, 2
    %v6832 = vadd.f32 %v6830, %v6831
    %v6833 = vrot.slane %v6832, 1
    %v6834 = vadd.f32 %v6832, %v6833
    %v6835 = vadd.f32 %v6683, %v6699
    %v6836 = vsel %vm4012, %v6715, 0.0
    %v6837 = vadd.f32 %v6835, %v6836
    %v6838 = vrot.slane %v6837, 4
    %v6839 = vadd.f32 %v6837, %v6838
    %v6840 = vrot.slane %v6839, 2
    %v6841 = vadd.f32 %v6839, %v6840
    %v6842 = vrot.slane %v6841, 1
    %v6843 = vadd.f32 %v6841, %v6842
    %v6844 = vadd.f32 %v6684, %v6700
    %v6845 = vsel %vm4012, %v6716, 0.0
    %v6846 = vadd.f32 %v6844, %v6845
    %v6847 = vrot.slane %v6846, 4
    %v6848 = vadd.f32 %v6846, %v6847
    %v6849 = vrot.slane %v6848, 2
    %v6850 = vadd.f32 %v6848, %v6849
    %v6851 = vrot.slane %v6850, 1
    %v6852 = vadd.f32 %v6850, %v6851
    %v6853 = vadd.f32 %v6685, %v6701
    %v6854 = vsel %vm4012, %v6717, 0.0
    %v6855 = vadd.f32 %v6853, %v6854
    %v6856 = vrot.slane %v6855, 4
    %v6857 = vadd.f32 %v6855, %v6856
    %v6858 = vrot.slane %v6857, 2
    %v6859 = vadd.f32 %v6857, %v6858
    %v6860 = vrot.slane %v6859, 1
    %v6861 = vadd.f32 %v6859, %v6860
    %v6862 = vsub.f32 %v6446, %v6726
    %v6863 = vsub.f32 %v6447, %v6735
    %v6864 = vsub.f32 %v6448, %v6744
    %v6865 = vsub.f32 %v6449, %v6753
    %v6866 = vsub.f32 %v6450, %v6762
    %v6867 = vsub.f32 %v6451, %v6771
    %v6868 = vsub.f32 %v6452, %v6780
    %v6869 = vsub.f32 %v6453, %v6789
    %v6870 = vsub.f32 %v6454, %v6798
    %v6871 = vsub.f32 %v6455, %v6807
    %v6872 = vsub.f32 %v6456, %v6816
    %v6873 = vsub.f32 %v6457, %v6825
    %v6874 = vsub.f32 %v6458, %v6834
    %v6875 = vsub.f32 %v6459, %v6843
    %v6876 = vsub.f32 %v6460, %v6852
    %v6877 = vsub.f32 %v6461, %v6861
    %v6878 = vadd.f32 %v5893, %v6862
    %v6879 = vadd.f32 %v5894, %v6863
    %v6880 = vadd.f32 %v5895, %v6864
    %v6881 = vadd.f32 %v5896, %v6865
    %v6882 = vadd.f32 %v5897, %v6866
    %v6883 = vadd.f32 %v5898, %v6867
    %v6884 = vadd.f32 %v5899, %v6868
    %v6885 = vadd.f32 %v5900, %v6869
    %v6886 = vadd.f32 %v5901, %v6870
    %v6887 = vadd.f32 %v5902, %v6871
    %v6888 = vadd.f32 %v5903, %v6872
    %v6889 = vadd.f32 %v5904, %v6873
    %v6890 = vadd.f32 %v5905, %v6874
    %v6891 = vadd.f32 %v5906, %v6875
    %v6892 = vadd.f32 %v5907, %v6876
    %v6893 = vadd.f32 %v5908, %v6877
    %s6894 = scalar_lea.vmem %s1, 576
    %v6895 = vld [vmem:[%s6894] sm:$0xff]
    %v6896 = vld [vmem:[%s6894 + $0x8] sm:$0xff]
    %v6897 = vld [vmem:[%s6894 + $0x10] sm:$0xff]
    %v6898 = vld [vmem:[%s6894 + $0x18] sm:$0xff]
    %v6899 = vld [vmem:[%s6894 + $0x20] sm:$0xff]
    %v6900 = vld [vmem:[%s6894 + $0x28] sm:$0xff]
    %v6901 = vld [vmem:[%s6894 + $0x30] sm:$0xff]
    %v6902 = vld [vmem:[%s6894 + $0x38] sm:$0xff]
    %v6903 = vld [vmem:[%s6894 + $0x40] sm:$0xff]
    %v6904 = vld [vmem:[%s6894 + $0x48] sm:$0xff]
    %v6905 = vld [vmem:[%s6894 + $0x50] sm:$0xff]
    %v6906 = vld [vmem:[%s6894 + $0x58] sm:$0xff]
    %v6907 = vld [vmem:[%s6894 + $0x60] sm:$0xff]
    %v6908 = vld [vmem:[%s6894 + $0x68] sm:$0xff]
    %v6909 = vld [vmem:[%s6894 + $0x70] sm:$0xff]
    %v6910 = vld [vmem:[%s6894 + $0x78] sm:$0xff]
    %v6911 = vld [vmem:[%s6894 + $0x80] sm:$0x11]
    %v6912 = vld [vmem:[%s6894 + $0x88] sm:$0x11]
    %v6913 = vld [vmem:[%s6894 + $0x90] sm:$0x11]
    %v6914 = vld [vmem:[%s6894 + $0x98] sm:$0x11]
    %v6915 = vld [vmem:[%s6894 + $0xa0] sm:$0x11]
    %v6916 = vld [vmem:[%s6894 + $0xa8] sm:$0x11]
    %v6917 = vld [vmem:[%s6894 + $0xb0] sm:$0x11]
    %v6918 = vld [vmem:[%s6894 + $0xb8] sm:$0x11]
    %v6919 = vunpack.c.l.bf16 %v6895
    %v6920 = vunpack.c.h.bf16 %v6895
    %v6921 = vunpack.c.l.bf16 %v6896
    %v6922 = vunpack.c.h.bf16 %v6896
    %v6923 = vunpack.c.l.bf16 %v6897
    %v6924 = vunpack.c.h.bf16 %v6897
    %v6925 = vunpack.c.l.bf16 %v6898
    %v6926 = vunpack.c.h.bf16 %v6898
    %v6927 = vunpack.c.l.bf16 %v6899
    %v6928 = vunpack.c.h.bf16 %v6899
    %v6929 = vunpack.c.l.bf16 %v6900
    %v6930 = vunpack.c.h.bf16 %v6900
    %v6931 = vunpack.c.l.bf16 %v6901
    %v6932 = vunpack.c.h.bf16 %v6901
    %v6933 = vunpack.c.l.bf16 %v6902
    %v6934 = vunpack.c.h.bf16 %v6902
    %v6935 = vunpack.c.l.bf16 %v6903
    %v6936 = vunpack.c.h.bf16 %v6903
    %v6937 = vunpack.c.l.bf16 %v6904
    %v6938 = vunpack.c.h.bf16 %v6904
    %v6939 = vunpack.c.l.bf16 %v6905
    %v6940 = vunpack.c.h.bf16 %v6905
    %v6941 = vunpack.c.l.bf16 %v6906
    %v6942 = vunpack.c.h.bf16 %v6906
    %v6943 = vunpack.c.l.bf16 %v6907
    %v6944 = vunpack.c.h.bf16 %v6907
    %v6945 = vunpack.c.l.bf16 %v6908
    %v6946 = vunpack.c.h.bf16 %v6908
    %v6947 = vunpack.c.l.bf16 %v6909
    %v6948 = vunpack.c.h.bf16 %v6909
    %v6949 = vunpack.c.l.bf16 %v6910
    %v6950 = vunpack.c.h.bf16 %v6910
    %v6951 = vunpack.c.l.bf16 %v6911
    %v6952 = vunpack.c.h.bf16 %v6911
    %v6953 = vunpack.c.l.bf16 %v6912
    %v6954 = vunpack.c.h.bf16 %v6912
    %v6955 = vunpack.c.l.bf16 %v6913
    %v6956 = vunpack.c.h.bf16 %v6913
    %v6957 = vunpack.c.l.bf16 %v6914
    %v6958 = vunpack.c.h.bf16 %v6914
    %v6959 = vunpack.c.l.bf16 %v6915
    %v6960 = vunpack.c.h.bf16 %v6915
    %v6961 = vunpack.c.l.bf16 %v6916
    %v6962 = vunpack.c.h.bf16 %v6916
    %v6963 = vunpack.c.l.bf16 %v6917
    %v6964 = vunpack.c.h.bf16 %v6917
    %v6965 = vunpack.c.l.bf16 %v6918
    %v6966 = vunpack.c.h.bf16 %v6918
    %v6967 = vmax.f32 %v6919, %v6935
    %v6968 = vsel %vm4012, %v6951, -inf
    %v6969 = vmax.f32 %v6967, %v6968
    %v6970 = vrot.slane %v6969, 4
    %v6971 = vmax.f32 %v6969, %v6970
    %v6972 = vrot.slane %v6971, 2
    %v6973 = vmax.f32 %v6971, %v6972
    %v6974 = vrot.slane %v6973, 1
    %v6975 = vmax.f32 %v6973, %v6974
    %v6976 = vmax.f32 %v6920, %v6936
    %v6977 = vsel %vm4012, %v6952, -inf
    %v6978 = vmax.f32 %v6976, %v6977
    %v6979 = vrot.slane %v6978, 4
    %v6980 = vmax.f32 %v6978, %v6979
    %v6981 = vrot.slane %v6980, 2
    %v6982 = vmax.f32 %v6980, %v6981
    %v6983 = vrot.slane %v6982, 1
    %v6984 = vmax.f32 %v6982, %v6983
    %v6985 = vmax.f32 %v6921, %v6937
    %v6986 = vsel %vm4012, %v6953, -inf
    %v6987 = vmax.f32 %v6985, %v6986
    %v6988 = vrot.slane %v6987, 4
    %v6989 = vmax.f32 %v6987, %v6988
    %v6990 = vrot.slane %v6989, 2
    %v6991 = vmax.f32 %v6989, %v6990
    %v6992 = vrot.slane %v6991, 1
    %v6993 = vmax.f32 %v6991, %v6992
    %v6994 = vmax.f32 %v6922, %v6938
    %v6995 = vsel %vm4012, %v6954, -inf
    %v6996 = vmax.f32 %v6994, %v6995
    %v6997 = vrot.slane %v6996, 4
    %v6998 = vmax.f32 %v6996, %v6997
    %v6999 = vrot.slane %v6998, 2
    %v7000 = vmax.f32 %v6998, %v6999
    %v7001 = vrot.slane %v7000, 1
    %v7002 = vmax.f32 %v7000, %v7001
    %v7003 = vmax.f32 %v6923, %v6939
    %v7004 = vsel %vm4012, %v6955, -inf
    %v7005 = vmax.f32 %v7003, %v7004
    %v7006 = vrot.slane %v7005, 4
    %v7007 = vmax.f32 %v7005, %v7006
    %v7008 = vrot.slane %v7007, 2
    %v7009 = vmax.f32 %v7007, %v7008
    %v7010 = vrot.slane %v7009, 1
    %v7011 = vmax.f32 %v7009, %v7010
    %v7012 = vmax.f32 %v6924, %v6940
    %v7013 = vsel %vm4012, %v6956, -inf
    %v7014 = vmax.f32 %v7012, %v7013
    %v7015 = vrot.slane %v7014, 4
    %v7016 = vmax.f32 %v7014, %v7015
    %v7017 = vrot.slane %v7016, 2
    %v7018 = vmax.f32 %v7016, %v7017
    %v7019 = vrot.slane %v7018, 1
    %v7020 = vmax.f32 %v7018, %v7019
    %v7021 = vmax.f32 %v6925, %v6941
    %v7022 = vsel %vm4012, %v6957, -inf
    %v7023 = vmax.f32 %v7021, %v7022
    %v7024 = vrot.slane %v7023, 4
    %v7025 = vmax.f32 %v7023, %v7024
    %v7026 = vrot.slane %v7025, 2
    %v7027 = vmax.f32 %v7025, %v7026
    %v7028 = vrot.slane %v7027, 1
    %v7029 = vmax.f32 %v7027, %v7028
    %v7030 = vmax.f32 %v6926, %v6942
    %v7031 = vsel %vm4012, %v6958, -inf
    %v7032 = vmax.f32 %v7030, %v7031
    %v7033 = vrot.slane %v7032, 4
    %v7034 = vmax.f32 %v7032, %v7033
    %v7035 = vrot.slane %v7034, 2
    %v7036 = vmax.f32 %v7034, %v7035
    %v7037 = vrot.slane %v7036, 1
    %v7038 = vmax.f32 %v7036, %v7037
    %v7039 = vmax.f32 %v6927, %v6943
    %v7040 = vsel %vm4012, %v6959, -inf
    %v7041 = vmax.f32 %v7039, %v7040
    %v7042 = vrot.slane %v7041, 4
    %v7043 = vmax.f32 %v7041, %v7042
    %v7044 = vrot.slane %v7043, 2
    %v7045 = vmax.f32 %v7043, %v7044
    %v7046 = vrot.slane %v7045, 1
    %v7047 = vmax.f32 %v7045, %v7046
    %v7048 = vmax.f32 %v6928, %v6944
    %v7049 = vsel %vm4012, %v6960, -inf
    %v7050 = vmax.f32 %v7048, %v7049
    %v7051 = vrot.slane %v7050, 4
    %v7052 = vmax.f32 %v7050, %v7051
    %v7053 = vrot.slane %v7052, 2
    %v7054 = vmax.f32 %v7052, %v7053
    %v7055 = vrot.slane %v7054, 1
    %v7056 = vmax.f32 %v7054, %v7055
    %v7057 = vmax.f32 %v6929, %v6945
    %v7058 = vsel %vm4012, %v6961, -inf
    %v7059 = vmax.f32 %v7057, %v7058
    %v7060 = vrot.slane %v7059, 4
    %v7061 = vmax.f32 %v7059, %v7060
    %v7062 = vrot.slane %v7061, 2
    %v7063 = vmax.f32 %v7061, %v7062
    %v7064 = vrot.slane %v7063, 1
    %v7065 = vmax.f32 %v7063, %v7064
    %v7066 = vmax.f32 %v6930, %v6946
    %v7067 = vsel %vm4012, %v6962, -inf
    %v7068 = vmax.f32 %v7066, %v7067
    %v7069 = vrot.slane %v7068, 4
    %v7070 = vmax.f32 %v7068, %v7069
    %v7071 = vrot.slane %v7070, 2
    %v7072 = vmax.f32 %v7070, %v7071
    %v7073 = vrot.slane %v7072, 1
    %v7074 = vmax.f32 %v7072, %v7073
    %v7075 = vmax.f32 %v6931, %v6947
    %v7076 = vsel %vm4012, %v6963, -inf
    %v7077 = vmax.f32 %v7075, %v7076
    %v7078 = vrot.slane %v7077, 4
    %v7079 = vmax.f32 %v7077, %v7078
    %v7080 = vrot.slane %v7079, 2
    %v7081 = vmax.f32 %v7079, %v7080
    %v7082 = vrot.slane %v7081, 1
    %v7083 = vmax.f32 %v7081, %v7082
    %v7084 = vmax.f32 %v6932, %v6948
    %v7085 = vsel %vm4012, %v6964, -inf
    %v7086 = vmax.f32 %v7084, %v7085
    %v7087 = vrot.slane %v7086, 4
    %v7088 = vmax.f32 %v7086, %v7087
    %v7089 = vrot.slane %v7088, 2
    %v7090 = vmax.f32 %v7088, %v7089
    %v7091 = vrot.slane %v7090, 1
    %v7092 = vmax.f32 %v7090, %v7091
    %v7093 = vmax.f32 %v6933, %v6949
    %v7094 = vsel %vm4012, %v6965, -inf
    %v7095 = vmax.f32 %v7093, %v7094
    %v7096 = vrot.slane %v7095, 4
    %v7097 = vmax.f32 %v7095, %v7096
    %v7098 = vrot.slane %v7097, 2
    %v7099 = vmax.f32 %v7097, %v7098
    %v7100 = vrot.slane %v7099, 1
    %v7101 = vmax.f32 %v7099, %v7100
    %v7102 = vmax.f32 %v6934, %v6950
    %v7103 = vsel %vm4012, %v6966, -inf
    %v7104 = vmax.f32 %v7102, %v7103
    %v7105 = vrot.slane %v7104, 4
    %v7106 = vmax.f32 %v7104, %v7105
    %v7107 = vrot.slane %v7106, 2
    %v7108 = vmax.f32 %v7106, %v7107
    %v7109 = vrot.slane %v7108, 1
    %v7110 = vmax.f32 %v7108, %v7109
    %v7111 = vsub.f32 %v6919, %v6975
    %v7112 = vsub.f32 %v6920, %v6984
    %v7113 = vsub.f32 %v6921, %v6993
    %v7114 = vsub.f32 %v6922, %v7002
    %v7115 = vsub.f32 %v6923, %v7011
    %v7116 = vsub.f32 %v6924, %v7020
    %v7117 = vsub.f32 %v6925, %v7029
    %v7118 = vsub.f32 %v6926, %v7038
    %v7119 = vsub.f32 %v6927, %v7047
    %v7120 = vsub.f32 %v6928, %v7056
    %v7121 = vsub.f32 %v6929, %v7065
    %v7122 = vsub.f32 %v6930, %v7074
    %v7123 = vsub.f32 %v6931, %v7083
    %v7124 = vsub.f32 %v6932, %v7092
    %v7125 = vsub.f32 %v6933, %v7101
    %v7126 = vsub.f32 %v6934, %v7110
    %v7127 = vsub.f32 %v6935, %v6975
    %v7128 = vsub.f32 %v6936, %v6984
    %v7129 = vsub.f32 %v6937, %v6993
    %v7130 = vsub.f32 %v6938, %v7002
    %v7131 = vsub.f32 %v6939, %v7011
    %v7132 = vsub.f32 %v6940, %v7020
    %v7133 = vsub.f32 %v6941, %v7029
    %v7134 = vsub.f32 %v6942, %v7038
    %v7135 = vsub.f32 %v6943, %v7047
    %v7136 = vsub.f32 %v6944, %v7056
    %v7137 = vsub.f32 %v6945, %v7065
    %v7138 = vsub.f32 %v6946, %v7074
    %v7139 = vsub.f32 %v6947, %v7083
    %v7140 = vsub.f32 %v6948, %v7092
    %v7141 = vsub.f32 %v6949, %v7101
    %v7142 = vsub.f32 %v6950, %v7110
    %v7143 = vsub.f32 %v6951, %v6975
    %v7144 = vsub.f32 %v6952, %v6984
    %v7145 = vsub.f32 %v6953, %v6993
    %v7146 = vsub.f32 %v6954, %v7002
    %v7147 = vsub.f32 %v6955, %v7011
    %v7148 = vsub.f32 %v6956, %v7020
    %v7149 = vsub.f32 %v6957, %v7029
    %v7150 = vsub.f32 %v6958, %v7038
    %v7151 = vsub.f32 %v6959, %v7047
    %v7152 = vsub.f32 %v6960, %v7056
    %v7153 = vsub.f32 %v6961, %v7065
    %v7154 = vsub.f32 %v6962, %v7074
    %v7155 = vsub.f32 %v6963, %v7083
    %v7156 = vsub.f32 %v6964, %v7092
    %v7157 = vsub.f32 %v6965, %v7101
    %v7158 = vsub.f32 %v6966, %v7110
    %v7159 = vmul.f32 %v7111, 1.442695
    %v7160 = vpow.pop %v7159
    %v7161 = vmul.f32 %v7112, 1.442695
    %v7162 = vpow.pop %v7161
    %v7163 = vmul.f32 %v7113, 1.442695
    %v7164 = vpow.pop %v7163
    %v7165 = vmul.f32 %v7114, 1.442695
    %v7166 = vpow.pop %v7165
    %v7167 = vmul.f32 %v7115, 1.442695
    %v7168 = vpow.pop %v7167
    %v7169 = vmul.f32 %v7116, 1.442695
    %v7170 = vpow.pop %v7169
    %v7171 = vmul.f32 %v7117, 1.442695
    %v7172 = vpow.pop %v7171
    %v7173 = vmul.f32 %v7118, 1.442695
    %v7174 = vpow.pop %v7173
    %v7175 = vmul.f32 %v7119, 1.442695
    %v7176 = vpow.pop %v7175
    %v7177 = vmul.f32 %v7120, 1.442695
    %v7178 = vpow.pop %v7177
    %v7179 = vmul.f32 %v7121, 1.442695
    %v7180 = vpow.pop %v7179
    %v7181 = vmul.f32 %v7122, 1.442695
    %v7182 = vpow.pop %v7181
    %v7183 = vmul.f32 %v7123, 1.442695
    %v7184 = vpow.pop %v7183
    %v7185 = vmul.f32 %v7124, 1.442695
    %v7186 = vpow.pop %v7185
    %v7187 = vmul.f32 %v7125, 1.442695
    %v7188 = vpow.pop %v7187
    %v7189 = vmul.f32 %v7126, 1.442695
    %v7190 = vpow.pop %v7189
    %v7191 = vmul.f32 %v7127, 1.442695
    %v7192 = vpow.pop %v7191
    %v7193 = vmul.f32 %v7128, 1.442695
    %v7194 = vpow.pop %v7193
    %v7195 = vmul.f32 %v7129, 1.442695
    %v7196 = vpow.pop %v7195
    %v7197 = vmul.f32 %v7130, 1.442695
    %v7198 = vpow.pop %v7197
    %v7199 = vmul.f32 %v7131, 1.442695
    %v7200 = vpow.pop %v7199
    %v7201 = vmul.f32 %v7132, 1.442695
    %v7202 = vpow.pop %v7201
    %v7203 = vmul.f32 %v7133, 1.442695
    %v7204 = vpow.pop %v7203
    %v7205 = vmul.f32 %v7134, 1.442695
    %v7206 = vpow.pop %v7205
    %v7207 = vmul.f32 %v7135, 1.442695
    %v7208 = vpow.pop %v7207
    %v7209 = vmul.f32 %v7136, 1.442695
    %v7210 = vpow.pop %v7209
    %v7211 = vmul.f32 %v7137, 1.442695
    %v7212 = vpow.pop %v7211
    %v7213 = vmul.f32 %v7138, 1.442695
    %v7214 = vpow.pop %v7213
    %v7215 = vmul.f32 %v7139, 1.442695
    %v7216 = vpow.pop %v7215
    %v7217 = vmul.f32 %v7140, 1.442695
    %v7218 = vpow.pop %v7217
    %v7219 = vmul.f32 %v7141, 1.442695
    %v7220 = vpow.pop %v7219
    %v7221 = vmul.f32 %v7142, 1.442695
    %v7222 = vpow.pop %v7221
    %v7223 = vmul.f32 %v7143, 1.442695
    %v7224 = vpow.pop %v7223
    %v7225 = vmul.f32 %v7144, 1.442695
    %v7226 = vpow.pop %v7225
    %v7227 = vmul.f32 %v7145, 1.442695
    %v7228 = vpow.pop %v7227
    %v7229 = vmul.f32 %v7146, 1.442695
    %v7230 = vpow.pop %v7229
    %v7231 = vmul.f32 %v7147, 1.442695
    %v7232 = vpow.pop %v7231
    %v7233 = vmul.f32 %v7148, 1.442695
    %v7234 = vpow.pop %v7233
    %v7235 = vmul.f32 %v7149, 1.442695
    %v7236 = vpow.pop %v7235
    %v7237 = vmul.f32 %v7150, 1.442695
    %v7238 = vpow.pop %v7237
    %v7239 = vmul.f32 %v7151, 1.442695
    %v7240 = vpow.pop %v7239
    %v7241 = vmul.f32 %v7152, 1.442695
    %v7242 = vpow.pop %v7241
    %v7243 = vmul.f32 %v7153, 1.442695
    %v7244 = vpow.pop %v7243
    %v7245 = vmul.f32 %v7154, 1.442695
    %v7246 = vpow.pop %v7245
    %v7247 = vmul.f32 %v7155, 1.442695
    %v7248 = vpow.pop %v7247
    %v7249 = vmul.f32 %v7156, 1.442695
    %v7250 = vpow.pop %v7249
    %v7251 = vmul.f32 %v7157, 1.442695
    %v7252 = vpow.pop %v7251
    %v7253 = vmul.f32 %v7158, 1.442695
    %v7254 = vpow.pop %v7253
    %v7255 = vadd.f32 %v7160, %v7192
    %v7256 = vsel %vm4012, %v7224, 0.0
    %v7257 = vadd.f32 %v7255, %v7256
    %v7258 = vrot.slane %v7257, 4
    %v7259 = vadd.f32 %v7257, %v7258
    %v7260 = vrot.slane %v7259, 2
    %v7261 = vadd.f32 %v7259, %v7260
    %v7262 = vrot.slane %v7261, 1
    %v7263 = vadd.f32 %v7261, %v7262
    %v7264 = vadd.f32 %v7162, %v7194
    %v7265 = vsel %vm4012, %v7226, 0.0
    %v7266 = vadd.f32 %v7264, %v7265
    %v7267 = vrot.slane %v7266, 4
    %v7268 = vadd.f32 %v7266, %v7267
    %v7269 = vrot.slane %v7268, 2
    %v7270 = vadd.f32 %v7268, %v7269
    %v7271 = vrot.slane %v7270, 1
    %v7272 = vadd.f32 %v7270, %v7271
    %v7273 = vadd.f32 %v7164, %v7196
    %v7274 = vsel %vm4012, %v7228, 0.0
    %v7275 = vadd.f32 %v7273, %v7274
    %v7276 = vrot.slane %v7275, 4
    %v7277 = vadd.f32 %v7275, %v7276
    %v7278 = vrot.slane %v7277, 2
    %v7279 = vadd.f32 %v7277, %v7278
    %v7280 = vrot.slane %v7279, 1
    %v7281 = vadd.f32 %v7279, %v7280
    %v7282 = vadd.f32 %v7166, %v7198
    %v7283 = vsel %vm4012, %v7230, 0.0
    %v7284 = vadd.f32 %v7282, %v7283
    %v7285 = vrot.slane %v7284, 4
    %v7286 = vadd.f32 %v7284, %v7285
    %v7287 = vrot.slane %v7286, 2
    %v7288 = vadd.f32 %v7286, %v7287
    %v7289 = vrot.slane %v7288, 1
    %v7290 = vadd.f32 %v7288, %v7289
    %v7291 = vadd.f32 %v7168, %v7200
    %v7292 = vsel %vm4012, %v7232, 0.0
    %v7293 = vadd.f32 %v7291, %v7292
    %v7294 = vrot.slane %v7293, 4
    %v7295 = vadd.f32 %v7293, %v7294
    %v7296 = vrot.slane %v7295, 2
    %v7297 = vadd.f32 %v7295, %v7296
    %v7298 = vrot.slane %v7297, 1
    %v7299 = vadd.f32 %v7297, %v7298
    %v7300 = vadd.f32 %v7170, %v7202
    %v7301 = vsel %vm4012, %v7234, 0.0
    %v7302 = vadd.f32 %v7300, %v7301
    %v7303 = vrot.slane %v7302, 4
    %v7304 = vadd.f32 %v7302, %v7303
    %v7305 = vrot.slane %v7304, 2
    %v7306 = vadd.f32 %v7304, %v7305
    %v7307 = vrot.slane %v7306, 1
    %v7308 = vadd.f32 %v7306, %v7307
    %v7309 = vadd.f32 %v7172, %v7204
    %v7310 = vsel %vm4012, %v7236, 0.0
    %v7311 = vadd.f32 %v7309, %v7310
    %v7312 = vrot.slane %v7311, 4
    %v7313 = vadd.f32 %v7311, %v7312
    %v7314 = vrot.slane %v7313, 2
    %v7315 = vadd.f32 %v7313, %v7314
    %v7316 = vrot.slane %v7315, 1
    %v7317 = vadd.f32 %v7315, %v7316
    %v7318 = vadd.f32 %v7174, %v7206
    %v7319 = vsel %vm4012, %v7238, 0.0
    %v7320 = vadd.f32 %v7318, %v7319
    %v7321 = vrot.slane %v7320, 4
    %v7322 = vadd.f32 %v7320, %v7321
    %v7323 = vrot.slane %v7322, 2
    %v7324 = vadd.f32 %v7322, %v7323
    %v7325 = vrot.slane %v7324, 1
    %v7326 = vadd.f32 %v7324, %v7325
    %v7327 = vadd.f32 %v7176, %v7208
    %v7328 = vsel %vm4012, %v7240, 0.0
    %v7329 = vadd.f32 %v7327, %v7328
    %v7330 = vrot.slane %v7329, 4
    %v7331 = vadd.f32 %v7329, %v7330
    %v7332 = vrot.slane %v7331, 2
    %v7333 = vadd.f32 %v7331, %v7332
    %v7334 = vrot.slane %v7333, 1
    %v7335 = vadd.f32 %v7333, %v7334
    %v7336 = vadd.f32 %v7178, %v7210
    %v7337 = vsel %vm4012, %v7242, 0.0
    %v7338 = vadd.f32 %v7336, %v7337
    %v7339 = vrot.slane %v7338, 4
    %v7340 = vadd.f32 %v7338, %v7339
    %v7341 = vrot.slane %v7340, 2
    %v7342 = vadd.f32 %v7340, %v7341
    %v7343 = vrot.slane %v7342, 1
    %v7344 = vadd.f32 %v7342, %v7343
    %v7345 = vadd.f32 %v7180, %v7212
    %v7346 = vsel %vm4012, %v7244, 0.0
    %v7347 = vadd.f32 %v7345, %v7346
    %v7348 = vrot.slane %v7347, 4
    %v7349 = vadd.f32 %v7347, %v7348
    %v7350 = vrot.slane %v7349, 2
    %v7351 = vadd.f32 %v7349, %v7350
    %v7352 = vrot.slane %v7351, 1
    %v7353 = vadd.f32 %v7351, %v7352
    %v7354 = vadd.f32 %v7182, %v7214
    %v7355 = vsel %vm4012, %v7246, 0.0
    %v7356 = vadd.f32 %v7354, %v7355
    %v7357 = vrot.slane %v7356, 4
    %v7358 = vadd.f32 %v7356, %v7357
    %v7359 = vrot.slane %v7358, 2
    %v7360 = vadd.f32 %v7358, %v7359
    %v7361 = vrot.slane %v7360, 1
    %v7362 = vadd.f32 %v7360, %v7361
    %v7363 = vadd.f32 %v7184, %v7216
    %v7364 = vsel %vm4012, %v7248, 0.0
    %v7365 = vadd.f32 %v7363, %v7364
    %v7366 = vrot.slane %v7365, 4
    %v7367 = vadd.f32 %v7365, %v7366
    %v7368 = vrot.slane %v7367, 2
    %v7369 = vadd.f32 %v7367, %v7368
    %v7370 = vrot.slane %v7369, 1
    %v7371 = vadd.f32 %v7369, %v7370
    %v7372 = vadd.f32 %v7186, %v7218
    %v7373 = vsel %vm4012, %v7250, 0.0
    %v7374 = vadd.f32 %v7372, %v7373
    %v7375 = vrot.slane %v7374, 4
    %v7376 = vadd.f32 %v7374, %v7375
    %v7377 = vrot.slane %v7376, 2
    %v7378 = vadd.f32 %v7376, %v7377
    %v7379 = vrot.slane %v7378, 1
    %v7380 = vadd.f32 %v7378, %v7379
    %v7381 = vadd.f32 %v7188, %v7220
    %v7382 = vsel %vm4012, %v7252, 0.0
    %v7383 = vadd.f32 %v7381, %v7382
    %v7384 = vrot.slane %v7383, 4
    %v7385 = vadd.f32 %v7383, %v7384
    %v7386 = vrot.slane %v7385, 2
    %v7387 = vadd.f32 %v7385, %v7386
    %v7388 = vrot.slane %v7387, 1
    %v7389 = vadd.f32 %v7387, %v7388
    %v7390 = vadd.f32 %v7190, %v7222
    %v7391 = vsel %vm4012, %v7254, 0.0
    %v7392 = vadd.f32 %v7390, %v7391
    %v7393 = vrot.slane %v7392, 4
    %v7394 = vadd.f32 %v7392, %v7393
    %v7395 = vrot.slane %v7394, 2
    %v7396 = vadd.f32 %v7394, %v7395
    %v7397 = vrot.slane %v7396, 1
    %v7398 = vadd.f32 %v7396, %v7397
    %v7399 = vlog2.pop %v7263
    %v7400 = vmul.f32 %v7399, 0.6931472
    %v7401 = vlog2.pop %v7272
    %v7402 = vmul.f32 %v7401, 0.6931472
    %v7403 = vlog2.pop %v7281
    %v7404 = vmul.f32 %v7403, 0.6931472
    %v7405 = vlog2.pop %v7290
    %v7406 = vmul.f32 %v7405, 0.6931472
    %v7407 = vlog2.pop %v7299
    %v7408 = vmul.f32 %v7407, 0.6931472
    %v7409 = vlog2.pop %v7308
    %v7410 = vmul.f32 %v7409, 0.6931472
    %v7411 = vlog2.pop %v7317
    %v7412 = vmul.f32 %v7411, 0.6931472
    %v7413 = vlog2.pop %v7326
    %v7414 = vmul.f32 %v7413, 0.6931472
    %v7415 = vlog2.pop %v7335
    %v7416 = vmul.f32 %v7415, 0.6931472
    %v7417 = vlog2.pop %v7344
    %v7418 = vmul.f32 %v7417, 0.6931472
    %v7419 = vlog2.pop %v7353
    %v7420 = vmul.f32 %v7419, 0.6931472
    %v7421 = vlog2.pop %v7362
    %v7422 = vmul.f32 %v7421, 0.6931472
    %v7423 = vlog2.pop %v7371
    %v7424 = vmul.f32 %v7423, 0.6931472
    %v7425 = vlog2.pop %v7380
    %v7426 = vmul.f32 %v7425, 0.6931472
    %v7427 = vlog2.pop %v7389
    %v7428 = vmul.f32 %v7427, 0.6931472
    %v7429 = vlog2.pop %v7398
    %v7430 = vmul.f32 %v7429, 0.6931472
    %v7431 = vadd.f32 %v6975, %v7400
    %v7432 = vadd.f32 %v6984, %v7402
    %v7433 = vadd.f32 %v6993, %v7404
    %v7434 = vadd.f32 %v7002, %v7406
    %v7435 = vadd.f32 %v7011, %v7408
    %v7436 = vadd.f32 %v7020, %v7410
    %v7437 = vadd.f32 %v7029, %v7412
    %v7438 = vadd.f32 %v7038, %v7414
    %v7439 = vadd.f32 %v7047, %v7416
    %v7440 = vadd.f32 %v7056, %v7418
    %v7441 = vadd.f32 %v7065, %v7420
    %v7442 = vadd.f32 %v7074, %v7422
    %v7443 = vadd.f32 %v7083, %v7424
    %v7444 = vadd.f32 %v7092, %v7426
    %v7445 = vadd.f32 %v7101, %v7428
    %v7446 = vadd.f32 %v7110, %v7430
    %v7447 = vperm.slane %v3916, 7
    %v7448 = vperm.slane %v3917, 7
    %v7449 = vperm.slane %v3918, 7
    %v7450 = vperm.slane %v3919, 7
    %v7451 = vperm.slane %v3920, 7
    %v7452 = vperm.slane %v3921, 7
    %v7453 = vperm.slane %v3922, 7
    %v7454 = vperm.slane %v3923, 7
    %v7455 = vperm.slane %v3924, 7
    %v7456 = vperm.slane %v3925, 7
    %v7457 = vperm.slane %v3926, 7
    %v7458 = vperm.slane %v3927, 7
    %v7459 = vperm.slane %v3928, 7
    %v7460 = vperm.slane %v3929, 7
    %v7461 = vperm.slane %v3930, 7
    %v7462 = vperm.slane %v3931, 7
    %v7463 = vsub.f32 %v7447, %v3936
    %v7464 = vsub.f32 %v7448, %v3936
    %v7465 = vsub.f32 %v7449, %v3936
    %v7466 = vsub.f32 %v7450, %v3936
    %v7467 = vsub.f32 %v7451, %v3936
    %v7468 = vsub.f32 %v7452, %v3936
    %v7469 = vsub.f32 %v7453, %v3936
    %v7470 = vsub.f32 %v7454, %v3936
    %v7471 = vsub.f32 %v7455, %v3936
    %v7472 = vsub.f32 %v7456, %v3936
    %v7473 = vsub.f32 %v7457, %v3936
    %v7474 = vsub.f32 %v7458, %v3936
    %v7475 = vsub.f32 %v7459, %v3936
    %v7476 = vsub.f32 %v7460, %v3936
    %v7477 = vsub.f32 %v7461, %v3936
    %v7478 = vsub.f32 %v7462, %v3936
    %v7479 = vsub.f32 %v7447, %v3937
    %v7480 = vsub.f32 %v7448, %v3937
    %v7481 = vsub.f32 %v7449, %v3937
    %v7482 = vsub.f32 %v7450, %v3937
    %v7483 = vsub.f32 %v7451, %v3937
    %v7484 = vsub.f32 %v7452, %v3937
    %v7485 = vsub.f32 %v7453, %v3937
    %v7486 = vsub.f32 %v7454, %v3937
    %v7487 = vsub.f32 %v7455, %v3937
    %v7488 = vsub.f32 %v7456, %v3937
    %v7489 = vsub.f32 %v7457, %v3937
    %v7490 = vsub.f32 %v7458, %v3937
    %v7491 = vsub.f32 %v7459, %v3937
    %v7492 = vsub.f32 %v7460, %v3937
    %v7493 = vsub.f32 %v7461, %v3937
    %v7494 = vsub.f32 %v7462, %v3937
    %v7495 = vsub.f32 %v7447, %v3938
    %v7496 = vsub.f32 %v7448, %v3938
    %v7497 = vsub.f32 %v7449, %v3938
    %v7498 = vsub.f32 %v7450, %v3938
    %v7499 = vsub.f32 %v7451, %v3938
    %v7500 = vsub.f32 %v7452, %v3938
    %v7501 = vsub.f32 %v7453, %v3938
    %v7502 = vsub.f32 %v7454, %v3938
    %v7503 = vsub.f32 %v7455, %v3938
    %v7504 = vsub.f32 %v7456, %v3938
    %v7505 = vsub.f32 %v7457, %v3938
    %v7506 = vsub.f32 %v7458, %v3938
    %v7507 = vsub.f32 %v7459, %v3938
    %v7508 = vsub.f32 %v7460, %v3938
    %v7509 = vsub.f32 %v7461, %v3938
    %v7510 = vsub.f32 %v7462, %v3938
    %v7511 = vand.u32 2147483647, %v7463
    %v7512 = vand.u32 2147483647, %v7464
    %v7513 = vand.u32 2147483647, %v7465
    %v7514 = vand.u32 2147483647, %v7466
    %v7515 = vand.u32 2147483647, %v7467
    %v7516 = vand.u32 2147483647, %v7468
    %v7517 = vand.u32 2147483647, %v7469
    %v7518 = vand.u32 2147483647, %v7470
    %v7519 = vand.u32 2147483647, %v7471
    %v7520 = vand.u32 2147483647, %v7472
    %v7521 = vand.u32 2147483647, %v7473
    %v7522 = vand.u32 2147483647, %v7474
    %v7523 = vand.u32 2147483647, %v7475
    %v7524 = vand.u32 2147483647, %v7476
    %v7525 = vand.u32 2147483647, %v7477
    %v7526 = vand.u32 2147483647, %v7478
    %v7527 = vand.u32 2147483647, %v7479
    %v7528 = vand.u32 2147483647, %v7480
    %v7529 = vand.u32 2147483647, %v7481
    %v7530 = vand.u32 2147483647, %v7482
    %v7531 = vand.u32 2147483647, %v7483
    %v7532 = vand.u32 2147483647, %v7484
    %v7533 = vand.u32 2147483647, %v7485
    %v7534 = vand.u32 2147483647, %v7486
    %v7535 = vand.u32 2147483647, %v7487
    %v7536 = vand.u32 2147483647, %v7488
    %v7537 = vand.u32 2147483647, %v7489
    %v7538 = vand.u32 2147483647, %v7490
    %v7539 = vand.u32 2147483647, %v7491
    %v7540 = vand.u32 2147483647, %v7492
    %v7541 = vand.u32 2147483647, %v7493
    %v7542 = vand.u32 2147483647, %v7494
    %v7543 = vand.u32 2147483647, %v7495
    %v7544 = vand.u32 2147483647, %v7496
    %v7545 = vand.u32 2147483647, %v7497
    %v7546 = vand.u32 2147483647, %v7498
    %v7547 = vand.u32 2147483647, %v7499
    %v7548 = vand.u32 2147483647, %v7500
    %v7549 = vand.u32 2147483647, %v7501
    %v7550 = vand.u32 2147483647, %v7502
    %v7551 = vand.u32 2147483647, %v7503
    %v7552 = vand.u32 2147483647, %v7504
    %v7553 = vand.u32 2147483647, %v7505
    %v7554 = vand.u32 2147483647, %v7506
    %v7555 = vand.u32 2147483647, %v7507
    %v7556 = vand.u32 2147483647, %v7508
    %v7557 = vand.u32 2147483647, %v7509
    %v7558 = vand.u32 2147483647, %v7510
    %v7559 = vsub.f32 1.0, %v7511
    %v7560 = vsub.f32 1.0, %v7512
    %v7561 = vsub.f32 1.0, %v7513
    %v7562 = vsub.f32 1.0, %v7514
    %v7563 = vsub.f32 1.0, %v7515
    %v7564 = vsub.f32 1.0, %v7516
    %v7565 = vsub.f32 1.0, %v7517
    %v7566 = vsub.f32 1.0, %v7518
    %v7567 = vsub.f32 1.0, %v7519
    %v7568 = vsub.f32 1.0, %v7520
    %v7569 = vsub.f32 1.0, %v7521
    %v7570 = vsub.f32 1.0, %v7522
    %v7571 = vsub.f32 1.0, %v7523
    %v7572 = vsub.f32 1.0, %v7524
    %v7573 = vsub.f32 1.0, %v7525
    %v7574 = vsub.f32 1.0, %v7526
    %v7575 = vsub.f32 1.0, %v7527
    %v7576 = vsub.f32 1.0, %v7528
    %v7577 = vsub.f32 1.0, %v7529
    %v7578 = vsub.f32 1.0, %v7530
    %v7579 = vsub.f32 1.0, %v7531
    %v7580 = vsub.f32 1.0, %v7532
    %v7581 = vsub.f32 1.0, %v7533
    %v7582 = vsub.f32 1.0, %v7534
    %v7583 = vsub.f32 1.0, %v7535
    %v7584 = vsub.f32 1.0, %v7536
    %v7585 = vsub.f32 1.0, %v7537
    %v7586 = vsub.f32 1.0, %v7538
    %v7587 = vsub.f32 1.0, %v7539
    %v7588 = vsub.f32 1.0, %v7540
    %v7589 = vsub.f32 1.0, %v7541
    %v7590 = vsub.f32 1.0, %v7542
    %v7591 = vsub.f32 1.0, %v7543
    %v7592 = vsub.f32 1.0, %v7544
    %v7593 = vsub.f32 1.0, %v7545
    %v7594 = vsub.f32 1.0, %v7546
    %v7595 = vsub.f32 1.0, %v7547
    %v7596 = vsub.f32 1.0, %v7548
    %v7597 = vsub.f32 1.0, %v7549
    %v7598 = vsub.f32 1.0, %v7550
    %v7599 = vsub.f32 1.0, %v7551
    %v7600 = vsub.f32 1.0, %v7552
    %v7601 = vsub.f32 1.0, %v7553
    %v7602 = vsub.f32 1.0, %v7554
    %v7603 = vsub.f32 1.0, %v7555
    %v7604 = vsub.f32 1.0, %v7556
    %v7605 = vsub.f32 1.0, %v7557
    %v7606 = vsub.f32 1.0, %v7558
    %v7607 = vmax.f32 %v7559, 0.0
    %v7608 = vmax.f32 %v7560, 0.0
    %v7609 = vmax.f32 %v7561, 0.0
    %v7610 = vmax.f32 %v7562, 0.0
    %v7611 = vmax.f32 %v7563, 0.0
    %v7612 = vmax.f32 %v7564, 0.0
    %v7613 = vmax.f32 %v7565, 0.0
    %v7614 = vmax.f32 %v7566, 0.0
    %v7615 = vmax.f32 %v7567, 0.0
    %v7616 = vmax.f32 %v7568, 0.0
    %v7617 = vmax.f32 %v7569, 0.0
    %v7618 = vmax.f32 %v7570, 0.0
    %v7619 = vmax.f32 %v7571, 0.0
    %v7620 = vmax.f32 %v7572, 0.0
    %v7621 = vmax.f32 %v7573, 0.0
    %v7622 = vmax.f32 %v7574, 0.0
    %v7623 = vmax.f32 %v7575, 0.0
    %v7624 = vmax.f32 %v7576, 0.0
    %v7625 = vmax.f32 %v7577, 0.0
    %v7626 = vmax.f32 %v7578, 0.0
    %v7627 = vmax.f32 %v7579, 0.0
    %v7628 = vmax.f32 %v7580, 0.0
    %v7629 = vmax.f32 %v7581, 0.0
    %v7630 = vmax.f32 %v7582, 0.0
    %v7631 = vmax.f32 %v7583, 0.0
    %v7632 = vmax.f32 %v7584, 0.0
    %v7633 = vmax.f32 %v7585, 0.0
    %v7634 = vmax.f32 %v7586, 0.0
    %v7635 = vmax.f32 %v7587, 0.0
    %v7636 = vmax.f32 %v7588, 0.0
    %v7637 = vmax.f32 %v7589, 0.0
    %v7638 = vmax.f32 %v7590, 0.0
    %v7639 = vmax.f32 %v7591, 0.0
    %v7640 = vmax.f32 %v7592, 0.0
    %v7641 = vmax.f32 %v7593, 0.0
    %v7642 = vmax.f32 %v7594, 0.0
    %v7643 = vmax.f32 %v7595, 0.0
    %v7644 = vmax.f32 %v7596, 0.0
    %v7645 = vmax.f32 %v7597, 0.0
    %v7646 = vmax.f32 %v7598, 0.0
    %v7647 = vmax.f32 %v7599, 0.0
    %v7648 = vmax.f32 %v7600, 0.0
    %v7649 = vmax.f32 %v7601, 0.0
    %v7650 = vmax.f32 %v7602, 0.0
    %v7651 = vmax.f32 %v7603, 0.0
    %v7652 = vmax.f32 %v7604, 0.0
    %v7653 = vmax.f32 %v7605, 0.0
    %v7654 = vmax.f32 %v7606, 0.0
    %v7655 = vmul.f32 %v7607, %v6919
    %v7656 = vmul.f32 %v7608, %v6920
    %v7657 = vmul.f32 %v7609, %v6921
    %v7658 = vmul.f32 %v7610, %v6922
    %v7659 = vmul.f32 %v7611, %v6923
    %v7660 = vmul.f32 %v7612, %v6924
    %v7661 = vmul.f32 %v7613, %v6925
    %v7662 = vmul.f32 %v7614, %v6926
    %v7663 = vmul.f32 %v7615, %v6927
    %v7664 = vmul.f32 %v7616, %v6928
    %v7665 = vmul.f32 %v7617, %v6929
    %v7666 = vmul.f32 %v7618, %v6930
    %v7667 = vmul.f32 %v7619, %v6931
    %v7668 = vmul.f32 %v7620, %v6932
    %v7669 = vmul.f32 %v7621, %v6933
    %v7670 = vmul.f32 %v7622, %v6934
    %v7671 = vmul.f32 %v7623, %v6935
    %v7672 = vmul.f32 %v7624, %v6936
    %v7673 = vmul.f32 %v7625, %v6937
    %v7674 = vmul.f32 %v7626, %v6938
    %v7675 = vmul.f32 %v7627, %v6939
    %v7676 = vmul.f32 %v7628, %v6940
    %v7677 = vmul.f32 %v7629, %v6941
    %v7678 = vmul.f32 %v7630, %v6942
    %v7679 = vmul.f32 %v7631, %v6943
    %v7680 = vmul.f32 %v7632, %v6944
    %v7681 = vmul.f32 %v7633, %v6945
    %v7682 = vmul.f32 %v7634, %v6946
    %v7683 = vmul.f32 %v7635, %v6947
    %v7684 = vmul.f32 %v7636, %v6948
    %v7685 = vmul.f32 %v7637, %v6949
    %v7686 = vmul.f32 %v7638, %v6950
    %v7687 = vmul.f32 %v7639, %v6951
    %v7688 = vmul.f32 %v7640, %v6952
    %v7689 = vmul.f32 %v7641, %v6953
    %v7690 = vmul.f32 %v7642, %v6954
    %v7691 = vmul.f32 %v7643, %v6955
    %v7692 = vmul.f32 %v7644, %v6956
    %v7693 = vmul.f32 %v7645, %v6957
    %v7694 = vmul.f32 %v7646, %v6958
    %v7695 = vmul.f32 %v7647, %v6959
    %v7696 = vmul.f32 %v7648, %v6960
    %v7697 = vmul.f32 %v7649, %v6961
    %v7698 = vmul.f32 %v7650, %v6962
    %v7699 = vmul.f32 %v7651, %v6963
    %v7700 = vmul.f32 %v7652, %v6964
    %v7701 = vmul.f32 %v7653, %v6965
    %v7702 = vmul.f32 %v7654, %v6966
    %v7703 = vadd.f32 %v7655, %v7671
    %v7704 = vsel %vm4012, %v7687, 0.0
    %v7705 = vadd.f32 %v7703, %v7704
    %v7706 = vrot.slane %v7705, 4
    %v7707 = vadd.f32 %v7705, %v7706
    %v7708 = vrot.slane %v7707, 2
    %v7709 = vadd.f32 %v7707, %v7708
    %v7710 = vrot.slane %v7709, 1
    %v7711 = vadd.f32 %v7709, %v7710
    %v7712 = vadd.f32 %v7656, %v7672
    %v7713 = vsel %vm4012, %v7688, 0.0
    %v7714 = vadd.f32 %v7712, %v7713
    %v7715 = vrot.slane %v7714, 4
    %v7716 = vadd.f32 %v7714, %v7715
    %v7717 = vrot.slane %v7716, 2
    %v7718 = vadd.f32 %v7716, %v7717
    %v7719 = vrot.slane %v7718, 1
    %v7720 = vadd.f32 %v7718, %v7719
    %v7721 = vadd.f32 %v7657, %v7673
    %v7722 = vsel %vm4012, %v7689, 0.0
    %v7723 = vadd.f32 %v7721, %v7722
    %v7724 = vrot.slane %v7723, 4
    %v7725 = vadd.f32 %v7723, %v7724
    %v7726 = vrot.slane %v7725, 2
    %v7727 = vadd.f32 %v7725, %v7726
    %v7728 = vrot.slane %v7727, 1
    %v7729 = vadd.f32 %v7727, %v7728
    %v7730 = vadd.f32 %v7658, %v7674
    %v7731 = vsel %vm4012, %v7690, 0.0
    %v7732 = vadd.f32 %v7730, %v7731
    %v7733 = vrot.slane %v7732, 4
    %v7734 = vadd.f32 %v7732, %v7733
    %v7735 = vrot.slane %v7734, 2
    %v7736 = vadd.f32 %v7734, %v7735
    %v7737 = vrot.slane %v7736, 1
    %v7738 = vadd.f32 %v7736, %v7737
    %v7739 = vadd.f32 %v7659, %v7675
    %v7740 = vsel %vm4012, %v7691, 0.0
    %v7741 = vadd.f32 %v7739, %v7740
    %v7742 = vrot.slane %v7741, 4
    %v7743 = vadd.f32 %v7741, %v7742
    %v7744 = vrot.slane %v7743, 2
    %v7745 = vadd.f32 %v7743, %v7744
    %v7746 = vrot.slane %v7745, 1
    %v7747 = vadd.f32 %v7745, %v7746
    %v7748 = vadd.f32 %v7660, %v7676
    %v7749 = vsel %vm4012, %v7692, 0.0
    %v7750 = vadd.f32 %v7748, %v7749
    %v7751 = vrot.slane %v7750, 4
    %v7752 = vadd.f32 %v7750, %v7751
    %v7753 = vrot.slane %v7752, 2
    %v7754 = vadd.f32 %v7752, %v7753
    %v7755 = vrot.slane %v7754, 1
    %v7756 = vadd.f32 %v7754, %v7755
    %v7757 = vadd.f32 %v7661, %v7677
    %v7758 = vsel %vm4012, %v7693, 0.0
    %v7759 = vadd.f32 %v7757, %v7758
    %v7760 = vrot.slane %v7759, 4
    %v7761 = vadd.f32 %v7759, %v7760
    %v7762 = vrot.slane %v7761, 2
    %v7763 = vadd.f32 %v7761, %v7762
    %v7764 = vrot.slane %v7763, 1
    %v7765 = vadd.f32 %v7763, %v7764
    %v7766 = vadd.f32 %v7662, %v7678
    %v7767 = vsel %vm4012, %v7694, 0.0
    %v7768 = vadd.f32 %v7766, %v7767
    %v7769 = vrot.slane %v7768, 4
    %v7770 = vadd.f32 %v7768, %v7769
    %v7771 = vrot.slane %v7770, 2
    %v7772 = vadd.f32 %v7770, %v7771
    %v7773 = vrot.slane %v7772, 1
    %v7774 = vadd.f32 %v7772, %v7773
    %v7775 = vadd.f32 %v7663, %v7679
    %v7776 = vsel %vm4012, %v7695, 0.0
    %v7777 = vadd.f32 %v7775, %v7776
    %v7778 = vrot.slane %v7777, 4
    %v7779 = vadd.f32 %v7777, %v7778
    %v7780 = vrot.slane %v7779, 2
    %v7781 = vadd.f32 %v7779, %v7780
    %v7782 = vrot.slane %v7781, 1
    %v7783 = vadd.f32 %v7781, %v7782
    %v7784 = vadd.f32 %v7664, %v7680
    %v7785 = vsel %vm4012, %v7696, 0.0
    %v7786 = vadd.f32 %v7784, %v7785
    %v7787 = vrot.slane %v7786, 4
    %v7788 = vadd.f32 %v7786, %v7787
    %v7789 = vrot.slane %v7788, 2
    %v7790 = vadd.f32 %v7788, %v7789
    %v7791 = vrot.slane %v7790, 1
    %v7792 = vadd.f32 %v7790, %v7791
    %v7793 = vadd.f32 %v7665, %v7681
    %v7794 = vsel %vm4012, %v7697, 0.0
    %v7795 = vadd.f32 %v7793, %v7794
    %v7796 = vrot.slane %v7795, 4
    %v7797 = vadd.f32 %v7795, %v7796
    %v7798 = vrot.slane %v7797, 2
    %v7799 = vadd.f32 %v7797, %v7798
    %v7800 = vrot.slane %v7799, 1
    %v7801 = vadd.f32 %v7799, %v7800
    %v7802 = vadd.f32 %v7666, %v7682
    %v7803 = vsel %vm4012, %v7698, 0.0
    %v7804 = vadd.f32 %v7802, %v7803
    %v7805 = vrot.slane %v7804, 4
    %v7806 = vadd.f32 %v7804, %v7805
    %v7807 = vrot.slane %v7806, 2
    %v7808 = vadd.f32 %v7806, %v7807
    %v7809 = vrot.slane %v7808, 1
    %v7810 = vadd.f32 %v7808, %v7809
    %v7811 = vadd.f32 %v7667, %v7683
    %v7812 = vsel %vm4012, %v7699, 0.0
    %v7813 = vadd.f32 %v7811, %v7812
    %v7814 = vrot.slane %v7813, 4
    %v7815 = vadd.f32 %v7813, %v7814
    %v7816 = vrot.slane %v7815, 2
    %v7817 = vadd.f32 %v7815, %v7816
    %v7818 = vrot.slane %v7817, 1
    %v7819 = vadd.f32 %v7817, %v7818
    %v7820 = vadd.f32 %v7668, %v7684
    %v7821 = vsel %vm4012, %v7700, 0.0
    %v7822 = vadd.f32 %v7820, %v7821
    %v7823 = vrot.slane %v7822, 4
    %v7824 = vadd.f32 %v7822, %v7823
    %v7825 = vrot.slane %v7824, 2
    %v7826 = vadd.f32 %v7824, %v7825
    %v7827 = vrot.slane %v7826, 1
    %v7828 = vadd.f32 %v7826, %v7827
    %v7829 = vadd.f32 %v7669, %v7685
    %v7830 = vsel %vm4012, %v7701, 0.0
    %v7831 = vadd.f32 %v7829, %v7830
    %v7832 = vrot.slane %v7831, 4
    %v7833 = vadd.f32 %v7831, %v7832
    %v7834 = vrot.slane %v7833, 2
    %v7835 = vadd.f32 %v7833, %v7834
    %v7836 = vrot.slane %v7835, 1
    %v7837 = vadd.f32 %v7835, %v7836
    %v7838 = vadd.f32 %v7670, %v7686
    %v7839 = vsel %vm4012, %v7702, 0.0
    %v7840 = vadd.f32 %v7838, %v7839
    %v7841 = vrot.slane %v7840, 4
    %v7842 = vadd.f32 %v7840, %v7841
    %v7843 = vrot.slane %v7842, 2
    %v7844 = vadd.f32 %v7842, %v7843
    %v7845 = vrot.slane %v7844, 1
    %v7846 = vadd.f32 %v7844, %v7845
    %v7847 = vsub.f32 %v7431, %v7711
    %v7848 = vsub.f32 %v7432, %v7720
    %v7849 = vsub.f32 %v7433, %v7729
    %v7850 = vsub.f32 %v7434, %v7738
    %v7851 = vsub.f32 %v7435, %v7747
    %v7852 = vsub.f32 %v7436, %v7756
    %v7853 = vsub.f32 %v7437, %v7765
    %v7854 = vsub.f32 %v7438, %v7774
    %v7855 = vsub.f32 %v7439, %v7783
    %v7856 = vsub.f32 %v7440, %v7792
    %v7857 = vsub.f32 %v7441, %v7801
    %v7858 = vsub.f32 %v7442, %v7810
    %v7859 = vsub.f32 %v7443, %v7819
    %v7860 = vsub.f32 %v7444, %v7828
    %v7861 = vsub.f32 %v7445, %v7837
    %v7862 = vsub.f32 %v7446, %v7846
    %v7863 = vadd.f32 %v6878, %v7847
    %v7864 = vadd.f32 %v6879, %v7848
    %v7865 = vadd.f32 %v6880, %v7849
    %v7866 = vadd.f32 %v6881, %v7850
    %v7867 = vadd.f32 %v6882, %v7851
    %v7868 = vadd.f32 %v6883, %v7852
    %v7869 = vadd.f32 %v6884, %v7853
    %v7870 = vadd.f32 %v6885, %v7854
    %v7871 = vadd.f32 %v6886, %v7855
    %v7872 = vadd.f32 %v6887, %v7856
    %v7873 = vadd.f32 %v6888, %v7857
    %v7874 = vadd.f32 %v6889, %v7858
    %v7875 = vadd.f32 %v6890, %v7859
    %v7876 = vadd.f32 %v6891, %v7860
    %v7877 = vadd.f32 %v6892, %v7861
    %v7878 = vadd.f32 %v6893, %v7862
    %v7879 = vmul.f32 %v7863, 0.25
    %v7880 = vmul.f32 %v7864, 0.25
    %v7881 = vmul.f32 %v7865, 0.25
    %v7882 = vmul.f32 %v7866, 0.25
    %v7883 = vmul.f32 %v7867, 0.25
    %v7884 = vmul.f32 %v7868, 0.25
    %v7885 = vmul.f32 %v7869, 0.25
    %v7886 = vmul.f32 %v7870, 0.25
    %v7887 = vmul.f32 %v7871, 0.25
    %v7888 = vmul.f32 %v7872, 0.25
    %v7889 = vmul.f32 %v7873, 0.25
    %v7890 = vmul.f32 %v7874, 0.25
    %v7891 = vmul.f32 %v7875, 0.25
    %v7892 = vmul.f32 %v7876, 0.25
    %v7893 = vmul.f32 %v7877, 0.25
    %v7894 = vmul.f32 %v7878, 0.25
    %v7895 = vmul.f32 %v7879, %v28
    %v7896 = vmul.f32 %v7880, %v29
    %v7897 = vmul.f32 %v7881, %v30
    %v7898 = vmul.f32 %v7882, %v31
    %v7899 = vmul.f32 %v7883, %v32
    %v7900 = vmul.f32 %v7884, %v33
    %v7901 = vmul.f32 %v7885, %v34
    %v7902 = vmul.f32 %v7886, %v35
    %v7903 = vmul.f32 %v7887, %v36
    %v7904 = vmul.f32 %v7888, %v37
    %v7905 = vmul.f32 %v7889, %v38
    %v7906 = vmul.f32 %v7890, %v39
    %v7907 = vmul.f32 %v7891, %v40
    %v7908 = vmul.f32 %v7892, %v41
    %v7909 = vmul.f32 %v7893, %v42
    %v7910 = vmul.f32 %v7894, %v43
    %v7927 = vrot.slane %v7895, 7
    %v7928 = vrot.slane %v7896, 7
    %v7929 = vrot.slane %v7897, 7
    %v7930 = vrot.slane %v7898, 7
    %v7931 = vrot.slane %v7899, 7
    %v7932 = vrot.slane %v7900, 7
    %v7933 = vrot.slane %v7901, 7
    %v7934 = vrot.slane %v7902, 7
    %v7935 = vrot.slane %v7903, 7
    %v7936 = vrot.slane %v7904, 7
    %v7937 = vrot.slane %v7905, 7
    %v7938 = vrot.slane %v7906, 7
    %v7939 = vrot.slane %v7907, 7
    %v7940 = vrot.slane %v7908, 7
    %v7941 = vrot.slane %v7909, 7
    %v7942 = vrot.slane %v7910, 7
    %v7959 = vsel %vm1820, %v7927, 0.0
    %v7960 = vsel %vm1821, %v7928, 0.0
    %v7961 = vsel %vm1822, %v7929, 0.0
    %v7962 = vsel %vm1823, %v7930, 0.0
    %v7963 = vsel %vm1824, %v7931, 0.0
    %v7964 = vsel %vm1825, %v7932, 0.0
    %v7965 = vsel %vm1826, %v7933, 0.0
    %v7966 = vsel %vm1827, %v7934, 0.0
    %v7967 = vsel %vm1828, %v7935, 0.0
    %v7968 = vsel %vm1829, %v7936, 0.0
    %v7969 = vsel %vm1830, %v7937, 0.0
    %v7970 = vsel %vm1831, %v7938, 0.0
    %v7971 = vsel %vm1832, %v7939, 0.0
    %v7972 = vsel %vm1833, %v7940, 0.0
    %v7973 = vsel %vm1834, %v7941, 0.0
    %v7974 = vsel %vm1835, %v7942, 0.0
    %v7991 = vrot.slane %v1916, 3
    %v7992 = vrot.slane %v1917, 3
    %v7993 = vrot.slane %v1918, 3
    %v7994 = vrot.slane %v1919, 3
    %v7995 = vrot.slane %v1920, 3
    %v7996 = vrot.slane %v1921, 3
    %v7997 = vrot.slane %v1922, 3
    %v7998 = vrot.slane %v1923, 3
    %v7999 = vrot.slane %v1924, 3
    %v8000 = vrot.slane %v1925, 3
    %v8001 = vrot.slane %v1926, 3
    %v8002 = vrot.slane %v1927, 3
    %v8003 = vrot.slane %v1928, 3
    %v8004 = vrot.slane %v1929, 3
    %v8005 = vrot.slane %v1930, 3
    %v8006 = vrot.slane %v1931, 3
    %v8039 = vrot.slane %v7959, 2
    %v8040 = vrot.slane %v7960, 2
    %v8041 = vrot.slane %v7961, 2
    %v8042 = vrot.slane %v7962, 2
    %v8043 = vrot.slane %v7963, 2
    %v8044 = vrot.slane %v7964, 2
    %v8045 = vrot.slane %v7965, 2
    %v8046 = vrot.slane %v7966, 2
    %v8047 = vrot.slane %v7967, 2
    %v8048 = vrot.slane %v7968, 2
    %v8049 = vrot.slane %v7969, 2
    %v8050 = vrot.slane %v7970, 2
    %v8051 = vrot.slane %v7971, 2
    %v8052 = vrot.slane %v7972, 2
    %v8053 = vrot.slane %v7973, 2
    %v8054 = vrot.slane %v7974, 2
    %v8071 = vsel %vm4012, %v7991, %v8039
    %v8072 = vsel %vm4012, %v7992, %v8040
    %v8073 = vsel %vm4012, %v7993, %v8041
    %v8074 = vsel %vm4012, %v7994, %v8042
    %v8075 = vsel %vm4012, %v7995, %v8043
    %v8076 = vsel %vm4012, %v7996, %v8044
    %v8077 = vsel %vm4012, %v7997, %v8045
    %v8078 = vsel %vm4012, %v7998, %v8046
    %v8079 = vsel %vm4012, %v7999, %v8047
    %v8080 = vsel %vm4012, %v8000, %v8048
    %v8081 = vsel %vm4012, %v8001, %v8049
    %v8082 = vsel %vm4012, %v8002, %v8050
    %v8083 = vsel %vm4012, %v8003, %v8051
    %v8084 = vsel %vm4012, %v8004, %v8052
    %v8085 = vsel %vm4012, %v8005, %v8053
    %v8086 = vsel %vm4012, %v8006, %v8054
    %v8103 = vrot.slane %v8072, 6
    %v8104 = vrot.slane %v8073, 4
    %v8105 = vrot.slane %v8074, 2
    %v8106 = vrot.slane %v8076, 6
    %v8107 = vrot.slane %v8077, 4
    %v8108 = vrot.slane %v8078, 2
    %v8109 = vrot.slane %v8080, 6
    %v8110 = vrot.slane %v8081, 4
    %v8111 = vrot.slane %v8082, 2
    %v8112 = vrot.slane %v8084, 6
    %v8113 = vrot.slane %v8085, 4
    %v8114 = vrot.slane %v8086, 2
    %vm8115 = vcmask 1041408
    %v8116 = vsel %vm8115, %v8071, %v8103
    %vm8117 = vcmask 1045508
    %v8118 = vsel %vm8117, %v8104, %v8105
    %vm8119 = vcmask 1043456
    %v8120 = vsel %vm8119, %v8116, %v8118
    %v8121 = vsel %vm8115, %v8075, %v8106
    %v8122 = vsel %vm8117, %v8107, %v8108
    %v8123 = vsel %vm8119, %v8121, %v8122
    %v8124 = vsel %vm8115, %v8079, %v8109
    %v8125 = vsel %vm8117, %v8110, %v8111
    %v8126 = vsel %vm8119, %v8124, %v8125
    %v8127 = vsel %vm8115, %v8083, %v8112
    %v8128 = vsel %vm8117, %v8113, %v8114
    %v8129 = vsel %vm8119, %v8127, %v8128
    %8134 = vst [vmem:[#allocation2] sm:$0xff] %v8120
    %8135 = vst [vmem:[#allocation2 + $0x8] sm:$0xff] %v8123
    %8136 = vst [vmem:[#allocation2 + $0x10] sm:$0xff] %v8126
    %8137 = vst [vmem:[#allocation2 + $0x18] sm:$0xff] %v8129
    // Predicated region
    $region10: #{tpu_custom_call.1} parent=1 // pred_check
      _
    $region11: #{tpu_custom_call.1} parent=1 // pred_check_branch
      %8139 = sbr.rel (0) target = $region13
    $region12: #{tpu_custom_call.1} parent=1 // pred_region
      %8141 = vsyncadd [#allocation3], 0
      %s8143 = sshll.u32 [#allocation2], 4
      %s8144 = int_to_ptr.vmem [resolvable:$true] %s8143
      %s8145 = sshll.u32 %s2, 4
      %s8146 = int_to_ptr.hbm [resolvable:$true] %s8145
      %8148 = dma.vmem_to_hbm [thread:$0]  %s8144, 512, %s8146, [#allocation3]
    $region13: #{tpu_custom_call.1} parent=1 // pred_fallthru
      _
    // Predicated region
    $region14: #{tpu_custom_call.1} parent=1 // pred_check
      _
    $region15: #{tpu_custom_call.1} parent=1 // pred_check_branch
      %8150 = sbr.rel (0) target = $region17
    $region16: #{tpu_custom_call.1} parent=1 // pred_region
      %8152 = dma.done [#allocation3], 512
    $region17: #{tpu_custom_call.1} parent=1 // pred_fallthru
      _
    %8153 = vsyncpa [#allocation3], 1

</llo_original>
